<compile_context>
chip_gen: v7x
topology: tpu7x:2x2x1
jax: 0.10.0
libtpu: 0.0.40
codegen_flags: <defaults>
</compile_context>

<pallas_src>
import functools

import jax
import jax.numpy as jnp
from jax.experimental import pallas as pl
from jax.experimental.pallas import tpu as pltpu

EPS = 1e-5  # nn.GroupNorm default eps


# --------------------------------------------------------------------------
# Fused residual-block kernel (one image per grid step, NHWC in VMEM)
# --------------------------------------------------------------------------
def _resblock_kernel(x_ref, w1_ref, b1_ref, g1_ref, be1_ref,
                     w2_ref, b2_ref, g2_ref, be2_ref, m_ref,
                     o_ref, pad_ref, patch_ref):
    H, W, C = x_ref.shape            # batch dim squeezed away by the BlockSpec
    HW = H * W

    # ---- keep the 1-pixel halo of the padded scratch at zero --------------
    # Only the interior is ever written below, so re-zeroing just the ring is
    # enough (no dependence on previous grid steps -> "parallel" is safe).
    zrow = jnp.zeros((W + 2, C), jnp.float32)
    zcol = jnp.zeros((H, 1, C), jnp.float32)
    pad_ref[0, :, :] = zrow
    pad_ref[H + 1, :, :] = zrow
    pad_ref[1:H + 1, 0:1, :] = zcol
    pad_ref[1:H + 1, W + 1:W + 2, :] = zcol

    def build_patches():
        # im2col: tap k of the 3x3 window goes to lanes [k*C, (k+1)*C).
        for k in range(9):                       # static unrolled taps
            dy, dx = k // 3, k % 3
            patch_ref[:, k * C:(k + 1) * C] = (
                pad_ref[dy:dy + H, dx:dx + W, :].reshape(HW, C))

    def conv(w_ref_, bias_row):
        # Single MXU matmul per conv: (H*W, 9*C) x (9*C, C), default precision.
        return jnp.dot(patch_ref[...], w_ref_[...],
                       preferred_element_type=jnp.float32) + bias_row

    def groupnorm(h2d, gamma_row, beta_row):
        s = jnp.sum(h2d, axis=0, keepdims=True)          # (1, C) per-ch sum
        ss = jnp.sum(h2d * h2d, axis=0, keepdims=True)   # (1, C) sum of squares
        stats = jnp.concatenate([s, ss], axis=0)         # (2, C)
        # One small matmul per GN against the block-diagonal group-avg matrix.
        g = jnp.dot(stats, m_ref[...], preferred_element_type=jnp.float32)
        mean = g[0:1, :]
        var = jnp.maximum(g[1:2, :] - mean * mean, 0.0)  # clamp cancellation
        inv = jax.lax.rsqrt(var + EPS)
        return (h2d - mean) * inv * gamma_row + beta_row

    def silu(v):
        return v * jax.nn.sigmoid(v)

    x2d = x_ref[...].reshape(HW, C)

    # ---- conv1 -> gn1 -> silu ----------------------------------------------
    pad_ref[1:H + 1, 1:W + 1, :] = x_ref[...]
    build_patches()
    h = silu(groupnorm(conv(w1_ref, b1_ref[...]), g1_ref[...], be1_ref[...]))

    # ---- conv2 -> gn2 --------------------------------------------------------
    pad_ref[1:H + 1, 1:W + 1, :] = h.reshape(H, W, C)    # halo still zero
    build_patches()
    h = groupnorm(conv(w2_ref, b2_ref[...]), g2_ref[...], be2_ref[...])

    # ---- residual add -> silu ------------------------------------------------
    o_ref[...] = silu(x2d + h).reshape(H, W, C)


def _full_spec(shape):
    nd = len(shape)
    return pl.BlockSpec(shape, lambda *args, _nd=nd: (0,) * _nd)


@functools.partial(jax.jit, static_argnames=("groups",))
def residual_block(x_nchw, params, groups):
    """x_nchw: (N, C, H, W) float32, like the PyTorch module input."""
    (w1, b1, g1, be1, w2, b2, g2, be2) = params
    N, C, H, W = x_nchw.shape
    Cg = C // groups

    x_nhwc = jnp.transpose(x_nchw, (0, 2, 3, 1)).astype(jnp.float32)

    # PyTorch conv weight is (Cout, Cin, 3, 3); im2col wants (9*Cin, Cout)
    # ordered as (ky, kx, cin) along the contraction dim.
    def prep_w(w):
        return jnp.transpose(w, (2, 3, 1, 0)).reshape(9 * C, C).astype(jnp.float32)

    w1k, w2k = prep_w(w1), prep_w(w2)
    row = lambda v: v.reshape(1, C).astype(jnp.float32)

    # Group-averaging matrix: M[c, c'] = 1/(H*W*Cg) if same group else 0.
    gid = jnp.arange(C) // Cg
    M = (gid[:, None] == gid[None, :]).astype(jnp.float32) / float(H * W * Cg)

    out_nhwc = pl.pallas_call(
        _resblock_kernel,
        out_shape=jax.ShapeDtypeStruct((N, H, W, C), jnp.float32),
        grid_spec=pltpu.PrefetchScalarGridSpec(
            num_scalar_prefetch=0,
            grid=(N,),
            in_specs=[
                pl.BlockSpec((None, H, W, C), lambda n: (n, 0, 0, 0)),
                _full_spec((9 * C, C)), _full_spec((1, C)),
                _full_spec((1, C)), _full_spec((1, C)),
                _full_spec((9 * C, C)), _full_spec((1, C)),
                _full_spec((1, C)), _full_spec((1, C)),
                _full_spec((C, C)),
            ],
            out_specs=pl.BlockSpec((None, H, W, C), lambda n: (n, 0, 0, 0)),
            scratch_shapes=[
                pltpu.VMEM((H + 2, W + 2, C), jnp.float32),   # zero-halo image
                pltpu.VMEM((H * W, 9 * C), jnp.float32),      # im2col patches
            ],
        ),
        compiler_params=pltpu.CompilerParams(
            dimension_semantics=("parallel",)),   # v7x: shard batch over 2 TCs
    )(x_nhwc, w1k, row(b1), row(g1), row(be1), w2k, row(b2), row(g2), row(be2), M)

    return jnp.transpose(out_nhwc, (0, 3, 1, 2))


# --------------------------------------------------------------------------
# Pure-JAX reference (mirrors the PyTorch forward) for a correctness check
# --------------------------------------------------------------------------
def _ref_forward(x_nchw, params, groups):
    (w1, b1, g1, be1, w2, b2, g2, be2) = params
    x = jnp.transpose(x_nchw, (0, 2, 3, 1))

    def conv(v, w, b):
        w_hwio = jnp.transpose(w, (2, 3, 1, 0))
        y = jax.lax.conv_general_dilated(
            v, w_hwio, window_strides=(1, 1), padding="SAME",
            dimension_numbers=("NHWC", "HWIO", "NHWC"))
        return y + b

    def gn(v, gamma, beta):
        N, H, W, C = v.shape
        vg = v.reshape(N, H, W, groups, C // groups)
        mean = vg.mean(axis=(1, 2, 4), keepdims=True)
        var = vg.var(axis=(1, 2, 4), keepdims=True)
        vn = ((vg - mean) / jnp.sqrt(var + EPS)).reshape(N, H, W, C)
        return vn * gamma + beta

    silu = lambda v: v * jax.nn.sigmoid(v)
    h = silu(gn(conv(x, w1, b1), g1, be1))
    h = gn(conv(h, w2, b2), g2, be2)
    return jnp.transpose(silu(x + h), (0, 3, 1, 2))


# --------------------------------------------------------------------------
if __name__ == "__main__":
    N, C, H, W = 2, 32, 16, 16
    GROUPS = 16   # nn.GroupNorm(16, ch) default from the module

    keys = jax.random.split(jax.random.PRNGKey(0), 9)

    # Deterministic synthetic parameters (shapes match nn.Conv2d / nn.GroupNorm).
    w1 = 0.1 * jax.random.normal(keys[0], (C, C, 3, 3), jnp.float32)   # OIHW
    b1 = 0.05 * jax.random.normal(keys[1], (C,), jnp.float32)
    g1 = 1.0 + 0.1 * jax.random.normal(keys[2], (C,), jnp.float32)     # GN weight
    be1 = 0.1 * jax.random.normal(keys[3], (C,), jnp.float32)          # GN bias
    w2 = 0.1 * jax.random.normal(keys[4], (C, C, 3, 3), jnp.float32)
    b2 = 0.05 * jax.random.normal(keys[5], (C,), jnp.float32)
    g2 = 1.0 + 0.1 * jax.random.normal(keys[6], (C,), jnp.float32)
    be2 = 0.1 * jax.random.normal(keys[7], (C,), jnp.float32)
    params = (w1, b1, g1, be1, w2, b2, g2, be2)

    x = jax.random.normal(keys[8], (N, C, H, W), jnp.float32)

    out = jax.block_until_ready(residual_block(x, params, GROUPS))
    ref = jax.block_until_ready(_ref_forward(x, params, GROUPS))

    assert out.shape == (N, C, H, W)
    # Default (bf16-pass) MXU precision in the kernel vs. the XLA reference ->
    # loosened tolerance (per review); real bugs produce O(0.1+) errors.
    assert jnp.allclose(out, ref, rtol=5e-2, atol=5e-2), (
        float(jnp.max(jnp.abs(out - ref))))

    print("KERNEL_OK")
</pallas_src>

<mosaic_0001>
module attributes {stable_mosaic.version = 11 : i64} {
  func.func @_resblock_kernel(%arg0: i32, %arg1: memref<1x16x16x32xf32, #tpu.memory_space<vmem>>, %arg2: memref<288x32xf32, #tpu.memory_space<vmem>>, %arg3: memref<1x32xf32, #tpu.memory_space<vmem>>, %arg4: memref<1x32xf32, #tpu.memory_space<vmem>>, %arg5: memref<1x32xf32, #tpu.memory_space<vmem>>, %arg6: memref<288x32xf32, #tpu.memory_space<vmem>>, %arg7: memref<1x32xf32, #tpu.memory_space<vmem>>, %arg8: memref<1x32xf32, #tpu.memory_space<vmem>>, %arg9: memref<1x32xf32, #tpu.memory_space<vmem>>, %arg10: memref<32x32xf32, #tpu.memory_space<vmem>>, %arg11: memref<1x16x16x32xf32, #tpu.memory_space<vmem>>, %arg12: memref<18x18x32xf32, #tpu.memory_space<vmem>>, %arg13: memref<256x288xf32, #tpu.memory_space<vmem>>) attributes {dimension_semantics = [#tpu.dimension_semantics<parallel>], iteration_bounds = array<i64: 2>, scalar_prefetch = 0 : i64, scratch_operands = 2 : i64, tpu.core_type = #tpu.core_type<tc>, window_params = [{transform_indices = @transform_0, window_bounds = array<i64: 1, 16, 16, 32>}, {pipeline_mode = #tpu.pipeline_mode<synchronous>, transform_indices = @transform_1, window_bounds = array<i64: 288, 32>}, {pipeline_mode = #tpu.pipeline_mode<synchronous>, transform_indices = @transform_2, window_bounds = array<i64: 1, 32>}, {pipeline_mode = #tpu.pipeline_mode<synchronous>, transform_indices = @transform_3, window_bounds = array<i64: 1, 32>}, {pipeline_mode = #tpu.pipeline_mode<synchronous>, transform_indices = @transform_4, window_bounds = array<i64: 1, 32>}, {pipeline_mode = #tpu.pipeline_mode<synchronous>, transform_indices = @transform_5, window_bounds = array<i64: 288, 32>}, {pipeline_mode = #tpu.pipeline_mode<synchronous>, transform_indices = @transform_6, window_bounds = array<i64: 1, 32>}, {pipeline_mode = #tpu.pipeline_mode<synchronous>, transform_indices = @transform_7, window_bounds = array<i64: 1, 32>}, {pipeline_mode = #tpu.pipeline_mode<synchronous>, transform_indices = @transform_8, window_bounds = array<i64: 1, 32>}, {pipeline_mode = #tpu.pipeline_mode<synchronous>, transform_indices = @transform_9, window_bounds = array<i64: 32, 32>}, {transform_indices = @transform_10, window_bounds = array<i64: 1, 16, 16, 32>}]} {
    %cst = arith.constant 0.000000e+00 : f32
    %0 = vector.broadcast %cst : f32 to vector<18x32xf32>
    %cst_0 = arith.constant 0.000000e+00 : f32
    %1 = vector.broadcast %cst_0 : f32 to vector<16x1x32xf32>
    %c0 = arith.constant 0 : index
    %c0_1 = arith.constant 0 : index
    %c0_2 = arith.constant 0 : index
    %2 = vector.load %arg12[%c0, %c0_1, %c0_2] : memref<18x18x32xf32, #tpu.memory_space<vmem>>, vector<1x18x32xf32>
    %3 = vector.shape_cast %2 : vector<1x18x32xf32> to vector<18x32xf32>
    %4 = vector.shape_cast %0 : vector<18x32xf32> to vector<1x18x32xf32>
    tpu.vector_store %arg12[%c0, %c0_1, %c0_2], %4 {strides = array<i32>} : memref<18x18x32xf32, #tpu.memory_space<vmem>>, vector<1x18x32xf32>,
    %c17 = arith.constant 17 : index
    %c0_3 = arith.constant 0 : index
    %c0_4 = arith.constant 0 : index
    %5 = vector.load %arg12[%c17, %c0_3, %c0_4] : memref<18x18x32xf32, #tpu.memory_space<vmem>>, vector<1x18x32xf32>
    %6 = vector.shape_cast %5 : vector<1x18x32xf32> to vector<18x32xf32>
    %7 = vector.shape_cast %0 : vector<18x32xf32> to vector<1x18x32xf32>
    tpu.vector_store %arg12[%c17, %c0_3, %c0_4], %7 {strides = array<i32>} : memref<18x18x32xf32, #tpu.memory_space<vmem>>, vector<1x18x32xf32>,
    %c1 = arith.constant 1 : index
    %c0_5 = arith.constant 0 : index
    %c0_6 = arith.constant 0 : index
    %8 = vector.load %arg12[%c1, %c0_5, %c0_6] : memref<18x18x32xf32, #tpu.memory_space<vmem>>, vector<16x1x32xf32>
    tpu.vector_store %arg12[%c1, %c0_5, %c0_6], %1 {strides = array<i32>} : memref<18x18x32xf32, #tpu.memory_space<vmem>>, vector<16x1x32xf32>,
    %c1_7 = arith.constant 1 : index
    %c17_8 = arith.constant 17 : index
    %c0_9 = arith.constant 0 : index
    %9 = vector.load %arg12[%c1_7, %c17_8, %c0_9] : memref<18x18x32xf32, #tpu.memory_space<vmem>>, vector<16x1x32xf32>
    tpu.vector_store %arg12[%c1_7, %c17_8, %c0_9], %1 {strides = array<i32>} : memref<18x18x32xf32, #tpu.memory_space<vmem>>, vector<16x1x32xf32>,
    %c0_10 = arith.constant 0 : index
    %c0_11 = arith.constant 0 : index
    %c0_12 = arith.constant 0 : index
    %c0_13 = arith.constant 0 : index
    %10 = vector.load %arg1[%c0_10, %c0_11, %c0_12, %c0_13] : memref<1x16x16x32xf32, #tpu.memory_space<vmem>>, vector<1x16x16x32xf32>
    %11 = vector.shape_cast %10 : vector<1x16x16x32xf32> to vector<16x16x32xf32>
    %12 = vector.shape_cast %11 : vector<16x16x32xf32> to vector<256x32xf32>
    %c0_14 = arith.constant 0 : index
    %c0_15 = arith.constant 0 : index
    %c0_16 = arith.constant 0 : index
    %c0_17 = arith.constant 0 : index
    %13 = vector.load %arg1[%c0_14, %c0_15, %c0_16, %c0_17] : memref<1x16x16x32xf32, #tpu.memory_space<vmem>>, vector<1x16x16x32xf32>
    %14 = vector.shape_cast %13 : vector<1x16x16x32xf32> to vector<16x16x32xf32>
    %c1_18 = arith.constant 1 : index
    %c1_19 = arith.constant 1 : index
    %c0_20 = arith.constant 0 : index
    %15 = vector.load %arg12[%c1_18, %c1_19, %c0_20] : memref<18x18x32xf32, #tpu.memory_space<vmem>>, vector<16x16x32xf32>
    tpu.vector_store %arg12[%c1_18, %c1_19, %c0_20], %14 {strides = array<i32>} : memref<18x18x32xf32, #tpu.memory_space<vmem>>, vector<16x16x32xf32>,
    %c0_21 = arith.constant 0 : index
    %c0_22 = arith.constant 0 : index
    %c0_23 = arith.constant 0 : index
    %16 = vector.load %arg12[%c0_21, %c0_22, %c0_23] : memref<18x18x32xf32, #tpu.memory_space<vmem>>, vector<16x16x32xf32>
    %17 = vector.shape_cast %16 : vector<16x16x32xf32> to vector<256x32xf32>
    %c0_24 = arith.constant 0 : index
    %c0_25 = arith.constant 0 : index
    %18 = vector.load %arg13[%c0_24, %c0_25] : memref<256x288xf32, #tpu.memory_space<vmem>>, vector<256x32xf32>
    tpu.vector_store %arg13[%c0_24, %c0_25], %17 {strides = array<i32>} : memref<256x288xf32, #tpu.memory_space<vmem>>, vector<256x32xf32>,
    %c0_26 = arith.constant 0 : index
    %c1_27 = arith.constant 1 : index
    %c0_28 = arith.constant 0 : index
    %19 = vector.load %arg12[%c0_26, %c1_27, %c0_28] : memref<18x18x32xf32, #tpu.memory_space<vmem>>, vector<16x16x32xf32>
    %20 = vector.shape_cast %19 : vector<16x16x32xf32> to vector<256x32xf32>
    %c0_29 = arith.constant 0 : index
    %c32 = arith.constant 32 : index
    %21 = vector.load %arg13[%c0_29, %c32] : memref<256x288xf32, #tpu.memory_space<vmem>>, vector<256x32xf32>
    tpu.vector_store %arg13[%c0_29, %c32], %20 {strides = array<i32>} : memref<256x288xf32, #tpu.memory_space<vmem>>, vector<256x32xf32>,
    %c0_30 = arith.constant 0 : index
    %c2 = arith.constant 2 : index
    %c0_31 = arith.constant 0 : index
    %22 = vector.load %arg12[%c0_30, %c2, %c0_31] : memref<18x18x32xf32, #tpu.memory_space<vmem>>, vector<16x16x32xf32>
    %23 = vector.shape_cast %22 : vector<16x16x32xf32> to vector<256x32xf32>
    %c0_32 = arith.constant 0 : index
    %c64 = arith.constant 64 : index
    %24 = vector.load %arg13[%c0_32, %c64] : memref<256x288xf32, #tpu.memory_space<vmem>>, vector<256x32xf32>
    tpu.vector_store %arg13[%c0_32, %c64], %23 {strides = array<i32>} : memref<256x288xf32, #tpu.memory_space<vmem>>, vector<256x32xf32>,
    %c1_33 = arith.constant 1 : index
    %c0_34 = arith.constant 0 : index
    %c0_35 = arith.constant 0 : index
    %25 = vector.load %arg12[%c1_33, %c0_34, %c0_35] : memref<18x18x32xf32, #tpu.memory_space<vmem>>, vector<16x16x32xf32>
    %26 = vector.shape_cast %25 : vector<16x16x32xf32> to vector<256x32xf32>
    %c0_36 = arith.constant 0 : index
    %c96 = arith.constant 96 : index
    %27 = vector.load %arg13[%c0_36, %c96] : memref<256x288xf32, #tpu.memory_space<vmem>>, vector<256x32xf32>
    tpu.vector_store %arg13[%c0_36, %c96], %26 {strides = array<i32>} : memref<256x288xf32, #tpu.memory_space<vmem>>, vector<256x32xf32>,
    %c1_37 = arith.constant 1 : index
    %c1_38 = arith.constant 1 : index
    %c0_39 = arith.constant 0 : index
    %28 = vector.load %arg12[%c1_37, %c1_38, %c0_39] : memref<18x18x32xf32, #tpu.memory_space<vmem>>, vector<16x16x32xf32>
    %29 = vector.shape_cast %28 : vector<16x16x32xf32> to vector<256x32xf32>
    %c0_40 = arith.constant 0 : index
    %c128 = arith.constant 128 : index
    %30 = vector.load %arg13[%c0_40, %c128] : memref<256x288xf32, #tpu.memory_space<vmem>>, vector<256x32xf32>
    tpu.vector_store %arg13[%c0_40, %c128], %29 {strides = array<i32>} : memref<256x288xf32, #tpu.memory_space<vmem>>, vector<256x32xf32>,
    %c1_41 = arith.constant 1 : index
    %c2_42 = arith.constant 2 : index
    %c0_43 = arith.constant 0 : index
    %31 = vector.load %arg12[%c1_41, %c2_42, %c0_43] : memref<18x18x32xf32, #tpu.memory_space<vmem>>, vector<16x16x32xf32>
    %32 = vector.shape_cast %31 : vector<16x16x32xf32> to vector<256x32xf32>
    %c0_44 = arith.constant 0 : index
    %c160 = arith.constant 160 : index
    %33 = vector.load %arg13[%c0_44, %c160] : memref<256x288xf32, #tpu.memory_space<vmem>>, vector<256x32xf32>
    tpu.vector_store %arg13[%c0_44, %c160], %32 {strides = array<i32>} : memref<256x288xf32, #tpu.memory_space<vmem>>, vector<256x32xf32>,
    %c2_45 = arith.constant 2 : index
    %c0_46 = arith.constant 0 : index
    %c0_47 = arith.constant 0 : index
    %34 = vector.load %arg12[%c2_45, %c0_46, %c0_47] : memref<18x18x32xf32, #tpu.memory_space<vmem>>, vector<16x16x32xf32>
    %35 = vector.shape_cast %34 : vector<16x16x32xf32> to vector<256x32xf32>
    %c0_48 = arith.constant 0 : index
    %c192 = arith.constant 192 : index
    %36 = vector.load %arg13[%c0_48, %c192] : memref<256x288xf32, #tpu.memory_space<vmem>>, vector<256x32xf32>
    tpu.vector_store %arg13[%c0_48, %c192], %35 {strides = array<i32>} : memref<256x288xf32, #tpu.memory_space<vmem>>, vector<256x32xf32>,
    %c2_49 = arith.constant 2 : index
    %c1_50 = arith.constant 1 : index
    %c0_51 = arith.constant 0 : index
    %37 = vector.load %arg12[%c2_49, %c1_50, %c0_51] : memref<18x18x32xf32, #tpu.memory_space<vmem>>, vector<16x16x32xf32>
    %38 = vector.shape_cast %37 : vector<16x16x32xf32> to vector<256x32xf32>
    %c0_52 = arith.constant 0 : index
    %c224 = arith.constant 224 : index
    %39 = vector.load %arg13[%c0_52, %c224] : memref<256x288xf32, #tpu.memory_space<vmem>>, vector<256x32xf32>
    tpu.vector_store %arg13[%c0_52, %c224], %38 {strides = array<i32>} : memref<256x288xf32, #tpu.memory_space<vmem>>, vector<256x32xf32>,
    %c2_53 = arith.constant 2 : index
    %c2_54 = arith.constant 2 : index
    %c0_55 = arith.constant 0 : index
    %40 = vector.load %arg12[%c2_53, %c2_54, %c0_55] : memref<18x18x32xf32, #tpu.memory_space<vmem>>, vector<16x16x32xf32>
    %41 = vector.shape_cast %40 : vector<16x16x32xf32> to vector<256x32xf32>
    %c0_56 = arith.constant 0 : index
    %c256 = arith.constant 256 : index
    %42 = vector.load %arg13[%c0_56, %c256] : memref<256x288xf32, #tpu.memory_space<vmem>>, vector<256x32xf32>
    tpu.vector_store %arg13[%c0_56, %c256], %41 {strides = array<i32>} : memref<256x288xf32, #tpu.memory_space<vmem>>, vector<256x32xf32>,
    %c0_57 = arith.constant 0 : index
    %c0_58 = arith.constant 0 : index
    %43 = vector.load %arg3[%c0_57, %c0_58] : memref<1x32xf32, #tpu.memory_space<vmem>>, vector<1x32xf32>
    %c0_59 = arith.constant 0 : index
    %c0_60 = arith.constant 0 : index
    %44 = vector.load %arg13[%c0_59, %c0_60] : memref<256x288xf32, #tpu.memory_space<vmem>>, vector<256x288xf32>
    %c0_61 = arith.constant 0 : index
    %c0_62 = arith.constant 0 : index
    %45 = vector.load %arg2[%c0_61, %c0_62] : memref<288x32xf32, #tpu.memory_space<vmem>>, vector<288x32xf32>
    %cst_63 = arith.constant dense<0.000000e+00> : vector<256x32xf32>
    %46 = tpu.matmul %44, %45, %cst_63 {dimension_numbers = #tpu.dot_dimension_numbers<[1], [0], [0], [1], [0, 0, 1, 1], [], []>} : vector<256x288xf32>, vector<288x32xf32>, vector<256x32xf32> -> vector<256x32xf32>
    %47 = vector.broadcast %43 : vector<1x32xf32> to vector<256x32xf32>
    %48 = arith.addf %46, %47 : vector<256x32xf32>
    %c0_64 = arith.constant 0 : index
    %c0_65 = arith.constant 0 : index
    %49 = vector.load %arg4[%c0_64, %c0_65] : memref<1x32xf32, #tpu.memory_space<vmem>>, vector<1x32xf32>
    %c0_66 = arith.constant 0 : index
    %c0_67 = arith.constant 0 : index
    %50 = vector.load %arg5[%c0_66, %c0_67] : memref<1x32xf32, #tpu.memory_space<vmem>>, vector<1x32xf32>
    %cst_68 = arith.constant dense<0.000000e+00> : vector<32xf32>
    %51 = vector.multi_reduction <add>, %48, %cst_68 [0] : vector<256x32xf32> to vector<32xf32>
    %52 = vector.shape_cast %51 : vector<32xf32> to vector<1x32xf32>
    %53 = arith.mulf %48, %48 : vector<256x32xf32>
    %cst_69 = arith.constant dense<0.000000e+00> : vector<32xf32>
    %54 = vector.multi_reduction <add>, %53, %cst_69 [0] : vector<256x32xf32> to vector<32xf32>
    %55 = vector.shape_cast %54 : vector<32xf32> to vector<1x32xf32>
    %56 = tpu.concatenate %52, %55 in 0 : vector<1x32xf32>, vector<1x32xf32> -> vector<2x32xf32>
    %c0_70 = arith.constant 0 : index
    %c0_71 = arith.constant 0 : index
    %57 = vector.load %arg10[%c0_70, %c0_71] : memref<32x32xf32, #tpu.memory_space<vmem>>, vector<32x32xf32>
    %cst_72 = arith.constant dense<0.000000e+00> : vector<2x32xf32>
    %58 = tpu.matmul %56, %57, %cst_72 {dimension_numbers = #tpu.dot_dimension_numbers<[1], [0], [0], [1], [0, 0, 1, 1], [], []>} : vector<2x32xf32>, vector<32x32xf32>, vector<2x32xf32> -> vector<2x32xf32>
    %59 = vector.extract_strided_slice %58 {offsets = [0, 0], sizes = [1, 32], strides = [1, 1]} : vector<2x32xf32> to vector<1x32xf32>
    %60 = vector.extract_strided_slice %58 {offsets = [1, 0], sizes = [1, 32], strides = [1, 1]} : vector<2x32xf32> to vector<1x32xf32>
    %61 = arith.mulf %59, %59 : vector<1x32xf32>
    %62 = arith.subf %60, %61 : vector<1x32xf32>
    %cst_73 = arith.constant 0.000000e+00 : f32
    %63 = vector.broadcast %cst_73 : f32 to vector<1x32xf32>
    %64 = arith.maximumf %62, %63 : vector<1x32xf32>
    %cst_74 = arith.constant 9.99999974E-6 : f32
    %65 = vector.broadcast %cst_74 : f32 to vector<1x32xf32>
    %66 = arith.addf %64, %65 : vector<1x32xf32>
    %67 = math.rsqrt %66 : vector<1x32xf32>
    %68 = vector.broadcast %59 : vector<1x32xf32> to vector<256x32xf32>
    %69 = arith.subf %48, %68 : vector<256x32xf32>
    %70 = vector.broadcast %67 : vector<1x32xf32> to vector<256x32xf32>
    %71 = arith.mulf %69, %70 : vector<256x32xf32>
    %72 = vector.broadcast %49 : vector<1x32xf32> to vector<256x32xf32>
    %73 = arith.mulf %71, %72 : vector<256x32xf32>
    %74 = vector.broadcast %50 : vector<1x32xf32> to vector<256x32xf32>
    %75 = arith.addf %73, %74 : vector<256x32xf32>
    %76 = arith.negf %75 : vector<256x32xf32>
    %77 = math.exp %76 : vector<256x32xf32>
    %cst_75 = arith.constant 1.000000e+00 : f32
    %78 = vector.broadcast %cst_75 : f32 to vector<256x32xf32>
    %79 = arith.addf %78, %77 : vector<256x32xf32>
    %80 = arith.divf %78, %79 : vector<256x32xf32>
    %81 = arith.mulf %75, %80 : vector<256x32xf32>
    %82 = vector.shape_cast %81 : vector<256x32xf32> to vector<16x16x32xf32>
    %c1_76 = arith.constant 1 : index
    %c1_77 = arith.constant 1 : index
    %c0_78 = arith.constant 0 : index
    %83 = vector.load %arg12[%c1_76, %c1_77, %c0_78] : memref<18x18x32xf32, #tpu.memory_space<vmem>>, vector<16x16x32xf32>
    tpu.vector_store %arg12[%c1_76, %c1_77, %c0_78], %82 {strides = array<i32>} : memref<18x18x32xf32, #tpu.memory_space<vmem>>, vector<16x16x32xf32>,
    %c0_79 = arith.constant 0 : index
    %c0_80 = arith.constant 0 : index
    %c0_81 = arith.constant 0 : index
    %84 = vector.load %arg12[%c0_79, %c0_80, %c0_81] : memref<18x18x32xf32, #tpu.memory_space<vmem>>, vector<16x16x32xf32>
    %85 = vector.shape_cast %84 : vector<16x16x32xf32> to vector<256x32xf32>
    %c0_82 = arith.constant 0 : index
    %c0_83 = arith.constant 0 : index
    %86 = vector.load %arg13[%c0_82, %c0_83] : memref<256x288xf32, #tpu.memory_space<vmem>>, vector<256x32xf32>
    tpu.vector_store %arg13[%c0_82, %c0_83], %85 {strides = array<i32>} : memref<256x288xf32, #tpu.memory_space<vmem>>, vector<256x32xf32>,
    %c0_84 = arith.constant 0 : index
    %c1_85 = arith.constant 1 : index
    %c0_86 = arith.constant 0 : index
    %87 = vector.load %arg12[%c0_84, %c1_85, %c0_86] : memref<18x18x32xf32, #tpu.memory_space<vmem>>, vector<16x16x32xf32>
    %88 = vector.shape_cast %87 : vector<16x16x32xf32> to vector<256x32xf32>
    %c0_87 = arith.constant 0 : index
    %c32_88 = arith.constant 32 : index
    %89 = vector.load %arg13[%c0_87, %c32_88] : memref<256x288xf32, #tpu.memory_space<vmem>>, vector<256x32xf32>
    tpu.vector_store %arg13[%c0_87, %c32_88], %88 {strides = array<i32>} : memref<256x288xf32, #tpu.memory_space<vmem>>, vector<256x32xf32>,
    %c0_89 = arith.constant 0 : index
    %c2_90 = arith.constant 2 : index
    %c0_91 = arith.constant 0 : index
    %90 = vector.load %arg12[%c0_89, %c2_90, %c0_91] : memref<18x18x32xf32, #tpu.memory_space<vmem>>, vector<16x16x32xf32>
    %91 = vector.shape_cast %90 : vector<16x16x32xf32> to vector<256x32xf32>
    %c0_92 = arith.constant 0 : index
    %c64_93 = arith.constant 64 : index
    %92 = vector.load %arg13[%c0_92, %c64_93] : memref<256x288xf32, #tpu.memory_space<vmem>>, vector<256x32xf32>
    tpu.vector_store %arg13[%c0_92, %c64_93], %91 {strides = array<i32>} : memref<256x288xf32, #tpu.memory_space<vmem>>, vector<256x32xf32>,
    %c1_94 = arith.constant 1 : index
    %c0_95 = arith.constant 0 : index
    %c0_96 = arith.constant 0 : index
    %93 = vector.load %arg12[%c1_94, %c0_95, %c0_96] : memref<18x18x32xf32, #tpu.memory_space<vmem>>, vector<16x16x32xf32>
    %94 = vector.shape_cast %93 : vector<16x16x32xf32> to vector<256x32xf32>
    %c0_97 = arith.constant 0 : index
    %c96_98 = arith.constant 96 : index
    %95 = vector.load %arg13[%c0_97, %c96_98] : memref<256x288xf32, #tpu.memory_space<vmem>>, vector<256x32xf32>
    tpu.vector_store %arg13[%c0_97, %c96_98], %94 {strides = array<i32>} : memref<256x288xf32, #tpu.memory_space<vmem>>, vector<256x32xf32>,
    %c1_99 = arith.constant 1 : index
    %c1_100 = arith.constant 1 : index
    %c0_101 = arith.constant 0 : index
    %96 = vector.load %arg12[%c1_99, %c1_100, %c0_101] : memref<18x18x32xf32, #tpu.memory_space<vmem>>, vector<16x16x32xf32>
    %97 = vector.shape_cast %96 : vector<16x16x32xf32> to vector<256x32xf32>
    %c0_102 = arith.constant 0 : index
    %c128_103 = arith.constant 128 : index
    %98 = vector.load %arg13[%c0_102, %c128_103] : memref<256x288xf32, #tpu.memory_space<vmem>>, vector<256x32xf32>
    tpu.vector_store %arg13[%c0_102, %c128_103], %97 {strides = array<i32>} : memref<256x288xf32, #tpu.memory_space<vmem>>, vector<256x32xf32>,
    %c1_104 = arith.constant 1 : index
    %c2_105 = arith.constant 2 : index
    %c0_106 = arith.constant 0 : index
    %99 = vector.load %arg12[%c1_104, %c2_105, %c0_106] : memref<18x18x32xf32, #tpu.memory_space<vmem>>, vector<16x16x32xf32>
    %100 = vector.shape_cast %99 : vector<16x16x32xf32> to vector<256x32xf32>
    %c0_107 = arith.constant 0 : index
    %c160_108 = arith.constant 160 : index
    %101 = vector.load %arg13[%c0_107, %c160_108] : memref<256x288xf32, #tpu.memory_space<vmem>>, vector<256x32xf32>
    tpu.vector_store %arg13[%c0_107, %c160_108], %100 {strides = array<i32>} : memref<256x288xf32, #tpu.memory_space<vmem>>, vector<256x32xf32>,
    %c2_109 = arith.constant 2 : index
    %c0_110 = arith.constant 0 : index
    %c0_111 = arith.constant 0 : index
    %102 = vector.load %arg12[%c2_109, %c0_110, %c0_111] : memref<18x18x32xf32, #tpu.memory_space<vmem>>, vector<16x16x32xf32>
    %103 = vector.shape_cast %102 : vector<16x16x32xf32> to vector<256x32xf32>
    %c0_112 = arith.constant 0 : index
    %c192_113 = arith.constant 192 : index
    %104 = vector.load %arg13[%c0_112, %c192_113] : memref<256x288xf32, #tpu.memory_space<vmem>>, vector<256x32xf32>
    tpu.vector_store %arg13[%c0_112, %c192_113], %103 {strides = array<i32>} : memref<256x288xf32, #tpu.memory_space<vmem>>, vector<256x32xf32>,
    %c2_114 = arith.constant 2 : index
    %c1_115 = arith.constant 1 : index
    %c0_116 = arith.constant 0 : index
    %105 = vector.load %arg12[%c2_114, %c1_115, %c0_116] : memref<18x18x32xf32, #tpu.memory_space<vmem>>, vector<16x16x32xf32>
    %106 = vector.shape_cast %105 : vector<16x16x32xf32> to vector<256x32xf32>
    %c0_117 = arith.constant 0 : index
    %c224_118 = arith.constant 224 : index
    %107 = vector.load %arg13[%c0_117, %c224_118] : memref<256x288xf32, #tpu.memory_space<vmem>>, vector<256x32xf32>
    tpu.vector_store %arg13[%c0_117, %c224_118], %106 {strides = array<i32>} : memref<256x288xf32, #tpu.memory_space<vmem>>, vector<256x32xf32>,
    %c2_119 = arith.constant 2 : index
    %c2_120 = arith.constant 2 : index
    %c0_121 = arith.constant 0 : index
    %108 = vector.load %arg12[%c2_119, %c2_120, %c0_121] : memref<18x18x32xf32, #tpu.memory_space<vmem>>, vector<16x16x32xf32>
    %109 = vector.shape_cast %108 : vector<16x16x32xf32> to vector<256x32xf32>
    %c0_122 = arith.constant 0 : index
    %c256_123 = arith.constant 256 : index
    %110 = vector.load %arg13[%c0_122, %c256_123] : memref<256x288xf32, #tpu.memory_space<vmem>>, vector<256x32xf32>
    tpu.vector_store %arg13[%c0_122, %c256_123], %109 {strides = array<i32>} : memref<256x288xf32, #tpu.memory_space<vmem>>, vector<256x32xf32>,
    %c0_124 = arith.constant 0 : index
    %c0_125 = arith.constant 0 : index
    %111 = vector.load %arg7[%c0_124, %c0_125] : memref<1x32xf32, #tpu.memory_space<vmem>>, vector<1x32xf32>
    %c0_126 = arith.constant 0 : index
    %c0_127 = arith.constant 0 : index
    %112 = vector.load %arg13[%c0_126, %c0_127] : memref<256x288xf32, #tpu.memory_space<vmem>>, vector<256x288xf32>
    %c0_128 = arith.constant 0 : index
    %c0_129 = arith.constant 0 : index
    %113 = vector.load %arg6[%c0_128, %c0_129] : memref<288x32xf32, #tpu.memory_space<vmem>>, vector<288x32xf32>
    %cst_130 = arith.constant dense<0.000000e+00> : vector<256x32xf32>
    %114 = tpu.matmul %112, %113, %cst_130 {dimension_numbers = #tpu.dot_dimension_numbers<[1], [0], [0], [1], [0, 0, 1, 1], [], []>} : vector<256x288xf32>, vector<288x32xf32>, vector<256x32xf32> -> vector<256x32xf32>
    %115 = vector.broadcast %111 : vector<1x32xf32> to vector<256x32xf32>
    %116 = arith.addf %114, %115 : vector<256x32xf32>
    %c0_131 = arith.constant 0 : index
    %c0_132 = arith.constant 0 : index
    %117 = vector.load %arg8[%c0_131, %c0_132] : memref<1x32xf32, #tpu.memory_space<vmem>>, vector<1x32xf32>
    %c0_133 = arith.constant 0 : index
    %c0_134 = arith.constant 0 : index
    %118 = vector.load %arg9[%c0_133, %c0_134] : memref<1x32xf32, #tpu.memory_space<vmem>>, vector<1x32xf32>
    %cst_135 = arith.constant dense<0.000000e+00> : vector<32xf32>
    %119 = vector.multi_reduction <add>, %116, %cst_135 [0] : vector<256x32xf32> to vector<32xf32>
    %120 = vector.shape_cast %119 : vector<32xf32> to vector<1x32xf32>
    %121 = arith.mulf %116, %116 : vector<256x32xf32>
    %cst_136 = arith.constant dense<0.000000e+00> : vector<32xf32>
    %122 = vector.multi_reduction <add>, %121, %cst_136 [0] : vector<256x32xf32> to vector<32xf32>
    %123 = vector.shape_cast %122 : vector<32xf32> to vector<1x32xf32>
    %124 = tpu.concatenate %120, %123 in 0 : vector<1x32xf32>, vector<1x32xf32> -> vector<2x32xf32>
    %c0_137 = arith.constant 0 : index
    %c0_138 = arith.constant 0 : index
    %125 = vector.load %arg10[%c0_137, %c0_138] : memref<32x32xf32, #tpu.memory_space<vmem>>, vector<32x32xf32>
    %cst_139 = arith.constant dense<0.000000e+00> : vector<2x32xf32>
    %126 = tpu.matmul %124, %125, %cst_139 {dimension_numbers = #tpu.dot_dimension_numbers<[1], [0], [0], [1], [0, 0, 1, 1], [], []>} : vector<2x32xf32>, vector<32x32xf32>, vector<2x32xf32> -> vector<2x32xf32>
    %127 = vector.extract_strided_slice %126 {offsets = [0, 0], sizes = [1, 32], strides = [1, 1]} : vector<2x32xf32> to vector<1x32xf32>
    %128 = vector.extract_strided_slice %126 {offsets = [1, 0], sizes = [1, 32], strides = [1, 1]} : vector<2x32xf32> to vector<1x32xf32>
    %129 = arith.mulf %127, %127 : vector<1x32xf32>
    %130 = arith.subf %128, %129 : vector<1x32xf32>
    %cst_140 = arith.constant 0.000000e+00 : f32
    %131 = vector.broadcast %cst_140 : f32 to vector<1x32xf32>
    %132 = arith.maximumf %130, %131 : vector<1x32xf32>
    %cst_141 = arith.constant 9.99999974E-6 : f32
    %133 = vector.broadcast %cst_141 : f32 to vector<1x32xf32>
    %134 = arith.addf %132, %133 : vector<1x32xf32>
    %135 = math.rsqrt %134 : vector<1x32xf32>
    %136 = vector.broadcast %127 : vector<1x32xf32> to vector<256x32xf32>
    %137 = arith.subf %116, %136 : vector<256x32xf32>
    %138 = vector.broadcast %135 : vector<1x32xf32> to vector<256x32xf32>
    %139 = arith.mulf %137, %138 : vector<256x32xf32>
    %140 = vector.broadcast %117 : vector<1x32xf32> to vector<256x32xf32>
    %141 = arith.mulf %139, %140 : vector<256x32xf32>
    %142 = vector.broadcast %118 : vector<1x32xf32> to vector<256x32xf32>
    %143 = arith.addf %141, %142 : vector<256x32xf32>
    %144 = arith.addf %12, %143 : vector<256x32xf32>
    %145 = arith.negf %144 : vector<256x32xf32>
    %146 = math.exp %145 : vector<256x32xf32>
    %cst_142 = arith.constant 1.000000e+00 : f32
    %147 = vector.broadcast %cst_142 : f32 to vector<256x32xf32>
    %148 = arith.addf %147, %146 : vector<256x32xf32>
    %149 = arith.divf %147, %148 : vector<256x32xf32>
    %150 = arith.mulf %144, %149 : vector<256x32xf32>
    %151 = vector.shape_cast %150 : vector<256x32xf32> to vector<16x16x32xf32>
    %c0_143 = arith.constant 0 : index
    %c0_144 = arith.constant 0 : index
    %c0_145 = arith.constant 0 : index
    %c0_146 = arith.constant 0 : index
    %152 = vector.load %arg11[%c0_143, %c0_144, %c0_145, %c0_146] : memref<1x16x16x32xf32, #tpu.memory_space<vmem>>, vector<1x16x16x32xf32>
    %153 = vector.shape_cast %152 : vector<1x16x16x32xf32> to vector<16x16x32xf32>
    %154 = vector.shape_cast %151 : vector<16x16x32xf32> to vector<1x16x16x32xf32>
    tpu.vector_store %arg11[%c0_143, %c0_144, %c0_145, %c0_146], %154 {strides = array<i32>} : memref<1x16x16x32xf32, #tpu.memory_space<vmem>>, vector<1x16x16x32xf32>,
    return
  }
  func.func @transform_0(%arg0: i32) -> (i32, i32, i32, i32) {
    %c0_i32 = arith.constant 0 : i32
    %c0_i32_0 = arith.constant 0 : i32
    %c0_i32_1 = arith.constant 0 : i32
    %c0_i32_2 = arith.constant 0 : i32
    return %arg0, %c0_i32, %c0_i32_0, %c0_i32_1 : i32, i32, i32, i32
  }
  func.func @transform_1(%arg0: i32) -> (i32, i32) {
    %c0_i32 = arith.constant 0 : i32
    %c0_i32_0 = arith.constant 0 : i32
    %c0_i32_1 = arith.constant 0 : i32
    return %c0_i32, %c0_i32_0 : i32, i32
  }
  func.func @transform_2(%arg0: i32) -> (i32, i32) {
    %c0_i32 = arith.constant 0 : i32
    %c0_i32_0 = arith.constant 0 : i32
    %c0_i32_1 = arith.constant 0 : i32
    return %c0_i32, %c0_i32_0 : i32, i32
  }
  func.func @transform_3(%arg0: i32) -> (i32, i32) {
    %c0_i32 = arith.constant 0 : i32
    %c0_i32_0 = arith.constant 0 : i32
    %c0_i32_1 = arith.constant 0 : i32
    return %c0_i32, %c0_i32_0 : i32, i32
  }
  func.func @transform_4(%arg0: i32) -> (i32, i32) {
    %c0_i32 = arith.constant 0 : i32
    %c0_i32_0 = arith.constant 0 : i32
    %c0_i32_1 = arith.constant 0 : i32
    return %c0_i32, %c0_i32_0 : i32, i32
  }
  func.func @transform_5(%arg0: i32) -> (i32, i32) {
    %c0_i32 = arith.constant 0 : i32
    %c0_i32_0 = arith.constant 0 : i32
    %c0_i32_1 = arith.constant 0 : i32
    return %c0_i32, %c0_i32_0 : i32, i32
  }
  func.func @transform_6(%arg0: i32) -> (i32, i32) {
    %c0_i32 = arith.constant 0 : i32
    %c0_i32_0 = arith.constant 0 : i32
    %c0_i32_1 = arith.constant 0 : i32
    return %c0_i32, %c0_i32_0 : i32, i32
  }
  func.func @transform_7(%arg0: i32) -> (i32, i32) {
    %c0_i32 = arith.constant 0 : i32
    %c0_i32_0 = arith.constant 0 : i32
    %c0_i32_1 = arith.constant 0 : i32
    return %c0_i32, %c0_i32_0 : i32, i32
  }
  func.func @transform_8(%arg0: i32) -> (i32, i32) {
    %c0_i32 = arith.constant 0 : i32
    %c0_i32_0 = arith.constant 0 : i32
    %c0_i32_1 = arith.constant 0 : i32
    return %c0_i32, %c0_i32_0 : i32, i32
  }
  func.func @transform_9(%arg0: i32) -> (i32, i32) {
    %c0_i32 = arith.constant 0 : i32
    %c0_i32_0 = arith.constant 0 : i32
    %c0_i32_1 = arith.constant 0 : i32
    return %c0_i32, %c0_i32_0 : i32, i32
  }
  func.func @transform_10(%arg0: i32) -> (i32, i32, i32, i32) {
    %c0_i32 = arith.constant 0 : i32
    %c0_i32_0 = arith.constant 0 : i32
    %c0_i32_1 = arith.constant 0 : i32
    %c0_i32_2 = arith.constant 0 : i32
    return %arg0, %c0_i32, %c0_i32_0, %c0_i32_1 : i32, i32, i32, i32
  }
}

</mosaic_0001>

<llo_original>
// kernel: residual_block.1
$region0: #{residual_block.1}
  #allocation0 [shape = 'u32[]', space=smem, size = 0x4, offset = 0x4, fixed_abs, tag = 'smem constant byte address 0x4 - core index']
  #allocation1 [shape = 'u32[144,128]{1,0:T(1,128)}', space=vmem, size = 0x12000, scoped, tag = 'internal scratch']
  #allocation2 [shape = 'f32[18,18,32]{2,1,0:T(8,128)}', space=vmem, size = 0x36000, scoped, tag = 'scratch operand']
  #allocation3 [shape = 'f32[256,288]{1,0:T(8,128)}', space=vmem, size = 0x60000, scoped, tag = 'scratch operand']
  %s0 = inlined_call_operand.vmem [shape: f32[2,16,16,32], index: 0, kind: input, shape index: {}]
  %s1 = inlined_call_operand.vmem [shape: f32[288,32], index: 1, kind: input, shape index: {}]
  %s2 = inlined_call_operand.vmem [shape: f32[1,32], index: 2, kind: input, shape index: {}]
  %s3 = inlined_call_operand.vmem [shape: f32[1,32], index: 3, kind: input, shape index: {}]
  %s4 = inlined_call_operand.vmem [shape: f32[1,32], index: 4, kind: input, shape index: {}]
  %s5 = inlined_call_operand.vmem [shape: f32[288,32], index: 5, kind: input, shape index: {}]
  %s6 = inlined_call_operand.vmem [shape: f32[1,32], index: 6, kind: input, shape index: {}]
  %s7 = inlined_call_operand.vmem [shape: f32[1,32], index: 7, kind: input, shape index: {}]
  %s8 = inlined_call_operand.vmem [shape: f32[1,32], index: 8, kind: input, shape index: {}]
  %s9 = inlined_call_operand.vmem [shape: f32[32,32], index: 9, kind: input, shape index: {}]
  %s10 = inlined_call_operand.hbm [shape: f32[2,16,16,32], index: 10, kind: output, shape index: {}]
  %s11 = sld [smem:[#allocation0]]
  $region73: #{residual_block.1} parent=0
    _
  %s13 = ssub.s32 1, %s11
  %s14 = scalar_select 0, %s13, %s11
  $region1: #{residual_block.1} parent=0
    #allocation4 [shape = 'u8[262144]{0}', space=vmem, size = 0x40000, scoped, tag = 'output window, operand 0']
    #allocation5 [shape = 's32[2]{0}', space=sflag, size = 0x8, scoped, tag = 'scoped memory for residual_block.1']
    %15 = vsyncpa [#allocation5], 0
    %s16 = scalar_lea.sflag [#allocation5], 1
    %17 = vsyncpa %s16, 0
    loop: start=0, step=1, limit=4
    $region2: #{residual_block.1} parent=1 // loop_pre_header
      _
    $region3: #{residual_block.1} parent=1 // loop_header
      %s19 = sphi 0, %s23
      %p20 = scmp.ge.s32.totalorder %s19, 4
      %s29 = sphi 0, %s31
      %s32 = sphi 0, %s29
      %s33 = sphi 0, %s32
      %s49 = sphi 0, %s33
      %s53 = sphi 0, %s53
      %s55 = sphi 0, %s53
      %s56 = sphi 0, %s55
      %s70 = sphi 0, %s56
      %s74 = sphi 0, %s74
      %s76 = sphi 0, %s74
      %s77 = sphi 0, %s76
      %s91 = sphi 0, %s77
      %s95 = sphi 0, %s95
      %s97 = sphi 0, %s95
      %s98 = sphi 0, %s97
      %s112 = sphi 0, %s98
      %s116 = sphi 0, %s116
      %s118 = sphi 0, %s116
      %s119 = sphi 0, %s118
      %s133 = sphi 0, %s119
      %s137 = sphi 0, %s137
      %s139 = sphi 0, %s137
      %s140 = sphi 0, %s139
      %s154 = sphi 0, %s140
      %s158 = sphi 0, %s158
      %s160 = sphi 0, %s158
      %s161 = sphi 0, %s160
      %s175 = sphi 0, %s161
      %s179 = sphi 0, %s179
      %s181 = sphi 0, %s179
      %s182 = sphi 0, %s181
      %s196 = sphi 0, %s182
      %s200 = sphi 0, %s200
      %s202 = sphi 0, %s200
      %s203 = sphi 0, %s202
      %s217 = sphi 0, %s203
      %s221 = sphi 0, %s221
      %s223 = sphi 0, %s221
      %s224 = sphi 0, %s223
      %s238 = sphi 0, %s224
      %s244 = sphi 0, %s246
      %s247 = sphi 0, %s244
      %s248 = sphi 0, %s247
      %s264 = sphi 0, %s248
    $region4: #{residual_block.1} parent=1 // loop_header_branch
      %22 = sbr.rel (%p20) target = $region8
    $region5: #{residual_block.1} parent=1 // loop_body
      %s24 = ssub.s32 %s19, 1
      %s25 = ssub.s32 %s19, 2
      %s26 = sadd.s32 %s19, 1
      %s27 = ssub.s32 %s19, %s26
      %p28 = scmp.eq.s32.totalorder %s27, 0
      %s30 = sadd.s32 %s29, 1
      %s31 = scalar_select %p28, %s29, %s30
      %p34 = pneg %p28
      %p35 = scmp.eq.s32.totalorder %s19, 1
      %p36 = por %p34, %p35
      %p37 = scmp.ne.s32.totalorder %s29, %s32
      %p38 = scmp.eq.s32.totalorder %s19, 0
      %p39 = por %p37, %p38
      %p40 = scmp.ne.s32.totalorder %s29, %s32
      %p41 = scmp.eq.s32.totalorder %s24, 1
      %p42 = por %p40, %p41
      %p43 = scmp.ne.s32.totalorder %s32, %s33
      %p44 = scmp.eq.s32.totalorder %s24, 0
      %p45 = por %p43, %p44
      %p46 = scmp.ne.s32.totalorder %s32, %s33
      %p47 = scmp.eq.s32.totalorder %s25, 1
      %p48 = por %p46, %p47
      %p50 = scmp.ne.s32.totalorder %s33, %s49
      %p51 = scmp.eq.s32.totalorder %s25, 0
      %p52 = por %p50, %p51
      %s54 = sadd.s32 %s53, 1
      %p57 = scmp.eq.s32.totalorder %s19, 1
      %p58 = scmp.ne.s32.totalorder %s53, %s55
      %p59 = scmp.eq.s32.totalorder %s19, 0
      %p60 = por %p58, %p59
      %p61 = scmp.ne.s32.totalorder %s53, %s55
      %p62 = scmp.eq.s32.totalorder %s24, 1
      %p63 = por %p61, %p62
      %p64 = scmp.ne.s32.totalorder %s55, %s56
      %p65 = scmp.eq.s32.totalorder %s24, 0
      %p66 = por %p64, %p65
      %p67 = scmp.ne.s32.totalorder %s55, %s56
      %p68 = scmp.eq.s32.totalorder %s25, 1
      %p69 = por %p67, %p68
      %p71 = scmp.ne.s32.totalorder %s56, %s70
      %p72 = scmp.eq.s32.totalorder %s25, 0
      %p73 = por %p71, %p72
      %s75 = sadd.s32 %s74, 1
      %p78 = scmp.eq.s32.totalorder %s19, 1
      %p79 = scmp.ne.s32.totalorder %s74, %s76
      %p80 = scmp.eq.s32.totalorder %s19, 0
      %p81 = por %p79, %p80
      %p82 = scmp.ne.s32.totalorder %s74, %s76
      %p83 = scmp.eq.s32.totalorder %s24, 1
      %p84 = por %p82, %p83
      %p85 = scmp.ne.s32.totalorder %s76, %s77
      %p86 = scmp.eq.s32.totalorder %s24, 0
      %p87 = por %p85, %p86
      %p88 = scmp.ne.s32.totalorder %s76, %s77
      %p89 = scmp.eq.s32.totalorder %s25, 1
      %p90 = por %p88, %p89
      %p92 = scmp.ne.s32.totalorder %s77, %s91
      %p93 = scmp.eq.s32.totalorder %s25, 0
      %p94 = por %p92, %p93
      %s96 = sadd.s32 %s95, 1
      %p99 = scmp.eq.s32.totalorder %s19, 1
      %p100 = scmp.ne.s32.totalorder %s95, %s97
      %p101 = scmp.eq.s32.totalorder %s19, 0
      %p102 = por %p100, %p101
      %p103 = scmp.ne.s32.totalorder %s95, %s97
      %p104 = scmp.eq.s32.totalorder %s24, 1
      %p105 = por %p103, %p104
      %p106 = scmp.ne.s32.totalorder %s97, %s98
      %p107 = scmp.eq.s32.totalorder %s24, 0
      %p108 = por %p106, %p107
      %p109 = scmp.ne.s32.totalorder %s97, %s98
      %p110 = scmp.eq.s32.totalorder %s25, 1
      %p111 = por %p109, %p110
      %p113 = scmp.ne.s32.totalorder %s98, %s112
      %p114 = scmp.eq.s32.totalorder %s25, 0
      %p115 = por %p113, %p114
      %s117 = sadd.s32 %s116, 1
      %p120 = scmp.eq.s32.totalorder %s19, 1
      %p121 = scmp.ne.s32.totalorder %s116, %s118
      %p122 = scmp.eq.s32.totalorder %s19, 0
      %p123 = por %p121, %p122
      %p124 = scmp.ne.s32.totalorder %s116, %s118
      %p125 = scmp.eq.s32.totalorder %s24, 1
      %p126 = por %p124, %p125
      %p127 = scmp.ne.s32.totalorder %s118, %s119
      %p128 = scmp.eq.s32.totalorder %s24, 0
      %p129 = por %p127, %p128
      %p130 = scmp.ne.s32.totalorder %s118, %s119
      %p131 = scmp.eq.s32.totalorder %s25, 1
      %p132 = por %p130, %p131
      %p134 = scmp.ne.s32.totalorder %s119, %s133
      %p135 = scmp.eq.s32.totalorder %s25, 0
      %p136 = por %p134, %p135
      %s138 = sadd.s32 %s137, 1
      %p141 = scmp.eq.s32.totalorder %s19, 1
      %p142 = scmp.ne.s32.totalorder %s137, %s139
      %p143 = scmp.eq.s32.totalorder %s19, 0
      %p144 = por %p142, %p143
      %p145 = scmp.ne.s32.totalorder %s137, %s139
      %p146 = scmp.eq.s32.totalorder %s24, 1
      %p147 = por %p145, %p146
      %p148 = scmp.ne.s32.totalorder %s139, %s140
      %p149 = scmp.eq.s32.totalorder %s24, 0
      %p150 = por %p148, %p149
      %p151 = scmp.ne.s32.totalorder %s139, %s140
      %p152 = scmp.eq.s32.totalorder %s25, 1
      %p153 = por %p151, %p152
      %p155 = scmp.ne.s32.totalorder %s140, %s154
      %p156 = scmp.eq.s32.totalorder %s25, 0
      %p157 = por %p155, %p156
      %s159 = sadd.s32 %s158, 1
      %p162 = scmp.eq.s32.totalorder %s19, 1
      %p163 = scmp.ne.s32.totalorder %s158, %s160
      %p164 = scmp.eq.s32.totalorder %s19, 0
      %p165 = por %p163, %p164
      %p166 = scmp.ne.s32.totalorder %s158, %s160
      %p167 = scmp.eq.s32.totalorder %s24, 1
      %p168 = por %p166, %p167
      %p169 = scmp.ne.s32.totalorder %s160, %s161
      %p170 = scmp.eq.s32.totalorder %s24, 0
      %p171 = por %p169, %p170
      %p172 = scmp.ne.s32.totalorder %s160, %s161
      %p173 = scmp.eq.s32.totalorder %s25, 1
      %p174 = por %p172, %p173
      %p176 = scmp.ne.s32.totalorder %s161, %s175
      %p177 = scmp.eq.s32.totalorder %s25, 0
      %p178 = por %p176, %p177
      %s180 = sadd.s32 %s179, 1
      %p183 = scmp.eq.s32.totalorder %s19, 1
      %p184 = scmp.ne.s32.totalorder %s179, %s181
      %p185 = scmp.eq.s32.totalorder %s19, 0
      %p186 = por %p184, %p185
      %p187 = scmp.ne.s32.totalorder %s179, %s181
      %p188 = scmp.eq.s32.totalorder %s24, 1
      %p189 = por %p187, %p188
      %p190 = scmp.ne.s32.totalorder %s181, %s182
      %p191 = scmp.eq.s32.totalorder %s24, 0
      %p192 = por %p190, %p191
      %p193 = scmp.ne.s32.totalorder %s181, %s182
      %p194 = scmp.eq.s32.totalorder %s25, 1
      %p195 = por %p193, %p194
      %p197 = scmp.ne.s32.totalorder %s182, %s196
      %p198 = scmp.eq.s32.totalorder %s25, 0
      %p199 = por %p197, %p198
      %s201 = sadd.s32 %s200, 1
      %p204 = scmp.eq.s32.totalorder %s19, 1
      %p205 = scmp.ne.s32.totalorder %s200, %s202
      %p206 = scmp.eq.s32.totalorder %s19, 0
      %p207 = por %p205, %p206
      %p208 = scmp.ne.s32.totalorder %s200, %s202
      %p209 = scmp.eq.s32.totalorder %s24, 1
      %p210 = por %p208, %p209
      %p211 = scmp.ne.s32.totalorder %s202, %s203
      %p212 = scmp.eq.s32.totalorder %s24, 0
      %p213 = por %p211, %p212
      %p214 = scmp.ne.s32.totalorder %s202, %s203
      %p215 = scmp.eq.s32.totalorder %s25, 1
      %p216 = por %p214, %p215
      %p218 = scmp.ne.s32.totalorder %s203, %s217
      %p219 = scmp.eq.s32.totalorder %s25, 0
      %p220 = por %p218, %p219
      %s222 = sadd.s32 %s221, 1
      %p225 = scmp.eq.s32.totalorder %s19, 1
      %p226 = scmp.ne.s32.totalorder %s221, %s223
      %p227 = scmp.eq.s32.totalorder %s19, 0
      %p228 = por %p226, %p227
      %p229 = scmp.ne.s32.totalorder %s221, %s223
      %p230 = scmp.eq.s32.totalorder %s24, 1
      %p231 = por %p229, %p230
      %p232 = scmp.ne.s32.totalorder %s223, %s224
      %p233 = scmp.eq.s32.totalorder %s24, 0
      %p234 = por %p232, %p233
      %p235 = scmp.ne.s32.totalorder %s223, %s224
      %p236 = scmp.eq.s32.totalorder %s25, 1
      %p237 = por %p235, %p236
      %p239 = scmp.ne.s32.totalorder %s224, %s238
      %p240 = scmp.eq.s32.totalorder %s25, 0
      %p241 = por %p239, %p240
      %s242 = ssub.s32 %s19, %s26
      %p243 = scmp.eq.s32.totalorder %s242, 0
      %s245 = sadd.s32 %s244, 1
      %s246 = scalar_select %p243, %s244, %s245
      %p249 = pneg %p243
      %p250 = scmp.eq.s32.totalorder %s19, 1
      %p251 = por %p249, %p250
      %p252 = scmp.ne.s32.totalorder %s244, %s247
      %p253 = scmp.eq.s32.totalorder %s19, 0
      %p254 = por %p252, %p253
      %p255 = scmp.ne.s32.totalorder %s244, %s247
      %p256 = scmp.eq.s32.totalorder %s24, 1
      %p257 = por %p255, %p256
      %p258 = scmp.ne.s32.totalorder %s247, %s248
      %p259 = scmp.eq.s32.totalorder %s24, 0
      %p260 = por %p258, %p259
      %p261 = scmp.ne.s32.totalorder %s247, %s248
      %p262 = scmp.eq.s32.totalorder %s25, 1
      %p263 = por %p261, %p262
      %p265 = scmp.ne.s32.totalorder %s248, %s264
      %p266 = scmp.eq.s32.totalorder %s25, 0
      %p267 = por %p265, %p266
      %p268 = scmp.le.s32.totalorder 1, %s19
      %p269 = scmp.lt.s32.totalorder %s19, 3
      %p270 = pnand %p268, %p269
      %p271 = pneg %p270
      // Predicated region
      $region9: #{residual_block.1} parent=5 // pred_check
        _
      $region10: #{residual_block.1} parent=5 // pred_check_branch
        %273 = sbr.rel (%p270) target = $region12
      $region11: #{residual_block.1} parent=5 // pred_region
        %s274 = ssub.s32 %s19, 1
        // Predicated region
        $region13: #{residual_block.1} parent=11 // pred_check
          %p275 = pneg %p66
        $region14: #{residual_block.1} parent=11 // pred_check_branch
          %277 = sbr.rel (%p275) target = $region16
        $region15: #{residual_block.1} parent=11 // pred_region
          _
        $region16: #{residual_block.1} parent=11 // pred_fallthru
          _
        // Predicated region
        $region17: #{residual_block.1} parent=11 // pred_check
          %p278 = pneg %p87
        $region18: #{residual_block.1} parent=11 // pred_check_branch
          %280 = sbr.rel (%p278) target = $region20
        $region19: #{residual_block.1} parent=11 // pred_region
          _
        $region20: #{residual_block.1} parent=11 // pred_fallthru
          _
        // Predicated region
        $region21: #{residual_block.1} parent=11 // pred_check
          %p281 = pneg %p108
        $region22: #{residual_block.1} parent=11 // pred_check_branch
          %283 = sbr.rel (%p281) target = $region24
        $region23: #{residual_block.1} parent=11 // pred_region
          _
        $region24: #{residual_block.1} parent=11 // pred_fallthru
          _
        // Predicated region
        $region25: #{residual_block.1} parent=11 // pred_check
          %p284 = pneg %p129
        $region26: #{residual_block.1} parent=11 // pred_check_branch
          %286 = sbr.rel (%p284) target = $region28
        $region27: #{residual_block.1} parent=11 // pred_region
          _
        $region28: #{residual_block.1} parent=11 // pred_fallthru
          _
        // Predicated region
        $region29: #{residual_block.1} parent=11 // pred_check
          %p287 = pneg %p150
        $region30: #{residual_block.1} parent=11 // pred_check_branch
          %289 = sbr.rel (%p287) target = $region32
        $region31: #{residual_block.1} parent=11 // pred_region
          _
        $region32: #{residual_block.1} parent=11 // pred_fallthru
          _
        // Predicated region
        $region33: #{residual_block.1} parent=11 // pred_check
          %p290 = pneg %p171
        $region34: #{residual_block.1} parent=11 // pred_check_branch
          %292 = sbr.rel (%p290) target = $region36
        $region35: #{residual_block.1} parent=11 // pred_region
          _
        $region36: #{residual_block.1} parent=11 // pred_fallthru
          _
        // Predicated region
        $region37: #{residual_block.1} parent=11 // pred_check
          %p293 = pneg %p192
        $region38: #{residual_block.1} parent=11 // pred_check_branch
          %295 = sbr.rel (%p293) target = $region40
        $region39: #{residual_block.1} parent=11 // pred_region
          _
        $region40: #{residual_block.1} parent=11 // pred_fallthru
          _
        // Predicated region
        $region41: #{residual_block.1} parent=11 // pred_check
          %p296 = pneg %p213
        $region42: #{residual_block.1} parent=11 // pred_check_branch
          %298 = sbr.rel (%p296) target = $region44
        $region43: #{residual_block.1} parent=11 // pred_region
          _
        $region44: #{residual_block.1} parent=11 // pred_fallthru
          _
        // Predicated region
        $region45: #{residual_block.1} parent=11 // pred_check
          %p299 = pneg %p234
        $region46: #{residual_block.1} parent=11 // pred_check_branch
          %301 = sbr.rel (%p299) target = $region48
        $region47: #{residual_block.1} parent=11 // pred_region
          _
        $region48: #{residual_block.1} parent=11 // pred_fallthru
          _
      $region12: #{residual_block.1} parent=5 // pred_fallthru
        _
      %p302 = scmp.lt.s32.totalorder %s19, 2
      // Predicated region
      $region49: #{residual_block.1} parent=5 // pred_check
        %p303 = pneg %p302
      $region50: #{residual_block.1} parent=5 // pred_check_branch
        %305 = sbr.rel (%p303) target = $region52
      $region51: #{residual_block.1} parent=5 // pred_region
        // Predicated region
        $region53: #{residual_block.1} parent=51 // pred_check
          %p306 = pneg %p39
        $region54: #{residual_block.1} parent=51 // pred_check_branch
          %308 = sbr.rel (%p306) target = $region56
        $region55: #{residual_block.1} parent=51 // pred_region
          %p309 = scmp.lt.s32.totalorder %s19, 1
          %s310 = scalar_select %p309, %s19, 1
          %s311 = smul.addr %s310, 32
          %s312 = smul.addr %s311, 8
          %s313 = scalar_lea.vmem %s0, %s312
        $region56: #{residual_block.1} parent=51 // pred_fallthru
          _
      $region52: #{residual_block.1} parent=5 // pred_fallthru
        _
      %p314 = scmp.le.s32.totalorder 1, %s19
      %p315 = scmp.lt.s32.totalorder %s19, 3
      %p316 = pnand %p314, %p315
      %p317 = pneg %p316
      // Predicated region
      $region57: #{residual_block.1} parent=5 // pred_check
        _
      $region58: #{residual_block.1} parent=5 // pred_check_branch
        %319 = sbr.rel (%p316) target = $region60
      $region59: #{residual_block.1} parent=5 // pred_region
        %s320 = ssub.s32 %s19, 1
        %p321 = scmp.lt.s32.totalorder %s24, 1
        %s322 = scalar_select %p321, %s24, 1
        %s323 = smul.addr %s322, 32
        %s324 = smul.addr %s323, 8
        %s325 = scalar_lea.vmem %s0, %s324
        %p326 = pneg %p45
        %p327 = pneg %p42
        %p328 = pneg %p66
        %p329 = pneg %p63
        %p330 = pneg %p87
        %p331 = pneg %p84
        %p332 = pneg %p108
        %p333 = pneg %p105
        %p334 = pneg %p129
        %p335 = pneg %p126
        %p336 = pneg %p150
        %p337 = pneg %p147
        %p338 = pneg %p171
        %p339 = pneg %p168
        %p340 = pneg %p192
        %p341 = pneg %p189
        %p342 = pneg %p213
        %p343 = pneg %p210
        %p344 = pneg %p234
        %p345 = pneg %p231
        %p346 = pneg %p260
        %p347 = pneg %p257
        %s348 = sand.u32 %s247, 1
        %s349 = scalar_lea.sflag [#allocation5], %s348
        %s350 = sand.u32 %s247, 1
        %s351 = smul.addr %s350, 256
        %s352 = scalar_lea.vmem [#allocation4], %s351
        %p353 = scmp.lt.s32.totalorder %s24, 1
        %s354 = scalar_select %p353, %s24, 1
        %s355 = smul.addr %s354, 32
        %s356 = smul.addr %s355, 8
        %s357 = scalar_lea.vmem %s0, %s356
        %vm358 = vcmask 261120
        %359 = vst.msk [vmem:[#allocation2] sm:$0xff] %vm358, 0.0
        %360 = vst.msk [vmem:[#allocation2 + $0x8] sm:$0xff] %vm358, 0.0
        %vm361 = vcmask 254976
        %362 = vst.msk [vmem:[#allocation2 + $0x10] sm:$0x3] %vm361, 0.0
        %s363 = scalar_lea.vmem [#allocation2], 408
        %364 = vst.msk [vmem:[%s363] sm:$0xff] %vm358, 0.0
        %365 = vst.msk [vmem:[%s363 + $0x8] sm:$0xff] %vm358, 0.0
        %366 = vst.msk [vmem:[%s363 + $0x10] sm:$0x3] %vm361, 0.0
        %s367 = scalar_lea.vmem [#allocation2], 24
        %vm368 = vcmask 253952
        %369 = vst.msk [vmem:[%s367] sm:$0x1] %vm368, 0.0
        %370 = vst.msk [vmem:[%s367 + $0x18] sm:$0x1] %vm368, 0.0
        %371 = vst.msk [vmem:[%s367 + $0x30] sm:$0x1] %vm368, 0.0
        %372 = vst.msk [vmem:[%s367 + $0x48] sm:$0x1] %vm368, 0.0
        %373 = vst.msk [vmem:[%s367 + $0x60] sm:$0x1] %vm368, 0.0
        %374 = vst.msk [vmem:[%s367 + $0x78] sm:$0x1] %vm368, 0.0
        %375 = vst.msk [vmem:[%s367 + $0x90] sm:$0x1] %vm368, 0.0
        %376 = vst.msk [vmem:[%s367 + $0xa8] sm:$0x1] %vm368, 0.0
        %377 = vst.msk [vmem:[%s367 + $0xc0] sm:$0x1] %vm368, 0.0
        %378 = vst.msk [vmem:[%s367 + $0xd8] sm:$0x1] %vm368, 0.0
        %379 = vst.msk [vmem:[%s367 + $0xf0] sm:$0x1] %vm368, 0.0
        %380 = vst.msk [vmem:[%s367 + $0x108] sm:$0x1] %vm368, 0.0
        %381 = vst.msk [vmem:[%s367 + $0x120] sm:$0x1] %vm368, 0.0
        %382 = vst.msk [vmem:[%s367 + $0x138] sm:$0x1] %vm368, 0.0
        %383 = vst.msk [vmem:[%s367 + $0x150] sm:$0x1] %vm368, 0.0
        %384 = vst.msk [vmem:[%s367 + $0x168] sm:$0x1] %vm368, 0.0
        %385 = vst.msk [vmem:[%s367 + $0x11] sm:$0x1] %vm368, 0.0
        %386 = vst.msk [vmem:[%s367 + $0x29] sm:$0x1] %vm368, 0.0
        %387 = vst.msk [vmem:[%s367 + $0x41] sm:$0x1] %vm368, 0.0
        %388 = vst.msk [vmem:[%s367 + $0x59] sm:$0x1] %vm368, 0.0
        %389 = vst.msk [vmem:[%s367 + $0x71] sm:$0x1] %vm368, 0.0
        %390 = vst.msk [vmem:[%s367 + $0x89] sm:$0x1] %vm368, 0.0
        %391 = vst.msk [vmem:[%s367 + $0xa1] sm:$0x1] %vm368, 0.0
        %392 = vst.msk [vmem:[%s367 + $0xb9] sm:$0x1] %vm368, 0.0
        %393 = vst.msk [vmem:[%s367 + $0xd1] sm:$0x1] %vm368, 0.0
        %394 = vst.msk [vmem:[%s367 + $0xe9] sm:$0x1] %vm368, 0.0
        %395 = vst.msk [vmem:[%s367 + $0x101] sm:$0x1] %vm368, 0.0
        %396 = vst.msk [vmem:[%s367 + $0x119] sm:$0x1] %vm368, 0.0
        %397 = vst.msk [vmem:[%s367 + $0x131] sm:$0x1] %vm368, 0.0
        %398 = vst.msk [vmem:[%s367 + $0x149] sm:$0x1] %vm368, 0.0
        %399 = vst.msk [vmem:[%s367 + $0x161] sm:$0x1] %vm368, 0.0
        %400 = vst.msk [vmem:[%s367 + $0x179] sm:$0x1] %vm368, 0.0
        %v401 = vld [vmem:[%s357] sm:$0xff]
        %v402 = vld [vmem:[%s357 + $0x8] sm:$0xff]
        %v403 = vld [vmem:[%s357 + $0x10] sm:$0xff]
        %v404 = vld [vmem:[%s357 + $0x18] sm:$0xff]
        %v405 = vld [vmem:[%s357 + $0x20] sm:$0xff]
        %v406 = vld [vmem:[%s357 + $0x28] sm:$0xff]
        %v407 = vld [vmem:[%s357 + $0x30] sm:$0xff]
        %v408 = vld [vmem:[%s357 + $0x38] sm:$0xff]
        %v409 = vld [vmem:[%s357 + $0x40] sm:$0xff]
        %v410 = vld [vmem:[%s357 + $0x48] sm:$0xff]
        %v411 = vld [vmem:[%s357 + $0x50] sm:$0xff]
        %v412 = vld [vmem:[%s357 + $0x58] sm:$0xff]
        %v413 = vld [vmem:[%s357 + $0x60] sm:$0xff]
        %v414 = vld [vmem:[%s357 + $0x68] sm:$0xff]
        %v415 = vld [vmem:[%s357 + $0x70] sm:$0xff]
        %v416 = vld [vmem:[%s357 + $0x78] sm:$0xff]
        %v417 = vld [vmem:[%s357 + $0x80] sm:$0xff]
        %v418 = vld [vmem:[%s357 + $0x88] sm:$0xff]
        %v419 = vld [vmem:[%s357 + $0x90] sm:$0xff]
        %v420 = vld [vmem:[%s357 + $0x98] sm:$0xff]
        %v421 = vld [vmem:[%s357 + $0xa0] sm:$0xff]
        %v422 = vld [vmem:[%s357 + $0xa8] sm:$0xff]
        %v423 = vld [vmem:[%s357 + $0xb0] sm:$0xff]
        %v424 = vld [vmem:[%s357 + $0xb8] sm:$0xff]
        %v425 = vld [vmem:[%s357 + $0xc0] sm:$0xff]
        %v426 = vld [vmem:[%s357 + $0xc8] sm:$0xff]
        %v427 = vld [vmem:[%s357 + $0xd0] sm:$0xff]
        %v428 = vld [vmem:[%s357 + $0xd8] sm:$0xff]
        %v429 = vld [vmem:[%s357 + $0xe0] sm:$0xff]
        %v430 = vld [vmem:[%s357 + $0xe8] sm:$0xff]
        %v431 = vld [vmem:[%s357 + $0xf0] sm:$0xff]
        %v432 = vld [vmem:[%s357 + $0xf8] sm:$0xff]
        %433 = vst.msk [vmem:[%s367 + $0x1] sm:$0xff] %vm358, %v401
        %434 = vst.msk [vmem:[%s367 + $0x9] sm:$0xff] %vm358, %v402
        %435 = vst.msk [vmem:[%s367 + $0x19] sm:$0xff] %vm358, %v403
        %436 = vst.msk [vmem:[%s367 + $0x21] sm:$0xff] %vm358, %v404
        %437 = vst.msk [vmem:[%s367 + $0x31] sm:$0xff] %vm358, %v405
        %438 = vst.msk [vmem:[%s367 + $0x39] sm:$0xff] %vm358, %v406
        %439 = vst.msk [vmem:[%s367 + $0x49] sm:$0xff] %vm358, %v407
        %440 = vst.msk [vmem:[%s367 + $0x51] sm:$0xff] %vm358, %v408
        %441 = vst.msk [vmem:[%s367 + $0x61] sm:$0xff] %vm358, %v409
        %442 = vst.msk [vmem:[%s367 + $0x69] sm:$0xff] %vm358, %v410
        %443 = vst.msk [vmem:[%s367 + $0x79] sm:$0xff] %vm358, %v411
        %444 = vst.msk [vmem:[%s367 + $0x81] sm:$0xff] %vm358, %v412
        %445 = vst.msk [vmem:[%s367 + $0x91] sm:$0xff] %vm358, %v413
        %446 = vst.msk [vmem:[%s367 + $0x99] sm:$0xff] %vm358, %v414
        %447 = vst.msk [vmem:[%s367 + $0xa9] sm:$0xff] %vm358, %v415
        %448 = vst.msk [vmem:[%s367 + $0xb1] sm:$0xff] %vm358, %v416
        %449 = vst.msk [vmem:[%s367 + $0xc1] sm:$0xff] %vm358, %v417
        %450 = vst.msk [vmem:[%s367 + $0xc9] sm:$0xff] %vm358, %v418
        %451 = vst.msk [vmem:[%s367 + $0xd9] sm:$0xff] %vm358, %v419
        %452 = vst.msk [vmem:[%s367 + $0xe1] sm:$0xff] %vm358, %v420
        %453 = vst.msk [vmem:[%s367 + $0xf1] sm:$0xff] %vm358, %v421
        %454 = vst.msk [vmem:[%s367 + $0xf9] sm:$0xff] %vm358, %v422
        %455 = vst.msk [vmem:[%s367 + $0x109] sm:$0xff] %vm358, %v423
        %456 = vst.msk [vmem:[%s367 + $0x111] sm:$0xff] %vm358, %v424
        %457 = vst.msk [vmem:[%s367 + $0x121] sm:$0xff] %vm358, %v425
        %458 = vst.msk [vmem:[%s367 + $0x129] sm:$0xff] %vm358, %v426
        %459 = vst.msk [vmem:[%s367 + $0x139] sm:$0xff] %vm358, %v427
        %460 = vst.msk [vmem:[%s367 + $0x141] sm:$0xff] %vm358, %v428
        %461 = vst.msk [vmem:[%s367 + $0x151] sm:$0xff] %vm358, %v429
        %462 = vst.msk [vmem:[%s367 + $0x159] sm:$0xff] %vm358, %v430
        %463 = vst.msk [vmem:[%s367 + $0x169] sm:$0xff] %vm358, %v431
        %464 = vst.msk [vmem:[%s367 + $0x171] sm:$0xff] %vm358, %v432
        %v465 = vld [vmem:[#allocation2] sm:$0xff]
        %v466 = vld [vmem:[#allocation2 + $0x8] sm:$0xff]
        %v467 = vld [vmem:[#allocation2 + $0x18] sm:$0xff]
        %v468 = vld [vmem:[#allocation2 + $0x20] sm:$0xff]
        %v469 = vld [vmem:[#allocation2 + $0x30] sm:$0xff]
        %v470 = vld [vmem:[#allocation2 + $0x38] sm:$0xff]
        %v471 = vld [vmem:[#allocation2 + $0x48] sm:$0xff]
        %v472 = vld [vmem:[#allocation2 + $0x50] sm:$0xff]
        %v473 = vld [vmem:[#allocation2 + $0x60] sm:$0xff]
        %v474 = vld [vmem:[#allocation2 + $0x68] sm:$0xff]
        %v475 = vld [vmem:[#allocation2 + $0x78] sm:$0xff]
        %v476 = vld [vmem:[#allocation2 + $0x80] sm:$0xff]
        %v477 = vld [vmem:[#allocation2 + $0x90] sm:$0xff]
        %v478 = vld [vmem:[#allocation2 + $0x98] sm:$0xff]
        %v479 = vld [vmem:[#allocation2 + $0xa8] sm:$0xff]
        %v480 = vld [vmem:[#allocation2 + $0xb0] sm:$0xff]
        %v481 = vld [vmem:[#allocation2 + $0xc0] sm:$0xff]
        %v482 = vld [vmem:[#allocation2 + $0xc8] sm:$0xff]
        %v483 = vld [vmem:[#allocation2 + $0xd8] sm:$0xff]
        %v484 = vld [vmem:[#allocation2 + $0xe0] sm:$0xff]
        %v485 = vld [vmem:[#allocation2 + $0xf0] sm:$0xff]
        %v486 = vld [vmem:[#allocation2 + $0xf8] sm:$0xff]
        %v487 = vld [vmem:[#allocation2 + $0x108] sm:$0xff]
        %v488 = vld [vmem:[#allocation2 + $0x110] sm:$0xff]
        %v489 = vld [vmem:[#allocation2 + $0x120] sm:$0xff]
        %v490 = vld [vmem:[#allocation2 + $0x128] sm:$0xff]
        %v491 = vld [vmem:[#allocation2 + $0x138] sm:$0xff]
        %v492 = vld [vmem:[#allocation2 + $0x140] sm:$0xff]
        %v493 = vld [vmem:[#allocation2 + $0x150] sm:$0xff]
        %v494 = vld [vmem:[#allocation2 + $0x158] sm:$0xff]
        %v495 = vld [vmem:[#allocation2 + $0x168] sm:$0xff]
        %v496 = vld [vmem:[#allocation2 + $0x170] sm:$0xff]
        %497 = vst.msk [vmem:[#allocation3] sm:$0xff] %vm358, %v465
        %498 = vst.msk [vmem:[#allocation3 + $0x18] sm:$0xff] %vm358, %v466
        %499 = vst.msk [vmem:[#allocation3 + $0x30] sm:$0xff] %vm358, %v467
        %500 = vst.msk [vmem:[#allocation3 + $0x48] sm:$0xff] %vm358, %v468
        %501 = vst.msk [vmem:[#allocation3 + $0x60] sm:$0xff] %vm358, %v469
        %502 = vst.msk [vmem:[#allocation3 + $0x78] sm:$0xff] %vm358, %v470
        %503 = vst.msk [vmem:[#allocation3 + $0x90] sm:$0xff] %vm358, %v471
        %504 = vst.msk [vmem:[#allocation3 + $0xa8] sm:$0xff] %vm358, %v472
        %505 = vst.msk [vmem:[#allocation3 + $0xc0] sm:$0xff] %vm358, %v473
        %506 = vst.msk [vmem:[#allocation3 + $0xd8] sm:$0xff] %vm358, %v474
        %507 = vst.msk [vmem:[#allocation3 + $0xf0] sm:$0xff] %vm358, %v475
        %508 = vst.msk [vmem:[#allocation3 + $0x108] sm:$0xff] %vm358, %v476
        %509 = vst.msk [vmem:[#allocation3 + $0x120] sm:$0xff] %vm358, %v477
        %510 = vst.msk [vmem:[#allocation3 + $0x138] sm:$0xff] %vm358, %v478
        %511 = vst.msk [vmem:[#allocation3 + $0x150] sm:$0xff] %vm358, %v479
        %512 = vst.msk [vmem:[#allocation3 + $0x168] sm:$0xff] %vm358, %v480
        %513 = vst.msk [vmem:[#allocation3 + $0x180] sm:$0xff] %vm358, %v481
        %514 = vst.msk [vmem:[#allocation3 + $0x198] sm:$0xff] %vm358, %v482
        %515 = vst.msk [vmem:[#allocation3 + $0x1b0] sm:$0xff] %vm358, %v483
        %516 = vst.msk [vmem:[#allocation3 + $0x1c8] sm:$0xff] %vm358, %v484
        %517 = vst.msk [vmem:[#allocation3 + $0x1e0] sm:$0xff] %vm358, %v485
        %518 = vst.msk [vmem:[#allocation3 + $0x1f8] sm:$0xff] %vm358, %v486
        %519 = vst.msk [vmem:[#allocation3 + $0x210] sm:$0xff] %vm358, %v487
        %520 = vst.msk [vmem:[#allocation3 + $0x228] sm:$0xff] %vm358, %v488
        %521 = vst.msk [vmem:[#allocation3 + $0x240] sm:$0xff] %vm358, %v489
        %522 = vst.msk [vmem:[#allocation3 + $0x258] sm:$0xff] %vm358, %v490
        %523 = vst.msk [vmem:[#allocation3 + $0x270] sm:$0xff] %vm358, %v491
        %524 = vst.msk [vmem:[#allocation3 + $0x288] sm:$0xff] %vm358, %v492
        %525 = vst.msk [vmem:[#allocation3 + $0x2a0] sm:$0xff] %vm358, %v493
        %526 = vst.msk [vmem:[#allocation3 + $0x2b8] sm:$0xff] %vm358, %v494
        %527 = vst.msk [vmem:[#allocation3 + $0x2d0] sm:$0xff] %vm358, %v495
        %528 = vst.msk [vmem:[#allocation3 + $0x2e8] sm:$0xff] %vm358, %v496
        %v529 = vld [vmem:[#allocation2 + $0x1] sm:$0xff]
        %v530 = vld [vmem:[#allocation2 + $0x9] sm:$0xff]
        %v531 = vld [vmem:[#allocation2 + $0x19] sm:$0xff]
        %v532 = vld [vmem:[#allocation2 + $0x21] sm:$0xff]
        %v533 = vld [vmem:[#allocation2 + $0x31] sm:$0xff]
        %v534 = vld [vmem:[#allocation2 + $0x39] sm:$0xff]
        %v535 = vld [vmem:[#allocation2 + $0x49] sm:$0xff]
        %v536 = vld [vmem:[#allocation2 + $0x51] sm:$0xff]
        %v537 = vld [vmem:[#allocation2 + $0x61] sm:$0xff]
        %v538 = vld [vmem:[#allocation2 + $0x69] sm:$0xff]
        %v539 = vld [vmem:[#allocation2 + $0x79] sm:$0xff]
        %v540 = vld [vmem:[#allocation2 + $0x81] sm:$0xff]
        %v541 = vld [vmem:[#allocation2 + $0x91] sm:$0xff]
        %v542 = vld [vmem:[#allocation2 + $0x99] sm:$0xff]
        %v543 = vld [vmem:[#allocation2 + $0xa9] sm:$0xff]
        %v544 = vld [vmem:[#allocation2 + $0xb1] sm:$0xff]
        %v545 = vld [vmem:[#allocation2 + $0xc1] sm:$0xff]
        %v546 = vld [vmem:[#allocation2 + $0xc9] sm:$0xff]
        %v547 = vld [vmem:[#allocation2 + $0xd9] sm:$0xff]
        %v548 = vld [vmem:[#allocation2 + $0xe1] sm:$0xff]
        %v549 = vld [vmem:[#allocation2 + $0xf1] sm:$0xff]
        %v550 = vld [vmem:[#allocation2 + $0xf9] sm:$0xff]
        %v551 = vld [vmem:[#allocation2 + $0x109] sm:$0xff]
        %v552 = vld [vmem:[#allocation2 + $0x111] sm:$0xff]
        %v553 = vld [vmem:[#allocation2 + $0x121] sm:$0xff]
        %v554 = vld [vmem:[#allocation2 + $0x129] sm:$0xff]
        %v555 = vld [vmem:[#allocation2 + $0x139] sm:$0xff]
        %v556 = vld [vmem:[#allocation2 + $0x141] sm:$0xff]
        %v557 = vld [vmem:[#allocation2 + $0x151] sm:$0xff]
        %v558 = vld [vmem:[#allocation2 + $0x159] sm:$0xff]
        %v559 = vld [vmem:[#allocation2 + $0x169] sm:$0xff]
        %v560 = vld [vmem:[#allocation2 + $0x171] sm:$0xff]
        %593 = vrot.lane.b32.xlu0 %v529, 32
        %v594 = vpop.permute.xlu0 %593
        %595 = vrot.lane.b32.xlu0 %v530, 32
        %v596 = vpop.permute.xlu0 %595
        %597 = vrot.lane.b32.xlu0 %v531, 32
        %v598 = vpop.permute.xlu0 %597
        %599 = vrot.lane.b32.xlu0 %v532, 32
        %v600 = vpop.permute.xlu0 %599
        %601 = vrot.lane.b32.xlu0 %v533, 32
        %v602 = vpop.permute.xlu0 %601
        %603 = vrot.lane.b32.xlu0 %v534, 32
        %v604 = vpop.permute.xlu0 %603
        %605 = vrot.lane.b32.xlu0 %v535, 32
        %v606 = vpop.permute.xlu0 %605
        %607 = vrot.lane.b32.xlu0 %v536, 32
        %v608 = vpop.permute.xlu0 %607
        %609 = vrot.lane.b32.xlu0 %v537, 32
        %v610 = vpop.permute.xlu0 %609
        %611 = vrot.lane.b32.xlu0 %v538, 32
        %v612 = vpop.permute.xlu0 %611
        %613 = vrot.lane.b32.xlu0 %v539, 32
        %v614 = vpop.permute.xlu0 %613
        %615 = vrot.lane.b32.xlu0 %v540, 32
        %v616 = vpop.permute.xlu0 %615
        %617 = vrot.lane.b32.xlu0 %v541, 32
        %v618 = vpop.permute.xlu0 %617
        %619 = vrot.lane.b32.xlu0 %v542, 32
        %v620 = vpop.permute.xlu0 %619
        %621 = vrot.lane.b32.xlu0 %v543, 32
        %v622 = vpop.permute.xlu0 %621
        %623 = vrot.lane.b32.xlu0 %v544, 32
        %v624 = vpop.permute.xlu0 %623
        %625 = vrot.lane.b32.xlu0 %v545, 32
        %v626 = vpop.permute.xlu0 %625
        %627 = vrot.lane.b32.xlu0 %v546, 32
        %v628 = vpop.permute.xlu0 %627
        %629 = vrot.lane.b32.xlu0 %v547, 32
        %v630 = vpop.permute.xlu0 %629
        %631 = vrot.lane.b32.xlu0 %v548, 32
        %v632 = vpop.permute.xlu0 %631
        %633 = vrot.lane.b32.xlu0 %v549, 32
        %v634 = vpop.permute.xlu0 %633
        %635 = vrot.lane.b32.xlu0 %v550, 32
        %v636 = vpop.permute.xlu0 %635
        %637 = vrot.lane.b32.xlu0 %v551, 32
        %v638 = vpop.permute.xlu0 %637
        %639 = vrot.lane.b32.xlu0 %v552, 32
        %v640 = vpop.permute.xlu0 %639
        %641 = vrot.lane.b32.xlu0 %v553, 32
        %v642 = vpop.permute.xlu0 %641
        %643 = vrot.lane.b32.xlu0 %v554, 32
        %v644 = vpop.permute.xlu0 %643
        %645 = vrot.lane.b32.xlu0 %v555, 32
        %v646 = vpop.permute.xlu0 %645
        %647 = vrot.lane.b32.xlu0 %v556, 32
        %v648 = vpop.permute.xlu0 %647
        %649 = vrot.lane.b32.xlu0 %v557, 32
        %v650 = vpop.permute.xlu0 %649
        %651 = vrot.lane.b32.xlu0 %v558, 32
        %v652 = vpop.permute.xlu0 %651
        %653 = vrot.lane.b32.xlu0 %v559, 32
        %v654 = vpop.permute.xlu0 %653
        %655 = vrot.lane.b32.xlu0 %v560, 32
        %v656 = vpop.permute.xlu0 %655
        %vm689 = vcmask 523520
        %690 = vst.msk [vmem:[#allocation3] sm:$0xff] %vm689, %v594
        %691 = vst.msk [vmem:[#allocation3 + $0x18] sm:$0xff] %vm689, %v596
        %692 = vst.msk [vmem:[#allocation3 + $0x30] sm:$0xff] %vm689, %v598
        %693 = vst.msk [vmem:[#allocation3 + $0x48] sm:$0xff] %vm689, %v600
        %694 = vst.msk [vmem:[#allocation3 + $0x60] sm:$0xff] %vm689, %v602
        %695 = vst.msk [vmem:[#allocation3 + $0x78] sm:$0xff] %vm689, %v604
        %696 = vst.msk [vmem:[#allocation3 + $0x90] sm:$0xff] %vm689, %v606
        %697 = vst.msk [vmem:[#allocation3 + $0xa8] sm:$0xff] %vm689, %v608
        %698 = vst.msk [vmem:[#allocation3 + $0xc0] sm:$0xff] %vm689, %v610
        %699 = vst.msk [vmem:[#allocation3 + $0xd8] sm:$0xff] %vm689, %v612
        %700 = vst.msk [vmem:[#allocation3 + $0xf0] sm:$0xff] %vm689, %v614
        %701 = vst.msk [vmem:[#allocation3 + $0x108] sm:$0xff] %vm689, %v616
        %702 = vst.msk [vmem:[#allocation3 + $0x120] sm:$0xff] %vm689, %v618
        %703 = vst.msk [vmem:[#allocation3 + $0x138] sm:$0xff] %vm689, %v620
        %704 = vst.msk [vmem:[#allocation3 + $0x150] sm:$0xff] %vm689, %v622
        %705 = vst.msk [vmem:[#allocation3 + $0x168] sm:$0xff] %vm689, %v624
        %706 = vst.msk [vmem:[#allocation3 + $0x180] sm:$0xff] %vm689, %v626
        %707 = vst.msk [vmem:[#allocation3 + $0x198] sm:$0xff] %vm689, %v628
        %708 = vst.msk [vmem:[#allocation3 + $0x1b0] sm:$0xff] %vm689, %v630
        %709 = vst.msk [vmem:[#allocation3 + $0x1c8] sm:$0xff] %vm689, %v632
        %710 = vst.msk [vmem:[#allocation3 + $0x1e0] sm:$0xff] %vm689, %v634
        %711 = vst.msk [vmem:[#allocation3 + $0x1f8] sm:$0xff] %vm689, %v636
        %712 = vst.msk [vmem:[#allocation3 + $0x210] sm:$0xff] %vm689, %v638
        %713 = vst.msk [vmem:[#allocation3 + $0x228] sm:$0xff] %vm689, %v640
        %714 = vst.msk [vmem:[#allocation3 + $0x240] sm:$0xff] %vm689, %v642
        %715 = vst.msk [vmem:[#allocation3 + $0x258] sm:$0xff] %vm689, %v644
        %716 = vst.msk [vmem:[#allocation3 + $0x270] sm:$0xff] %vm689, %v646
        %717 = vst.msk [vmem:[#allocation3 + $0x288] sm:$0xff] %vm689, %v648
        %718 = vst.msk [vmem:[#allocation3 + $0x2a0] sm:$0xff] %vm689, %v650
        %719 = vst.msk [vmem:[#allocation3 + $0x2b8] sm:$0xff] %vm689, %v652
        %720 = vst.msk [vmem:[#allocation3 + $0x2d0] sm:$0xff] %vm689, %v654
        %721 = vst.msk [vmem:[#allocation3 + $0x2e8] sm:$0xff] %vm689, %v656
        %v722 = vld [vmem:[#allocation2 + $0x2] sm:$0xff]
        %v723 = vld [vmem:[#allocation2 + $0xa] sm:$0xff]
        %v724 = vld [vmem:[#allocation2 + $0x1a] sm:$0xff]
        %v725 = vld [vmem:[#allocation2 + $0x22] sm:$0xff]
        %v726 = vld [vmem:[#allocation2 + $0x32] sm:$0xff]
        %v727 = vld [vmem:[#allocation2 + $0x3a] sm:$0xff]
        %v728 = vld [vmem:[#allocation2 + $0x4a] sm:$0xff]
        %v729 = vld [vmem:[#allocation2 + $0x52] sm:$0xff]
        %v730 = vld [vmem:[#allocation2 + $0x62] sm:$0xff]
        %v731 = vld [vmem:[#allocation2 + $0x6a] sm:$0xff]
        %v732 = vld [vmem:[#allocation2 + $0x7a] sm:$0xff]
        %v733 = vld [vmem:[#allocation2 + $0x82] sm:$0xff]
        %v734 = vld [vmem:[#allocation2 + $0x92] sm:$0xff]
        %v735 = vld [vmem:[#allocation2 + $0x9a] sm:$0xff]
        %v736 = vld [vmem:[#allocation2 + $0xaa] sm:$0xff]
        %v737 = vld [vmem:[#allocation2 + $0xb2] sm:$0xff]
        %v738 = vld [vmem:[#allocation2 + $0xc2] sm:$0xff]
        %v739 = vld [vmem:[#allocation2 + $0xca] sm:$0xff]
        %v740 = vld [vmem:[#allocation2 + $0xda] sm:$0xff]
        %v741 = vld [vmem:[#allocation2 + $0xe2] sm:$0xff]
        %v742 = vld [vmem:[#allocation2 + $0xf2] sm:$0xff]
        %v743 = vld [vmem:[#allocation2 + $0xfa] sm:$0xff]
        %v744 = vld [vmem:[#allocation2 + $0x10a] sm:$0xff]
        %v745 = vld [vmem:[#allocation2 + $0x112] sm:$0xff]
        %v746 = vld [vmem:[#allocation2 + $0x122] sm:$0xff]
        %v747 = vld [vmem:[#allocation2 + $0x12a] sm:$0xff]
        %v748 = vld [vmem:[#allocation2 + $0x13a] sm:$0xff]
        %v749 = vld [vmem:[#allocation2 + $0x142] sm:$0xff]
        %v750 = vld [vmem:[#allocation2 + $0x152] sm:$0xff]
        %v751 = vld [vmem:[#allocation2 + $0x15a] sm:$0xff]
        %v752 = vld [vmem:[#allocation2 + $0x16a] sm:$0xff]
        %v753 = vld [vmem:[#allocation2 + $0x172] sm:$0xff]
        %786 = vrot.lane.b32.xlu0 %v722, 64
        %v787 = vpop.permute.xlu0 %786
        %788 = vrot.lane.b32.xlu0 %v723, 64
        %v789 = vpop.permute.xlu0 %788
        %790 = vrot.lane.b32.xlu0 %v724, 64
        %v791 = vpop.permute.xlu0 %790
        %792 = vrot.lane.b32.xlu0 %v725, 64
        %v793 = vpop.permute.xlu0 %792
        %794 = vrot.lane.b32.xlu0 %v726, 64
        %v795 = vpop.permute.xlu0 %794
        %796 = vrot.lane.b32.xlu0 %v727, 64
        %v797 = vpop.permute.xlu0 %796
        %798 = vrot.lane.b32.xlu0 %v728, 64
        %v799 = vpop.permute.xlu0 %798
        %800 = vrot.lane.b32.xlu0 %v729, 64
        %v801 = vpop.permute.xlu0 %800
        %802 = vrot.lane.b32.xlu0 %v730, 64
        %v803 = vpop.permute.xlu0 %802
        %804 = vrot.lane.b32.xlu0 %v731, 64
        %v805 = vpop.permute.xlu0 %804
        %806 = vrot.lane.b32.xlu0 %v732, 64
        %v807 = vpop.permute.xlu0 %806
        %808 = vrot.lane.b32.xlu0 %v733, 64
        %v809 = vpop.permute.xlu0 %808
        %810 = vrot.lane.b32.xlu0 %v734, 64
        %v811 = vpop.permute.xlu0 %810
        %812 = vrot.lane.b32.xlu0 %v735, 64
        %v813 = vpop.permute.xlu0 %812
        %814 = vrot.lane.b32.xlu0 %v736, 64
        %v815 = vpop.permute.xlu0 %814
        %816 = vrot.lane.b32.xlu0 %v737, 64
        %v817 = vpop.permute.xlu0 %816
        %818 = vrot.lane.b32.xlu0 %v738, 64
        %v819 = vpop.permute.xlu0 %818
        %820 = vrot.lane.b32.xlu0 %v739, 64
        %v821 = vpop.permute.xlu0 %820
        %822 = vrot.lane.b32.xlu0 %v740, 64
        %v823 = vpop.permute.xlu0 %822
        %824 = vrot.lane.b32.xlu0 %v741, 64
        %v825 = vpop.permute.xlu0 %824
        %826 = vrot.lane.b32.xlu0 %v742, 64
        %v827 = vpop.permute.xlu0 %826
        %828 = vrot.lane.b32.xlu0 %v743, 64
        %v829 = vpop.permute.xlu0 %828
        %830 = vrot.lane.b32.xlu0 %v744, 64
        %v831 = vpop.permute.xlu0 %830
        %832 = vrot.lane.b32.xlu0 %v745, 64
        %v833 = vpop.permute.xlu0 %832
        %834 = vrot.lane.b32.xlu0 %v746, 64
        %v835 = vpop.permute.xlu0 %834
        %836 = vrot.lane.b32.xlu0 %v747, 64
        %v837 = vpop.permute.xlu0 %836
        %838 = vrot.lane.b32.xlu0 %v748, 64
        %v839 = vpop.permute.xlu0 %838
        %840 = vrot.lane.b32.xlu0 %v749, 64
        %v841 = vpop.permute.xlu0 %840
        %842 = vrot.lane.b32.xlu0 %v750, 64
        %v843 = vpop.permute.xlu0 %842
        %844 = vrot.lane.b32.xlu0 %v751, 64
        %v845 = vpop.permute.xlu0 %844
        %846 = vrot.lane.b32.xlu0 %v752, 64
        %v847 = vpop.permute.xlu0 %846
        %848 = vrot.lane.b32.xlu0 %v753, 64
        %v849 = vpop.permute.xlu0 %848
        %vm882 = vcmask 785920
        %883 = vst.msk [vmem:[#allocation3] sm:$0xff] %vm882, %v787
        %884 = vst.msk [vmem:[#allocation3 + $0x18] sm:$0xff] %vm882, %v789
        %885 = vst.msk [vmem:[#allocation3 + $0x30] sm:$0xff] %vm882, %v791
        %886 = vst.msk [vmem:[#allocation3 + $0x48] sm:$0xff] %vm882, %v793
        %887 = vst.msk [vmem:[#allocation3 + $0x60] sm:$0xff] %vm882, %v795
        %888 = vst.msk [vmem:[#allocation3 + $0x78] sm:$0xff] %vm882, %v797
        %889 = vst.msk [vmem:[#allocation3 + $0x90] sm:$0xff] %vm882, %v799
        %890 = vst.msk [vmem:[#allocation3 + $0xa8] sm:$0xff] %vm882, %v801
        %891 = vst.msk [vmem:[#allocation3 + $0xc0] sm:$0xff] %vm882, %v803
        %892 = vst.msk [vmem:[#allocation3 + $0xd8] sm:$0xff] %vm882, %v805
        %893 = vst.msk [vmem:[#allocation3 + $0xf0] sm:$0xff] %vm882, %v807
        %894 = vst.msk [vmem:[#allocation3 + $0x108] sm:$0xff] %vm882, %v809
        %895 = vst.msk [vmem:[#allocation3 + $0x120] sm:$0xff] %vm882, %v811
        %896 = vst.msk [vmem:[#allocation3 + $0x138] sm:$0xff] %vm882, %v813
        %897 = vst.msk [vmem:[#allocation3 + $0x150] sm:$0xff] %vm882, %v815
        %898 = vst.msk [vmem:[#allocation3 + $0x168] sm:$0xff] %vm882, %v817
        %899 = vst.msk [vmem:[#allocation3 + $0x180] sm:$0xff] %vm882, %v819
        %900 = vst.msk [vmem:[#allocation3 + $0x198] sm:$0xff] %vm882, %v821
        %901 = vst.msk [vmem:[#allocation3 + $0x1b0] sm:$0xff] %vm882, %v823
        %902 = vst.msk [vmem:[#allocation3 + $0x1c8] sm:$0xff] %vm882, %v825
        %903 = vst.msk [vmem:[#allocation3 + $0x1e0] sm:$0xff] %vm882, %v827
        %904 = vst.msk [vmem:[#allocation3 + $0x1f8] sm:$0xff] %vm882, %v829
        %905 = vst.msk [vmem:[#allocation3 + $0x210] sm:$0xff] %vm882, %v831
        %906 = vst.msk [vmem:[#allocation3 + $0x228] sm:$0xff] %vm882, %v833
        %907 = vst.msk [vmem:[#allocation3 + $0x240] sm:$0xff] %vm882, %v835
        %908 = vst.msk [vmem:[#allocation3 + $0x258] sm:$0xff] %vm882, %v837
        %909 = vst.msk [vmem:[#allocation3 + $0x270] sm:$0xff] %vm882, %v839
        %910 = vst.msk [vmem:[#allocation3 + $0x288] sm:$0xff] %vm882, %v841
        %911 = vst.msk [vmem:[#allocation3 + $0x2a0] sm:$0xff] %vm882, %v843
        %912 = vst.msk [vmem:[#allocation3 + $0x2b8] sm:$0xff] %vm882, %v845
        %913 = vst.msk [vmem:[#allocation3 + $0x2d0] sm:$0xff] %vm882, %v847
        %914 = vst.msk [vmem:[#allocation3 + $0x2e8] sm:$0xff] %vm882, %v849
        %v915 = vld [vmem:[%s367] sm:$0xff]
        %v916 = vld [vmem:[%s367 + $0x8] sm:$0xff]
        %v917 = vld [vmem:[%s367 + $0x18] sm:$0xff]
        %v918 = vld [vmem:[%s367 + $0x20] sm:$0xff]
        %v919 = vld [vmem:[%s367 + $0x30] sm:$0xff]
        %v920 = vld [vmem:[%s367 + $0x38] sm:$0xff]
        %v921 = vld [vmem:[%s367 + $0x48] sm:$0xff]
        %v922 = vld [vmem:[%s367 + $0x50] sm:$0xff]
        %v923 = vld [vmem:[%s367 + $0x60] sm:$0xff]
        %v924 = vld [vmem:[%s367 + $0x68] sm:$0xff]
        %v925 = vld [vmem:[%s367 + $0x78] sm:$0xff]
        %v926 = vld [vmem:[%s367 + $0x80] sm:$0xff]
        %v927 = vld [vmem:[%s367 + $0x90] sm:$0xff]
        %v928 = vld [vmem:[%s367 + $0x98] sm:$0xff]
        %v929 = vld [vmem:[%s367 + $0xa8] sm:$0xff]
        %v930 = vld [vmem:[%s367 + $0xb0] sm:$0xff]
        %v931 = vld [vmem:[%s367 + $0xc0] sm:$0xff]
        %v932 = vld [vmem:[%s367 + $0xc8] sm:$0xff]
        %v933 = vld [vmem:[%s367 + $0xd8] sm:$0xff]
        %v934 = vld [vmem:[%s367 + $0xe0] sm:$0xff]
        %v935 = vld [vmem:[%s367 + $0xf0] sm:$0xff]
        %v936 = vld [vmem:[%s367 + $0xf8] sm:$0xff]
        %v937 = vld [vmem:[%s367 + $0x108] sm:$0xff]
        %v938 = vld [vmem:[%s367 + $0x110] sm:$0xff]
        %v939 = vld [vmem:[%s367 + $0x120] sm:$0xff]
        %v940 = vld [vmem:[%s367 + $0x128] sm:$0xff]
        %v941 = vld [vmem:[%s367 + $0x138] sm:$0xff]
        %v942 = vld [vmem:[%s367 + $0x140] sm:$0xff]
        %v943 = vld [vmem:[%s367 + $0x150] sm:$0xff]
        %v944 = vld [vmem:[%s367 + $0x158] sm:$0xff]
        %v945 = vld [vmem:[%s367 + $0x168] sm:$0xff]
        %v946 = vld [vmem:[%s367 + $0x170] sm:$0xff]
        %979 = vrot.lane.b32.xlu0 %v915, 96
        %v980 = vpop.permute.xlu0 %979
        %981 = vrot.lane.b32.xlu0 %v916, 96
        %v982 = vpop.permute.xlu0 %981
        %983 = vrot.lane.b32.xlu0 %v917, 96
        %v984 = vpop.permute.xlu0 %983
        %985 = vrot.lane.b32.xlu0 %v918, 96
        %v986 = vpop.permute.xlu0 %985
        %987 = vrot.lane.b32.xlu0 %v919, 96
        %v988 = vpop.permute.xlu0 %987
        %989 = vrot.lane.b32.xlu0 %v920, 96
        %v990 = vpop.permute.xlu0 %989
        %991 = vrot.lane.b32.xlu0 %v921, 96
        %v992 = vpop.permute.xlu0 %991
        %993 = vrot.lane.b32.xlu0 %v922, 96
        %v994 = vpop.permute.xlu0 %993
        %995 = vrot.lane.b32.xlu0 %v923, 96
        %v996 = vpop.permute.xlu0 %995
        %997 = vrot.lane.b32.xlu0 %v924, 96
        %v998 = vpop.permute.xlu0 %997
        %999 = vrot.lane.b32.xlu0 %v925, 96
        %v1000 = vpop.permute.xlu0 %999
        %1001 = vrot.lane.b32.xlu0 %v926, 96
        %v1002 = vpop.permute.xlu0 %1001
        %1003 = vrot.lane.b32.xlu0 %v927, 96
        %v1004 = vpop.permute.xlu0 %1003
        %1005 = vrot.lane.b32.xlu0 %v928, 96
        %v1006 = vpop.permute.xlu0 %1005
        %1007 = vrot.lane.b32.xlu0 %v929, 96
        %v1008 = vpop.permute.xlu0 %1007
        %1009 = vrot.lane.b32.xlu0 %v930, 96
        %v1010 = vpop.permute.xlu0 %1009
        %1011 = vrot.lane.b32.xlu0 %v931, 96
        %v1012 = vpop.permute.xlu0 %1011
        %1013 = vrot.lane.b32.xlu0 %v932, 96
        %v1014 = vpop.permute.xlu0 %1013
        %1015 = vrot.lane.b32.xlu0 %v933, 96
        %v1016 = vpop.permute.xlu0 %1015
        %1017 = vrot.lane.b32.xlu0 %v934, 96
        %v1018 = vpop.permute.xlu0 %1017
        %1019 = vrot.lane.b32.xlu0 %v935, 96
        %v1020 = vpop.permute.xlu0 %1019
        %1021 = vrot.lane.b32.xlu0 %v936, 96
        %v1022 = vpop.permute.xlu0 %1021
        %1023 = vrot.lane.b32.xlu0 %v937, 96
        %v1024 = vpop.permute.xlu0 %1023
        %1025 = vrot.lane.b32.xlu0 %v938, 96
        %v1026 = vpop.permute.xlu0 %1025
        %1027 = vrot.lane.b32.xlu0 %v939, 96
        %v1028 = vpop.permute.xlu0 %1027
        %1029 = vrot.lane.b32.xlu0 %v940, 96
        %v1030 = vpop.permute.xlu0 %1029
        %1031 = vrot.lane.b32.xlu0 %v941, 96
        %v1032 = vpop.permute.xlu0 %1031
        %1033 = vrot.lane.b32.xlu0 %v942, 96
        %v1034 = vpop.permute.xlu0 %1033
        %1035 = vrot.lane.b32.xlu0 %v943, 96
        %v1036 = vpop.permute.xlu0 %1035
        %1037 = vrot.lane.b32.xlu0 %v944, 96
        %v1038 = vpop.permute.xlu0 %1037
        %1039 = vrot.lane.b32.xlu0 %v945, 96
        %v1040 = vpop.permute.xlu0 %1039
        %1041 = vrot.lane.b32.xlu0 %v946, 96
        %v1042 = vpop.permute.xlu0 %1041
        %vm1075 = vcmask 1048320
        %1076 = vst.msk [vmem:[#allocation3] sm:$0xff] %vm1075, %v980
        %1077 = vst.msk [vmem:[#allocation3 + $0x18] sm:$0xff] %vm1075, %v982
        %1078 = vst.msk [vmem:[#allocation3 + $0x30] sm:$0xff] %vm1075, %v984
        %1079 = vst.msk [vmem:[#allocation3 + $0x48] sm:$0xff] %vm1075, %v986
        %1080 = vst.msk [vmem:[#allocation3 + $0x60] sm:$0xff] %vm1075, %v988
        %1081 = vst.msk [vmem:[#allocation3 + $0x78] sm:$0xff] %vm1075, %v990
        %1082 = vst.msk [vmem:[#allocation3 + $0x90] sm:$0xff] %vm1075, %v992
        %1083 = vst.msk [vmem:[#allocation3 + $0xa8] sm:$0xff] %vm1075, %v994
        %1084 = vst.msk [vmem:[#allocation3 + $0xc0] sm:$0xff] %vm1075, %v996
        %1085 = vst.msk [vmem:[#allocation3 + $0xd8] sm:$0xff] %vm1075, %v998
        %1086 = vst.msk [vmem:[#allocation3 + $0xf0] sm:$0xff] %vm1075, %v1000
        %1087 = vst.msk [vmem:[#allocation3 + $0x108] sm:$0xff] %vm1075, %v1002
        %1088 = vst.msk [vmem:[#allocation3 + $0x120] sm:$0xff] %vm1075, %v1004
        %1089 = vst.msk [vmem:[#allocation3 + $0x138] sm:$0xff] %vm1075, %v1006
        %1090 = vst.msk [vmem:[#allocation3 + $0x150] sm:$0xff] %vm1075, %v1008
        %1091 = vst.msk [vmem:[#allocation3 + $0x168] sm:$0xff] %vm1075, %v1010
        %1092 = vst.msk [vmem:[#allocation3 + $0x180] sm:$0xff] %vm1075, %v1012
        %1093 = vst.msk [vmem:[#allocation3 + $0x198] sm:$0xff] %vm1075, %v1014
        %1094 = vst.msk [vmem:[#allocation3 + $0x1b0] sm:$0xff] %vm1075, %v1016
        %1095 = vst.msk [vmem:[#allocation3 + $0x1c8] sm:$0xff] %vm1075, %v1018
        %1096 = vst.msk [vmem:[#allocation3 + $0x1e0] sm:$0xff] %vm1075, %v1020
        %1097 = vst.msk [vmem:[#allocation3 + $0x1f8] sm:$0xff] %vm1075, %v1022
        %1098 = vst.msk [vmem:[#allocation3 + $0x210] sm:$0xff] %vm1075, %v1024
        %1099 = vst.msk [vmem:[#allocation3 + $0x228] sm:$0xff] %vm1075, %v1026
        %1100 = vst.msk [vmem:[#allocation3 + $0x240] sm:$0xff] %vm1075, %v1028
        %1101 = vst.msk [vmem:[#allocation3 + $0x258] sm:$0xff] %vm1075, %v1030
        %1102 = vst.msk [vmem:[#allocation3 + $0x270] sm:$0xff] %vm1075, %v1032
        %1103 = vst.msk [vmem:[#allocation3 + $0x288] sm:$0xff] %vm1075, %v1034
        %1104 = vst.msk [vmem:[#allocation3 + $0x2a0] sm:$0xff] %vm1075, %v1036
        %1105 = vst.msk [vmem:[#allocation3 + $0x2b8] sm:$0xff] %vm1075, %v1038
        %1106 = vst.msk [vmem:[#allocation3 + $0x2d0] sm:$0xff] %vm1075, %v1040
        %1107 = vst.msk [vmem:[#allocation3 + $0x2e8] sm:$0xff] %vm1075, %v1042
        %v1108 = vld [vmem:[%s367 + $0x1] sm:$0xff]
        %v1109 = vld [vmem:[%s367 + $0x9] sm:$0xff]
        %v1110 = vld [vmem:[%s367 + $0x19] sm:$0xff]
        %v1111 = vld [vmem:[%s367 + $0x21] sm:$0xff]
        %v1112 = vld [vmem:[%s367 + $0x31] sm:$0xff]
        %v1113 = vld [vmem:[%s367 + $0x39] sm:$0xff]
        %v1114 = vld [vmem:[%s367 + $0x49] sm:$0xff]
        %v1115 = vld [vmem:[%s367 + $0x51] sm:$0xff]
        %v1116 = vld [vmem:[%s367 + $0x61] sm:$0xff]
        %v1117 = vld [vmem:[%s367 + $0x69] sm:$0xff]
        %v1118 = vld [vmem:[%s367 + $0x79] sm:$0xff]
        %v1119 = vld [vmem:[%s367 + $0x81] sm:$0xff]
        %v1120 = vld [vmem:[%s367 + $0x91] sm:$0xff]
        %v1121 = vld [vmem:[%s367 + $0x99] sm:$0xff]
        %v1122 = vld [vmem:[%s367 + $0xa9] sm:$0xff]
        %v1123 = vld [vmem:[%s367 + $0xb1] sm:$0xff]
        %v1124 = vld [vmem:[%s367 + $0xc1] sm:$0xff]
        %v1125 = vld [vmem:[%s367 + $0xc9] sm:$0xff]
        %v1126 = vld [vmem:[%s367 + $0xd9] sm:$0xff]
        %v1127 = vld [vmem:[%s367 + $0xe1] sm:$0xff]
        %v1128 = vld [vmem:[%s367 + $0xf1] sm:$0xff]
        %v1129 = vld [vmem:[%s367 + $0xf9] sm:$0xff]
        %v1130 = vld [vmem:[%s367 + $0x109] sm:$0xff]
        %v1131 = vld [vmem:[%s367 + $0x111] sm:$0xff]
        %v1132 = vld [vmem:[%s367 + $0x121] sm:$0xff]
        %v1133 = vld [vmem:[%s367 + $0x129] sm:$0xff]
        %v1134 = vld [vmem:[%s367 + $0x139] sm:$0xff]
        %v1135 = vld [vmem:[%s367 + $0x141] sm:$0xff]
        %v1136 = vld [vmem:[%s367 + $0x151] sm:$0xff]
        %v1137 = vld [vmem:[%s367 + $0x159] sm:$0xff]
        %v1138 = vld [vmem:[%s367 + $0x169] sm:$0xff]
        %v1139 = vld [vmem:[%s367 + $0x171] sm:$0xff]
        %1140 = vst.msk [vmem:[#allocation3 + $0x8] sm:$0xff] %vm358, %v1108
        %1141 = vst.msk [vmem:[#allocation3 + $0x20] sm:$0xff] %vm358, %v1109
        %1142 = vst.msk [vmem:[#allocation3 + $0x38] sm:$0xff] %vm358, %v1110
        %1143 = vst.msk [vmem:[#allocation3 + $0x50] sm:$0xff] %vm358, %v1111
        %1144 = vst.msk [vmem:[#allocation3 + $0x68] sm:$0xff] %vm358, %v1112
        %1145 = vst.msk [vmem:[#allocation3 + $0x80] sm:$0xff] %vm358, %v1113
        %1146 = vst.msk [vmem:[#allocation3 + $0x98] sm:$0xff] %vm358, %v1114
        %1147 = vst.msk [vmem:[#allocation3 + $0xb0] sm:$0xff] %vm358, %v1115
        %1148 = vst.msk [vmem:[#allocation3 + $0xc8] sm:$0xff] %vm358, %v1116
        %1149 = vst.msk [vmem:[#allocation3 + $0xe0] sm:$0xff] %vm358, %v1117
        %1150 = vst.msk [vmem:[#allocation3 + $0xf8] sm:$0xff] %vm358, %v1118
        %1151 = vst.msk [vmem:[#allocation3 + $0x110] sm:$0xff] %vm358, %v1119
        %1152 = vst.msk [vmem:[#allocation3 + $0x128] sm:$0xff] %vm358, %v1120
        %1153 = vst.msk [vmem:[#allocation3 + $0x140] sm:$0xff] %vm358, %v1121
        %1154 = vst.msk [vmem:[#allocation3 + $0x158] sm:$0xff] %vm358, %v1122
        %1155 = vst.msk [vmem:[#allocation3 + $0x170] sm:$0xff] %vm358, %v1123
        %1156 = vst.msk [vmem:[#allocation3 + $0x188] sm:$0xff] %vm358, %v1124
        %1157 = vst.msk [vmem:[#allocation3 + $0x1a0] sm:$0xff] %vm358, %v1125
        %1158 = vst.msk [vmem:[#allocation3 + $0x1b8] sm:$0xff] %vm358, %v1126
        %1159 = vst.msk [vmem:[#allocation3 + $0x1d0] sm:$0xff] %vm358, %v1127
        %1160 = vst.msk [vmem:[#allocation3 + $0x1e8] sm:$0xff] %vm358, %v1128
        %1161 = vst.msk [vmem:[#allocation3 + $0x200] sm:$0xff] %vm358, %v1129
        %1162 = vst.msk [vmem:[#allocation3 + $0x218] sm:$0xff] %vm358, %v1130
        %1163 = vst.msk [vmem:[#allocation3 + $0x230] sm:$0xff] %vm358, %v1131
        %1164 = vst.msk [vmem:[#allocation3 + $0x248] sm:$0xff] %vm358, %v1132
        %1165 = vst.msk [vmem:[#allocation3 + $0x260] sm:$0xff] %vm358, %v1133
        %1166 = vst.msk [vmem:[#allocation3 + $0x278] sm:$0xff] %vm358, %v1134
        %1167 = vst.msk [vmem:[#allocation3 + $0x290] sm:$0xff] %vm358, %v1135
        %1168 = vst.msk [vmem:[#allocation3 + $0x2a8] sm:$0xff] %vm358, %v1136
        %1169 = vst.msk [vmem:[#allocation3 + $0x2c0] sm:$0xff] %vm358, %v1137
        %1170 = vst.msk [vmem:[#allocation3 + $0x2d8] sm:$0xff] %vm358, %v1138
        %1171 = vst.msk [vmem:[#allocation3 + $0x2f0] sm:$0xff] %vm358, %v1139
        %v1172 = vld [vmem:[%s367 + $0x2] sm:$0xff]
        %v1173 = vld [vmem:[%s367 + $0xa] sm:$0xff]
        %v1174 = vld [vmem:[%s367 + $0x1a] sm:$0xff]
        %v1175 = vld [vmem:[%s367 + $0x22] sm:$0xff]
        %v1176 = vld [vmem:[%s367 + $0x32] sm:$0xff]
        %v1177 = vld [vmem:[%s367 + $0x3a] sm:$0xff]
        %v1178 = vld [vmem:[%s367 + $0x4a] sm:$0xff]
        %v1179 = vld [vmem:[%s367 + $0x52] sm:$0xff]
        %v1180 = vld [vmem:[%s367 + $0x62] sm:$0xff]
        %v1181 = vld [vmem:[%s367 + $0x6a] sm:$0xff]
        %v1182 = vld [vmem:[%s367 + $0x7a] sm:$0xff]
        %v1183 = vld [vmem:[%s367 + $0x82] sm:$0xff]
        %v1184 = vld [vmem:[%s367 + $0x92] sm:$0xff]
        %v1185 = vld [vmem:[%s367 + $0x9a] sm:$0xff]
        %v1186 = vld [vmem:[%s367 + $0xaa] sm:$0xff]
        %v1187 = vld [vmem:[%s367 + $0xb2] sm:$0xff]
        %v1188 = vld [vmem:[%s367 + $0xc2] sm:$0xff]
        %v1189 = vld [vmem:[%s367 + $0xca] sm:$0xff]
        %v1190 = vld [vmem:[%s367 + $0xda] sm:$0xff]
        %v1191 = vld [vmem:[%s367 + $0xe2] sm:$0xff]
        %v1192 = vld [vmem:[%s367 + $0xf2] sm:$0xff]
        %v1193 = vld [vmem:[%s367 + $0xfa] sm:$0xff]
        %v1194 = vld [vmem:[%s367 + $0x10a] sm:$0xff]
        %v1195 = vld [vmem:[%s367 + $0x112] sm:$0xff]
        %v1196 = vld [vmem:[%s367 + $0x122] sm:$0xff]
        %v1197 = vld [vmem:[%s367 + $0x12a] sm:$0xff]
        %v1198 = vld [vmem:[%s367 + $0x13a] sm:$0xff]
        %v1199 = vld [vmem:[%s367 + $0x142] sm:$0xff]
        %v1200 = vld [vmem:[%s367 + $0x152] sm:$0xff]
        %v1201 = vld [vmem:[%s367 + $0x15a] sm:$0xff]
        %v1202 = vld [vmem:[%s367 + $0x16a] sm:$0xff]
        %v1203 = vld [vmem:[%s367 + $0x172] sm:$0xff]
        %1236 = vrot.lane.b32.xlu0 %v1172, 32
        %v1237 = vpop.permute.xlu0 %1236
        %1238 = vrot.lane.b32.xlu0 %v1173, 32
        %v1239 = vpop.permute.xlu0 %1238
        %1240 = vrot.lane.b32.xlu0 %v1174, 32
        %v1241 = vpop.permute.xlu0 %1240
        %1242 = vrot.lane.b32.xlu0 %v1175, 32
        %v1243 = vpop.permute.xlu0 %1242
        %1244 = vrot.lane.b32.xlu0 %v1176, 32
        %v1245 = vpop.permute.xlu0 %1244
        %1246 = vrot.lane.b32.xlu0 %v1177, 32
        %v1247 = vpop.permute.xlu0 %1246
        %1248 = vrot.lane.b32.xlu0 %v1178, 32
        %v1249 = vpop.permute.xlu0 %1248
        %1250 = vrot.lane.b32.xlu0 %v1179, 32
        %v1251 = vpop.permute.xlu0 %1250
        %1252 = vrot.lane.b32.xlu0 %v1180, 32
        %v1253 = vpop.permute.xlu0 %1252
        %1254 = vrot.lane.b32.xlu0 %v1181, 32
        %v1255 = vpop.permute.xlu0 %1254
        %1256 = vrot.lane.b32.xlu0 %v1182, 32
        %v1257 = vpop.permute.xlu0 %1256
        %1258 = vrot.lane.b32.xlu0 %v1183, 32
        %v1259 = vpop.permute.xlu0 %1258
        %1260 = vrot.lane.b32.xlu0 %v1184, 32
        %v1261 = vpop.permute.xlu0 %1260
        %1262 = vrot.lane.b32.xlu0 %v1185, 32
        %v1263 = vpop.permute.xlu0 %1262
        %1264 = vrot.lane.b32.xlu0 %v1186, 32
        %v1265 = vpop.permute.xlu0 %1264
        %1266 = vrot.lane.b32.xlu0 %v1187, 32
        %v1267 = vpop.permute.xlu0 %1266
        %1268 = vrot.lane.b32.xlu0 %v1188, 32
        %v1269 = vpop.permute.xlu0 %1268
        %1270 = vrot.lane.b32.xlu0 %v1189, 32
        %v1271 = vpop.permute.xlu0 %1270
        %1272 = vrot.lane.b32.xlu0 %v1190, 32
        %v1273 = vpop.permute.xlu0 %1272
        %1274 = vrot.lane.b32.xlu0 %v1191, 32
        %v1275 = vpop.permute.xlu0 %1274
        %1276 = vrot.lane.b32.xlu0 %v1192, 32
        %v1277 = vpop.permute.xlu0 %1276
        %1278 = vrot.lane.b32.xlu0 %v1193, 32
        %v1279 = vpop.permute.xlu0 %1278
        %1280 = vrot.lane.b32.xlu0 %v1194, 32
        %v1281 = vpop.permute.xlu0 %1280
        %1282 = vrot.lane.b32.xlu0 %v1195, 32
        %v1283 = vpop.permute.xlu0 %1282
        %1284 = vrot.lane.b32.xlu0 %v1196, 32
        %v1285 = vpop.permute.xlu0 %1284
        %1286 = vrot.lane.b32.xlu0 %v1197, 32
        %v1287 = vpop.permute.xlu0 %1286
        %1288 = vrot.lane.b32.xlu0 %v1198, 32
        %v1289 = vpop.permute.xlu0 %1288
        %1290 = vrot.lane.b32.xlu0 %v1199, 32
        %v1291 = vpop.permute.xlu0 %1290
        %1292 = vrot.lane.b32.xlu0 %v1200, 32
        %v1293 = vpop.permute.xlu0 %1292
        %1294 = vrot.lane.b32.xlu0 %v1201, 32
        %v1295 = vpop.permute.xlu0 %1294
        %1296 = vrot.lane.b32.xlu0 %v1202, 32
        %v1297 = vpop.permute.xlu0 %1296
        %1298 = vrot.lane.b32.xlu0 %v1203, 32
        %v1299 = vpop.permute.xlu0 %1298
        %1332 = vst.msk [vmem:[#allocation3 + $0x8] sm:$0xff] %vm689, %v1237
        %1333 = vst.msk [vmem:[#allocation3 + $0x20] sm:$0xff] %vm689, %v1239
        %1334 = vst.msk [vmem:[#allocation3 + $0x38] sm:$0xff] %vm689, %v1241
        %1335 = vst.msk [vmem:[#allocation3 + $0x50] sm:$0xff] %vm689, %v1243
        %1336 = vst.msk [vmem:[#allocation3 + $0x68] sm:$0xff] %vm689, %v1245
        %1337 = vst.msk [vmem:[#allocation3 + $0x80] sm:$0xff] %vm689, %v1247
        %1338 = vst.msk [vmem:[#allocation3 + $0x98] sm:$0xff] %vm689, %v1249
        %1339 = vst.msk [vmem:[#allocation3 + $0xb0] sm:$0xff] %vm689, %v1251
        %1340 = vst.msk [vmem:[#allocation3 + $0xc8] sm:$0xff] %vm689, %v1253
        %1341 = vst.msk [vmem:[#allocation3 + $0xe0] sm:$0xff] %vm689, %v1255
        %1342 = vst.msk [vmem:[#allocation3 + $0xf8] sm:$0xff] %vm689, %v1257
        %1343 = vst.msk [vmem:[#allocation3 + $0x110] sm:$0xff] %vm689, %v1259
        %1344 = vst.msk [vmem:[#allocation3 + $0x128] sm:$0xff] %vm689, %v1261
        %1345 = vst.msk [vmem:[#allocation3 + $0x140] sm:$0xff] %vm689, %v1263
        %1346 = vst.msk [vmem:[#allocation3 + $0x158] sm:$0xff] %vm689, %v1265
        %1347 = vst.msk [vmem:[#allocation3 + $0x170] sm:$0xff] %vm689, %v1267
        %1348 = vst.msk [vmem:[#allocation3 + $0x188] sm:$0xff] %vm689, %v1269
        %1349 = vst.msk [vmem:[#allocation3 + $0x1a0] sm:$0xff] %vm689, %v1271
        %1350 = vst.msk [vmem:[#allocation3 + $0x1b8] sm:$0xff] %vm689, %v1273
        %1351 = vst.msk [vmem:[#allocation3 + $0x1d0] sm:$0xff] %vm689, %v1275
        %1352 = vst.msk [vmem:[#allocation3 + $0x1e8] sm:$0xff] %vm689, %v1277
        %1353 = vst.msk [vmem:[#allocation3 + $0x200] sm:$0xff] %vm689, %v1279
        %1354 = vst.msk [vmem:[#allocation3 + $0x218] sm:$0xff] %vm689, %v1281
        %1355 = vst.msk [vmem:[#allocation3 + $0x230] sm:$0xff] %vm689, %v1283
        %1356 = vst.msk [vmem:[#allocation3 + $0x248] sm:$0xff] %vm689, %v1285
        %1357 = vst.msk [vmem:[#allocation3 + $0x260] sm:$0xff] %vm689, %v1287
        %1358 = vst.msk [vmem:[#allocation3 + $0x278] sm:$0xff] %vm689, %v1289
        %1359 = vst.msk [vmem:[#allocation3 + $0x290] sm:$0xff] %vm689, %v1291
        %1360 = vst.msk [vmem:[#allocation3 + $0x2a8] sm:$0xff] %vm689, %v1293
        %1361 = vst.msk [vmem:[#allocation3 + $0x2c0] sm:$0xff] %vm689, %v1295
        %1362 = vst.msk [vmem:[#allocation3 + $0x2d8] sm:$0xff] %vm689, %v1297
        %1363 = vst.msk [vmem:[#allocation3 + $0x2f0] sm:$0xff] %vm689, %v1299
        %s1364 = scalar_lea.vmem [#allocation2], 48
        %v1365 = vld [vmem:[%s1364] sm:$0xff]
        %v1366 = vld [vmem:[%s1364 + $0x8] sm:$0xff]
        %v1367 = vld [vmem:[%s1364 + $0x18] sm:$0xff]
        %v1368 = vld [vmem:[%s1364 + $0x20] sm:$0xff]
        %v1369 = vld [vmem:[%s1364 + $0x30] sm:$0xff]
        %v1370 = vld [vmem:[%s1364 + $0x38] sm:$0xff]
        %v1371 = vld [vmem:[%s1364 + $0x48] sm:$0xff]
        %v1372 = vld [vmem:[%s1364 + $0x50] sm:$0xff]
        %v1373 = vld [vmem:[%s1364 + $0x60] sm:$0xff]
        %v1374 = vld [vmem:[%s1364 + $0x68] sm:$0xff]
        %v1375 = vld [vmem:[%s1364 + $0x78] sm:$0xff]
        %v1376 = vld [vmem:[%s1364 + $0x80] sm:$0xff]
        %v1377 = vld [vmem:[%s1364 + $0x90] sm:$0xff]
        %v1378 = vld [vmem:[%s1364 + $0x98] sm:$0xff]
        %v1379 = vld [vmem:[%s1364 + $0xa8] sm:$0xff]
        %v1380 = vld [vmem:[%s1364 + $0xb0] sm:$0xff]
        %v1381 = vld [vmem:[%s1364 + $0xc0] sm:$0xff]
        %v1382 = vld [vmem:[%s1364 + $0xc8] sm:$0xff]
        %v1383 = vld [vmem:[%s1364 + $0xd8] sm:$0xff]
        %v1384 = vld [vmem:[%s1364 + $0xe0] sm:$0xff]
        %v1385 = vld [vmem:[%s1364 + $0xf0] sm:$0xff]
        %v1386 = vld [vmem:[%s1364 + $0xf8] sm:$0xff]
        %v1387 = vld [vmem:[%s1364 + $0x108] sm:$0xff]
        %v1388 = vld [vmem:[%s1364 + $0x110] sm:$0xff]
        %v1389 = vld [vmem:[%s1364 + $0x120] sm:$0xff]
        %v1390 = vld [vmem:[%s1364 + $0x128] sm:$0xff]
        %v1391 = vld [vmem:[%s1364 + $0x138] sm:$0xff]
        %v1392 = vld [vmem:[%s1364 + $0x140] sm:$0xff]
        %v1393 = vld [vmem:[%s1364 + $0x150] sm:$0xff]
        %v1394 = vld [vmem:[%s1364 + $0x158] sm:$0xff]
        %v1395 = vld [vmem:[%s1364 + $0x168] sm:$0xff]
        %v1396 = vld [vmem:[%s1364 + $0x170] sm:$0xff]
        %1429 = vrot.lane.b32.xlu0 %v1365, 64
        %v1430 = vpop.permute.xlu0 %1429
        %1431 = vrot.lane.b32.xlu0 %v1366, 64
        %v1432 = vpop.permute.xlu0 %1431
        %1433 = vrot.lane.b32.xlu0 %v1367, 64
        %v1434 = vpop.permute.xlu0 %1433
        %1435 = vrot.lane.b32.xlu0 %v1368, 64
        %v1436 = vpop.permute.xlu0 %1435
        %1437 = vrot.lane.b32.xlu0 %v1369, 64
        %v1438 = vpop.permute.xlu0 %1437
        %1439 = vrot.lane.b32.xlu0 %v1370, 64
        %v1440 = vpop.permute.xlu0 %1439
        %1441 = vrot.lane.b32.xlu0 %v1371, 64
        %v1442 = vpop.permute.xlu0 %1441
        %1443 = vrot.lane.b32.xlu0 %v1372, 64
        %v1444 = vpop.permute.xlu0 %1443
        %1445 = vrot.lane.b32.xlu0 %v1373, 64
        %v1446 = vpop.permute.xlu0 %1445
        %1447 = vrot.lane.b32.xlu0 %v1374, 64
        %v1448 = vpop.permute.xlu0 %1447
        %1449 = vrot.lane.b32.xlu0 %v1375, 64
        %v1450 = vpop.permute.xlu0 %1449
        %1451 = vrot.lane.b32.xlu0 %v1376, 64
        %v1452 = vpop.permute.xlu0 %1451
        %1453 = vrot.lane.b32.xlu0 %v1377, 64
        %v1454 = vpop.permute.xlu0 %1453
        %1455 = vrot.lane.b32.xlu0 %v1378, 64
        %v1456 = vpop.permute.xlu0 %1455
        %1457 = vrot.lane.b32.xlu0 %v1379, 64
        %v1458 = vpop.permute.xlu0 %1457
        %1459 = vrot.lane.b32.xlu0 %v1380, 64
        %v1460 = vpop.permute.xlu0 %1459
        %1461 = vrot.lane.b32.xlu0 %v1381, 64
        %v1462 = vpop.permute.xlu0 %1461
        %1463 = vrot.lane.b32.xlu0 %v1382, 64
        %v1464 = vpop.permute.xlu0 %1463
        %1465 = vrot.lane.b32.xlu0 %v1383, 64
        %v1466 = vpop.permute.xlu0 %1465
        %1467 = vrot.lane.b32.xlu0 %v1384, 64
        %v1468 = vpop.permute.xlu0 %1467
        %1469 = vrot.lane.b32.xlu0 %v1385, 64
        %v1470 = vpop.permute.xlu0 %1469
        %1471 = vrot.lane.b32.xlu0 %v1386, 64
        %v1472 = vpop.permute.xlu0 %1471
        %1473 = vrot.lane.b32.xlu0 %v1387, 64
        %v1474 = vpop.permute.xlu0 %1473
        %1475 = vrot.lane.b32.xlu0 %v1388, 64
        %v1476 = vpop.permute.xlu0 %1475
        %1477 = vrot.lane.b32.xlu0 %v1389, 64
        %v1478 = vpop.permute.xlu0 %1477
        %1479 = vrot.lane.b32.xlu0 %v1390, 64
        %v1480 = vpop.permute.xlu0 %1479
        %1481 = vrot.lane.b32.xlu0 %v1391, 64
        %v1482 = vpop.permute.xlu0 %1481
        %1483 = vrot.lane.b32.xlu0 %v1392, 64
        %v1484 = vpop.permute.xlu0 %1483
        %1485 = vrot.lane.b32.xlu0 %v1393, 64
        %v1486 = vpop.permute.xlu0 %1485
        %1487 = vrot.lane.b32.xlu0 %v1394, 64
        %v1488 = vpop.permute.xlu0 %1487
        %1489 = vrot.lane.b32.xlu0 %v1395, 64
        %v1490 = vpop.permute.xlu0 %1489
        %1491 = vrot.lane.b32.xlu0 %v1396, 64
        %v1492 = vpop.permute.xlu0 %1491
        %1525 = vst.msk [vmem:[#allocation3 + $0x8] sm:$0xff] %vm882, %v1430
        %1526 = vst.msk [vmem:[#allocation3 + $0x20] sm:$0xff] %vm882, %v1432
        %1527 = vst.msk [vmem:[#allocation3 + $0x38] sm:$0xff] %vm882, %v1434
        %1528 = vst.msk [vmem:[#allocation3 + $0x50] sm:$0xff] %vm882, %v1436
        %1529 = vst.msk [vmem:[#allocation3 + $0x68] sm:$0xff] %vm882, %v1438
        %1530 = vst.msk [vmem:[#allocation3 + $0x80] sm:$0xff] %vm882, %v1440
        %1531 = vst.msk [vmem:[#allocation3 + $0x98] sm:$0xff] %vm882, %v1442
        %1532 = vst.msk [vmem:[#allocation3 + $0xb0] sm:$0xff] %vm882, %v1444
        %1533 = vst.msk [vmem:[#allocation3 + $0xc8] sm:$0xff] %vm882, %v1446
        %1534 = vst.msk [vmem:[#allocation3 + $0xe0] sm:$0xff] %vm882, %v1448
        %1535 = vst.msk [vmem:[#allocation3 + $0xf8] sm:$0xff] %vm882, %v1450
        %1536 = vst.msk [vmem:[#allocation3 + $0x110] sm:$0xff] %vm882, %v1452
        %1537 = vst.msk [vmem:[#allocation3 + $0x128] sm:$0xff] %vm882, %v1454
        %1538 = vst.msk [vmem:[#allocation3 + $0x140] sm:$0xff] %vm882, %v1456
        %1539 = vst.msk [vmem:[#allocation3 + $0x158] sm:$0xff] %vm882, %v1458
        %1540 = vst.msk [vmem:[#allocation3 + $0x170] sm:$0xff] %vm882, %v1460
        %1541 = vst.msk [vmem:[#allocation3 + $0x188] sm:$0xff] %vm882, %v1462
        %1542 = vst.msk [vmem:[#allocation3 + $0x1a0] sm:$0xff] %vm882, %v1464
        %1543 = vst.msk [vmem:[#allocation3 + $0x1b8] sm:$0xff] %vm882, %v1466
        %1544 = vst.msk [vmem:[#allocation3 + $0x1d0] sm:$0xff] %vm882, %v1468
        %1545 = vst.msk [vmem:[#allocation3 + $0x1e8] sm:$0xff] %vm882, %v1470
        %1546 = vst.msk [vmem:[#allocation3 + $0x200] sm:$0xff] %vm882, %v1472
        %1547 = vst.msk [vmem:[#allocation3 + $0x218] sm:$0xff] %vm882, %v1474
        %1548 = vst.msk [vmem:[#allocation3 + $0x230] sm:$0xff] %vm882, %v1476
        %1549 = vst.msk [vmem:[#allocation3 + $0x248] sm:$0xff] %vm882, %v1478
        %1550 = vst.msk [vmem:[#allocation3 + $0x260] sm:$0xff] %vm882, %v1480
        %1551 = vst.msk [vmem:[#allocation3 + $0x278] sm:$0xff] %vm882, %v1482
        %1552 = vst.msk [vmem:[#allocation3 + $0x290] sm:$0xff] %vm882, %v1484
        %1553 = vst.msk [vmem:[#allocation3 + $0x2a8] sm:$0xff] %vm882, %v1486
        %1554 = vst.msk [vmem:[#allocation3 + $0x2c0] sm:$0xff] %vm882, %v1488
        %1555 = vst.msk [vmem:[#allocation3 + $0x2d8] sm:$0xff] %vm882, %v1490
        %1556 = vst.msk [vmem:[#allocation3 + $0x2f0] sm:$0xff] %vm882, %v1492
        %v1557 = vld [vmem:[%s1364 + $0x1] sm:$0xff]
        %v1558 = vld [vmem:[%s1364 + $0x9] sm:$0xff]
        %v1559 = vld [vmem:[%s1364 + $0x19] sm:$0xff]
        %v1560 = vld [vmem:[%s1364 + $0x21] sm:$0xff]
        %v1561 = vld [vmem:[%s1364 + $0x31] sm:$0xff]
        %v1562 = vld [vmem:[%s1364 + $0x39] sm:$0xff]
        %v1563 = vld [vmem:[%s1364 + $0x49] sm:$0xff]
        %v1564 = vld [vmem:[%s1364 + $0x51] sm:$0xff]
        %v1565 = vld [vmem:[%s1364 + $0x61] sm:$0xff]
        %v1566 = vld [vmem:[%s1364 + $0x69] sm:$0xff]
        %v1567 = vld [vmem:[%s1364 + $0x79] sm:$0xff]
        %v1568 = vld [vmem:[%s1364 + $0x81] sm:$0xff]
        %v1569 = vld [vmem:[%s1364 + $0x91] sm:$0xff]
        %v1570 = vld [vmem:[%s1364 + $0x99] sm:$0xff]
        %v1571 = vld [vmem:[%s1364 + $0xa9] sm:$0xff]
        %v1572 = vld [vmem:[%s1364 + $0xb1] sm:$0xff]
        %v1573 = vld [vmem:[%s1364 + $0xc1] sm:$0xff]
        %v1574 = vld [vmem:[%s1364 + $0xc9] sm:$0xff]
        %v1575 = vld [vmem:[%s1364 + $0xd9] sm:$0xff]
        %v1576 = vld [vmem:[%s1364 + $0xe1] sm:$0xff]
        %v1577 = vld [vmem:[%s1364 + $0xf1] sm:$0xff]
        %v1578 = vld [vmem:[%s1364 + $0xf9] sm:$0xff]
        %v1579 = vld [vmem:[%s1364 + $0x109] sm:$0xff]
        %v1580 = vld [vmem:[%s1364 + $0x111] sm:$0xff]
        %v1581 = vld [vmem:[%s1364 + $0x121] sm:$0xff]
        %v1582 = vld [vmem:[%s1364 + $0x129] sm:$0xff]
        %v1583 = vld [vmem:[%s1364 + $0x139] sm:$0xff]
        %v1584 = vld [vmem:[%s1364 + $0x141] sm:$0xff]
        %v1585 = vld [vmem:[%s1364 + $0x151] sm:$0xff]
        %v1586 = vld [vmem:[%s1364 + $0x159] sm:$0xff]
        %v1587 = vld [vmem:[%s1364 + $0x169] sm:$0xff]
        %v1588 = vld [vmem:[%s1364 + $0x171] sm:$0xff]
        %1621 = vrot.lane.b32.xlu0 %v1557, 96
        %v1622 = vpop.permute.xlu0 %1621
        %1623 = vrot.lane.b32.xlu0 %v1558, 96
        %v1624 = vpop.permute.xlu0 %1623
        %1625 = vrot.lane.b32.xlu0 %v1559, 96
        %v1626 = vpop.permute.xlu0 %1625
        %1627 = vrot.lane.b32.xlu0 %v1560, 96
        %v1628 = vpop.permute.xlu0 %1627
        %1629 = vrot.lane.b32.xlu0 %v1561, 96
        %v1630 = vpop.permute.xlu0 %1629
        %1631 = vrot.lane.b32.xlu0 %v1562, 96
        %v1632 = vpop.permute.xlu0 %1631
        %1633 = vrot.lane.b32.xlu0 %v1563, 96
        %v1634 = vpop.permute.xlu0 %1633
        %1635 = vrot.lane.b32.xlu0 %v1564, 96
        %v1636 = vpop.permute.xlu0 %1635
        %1637 = vrot.lane.b32.xlu0 %v1565, 96
        %v1638 = vpop.permute.xlu0 %1637
        %1639 = vrot.lane.b32.xlu0 %v1566, 96
        %v1640 = vpop.permute.xlu0 %1639
        %1641 = vrot.lane.b32.xlu0 %v1567, 96
        %v1642 = vpop.permute.xlu0 %1641
        %1643 = vrot.lane.b32.xlu0 %v1568, 96
        %v1644 = vpop.permute.xlu0 %1643
        %1645 = vrot.lane.b32.xlu0 %v1569, 96
        %v1646 = vpop.permute.xlu0 %1645
        %1647 = vrot.lane.b32.xlu0 %v1570, 96
        %v1648 = vpop.permute.xlu0 %1647
        %1649 = vrot.lane.b32.xlu0 %v1571, 96
        %v1650 = vpop.permute.xlu0 %1649
        %1651 = vrot.lane.b32.xlu0 %v1572, 96
        %v1652 = vpop.permute.xlu0 %1651
        %1653 = vrot.lane.b32.xlu0 %v1573, 96
        %v1654 = vpop.permute.xlu0 %1653
        %1655 = vrot.lane.b32.xlu0 %v1574, 96
        %v1656 = vpop.permute.xlu0 %1655
        %1657 = vrot.lane.b32.xlu0 %v1575, 96
        %v1658 = vpop.permute.xlu0 %1657
        %1659 = vrot.lane.b32.xlu0 %v1576, 96
        %v1660 = vpop.permute.xlu0 %1659
        %1661 = vrot.lane.b32.xlu0 %v1577, 96
        %v1662 = vpop.permute.xlu0 %1661
        %1663 = vrot.lane.b32.xlu0 %v1578, 96
        %v1664 = vpop.permute.xlu0 %1663
        %1665 = vrot.lane.b32.xlu0 %v1579, 96
        %v1666 = vpop.permute.xlu0 %1665
        %1667 = vrot.lane.b32.xlu0 %v1580, 96
        %v1668 = vpop.permute.xlu0 %1667
        %1669 = vrot.lane.b32.xlu0 %v1581, 96
        %v1670 = vpop.permute.xlu0 %1669
        %1671 = vrot.lane.b32.xlu0 %v1582, 96
        %v1672 = vpop.permute.xlu0 %1671
        %1673 = vrot.lane.b32.xlu0 %v1583, 96
        %v1674 = vpop.permute.xlu0 %1673
        %1675 = vrot.lane.b32.xlu0 %v1584, 96
        %v1676 = vpop.permute.xlu0 %1675
        %1677 = vrot.lane.b32.xlu0 %v1585, 96
        %v1678 = vpop.permute.xlu0 %1677
        %1679 = vrot.lane.b32.xlu0 %v1586, 96
        %v1680 = vpop.permute.xlu0 %1679
        %1681 = vrot.lane.b32.xlu0 %v1587, 96
        %v1682 = vpop.permute.xlu0 %1681
        %1683 = vrot.lane.b32.xlu0 %v1588, 96
        %v1684 = vpop.permute.xlu0 %1683
        %1717 = vst.msk [vmem:[#allocation3 + $0x8] sm:$0xff] %vm1075, %v1622
        %1718 = vst.msk [vmem:[#allocation3 + $0x20] sm:$0xff] %vm1075, %v1624
        %1719 = vst.msk [vmem:[#allocation3 + $0x38] sm:$0xff] %vm1075, %v1626
        %1720 = vst.msk [vmem:[#allocation3 + $0x50] sm:$0xff] %vm1075, %v1628
        %1721 = vst.msk [vmem:[#allocation3 + $0x68] sm:$0xff] %vm1075, %v1630
        %1722 = vst.msk [vmem:[#allocation3 + $0x80] sm:$0xff] %vm1075, %v1632
        %1723 = vst.msk [vmem:[#allocation3 + $0x98] sm:$0xff] %vm1075, %v1634
        %1724 = vst.msk [vmem:[#allocation3 + $0xb0] sm:$0xff] %vm1075, %v1636
        %1725 = vst.msk [vmem:[#allocation3 + $0xc8] sm:$0xff] %vm1075, %v1638
        %1726 = vst.msk [vmem:[#allocation3 + $0xe0] sm:$0xff] %vm1075, %v1640
        %1727 = vst.msk [vmem:[#allocation3 + $0xf8] sm:$0xff] %vm1075, %v1642
        %1728 = vst.msk [vmem:[#allocation3 + $0x110] sm:$0xff] %vm1075, %v1644
        %1729 = vst.msk [vmem:[#allocation3 + $0x128] sm:$0xff] %vm1075, %v1646
        %1730 = vst.msk [vmem:[#allocation3 + $0x140] sm:$0xff] %vm1075, %v1648
        %1731 = vst.msk [vmem:[#allocation3 + $0x158] sm:$0xff] %vm1075, %v1650
        %1732 = vst.msk [vmem:[#allocation3 + $0x170] sm:$0xff] %vm1075, %v1652
        %1733 = vst.msk [vmem:[#allocation3 + $0x188] sm:$0xff] %vm1075, %v1654
        %1734 = vst.msk [vmem:[#allocation3 + $0x1a0] sm:$0xff] %vm1075, %v1656
        %1735 = vst.msk [vmem:[#allocation3 + $0x1b8] sm:$0xff] %vm1075, %v1658
        %1736 = vst.msk [vmem:[#allocation3 + $0x1d0] sm:$0xff] %vm1075, %v1660
        %1737 = vst.msk [vmem:[#allocation3 + $0x1e8] sm:$0xff] %vm1075, %v1662
        %1738 = vst.msk [vmem:[#allocation3 + $0x200] sm:$0xff] %vm1075, %v1664
        %1739 = vst.msk [vmem:[#allocation3 + $0x218] sm:$0xff] %vm1075, %v1666
        %1740 = vst.msk [vmem:[#allocation3 + $0x230] sm:$0xff] %vm1075, %v1668
        %1741 = vst.msk [vmem:[#allocation3 + $0x248] sm:$0xff] %vm1075, %v1670
        %1742 = vst.msk [vmem:[#allocation3 + $0x260] sm:$0xff] %vm1075, %v1672
        %1743 = vst.msk [vmem:[#allocation3 + $0x278] sm:$0xff] %vm1075, %v1674
        %1744 = vst.msk [vmem:[#allocation3 + $0x290] sm:$0xff] %vm1075, %v1676
        %1745 = vst.msk [vmem:[#allocation3 + $0x2a8] sm:$0xff] %vm1075, %v1678
        %1746 = vst.msk [vmem:[#allocation3 + $0x2c0] sm:$0xff] %vm1075, %v1680
        %1747 = vst.msk [vmem:[#allocation3 + $0x2d8] sm:$0xff] %vm1075, %v1682
        %1748 = vst.msk [vmem:[#allocation3 + $0x2f0] sm:$0xff] %vm1075, %v1684
        %v1749 = vld [vmem:[%s1364 + $0x2] sm:$0xff]
        %v1750 = vld [vmem:[%s1364 + $0xa] sm:$0xff]
        %v1751 = vld [vmem:[%s1364 + $0x1a] sm:$0xff]
        %v1752 = vld [vmem:[%s1364 + $0x22] sm:$0xff]
        %v1753 = vld [vmem:[%s1364 + $0x32] sm:$0xff]
        %v1754 = vld [vmem:[%s1364 + $0x3a] sm:$0xff]
        %v1755 = vld [vmem:[%s1364 + $0x4a] sm:$0xff]
        %v1756 = vld [vmem:[%s1364 + $0x52] sm:$0xff]
        %v1757 = vld [vmem:[%s1364 + $0x62] sm:$0xff]
        %v1758 = vld [vmem:[%s1364 + $0x6a] sm:$0xff]
        %v1759 = vld [vmem:[%s1364 + $0x7a] sm:$0xff]
        %v1760 = vld [vmem:[%s1364 + $0x82] sm:$0xff]
        %v1761 = vld [vmem:[%s1364 + $0x92] sm:$0xff]
        %v1762 = vld [vmem:[%s1364 + $0x9a] sm:$0xff]
        %v1763 = vld [vmem:[%s1364 + $0xaa] sm:$0xff]
        %v1764 = vld [vmem:[%s1364 + $0xb2] sm:$0xff]
        %v1765 = vld [vmem:[%s1364 + $0xc2] sm:$0xff]
        %v1766 = vld [vmem:[%s1364 + $0xca] sm:$0xff]
        %v1767 = vld [vmem:[%s1364 + $0xda] sm:$0xff]
        %v1768 = vld [vmem:[%s1364 + $0xe2] sm:$0xff]
        %v1769 = vld [vmem:[%s1364 + $0xf2] sm:$0xff]
        %v1770 = vld [vmem:[%s1364 + $0xfa] sm:$0xff]
        %v1771 = vld [vmem:[%s1364 + $0x10a] sm:$0xff]
        %v1772 = vld [vmem:[%s1364 + $0x112] sm:$0xff]
        %v1773 = vld [vmem:[%s1364 + $0x122] sm:$0xff]
        %v1774 = vld [vmem:[%s1364 + $0x12a] sm:$0xff]
        %v1775 = vld [vmem:[%s1364 + $0x13a] sm:$0xff]
        %v1776 = vld [vmem:[%s1364 + $0x142] sm:$0xff]
        %v1777 = vld [vmem:[%s1364 + $0x152] sm:$0xff]
        %v1778 = vld [vmem:[%s1364 + $0x15a] sm:$0xff]
        %v1779 = vld [vmem:[%s1364 + $0x16a] sm:$0xff]
        %v1780 = vld [vmem:[%s1364 + $0x172] sm:$0xff]
        %1781 = vst.msk [vmem:[#allocation3 + $0x10] sm:$0xff] %vm358, %v1749
        %1782 = vst.msk [vmem:[#allocation3 + $0x28] sm:$0xff] %vm358, %v1750
        %1783 = vst.msk [vmem:[#allocation3 + $0x40] sm:$0xff] %vm358, %v1751
        %1784 = vst.msk [vmem:[#allocation3 + $0x58] sm:$0xff] %vm358, %v1752
        %1785 = vst.msk [vmem:[#allocation3 + $0x70] sm:$0xff] %vm358, %v1753
        %1786 = vst.msk [vmem:[#allocation3 + $0x88] sm:$0xff] %vm358, %v1754
        %1787 = vst.msk [vmem:[#allocation3 + $0xa0] sm:$0xff] %vm358, %v1755
        %1788 = vst.msk [vmem:[#allocation3 + $0xb8] sm:$0xff] %vm358, %v1756
        %1789 = vst.msk [vmem:[#allocation3 + $0xd0] sm:$0xff] %vm358, %v1757
        %1790 = vst.msk [vmem:[#allocation3 + $0xe8] sm:$0xff] %vm358, %v1758
        %1791 = vst.msk [vmem:[#allocation3 + $0x100] sm:$0xff] %vm358, %v1759
        %1792 = vst.msk [vmem:[#allocation3 + $0x118] sm:$0xff] %vm358, %v1760
        %1793 = vst.msk [vmem:[#allocation3 + $0x130] sm:$0xff] %vm358, %v1761
        %1794 = vst.msk [vmem:[#allocation3 + $0x148] sm:$0xff] %vm358, %v1762
        %1795 = vst.msk [vmem:[#allocation3 + $0x160] sm:$0xff] %vm358, %v1763
        %1796 = vst.msk [vmem:[#allocation3 + $0x178] sm:$0xff] %vm358, %v1764
        %1797 = vst.msk [vmem:[#allocation3 + $0x190] sm:$0xff] %vm358, %v1765
        %1798 = vst.msk [vmem:[#allocation3 + $0x1a8] sm:$0xff] %vm358, %v1766
        %1799 = vst.msk [vmem:[#allocation3 + $0x1c0] sm:$0xff] %vm358, %v1767
        %1800 = vst.msk [vmem:[#allocation3 + $0x1d8] sm:$0xff] %vm358, %v1768
        %1801 = vst.msk [vmem:[#allocation3 + $0x1f0] sm:$0xff] %vm358, %v1769
        %1802 = vst.msk [vmem:[#allocation3 + $0x208] sm:$0xff] %vm358, %v1770
        %1803 = vst.msk [vmem:[#allocation3 + $0x220] sm:$0xff] %vm358, %v1771
        %1804 = vst.msk [vmem:[#allocation3 + $0x238] sm:$0xff] %vm358, %v1772
        %1805 = vst.msk [vmem:[#allocation3 + $0x250] sm:$0xff] %vm358, %v1773
        %1806 = vst.msk [vmem:[#allocation3 + $0x268] sm:$0xff] %vm358, %v1774
        %1807 = vst.msk [vmem:[#allocation3 + $0x280] sm:$0xff] %vm358, %v1775
        %1808 = vst.msk [vmem:[#allocation3 + $0x298] sm:$0xff] %vm358, %v1776
        %1809 = vst.msk [vmem:[#allocation3 + $0x2b0] sm:$0xff] %vm358, %v1777
        %1810 = vst.msk [vmem:[#allocation3 + $0x2c8] sm:$0xff] %vm358, %v1778
        %1811 = vst.msk [vmem:[#allocation3 + $0x2e0] sm:$0xff] %vm358, %v1779
        %1812 = vst.msk [vmem:[#allocation3 + $0x2f8] sm:$0xff] %vm358, %v1780
        %v1813 = vld [vmem:[%s2] sm:$0x1]
        %v1814 = vld [vmem:[#allocation3] sm:$0xff]
        %v1815 = vld [vmem:[#allocation3 + $0x8] sm:$0xff]
        %v1816 = vld [vmem:[#allocation3 + $0x10] sm:$0xff]
        %v1817 = vld [vmem:[#allocation3 + $0x18] sm:$0xff]
        %v1818 = vld [vmem:[#allocation3 + $0x20] sm:$0xff]
        %v1819 = vld [vmem:[#allocation3 + $0x28] sm:$0xff]
        %v1820 = vld [vmem:[#allocation3 + $0x30] sm:$0xff]
        %v1821 = vld [vmem:[#allocation3 + $0x38] sm:$0xff]
        %v1822 = vld [vmem:[#allocation3 + $0x40] sm:$0xff]
        %v1823 = vld [vmem:[#allocation3 + $0x48] sm:$0xff]
        %v1824 = vld [vmem:[#allocation3 + $0x50] sm:$0xff]
        %v1825 = vld [vmem:[#allocation3 + $0x58] sm:$0xff]
        %v1826 = vld [vmem:[#allocation3 + $0x60] sm:$0xff]
        %v1827 = vld [vmem:[#allocation3 + $0x68] sm:$0xff]
        %v1828 = vld [vmem:[#allocation3 + $0x70] sm:$0xff]
        %v1829 = vld [vmem:[#allocation3 + $0x78] sm:$0xff]
        %v1830 = vld [vmem:[#allocation3 + $0x80] sm:$0xff]
        %v1831 = vld [vmem:[#allocation3 + $0x88] sm:$0xff]
        %v1832 = vld [vmem:[#allocation3 + $0x90] sm:$0xff]
        %v1833 = vld [vmem:[#allocation3 + $0x98] sm:$0xff]
        %v1834 = vld [vmem:[#allocation3 + $0xa0] sm:$0xff]
        %v1835 = vld [vmem:[#allocation3 + $0xa8] sm:$0xff]
        %v1836 = vld [vmem:[#allocation3 + $0xb0] sm:$0xff]
        %v1837 = vld [vmem:[#allocation3 + $0xb8] sm:$0xff]
        %v1838 = vld [vmem:[#allocation3 + $0xc0] sm:$0xff]
        %v1839 = vld [vmem:[#allocation3 + $0xc8] sm:$0xff]
        %v1840 = vld [vmem:[#allocation3 + $0xd0] sm:$0xff]
        %v1841 = vld [vmem:[#allocation3 + $0xd8] sm:$0xff]
        %v1842 = vld [vmem:[#allocation3 + $0xe0] sm:$0xff]
        %v1843 = vld [vmem:[#allocation3 + $0xe8] sm:$0xff]
        %v1844 = vld [vmem:[#allocation3 + $0xf0] sm:$0xff]
        %v1845 = vld [vmem:[#allocation3 + $0xf8] sm:$0xff]
        %v1846 = vld [vmem:[#allocation3 + $0x100] sm:$0xff]
        %v1847 = vld [vmem:[#allocation3 + $0x108] sm:$0xff]
        %v1848 = vld [vmem:[#allocation3 + $0x110] sm:$0xff]
        %v1849 = vld [vmem:[#allocation3 + $0x118] sm:$0xff]
        %v1850 = vld [vmem:[#allocation3 + $0x120] sm:$0xff]
        %v1851 = vld [vmem:[#allocation3 + $0x128] sm:$0xff]
        %v1852 = vld [vmem:[#allocation3 + $0x130] sm:$0xff]
        %v1853 = vld [vmem:[#allocation3 + $0x138] sm:$0xff]
        %v1854 = vld [vmem:[#allocation3 + $0x140] sm:$0xff]
        %v1855 = vld [vmem:[#allocation3 + $0x148] sm:$0xff]
        %v1856 = vld [vmem:[#allocation3 + $0x150] sm:$0xff]
        %v1857 = vld [vmem:[#allocation3 + $0x158] sm:$0xff]
        %v1858 = vld [vmem:[#allocation3 + $0x160] sm:$0xff]
        %v1859 = vld [vmem:[#allocation3 + $0x168] sm:$0xff]
        %v1860 = vld [vmem:[#allocation3 + $0x170] sm:$0xff]
        %v1861 = vld [vmem:[#allocation3 + $0x178] sm:$0xff]
        %v1862 = vld [vmem:[#allocation3 + $0x180] sm:$0xff]
        %v1863 = vld [vmem:[#allocation3 + $0x188] sm:$0xff]
        %v1864 = vld [vmem:[#allocation3 + $0x190] sm:$0xff]
        %v1865 = vld [vmem:[#allocation3 + $0x198] sm:$0xff]
        %v1866 = vld [vmem:[#allocation3 + $0x1a0] sm:$0xff]
        %v1867 = vld [vmem:[#allocation3 + $0x1a8] sm:$0xff]
        %v1868 = vld [vmem:[#allocation3 + $0x1b0] sm:$0xff]
        %v1869 = vld [vmem:[#allocation3 + $0x1b8] sm:$0xff]
        %v1870 = vld [vmem:[#allocation3 + $0x1c0] sm:$0xff]
        %v1871 = vld [vmem:[#allocation3 + $0x1c8] sm:$0xff]
        %v1872 = vld [vmem:[#allocation3 + $0x1d0] sm:$0xff]
        %v1873 = vld [vmem:[#allocation3 + $0x1d8] sm:$0xff]
        %v1874 = vld [vmem:[#allocation3 + $0x1e0] sm:$0xff]
        %v1875 = vld [vmem:[#allocation3 + $0x1e8] sm:$0xff]
        %v1876 = vld [vmem:[#allocation3 + $0x1f0] sm:$0xff]
        %v1877 = vld [vmem:[#allocation3 + $0x1f8] sm:$0xff]
        %v1878 = vld [vmem:[#allocation3 + $0x200] sm:$0xff]
        %v1879 = vld [vmem:[#allocation3 + $0x208] sm:$0xff]
        %v1880 = vld [vmem:[#allocation3 + $0x210] sm:$0xff]
        %v1881 = vld [vmem:[#allocation3 + $0x218] sm:$0xff]
        %v1882 = vld [vmem:[#allocation3 + $0x220] sm:$0xff]
        %v1883 = vld [vmem:[#allocation3 + $0x228] sm:$0xff]
        %v1884 = vld [vmem:[#allocation3 + $0x230] sm:$0xff]
        %v1885 = vld [vmem:[#allocation3 + $0x238] sm:$0xff]
        %v1886 = vld [vmem:[#allocation3 + $0x240] sm:$0xff]
        %v1887 = vld [vmem:[#allocation3 + $0x248] sm:$0xff]
        %v1888 = vld [vmem:[#allocation3 + $0x250] sm:$0xff]
        %v1889 = vld [vmem:[#allocation3 + $0x258] sm:$0xff]
        %v1890 = vld [vmem:[#allocation3 + $0x260] sm:$0xff]
        %v1891 = vld [vmem:[#allocation3 + $0x268] sm:$0xff]
        %v1892 = vld [vmem:[#allocation3 + $0x270] sm:$0xff]
        %v1893 = vld [vmem:[#allocation3 + $0x278] sm:$0xff]
        %v1894 = vld [vmem:[#allocation3 + $0x280] sm:$0xff]
        %v1895 = vld [vmem:[#allocation3 + $0x288] sm:$0xff]
        %v1896 = vld [vmem:[#allocation3 + $0x290] sm:$0xff]
        %v1897 = vld [vmem:[#allocation3 + $0x298] sm:$0xff]
        %v1898 = vld [vmem:[#allocation3 + $0x2a0] sm:$0xff]
        %v1899 = vld [vmem:[#allocation3 + $0x2a8] sm:$0xff]
        %v1900 = vld [vmem:[#allocation3 + $0x2b0] sm:$0xff]
        %v1901 = vld [vmem:[#allocation3 + $0x2b8] sm:$0xff]
        %v1902 = vld [vmem:[#allocation3 + $0x2c0] sm:$0xff]
        %v1903 = vld [vmem:[#allocation3 + $0x2c8] sm:$0xff]
        %v1904 = vld [vmem:[#allocation3 + $0x2d0] sm:$0xff]
        %v1905 = vld [vmem:[#allocation3 + $0x2d8] sm:$0xff]
        %v1906 = vld [vmem:[#allocation3 + $0x2e0] sm:$0xff]
        %v1907 = vld [vmem:[#allocation3 + $0x2e8] sm:$0xff]
        %v1908 = vld [vmem:[#allocation3 + $0x2f0] sm:$0xff]
        %v1909 = vld [vmem:[#allocation3 + $0x2f8] sm:$0xff]
        %v1910 = vld [vmem:[%s1] sm:$0xff]
        %v1911 = vld [vmem:[%s1 + $0x8] sm:$0xff]
        %v1912 = vld [vmem:[%s1 + $0x10] sm:$0xff]
        %v1913 = vld [vmem:[%s1 + $0x18] sm:$0xff]
        %v1914 = vld [vmem:[%s1 + $0x20] sm:$0xff]
        %v1915 = vld [vmem:[%s1 + $0x28] sm:$0xff]
        %v1916 = vld [vmem:[%s1 + $0x30] sm:$0xff]
        %v1917 = vld [vmem:[%s1 + $0x38] sm:$0xff]
        %v1918 = vld [vmem:[%s1 + $0x40] sm:$0xff]
        %v1919 = vld [vmem:[%s1 + $0x48] sm:$0xff]
        %v1920 = vld [vmem:[%s1 + $0x50] sm:$0xff]
        %v1921 = vld [vmem:[%s1 + $0x58] sm:$0xff]
        %v1922 = vld [vmem:[%s1 + $0x60] sm:$0xff]
        %v1923 = vld [vmem:[%s1 + $0x68] sm:$0xff]
        %v1924 = vld [vmem:[%s1 + $0x70] sm:$0xff]
        %v1925 = vld [vmem:[%s1 + $0x78] sm:$0xff]
        %v1926 = vld [vmem:[%s1 + $0x80] sm:$0xff]
        %v1927 = vld [vmem:[%s1 + $0x88] sm:$0xff]
        %v1928 = vld [vmem:[%s1 + $0x90] sm:$0xff]
        %v1929 = vld [vmem:[%s1 + $0x98] sm:$0xff]
        %v1930 = vld [vmem:[%s1 + $0xa0] sm:$0xff]
        %v1931 = vld [vmem:[%s1 + $0xa8] sm:$0xff]
        %v1932 = vld [vmem:[%s1 + $0xb0] sm:$0xff]
        %v1933 = vld [vmem:[%s1 + $0xb8] sm:$0xff]
        %v1934 = vld [vmem:[%s1 + $0xc0] sm:$0xff]
        %v1935 = vld [vmem:[%s1 + $0xc8] sm:$0xff]
        %v1936 = vld [vmem:[%s1 + $0xd0] sm:$0xff]
        %v1937 = vld [vmem:[%s1 + $0xd8] sm:$0xff]
        %v1938 = vld [vmem:[%s1 + $0xe0] sm:$0xff]
        %v1939 = vld [vmem:[%s1 + $0xe8] sm:$0xff]
        %v1940 = vld [vmem:[%s1 + $0xf0] sm:$0xff]
        %v1941 = vld [vmem:[%s1 + $0xf8] sm:$0xff]
        %v1942 = vld [vmem:[%s1 + $0x100] sm:$0xff]
        %v1943 = vld [vmem:[%s1 + $0x108] sm:$0xff]
        %v1944 = vld [vmem:[%s1 + $0x110] sm:$0xff]
        %v1945 = vld [vmem:[%s1 + $0x118] sm:$0xff]
        %v1947 = vlaneseq
        %v1948 = vshrl.u32 %v1947, 7
        %v1949 = vsub.s32 0, %v1948
        %v1950 = vrot.slane %v1813, %v1949
        %v1953 = vsel %vm358, %v1816, 0
        %v1956 = vsel %vm358, %v1819, 0
        %v1959 = vsel %vm358, %v1822, 0
        %v1962 = vsel %vm358, %v1825, 0
        %v1965 = vsel %vm358, %v1828, 0
        %v1968 = vsel %vm358, %v1831, 0
        %v1971 = vsel %vm358, %v1834, 0
        %v1974 = vsel %vm358, %v1837, 0
        %v1977 = vsel %vm358, %v1840, 0
        %v1980 = vsel %vm358, %v1843, 0
        %v1983 = vsel %vm358, %v1846, 0
        %v1986 = vsel %vm358, %v1849, 0
        %v1989 = vsel %vm358, %v1852, 0
        %v1992 = vsel %vm358, %v1855, 0
        %v1995 = vsel %vm358, %v1858, 0
        %v1998 = vsel %vm358, %v1861, 0
        %v2001 = vsel %vm358, %v1864, 0
        %v2004 = vsel %vm358, %v1867, 0
        %v2007 = vsel %vm358, %v1870, 0
        %v2010 = vsel %vm358, %v1873, 0
        %v2013 = vsel %vm358, %v1876, 0
        %v2016 = vsel %vm358, %v1879, 0
        %v2019 = vsel %vm358, %v1882, 0
        %v2022 = vsel %vm358, %v1885, 0
        %v2025 = vsel %vm358, %v1888, 0
        %v2028 = vsel %vm358, %v1891, 0
        %v2031 = vsel %vm358, %v1894, 0
        %v2034 = vsel %vm358, %v1897, 0
        %v2037 = vsel %vm358, %v1900, 0
        %v2040 = vsel %vm358, %v1903, 0
        %v2043 = vsel %vm358, %v1906, 0
        %v2046 = vsel %vm358, %v1909, 0
        %2048 = vmatprep.subr.mxu0 0.0
        %2049 = vmatpush1.msra.mxu0 %v1910
        %2050 = vmatprep.subr.mxu0 0.0
        %2051 = vmatpush1.msra.mxu0 %v1911
        %2052 = vmatprep.subr.mxu0 0.0
        %2053 = vmatpush1.msra.mxu0 %v1912
        %2054 = vmatprep.subr.mxu0 0.0
        %2055 = vmatpush1.msra.mxu0 %v1913
        %2056 = vmatprep.subr.mxu0 0.0
        %2057 = vmatpush1.msra.mxu0 %v1914
        %2058 = vmatprep.subr.mxu0 0.0
        %2059 = vmatpush1.msra.mxu0 %v1915
        %2060 = vmatprep.subr.mxu0 0.0
        %2061 = vmatpush1.msra.mxu0 %v1916
        %2062 = vmatprep.subr.mxu0 0.0
        %2063 = vmatpush1.msra.mxu0 %v1917
        %2064 = vmatprep.subr.mxu0 0.0
        %2065 = vmatpush1.msra.mxu0 %v1918
        %2066 = vmatprep.subr.mxu0 0.0
        %2067 = vmatpush1.msra.mxu0 %v1919
        %2068 = vmatprep.subr.mxu0 0.0
        %2069 = vmatpush1.msra.mxu0 %v1920
        %2070 = vmatprep.subr.mxu0 0.0
        %2071 = vmatpush1.msra.mxu0 %v1921
        %2072 = vmatprep.subr.mxu0 0.0
        %2073 = vmatpush1.msra.mxu0 %v1922
        %2074 = vmatprep.subr.mxu0 0.0
        %2075 = vmatpush1.msra.mxu0 %v1923
        %2076 = vmatprep.subr.mxu0 0.0
        %2077 = vmatpush1.msra.mxu0 %v1924
        %2078 = vmatprep.subr.mxu0 0.0
        %2079 = vmatpush1.msra.mxu0 %v1925
        %2080 = vmatprep.subr.mxu0 0.0
        %2081 = vmatpush1.msra.mxu0 %v1926
        %2082 = vmatprep.subr.mxu0 0.0
        %2083 = vmatpush1.msra.mxu0 %v1927
        %2084 = vmatprep.subr.mxu0 0.0
        %2085 = vmatpush1.msra.mxu0 %v1928
        %2086 = vmatprep.subr.mxu0 0.0
        %2087 = vmatpush1.msra.mxu0 %v1929
        %2088 = vmatprep.subr.mxu0 0.0
        %2089 = vmatpush1.msra.mxu0 %v1930
        %2090 = vmatprep.subr.mxu0 0.0
        %2091 = vmatpush1.msra.mxu0 %v1931
        %2092 = vmatprep.subr.mxu0 0.0
        %2093 = vmatpush1.msra.mxu0 %v1932
        %2094 = vmatprep.subr.mxu0 0.0
        %2095 = vmatpush1.msra.mxu0 %v1933
        %2096 = vmatprep.subr.mxu0 0.0
        %2097 = vmatpush1.msra.mxu0 %v1934
        %2098 = vmatprep.subr.mxu0 0.0
        %2099 = vmatpush1.msra.mxu0 %v1935
        %2100 = vmatprep.subr.mxu0 0.0
        %2101 = vmatpush1.msra.mxu0 %v1936
        %2102 = vmatprep.subr.mxu0 0.0
        %2103 = vmatpush1.msra.mxu0 %v1937
        %2104 = vmatprep.subr.mxu0 0.0
        %2105 = vmatpush1.msra.mxu0 %v1938
        %2106 = vmatprep.subr.mxu0 0.0
        %2107 = vmatpush1.msra.mxu0 %v1939
        %2108 = vmatprep.subr.mxu0 0.0
        %2109 = vmatpush1.msra.mxu0 %v1940
        %2110 = vmatprep.subr.mxu0 0.0
        %2111 = vmatpush1.msra.mxu0 %v1941
        %2112 = vmatprep.mubr.f32.mxu0 %v1815
        %2113 = vmatmul.mubr.f32.gmra.mrb[0].mxu0 %v1814
        %v2114 = vpop.f32.mrb[0].mxu0
        %v2115 = vadd.f32 %v1950, %v2114
        %v2116 = vpop.f32.mrb[0].mxu0
        %2117 = vmatprep.mubr.f32.mxu0 %v1818
        %2118 = vmatmul.mubr.f32.gmra.mrb[0].mxu0 %v1817
        %v2119 = vpop.f32.mrb[0].mxu0
        %v2120 = vadd.f32 %v1950, %v2119
        %v2121 = vpop.f32.mrb[0].mxu0
        %2122 = vmatprep.mubr.f32.mxu0 %v1821
        %2123 = vmatmul.mubr.f32.gmra.mrb[0].mxu0 %v1820
        %v2124 = vpop.f32.mrb[0].mxu0
        %v2125 = vadd.f32 %v1950, %v2124
        %v2126 = vpop.f32.mrb[0].mxu0
        %2127 = vmatprep.mubr.f32.mxu0 %v1824
        %2128 = vmatmul.mubr.f32.gmra.mrb[0].mxu0 %v1823
        %v2129 = vpop.f32.mrb[0].mxu0
        %v2130 = vadd.f32 %v1950, %v2129
        %v2131 = vpop.f32.mrb[0].mxu0
        %2132 = vmatprep.mubr.f32.mxu0 %v1827
        %2133 = vmatmul.mubr.f32.gmra.mrb[0].mxu0 %v1826
        %v2134 = vpop.f32.mrb[0].mxu0
        %v2135 = vadd.f32 %v1950, %v2134
        %v2136 = vpop.f32.mrb[0].mxu0
        %2137 = vmatprep.mubr.f32.mxu0 %v1830
        %2138 = vmatmul.mubr.f32.gmra.mrb[0].mxu0 %v1829
        %v2139 = vpop.f32.mrb[0].mxu0
        %v2140 = vadd.f32 %v1950, %v2139
        %v2141 = vpop.f32.mrb[0].mxu0
        %2142 = vmatprep.mubr.f32.mxu0 %v1833
        %2143 = vmatmul.mubr.f32.gmra.mrb[0].mxu0 %v1832
        %v2144 = vpop.f32.mrb[0].mxu0
        %v2145 = vadd.f32 %v1950, %v2144
        %v2146 = vpop.f32.mrb[0].mxu0
        %2147 = vmatprep.mubr.f32.mxu0 %v1836
        %2148 = vmatmul.mubr.f32.gmra.mrb[0].mxu0 %v1835
        %v2149 = vpop.f32.mrb[0].mxu0
        %v2150 = vadd.f32 %v1950, %v2149
        %v2151 = vpop.f32.mrb[0].mxu0
        %2152 = vmatprep.mubr.f32.mxu0 %v1839
        %2153 = vmatmul.mubr.f32.gmra.mrb[0].mxu0 %v1838
        %v2154 = vpop.f32.mrb[0].mxu0
        %v2155 = vadd.f32 %v1950, %v2154
        %v2156 = vpop.f32.mrb[0].mxu0
        %2157 = vmatprep.mubr.f32.mxu0 %v1842
        %2158 = vmatmul.mubr.f32.gmra.mrb[0].mxu0 %v1841
        %v2159 = vpop.f32.mrb[0].mxu0
        %v2160 = vadd.f32 %v1950, %v2159
        %v2161 = vpop.f32.mrb[0].mxu0
        %2162 = vmatprep.mubr.f32.mxu0 %v1845
        %2163 = vmatmul.mubr.f32.gmra.mrb[0].mxu0 %v1844
        %v2164 = vpop.f32.mrb[0].mxu0
        %v2165 = vadd.f32 %v1950, %v2164
        %v2166 = vpop.f32.mrb[0].mxu0
        %2167 = vmatprep.mubr.f32.mxu0 %v1848
        %2168 = vmatmul.mubr.f32.gmra.mrb[0].mxu0 %v1847
        %v2169 = vpop.f32.mrb[0].mxu0
        %v2170 = vadd.f32 %v1950, %v2169
        %v2171 = vpop.f32.mrb[0].mxu0
        %2172 = vmatprep.mubr.f32.mxu0 %v1851
        %2173 = vmatmul.mubr.f32.gmra.mrb[0].mxu0 %v1850
        %v2174 = vpop.f32.mrb[0].mxu0
        %v2175 = vadd.f32 %v1950, %v2174
        %v2176 = vpop.f32.mrb[0].mxu0
        %2177 = vmatprep.mubr.f32.mxu0 %v1854
        %2178 = vmatmul.mubr.f32.gmra.mrb[0].mxu0 %v1853
        %v2179 = vpop.f32.mrb[0].mxu0
        %v2180 = vadd.f32 %v1950, %v2179
        %v2181 = vpop.f32.mrb[0].mxu0
        %2182 = vmatprep.mubr.f32.mxu0 %v1857
        %2183 = vmatmul.mubr.f32.gmra.mrb[0].mxu0 %v1856
        %v2184 = vpop.f32.mrb[0].mxu0
        %v2185 = vadd.f32 %v1950, %v2184
        %v2186 = vpop.f32.mrb[0].mxu0
        %2187 = vmatprep.mubr.f32.mxu0 %v1860
        %2188 = vmatmul.mubr.f32.gmra.mrb[0].mxu0 %v1859
        %v2189 = vpop.f32.mrb[0].mxu0
        %v2190 = vadd.f32 %v1950, %v2189
        %v2191 = vpop.f32.mrb[0].mxu0
        %2192 = vmatprep.mubr.f32.mxu0 %v1863
        %2193 = vmatmul.mubr.f32.gmra.mrb[0].mxu0 %v1862
        %v2194 = vpop.f32.mrb[0].mxu0
        %v2195 = vadd.f32 %v1950, %v2194
        %v2196 = vpop.f32.mrb[0].mxu0
        %2197 = vmatprep.mubr.f32.mxu0 %v1866
        %2198 = vmatmul.mubr.f32.gmra.mrb[0].mxu0 %v1865
        %v2199 = vpop.f32.mrb[0].mxu0
        %v2200 = vadd.f32 %v1950, %v2199
        %v2201 = vpop.f32.mrb[0].mxu0
        %2202 = vmatprep.mubr.f32.mxu0 %v1869
        %2203 = vmatmul.mubr.f32.gmra.mrb[0].mxu0 %v1868
        %v2204 = vpop.f32.mrb[0].mxu0
        %v2205 = vadd.f32 %v1950, %v2204
        %v2206 = vpop.f32.mrb[0].mxu0
        %2207 = vmatprep.mubr.f32.mxu0 %v1872
        %2208 = vmatmul.mubr.f32.gmra.mrb[0].mxu0 %v1871
        %v2209 = vpop.f32.mrb[0].mxu0
        %v2210 = vadd.f32 %v1950, %v2209
        %v2211 = vpop.f32.mrb[0].mxu0
        %2212 = vmatprep.mubr.f32.mxu0 %v1875
        %2213 = vmatmul.mubr.f32.gmra.mrb[0].mxu0 %v1874
        %v2214 = vpop.f32.mrb[0].mxu0
        %v2215 = vadd.f32 %v1950, %v2214
        %v2216 = vpop.f32.mrb[0].mxu0
        %2217 = vmatprep.mubr.f32.mxu0 %v1878
        %2218 = vmatmul.mubr.f32.gmra.mrb[0].mxu0 %v1877
        %v2219 = vpop.f32.mrb[0].mxu0
        %v2220 = vadd.f32 %v1950, %v2219
        %v2221 = vpop.f32.mrb[0].mxu0
        %2222 = vmatprep.mubr.f32.mxu0 %v1881
        %2223 = vmatmul.mubr.f32.gmra.mrb[0].mxu0 %v1880
        %v2224 = vpop.f32.mrb[0].mxu0
        %v2225 = vadd.f32 %v1950, %v2224
        %v2226 = vpop.f32.mrb[0].mxu0
        %2227 = vmatprep.mubr.f32.mxu0 %v1884
        %2228 = vmatmul.mubr.f32.gmra.mrb[0].mxu0 %v1883
        %v2229 = vpop.f32.mrb[0].mxu0
        %v2230 = vadd.f32 %v1950, %v2229
        %v2231 = vpop.f32.mrb[0].mxu0
        %2232 = vmatprep.mubr.f32.mxu0 %v1887
        %2233 = vmatmul.mubr.f32.gmra.mrb[0].mxu0 %v1886
        %v2234 = vpop.f32.mrb[0].mxu0
        %v2235 = vadd.f32 %v1950, %v2234
        %v2236 = vpop.f32.mrb[0].mxu0
        %2237 = vmatprep.mubr.f32.mxu0 %v1890
        %2238 = vmatmul.mubr.f32.gmra.mrb[0].mxu0 %v1889
        %v2239 = vpop.f32.mrb[0].mxu0
        %v2240 = vadd.f32 %v1950, %v2239
        %v2241 = vpop.f32.mrb[0].mxu0
        %2242 = vmatprep.mubr.f32.mxu0 %v1893
        %2243 = vmatmul.mubr.f32.gmra.mrb[0].mxu0 %v1892
        %v2244 = vpop.f32.mrb[0].mxu0
        %v2245 = vadd.f32 %v1950, %v2244
        %v2246 = vpop.f32.mrb[0].mxu0
        %2247 = vmatprep.mubr.f32.mxu0 %v1896
        %2248 = vmatmul.mubr.f32.gmra.mrb[0].mxu0 %v1895
        %v2249 = vpop.f32.mrb[0].mxu0
        %v2250 = vadd.f32 %v1950, %v2249
        %v2251 = vpop.f32.mrb[0].mxu0
        %2252 = vmatprep.mubr.f32.mxu0 %v1899
        %2253 = vmatmul.mubr.f32.gmra.mrb[0].mxu0 %v1898
        %v2254 = vpop.f32.mrb[0].mxu0
        %v2255 = vadd.f32 %v1950, %v2254
        %v2256 = vpop.f32.mrb[0].mxu0
        %2257 = vmatprep.mubr.f32.mxu0 %v1902
        %2258 = vmatmul.mubr.f32.gmra.mrb[0].mxu0 %v1901
        %v2259 = vpop.f32.mrb[0].mxu0
        %v2260 = vadd.f32 %v1950, %v2259
        %v2261 = vpop.f32.mrb[0].mxu0
        %2262 = vmatprep.mubr.f32.mxu0 %v1905
        %2263 = vmatmul.mubr.f32.gmra.mrb[0].mxu0 %v1904
        %v2264 = vpop.f32.mrb[0].mxu0
        %v2265 = vadd.f32 %v1950, %v2264
        %v2266 = vpop.f32.mrb[0].mxu0
        %2267 = vmatprep.mubr.f32.mxu0 %v1908
        %2268 = vmatmul.mubr.f32.gmra.mrb[0].mxu0 %v1907
        %v2269 = vpop.f32.mrb[0].mxu0
        %v2270 = vadd.f32 %v1950, %v2269
        %v2271 = vpop.f32.mrb[0].mxu0
        %2272 = vdwg.mxu0
        %2273 = vmatprep.subr.mxu0 0.0
        %2274 = vmatpush1.msra.mxu0 %v1942
        %2275 = vmatprep.subr.mxu0 0.0
        %2276 = vmatpush1.msra.mxu0 %v1943
        %2277 = vmatprep.subr.mxu0 0.0
        %2278 = vmatpush1.msra.mxu0 %v1944
        %2279 = vmatprep.subr.mxu0 0.0
        %2280 = vmatpush1.msra.mxu0 %v1945
        %2281 = vmatprep.subr.mxu0 0.0
        %2282 = vmatpush1.msra.mxu0 0.0
        %2283 = vmatprep.subr.mxu0 0.0
        %2284 = vmatpush1.msra.mxu0 0.0
        %2285 = vmatprep.subr.mxu0 0.0
        %2286 = vmatpush1.msra.mxu0 0.0
        %2287 = vmatprep.subr.mxu0 0.0
        %2288 = vmatpush1.msra.mxu0 0.0
        %2289 = vmatprep.subr.mxu0 0.0
        %2290 = vmatpush1.msra.mxu0 0.0
        %2291 = vmatprep.subr.mxu0 0.0
        %2292 = vmatpush1.msra.mxu0 0.0
        %2293 = vmatprep.subr.mxu0 0.0
        %2294 = vmatpush1.msra.mxu0 0.0
        %2295 = vmatprep.subr.mxu0 0.0
        %2296 = vmatpush1.msra.mxu0 0.0
        %2297 = vmatprep.subr.mxu0 0.0
        %2298 = vmatpush1.msra.mxu0 0.0
        %2299 = vmatprep.subr.mxu0 0.0
        %2300 = vmatpush1.msra.mxu0 0.0
        %2301 = vmatprep.subr.mxu0 0.0
        %2302 = vmatpush1.msra.mxu0 0.0
        %2303 = vmatprep.subr.mxu0 0.0
        %2304 = vmatpush1.msra.mxu0 0.0
        %2305 = vmatprep.subr.mxu0 0.0
        %2306 = vmatpush1.msra.mxu0 0.0
        %2307 = vmatprep.subr.mxu0 0.0
        %2308 = vmatpush1.msra.mxu0 0.0
        %2309 = vmatprep.subr.mxu0 0.0
        %2310 = vmatpush1.msra.mxu0 0.0
        %2311 = vmatprep.subr.mxu0 0.0
        %2312 = vmatpush1.msra.mxu0 0.0
        %2313 = vmatprep.subr.mxu0 0.0
        %2314 = vmatpush1.msra.mxu0 0.0
        %2315 = vmatprep.subr.mxu0 0.0
        %2316 = vmatpush1.msra.mxu0 0.0
        %2317 = vmatprep.subr.mxu0 0.0
        %2318 = vmatpush1.msra.mxu0 0.0
        %2319 = vmatprep.subr.mxu0 0.0
        %2320 = vmatpush1.msra.mxu0 0.0
        %2321 = vmatprep.subr.mxu0 0.0
        %2322 = vmatpush1.msra.mxu0 0.0
        %2323 = vmatprep.subr.mxu0 0.0
        %2324 = vmatpush1.msra.mxu0 0.0
        %2325 = vmatprep.subr.mxu0 0.0
        %2326 = vmatpush1.msra.mxu0 0.0
        %2327 = vmatprep.subr.mxu0 0.0
        %2328 = vmatpush1.msra.mxu0 0.0
        %2329 = vmatprep.subr.mxu0 0.0
        %2330 = vmatpush1.msra.mxu0 0.0
        %2331 = vmatprep.subr.mxu0 0.0
        %2332 = vmatpush1.msra.mxu0 0.0
        %2333 = vmatprep.subr.mxu0 0.0
        %2334 = vmatpush1.msra.mxu0 0.0
        %2335 = vmatprep.subr.mxu0 0.0
        %2336 = vmatpush1.msra.mxu0 0.0
        %2337 = vmatprep.mubr.f32.mxu0 0.0
        %2338 = vmatmul.mubr.f32.gmra.mrb[0].mxu0 %v1953
        %v2339 = vpop.f32.mrb[0].mxu0
        %v2340 = vadd.f32 %v2115, %v2339
        %v2341 = vpop.f32.mrb[0].mxu0
        %2342 = vmatprep.mubr.f32.mxu0 0.0
        %2343 = vmatmul.mubr.f32.gmra.mrb[0].mxu0 %v1956
        %v2344 = vpop.f32.mrb[0].mxu0
        %v2345 = vadd.f32 %v2120, %v2344
        %v2346 = vpop.f32.mrb[0].mxu0
        %2347 = vmatprep.mubr.f32.mxu0 0.0
        %2348 = vmatmul.mubr.f32.gmra.mrb[0].mxu0 %v1959
        %v2349 = vpop.f32.mrb[0].mxu0
        %v2350 = vadd.f32 %v2125, %v2349
        %v2351 = vpop.f32.mrb[0].mxu0
        %2352 = vmatprep.mubr.f32.mxu0 0.0
        %2353 = vmatmul.mubr.f32.gmra.mrb[0].mxu0 %v1962
        %v2354 = vpop.f32.mrb[0].mxu0
        %v2355 = vadd.f32 %v2130, %v2354
        %v2356 = vpop.f32.mrb[0].mxu0
        %2357 = vmatprep.mubr.f32.mxu0 0.0
        %2358 = vmatmul.mubr.f32.gmra.mrb[0].mxu0 %v1965
        %v2359 = vpop.f32.mrb[0].mxu0
        %v2360 = vadd.f32 %v2135, %v2359
        %v2361 = vpop.f32.mrb[0].mxu0
        %2362 = vmatprep.mubr.f32.mxu0 0.0
        %2363 = vmatmul.mubr.f32.gmra.mrb[0].mxu0 %v1968
        %v2364 = vpop.f32.mrb[0].mxu0
        %v2365 = vadd.f32 %v2140, %v2364
        %v2366 = vpop.f32.mrb[0].mxu0
        %2367 = vmatprep.mubr.f32.mxu0 0.0
        %2368 = vmatmul.mubr.f32.gmra.mrb[0].mxu0 %v1971
        %v2369 = vpop.f32.mrb[0].mxu0
        %v2370 = vadd.f32 %v2145, %v2369
        %v2371 = vpop.f32.mrb[0].mxu0
        %2372 = vmatprep.mubr.f32.mxu0 0.0
        %2373 = vmatmul.mubr.f32.gmra.mrb[0].mxu0 %v1974
        %v2374 = vpop.f32.mrb[0].mxu0
        %v2375 = vadd.f32 %v2150, %v2374
        %v2376 = vpop.f32.mrb[0].mxu0
        %2377 = vmatprep.mubr.f32.mxu0 0.0
        %2378 = vmatmul.mubr.f32.gmra.mrb[0].mxu0 %v1977
        %v2379 = vpop.f32.mrb[0].mxu0
        %v2380 = vadd.f32 %v2155, %v2379
        %v2381 = vpop.f32.mrb[0].mxu0
        %2382 = vmatprep.mubr.f32.mxu0 0.0
        %2383 = vmatmul.mubr.f32.gmra.mrb[0].mxu0 %v1980
        %v2384 = vpop.f32.mrb[0].mxu0
        %v2385 = vadd.f32 %v2160, %v2384
        %v2386 = vpop.f32.mrb[0].mxu0
        %2387 = vmatprep.mubr.f32.mxu0 0.0
        %2388 = vmatmul.mubr.f32.gmra.mrb[0].mxu0 %v1983
        %v2389 = vpop.f32.mrb[0].mxu0
        %v2390 = vadd.f32 %v2165, %v2389
        %v2391 = vpop.f32.mrb[0].mxu0
        %2392 = vmatprep.mubr.f32.mxu0 0.0
        %2393 = vmatmul.mubr.f32.gmra.mrb[0].mxu0 %v1986
        %v2394 = vpop.f32.mrb[0].mxu0
        %v2395 = vadd.f32 %v2170, %v2394
        %v2396 = vpop.f32.mrb[0].mxu0
        %2397 = vmatprep.mubr.f32.mxu0 0.0
        %2398 = vmatmul.mubr.f32.gmra.mrb[0].mxu0 %v1989
        %v2399 = vpop.f32.mrb[0].mxu0
        %v2400 = vadd.f32 %v2175, %v2399
        %v2401 = vpop.f32.mrb[0].mxu0
        %2402 = vmatprep.mubr.f32.mxu0 0.0
        %2403 = vmatmul.mubr.f32.gmra.mrb[0].mxu0 %v1992
        %v2404 = vpop.f32.mrb[0].mxu0
        %v2405 = vadd.f32 %v2180, %v2404
        %v2406 = vpop.f32.mrb[0].mxu0
        %2407 = vmatprep.mubr.f32.mxu0 0.0
        %2408 = vmatmul.mubr.f32.gmra.mrb[0].mxu0 %v1995
        %v2409 = vpop.f32.mrb[0].mxu0
        %v2410 = vadd.f32 %v2185, %v2409
        %v2411 = vpop.f32.mrb[0].mxu0
        %2412 = vmatprep.mubr.f32.mxu0 0.0
        %2413 = vmatmul.mubr.f32.gmra.mrb[0].mxu0 %v1998
        %v2414 = vpop.f32.mrb[0].mxu0
        %v2415 = vadd.f32 %v2190, %v2414
        %v2416 = vpop.f32.mrb[0].mxu0
        %2417 = vmatprep.mubr.f32.mxu0 0.0
        %2418 = vmatmul.mubr.f32.gmra.mrb[0].mxu0 %v2001
        %v2419 = vpop.f32.mrb[0].mxu0
        %v2420 = vadd.f32 %v2195, %v2419
        %v2421 = vpop.f32.mrb[0].mxu0
        %2422 = vmatprep.mubr.f32.mxu0 0.0
        %2423 = vmatmul.mubr.f32.gmra.mrb[0].mxu0 %v2004
        %v2424 = vpop.f32.mrb[0].mxu0
        %v2425 = vadd.f32 %v2200, %v2424
        %v2426 = vpop.f32.mrb[0].mxu0
        %2427 = vmatprep.mubr.f32.mxu0 0.0
        %2428 = vmatmul.mubr.f32.gmra.mrb[0].mxu0 %v2007
        %v2429 = vpop.f32.mrb[0].mxu0
        %v2430 = vadd.f32 %v2205, %v2429
        %v2431 = vpop.f32.mrb[0].mxu0
        %2432 = vmatprep.mubr.f32.mxu0 0.0
        %2433 = vmatmul.mubr.f32.gmra.mrb[0].mxu0 %v2010
        %v2434 = vpop.f32.mrb[0].mxu0
        %v2435 = vadd.f32 %v2210, %v2434
        %v2436 = vpop.f32.mrb[0].mxu0
        %2437 = vmatprep.mubr.f32.mxu0 0.0
        %2438 = vmatmul.mubr.f32.gmra.mrb[0].mxu0 %v2013
        %v2439 = vpop.f32.mrb[0].mxu0
        %v2440 = vadd.f32 %v2215, %v2439
        %v2441 = vpop.f32.mrb[0].mxu0
        %2442 = vmatprep.mubr.f32.mxu0 0.0
        %2443 = vmatmul.mubr.f32.gmra.mrb[0].mxu0 %v2016
        %v2444 = vpop.f32.mrb[0].mxu0
        %v2445 = vadd.f32 %v2220, %v2444
        %v2446 = vpop.f32.mrb[0].mxu0
        %2447 = vmatprep.mubr.f32.mxu0 0.0
        %2448 = vmatmul.mubr.f32.gmra.mrb[0].mxu0 %v2019
        %v2449 = vpop.f32.mrb[0].mxu0
        %v2450 = vadd.f32 %v2225, %v2449
        %v2451 = vpop.f32.mrb[0].mxu0
        %2452 = vmatprep.mubr.f32.mxu0 0.0
        %2453 = vmatmul.mubr.f32.gmra.mrb[0].mxu0 %v2022
        %v2454 = vpop.f32.mrb[0].mxu0
        %v2455 = vadd.f32 %v2230, %v2454
        %v2456 = vpop.f32.mrb[0].mxu0
        %2457 = vmatprep.mubr.f32.mxu0 0.0
        %2458 = vmatmul.mubr.f32.gmra.mrb[0].mxu0 %v2025
        %v2459 = vpop.f32.mrb[0].mxu0
        %v2460 = vadd.f32 %v2235, %v2459
        %v2461 = vpop.f32.mrb[0].mxu0
        %2462 = vmatprep.mubr.f32.mxu0 0.0
        %2463 = vmatmul.mubr.f32.gmra.mrb[0].mxu0 %v2028
        %v2464 = vpop.f32.mrb[0].mxu0
        %v2465 = vadd.f32 %v2240, %v2464
        %v2466 = vpop.f32.mrb[0].mxu0
        %2467 = vmatprep.mubr.f32.mxu0 0.0
        %2468 = vmatmul.mubr.f32.gmra.mrb[0].mxu0 %v2031
        %v2469 = vpop.f32.mrb[0].mxu0
        %v2470 = vadd.f32 %v2245, %v2469
        %v2471 = vpop.f32.mrb[0].mxu0
        %2472 = vmatprep.mubr.f32.mxu0 0.0
        %2473 = vmatmul.mubr.f32.gmra.mrb[0].mxu0 %v2034
        %v2474 = vpop.f32.mrb[0].mxu0
        %v2475 = vadd.f32 %v2250, %v2474
        %v2476 = vpop.f32.mrb[0].mxu0
        %2477 = vmatprep.mubr.f32.mxu0 0.0
        %2478 = vmatmul.mubr.f32.gmra.mrb[0].mxu0 %v2037
        %v2479 = vpop.f32.mrb[0].mxu0
        %v2480 = vadd.f32 %v2255, %v2479
        %v2481 = vpop.f32.mrb[0].mxu0
        %2482 = vmatprep.mubr.f32.mxu0 0.0
        %2483 = vmatmul.mubr.f32.gmra.mrb[0].mxu0 %v2040
        %v2484 = vpop.f32.mrb[0].mxu0
        %v2485 = vadd.f32 %v2260, %v2484
        %v2486 = vpop.f32.mrb[0].mxu0
        %2487 = vmatprep.mubr.f32.mxu0 0.0
        %2488 = vmatmul.mubr.f32.gmra.mrb[0].mxu0 %v2043
        %v2489 = vpop.f32.mrb[0].mxu0
        %v2490 = vadd.f32 %v2265, %v2489
        %v2491 = vpop.f32.mrb[0].mxu0
        %2492 = vmatprep.mubr.f32.mxu0 0.0
        %2493 = vmatmul.mubr.f32.gmra.mrb[0].mxu0 %v2046
        %v2494 = vpop.f32.mrb[0].mxu0
        %v2495 = vadd.f32 %v2270, %v2494
        %v2496 = vpop.f32.mrb[0].mxu0
        %2497 = vdwg.mxu0
        %v2498 = vld [vmem:[%s3] sm:$0x1]
        %v2499 = vld [vmem:[%s4] sm:$0x1]
        %v2500 = vsel %vm358, %v2340, 0.0
        %v2501 = vsel %vm358, %v2345, 0.0
        %v2502 = vadd.f32 %v2500, %v2501
        %v2503 = vsel %vm358, %v2350, 0.0
        %v2504 = vadd.f32 %v2502, %v2503
        %v2505 = vsel %vm358, %v2355, 0.0
        %v2506 = vadd.f32 %v2504, %v2505
        %v2507 = vsel %vm358, %v2360, 0.0
        %v2508 = vadd.f32 %v2506, %v2507
        %v2509 = vsel %vm358, %v2365, 0.0
        %v2510 = vadd.f32 %v2508, %v2509
        %v2511 = vsel %vm358, %v2370, 0.0
        %v2512 = vadd.f32 %v2510, %v2511
        %v2513 = vsel %vm358, %v2375, 0.0
        %v2514 = vadd.f32 %v2512, %v2513
        %v2515 = vsel %vm358, %v2380, 0.0
        %v2516 = vadd.f32 %v2514, %v2515
        %v2517 = vsel %vm358, %v2385, 0.0
        %v2518 = vadd.f32 %v2516, %v2517
        %v2519 = vsel %vm358, %v2390, 0.0
        %v2520 = vadd.f32 %v2518, %v2519
        %v2521 = vsel %vm358, %v2395, 0.0
        %v2522 = vadd.f32 %v2520, %v2521
        %v2523 = vsel %vm358, %v2400, 0.0
        %v2524 = vadd.f32 %v2522, %v2523
        %v2525 = vsel %vm358, %v2405, 0.0
        %v2526 = vadd.f32 %v2524, %v2525
        %v2527 = vsel %vm358, %v2410, 0.0
        %v2528 = vadd.f32 %v2526, %v2527
        %v2529 = vsel %vm358, %v2415, 0.0
        %v2530 = vadd.f32 %v2528, %v2529
        %v2531 = vsel %vm358, %v2420, 0.0
        %v2532 = vadd.f32 %v2530, %v2531
        %v2533 = vsel %vm358, %v2425, 0.0
        %v2534 = vadd.f32 %v2532, %v2533
        %v2535 = vsel %vm358, %v2430, 0.0
        %v2536 = vadd.f32 %v2534, %v2535
        %v2537 = vsel %vm358, %v2435, 0.0
        %v2538 = vadd.f32 %v2536, %v2537
        %v2539 = vsel %vm358, %v2440, 0.0
        %v2540 = vadd.f32 %v2538, %v2539
        %v2541 = vsel %vm358, %v2445, 0.0
        %v2542 = vadd.f32 %v2540, %v2541
        %v2543 = vsel %vm358, %v2450, 0.0
        %v2544 = vadd.f32 %v2542, %v2543
        %v2545 = vsel %vm358, %v2455, 0.0
        %v2546 = vadd.f32 %v2544, %v2545
        %v2547 = vsel %vm358, %v2460, 0.0
        %v2548 = vadd.f32 %v2546, %v2547
        %v2549 = vsel %vm358, %v2465, 0.0
        %v2550 = vadd.f32 %v2548, %v2549
        %v2551 = vsel %vm358, %v2470, 0.0
        %v2552 = vadd.f32 %v2550, %v2551
        %v2553 = vsel %vm358, %v2475, 0.0
        %v2554 = vadd.f32 %v2552, %v2553
        %v2555 = vsel %vm358, %v2480, 0.0
        %v2556 = vadd.f32 %v2554, %v2555
        %v2557 = vsel %vm358, %v2485, 0.0
        %v2558 = vadd.f32 %v2556, %v2557
        %v2559 = vsel %vm358, %v2490, 0.0
        %v2560 = vadd.f32 %v2558, %v2559
        %v2561 = vsel %vm358, %v2495, 0.0
        %v2562 = vadd.f32 %v2560, %v2561
        %v2563 = vrot.slane %v2562, 4
        %v2564 = vadd.f32 %v2562, %v2563
        %v2565 = vrot.slane %v2564, 2
        %v2566 = vadd.f32 %v2564, %v2565
        %v2567 = vrot.slane %v2566, 1
        %v2568 = vadd.f32 %v2566, %v2567
        %v2569 = vmul.f32 %v2340, %v2340
        %v2570 = vmul.f32 %v2345, %v2345
        %v2571 = vmul.f32 %v2350, %v2350
        %v2572 = vmul.f32 %v2355, %v2355
        %v2573 = vmul.f32 %v2360, %v2360
        %v2574 = vmul.f32 %v2365, %v2365
        %v2575 = vmul.f32 %v2370, %v2370
        %v2576 = vmul.f32 %v2375, %v2375
        %v2577 = vmul.f32 %v2380, %v2380
        %v2578 = vmul.f32 %v2385, %v2385
        %v2579 = vmul.f32 %v2390, %v2390
        %v2580 = vmul.f32 %v2395, %v2395
        %v2581 = vmul.f32 %v2400, %v2400
        %v2582 = vmul.f32 %v2405, %v2405
        %v2583 = vmul.f32 %v2410, %v2410
        %v2584 = vmul.f32 %v2415, %v2415
        %v2585 = vmul.f32 %v2420, %v2420
        %v2586 = vmul.f32 %v2425, %v2425
        %v2587 = vmul.f32 %v2430, %v2430
        %v2588 = vmul.f32 %v2435, %v2435
        %v2589 = vmul.f32 %v2440, %v2440
        %v2590 = vmul.f32 %v2445, %v2445
        %v2591 = vmul.f32 %v2450, %v2450
        %v2592 = vmul.f32 %v2455, %v2455
        %v2593 = vmul.f32 %v2460, %v2460
        %v2594 = vmul.f32 %v2465, %v2465
        %v2595 = vmul.f32 %v2470, %v2470
        %v2596 = vmul.f32 %v2475, %v2475
        %v2597 = vmul.f32 %v2480, %v2480
        %v2598 = vmul.f32 %v2485, %v2485
        %v2599 = vmul.f32 %v2490, %v2490
        %v2600 = vmul.f32 %v2495, %v2495
        %v2601 = vsel %vm358, %v2569, 0.0
        %v2602 = vsel %vm358, %v2570, 0.0
        %v2603 = vadd.f32 %v2601, %v2602
        %v2604 = vsel %vm358, %v2571, 0.0
        %v2605 = vadd.f32 %v2603, %v2604
        %v2606 = vsel %vm358, %v2572, 0.0
        %v2607 = vadd.f32 %v2605, %v2606
        %v2608 = vsel %vm358, %v2573, 0.0
        %v2609 = vadd.f32 %v2607, %v2608
        %v2610 = vsel %vm358, %v2574, 0.0
        %v2611 = vadd.f32 %v2609, %v2610
        %v2612 = vsel %vm358, %v2575, 0.0
        %v2613 = vadd.f32 %v2611, %v2612
        %v2614 = vsel %vm358, %v2576, 0.0
        %v2615 = vadd.f32 %v2613, %v2614
        %v2616 = vsel %vm358, %v2577, 0.0
        %v2617 = vadd.f32 %v2615, %v2616
        %v2618 = vsel %vm358, %v2578, 0.0
        %v2619 = vadd.f32 %v2617, %v2618
        %v2620 = vsel %vm358, %v2579, 0.0
        %v2621 = vadd.f32 %v2619, %v2620
        %v2622 = vsel %vm358, %v2580, 0.0
        %v2623 = vadd.f32 %v2621, %v2622
        %v2624 = vsel %vm358, %v2581, 0.0
        %v2625 = vadd.f32 %v2623, %v2624
        %v2626 = vsel %vm358, %v2582, 0.0
        %v2627 = vadd.f32 %v2625, %v2626
        %v2628 = vsel %vm358, %v2583, 0.0
        %v2629 = vadd.f32 %v2627, %v2628
        %v2630 = vsel %vm358, %v2584, 0.0
        %v2631 = vadd.f32 %v2629, %v2630
        %v2632 = vsel %vm358, %v2585, 0.0
        %v2633 = vadd.f32 %v2631, %v2632
        %v2634 = vsel %vm358, %v2586, 0.0
        %v2635 = vadd.f32 %v2633, %v2634
        %v2636 = vsel %vm358, %v2587, 0.0
        %v2637 = vadd.f32 %v2635, %v2636
        %v2638 = vsel %vm358, %v2588, 0.0
        %v2639 = vadd.f32 %v2637, %v2638
        %v2640 = vsel %vm358, %v2589, 0.0
        %v2641 = vadd.f32 %v2639, %v2640
        %v2642 = vsel %vm358, %v2590, 0.0
        %v2643 = vadd.f32 %v2641, %v2642
        %v2644 = vsel %vm358, %v2591, 0.0
        %v2645 = vadd.f32 %v2643, %v2644
        %v2646 = vsel %vm358, %v2592, 0.0
        %v2647 = vadd.f32 %v2645, %v2646
        %v2648 = vsel %vm358, %v2593, 0.0
        %v2649 = vadd.f32 %v2647, %v2648
        %v2650 = vsel %vm358, %v2594, 0.0
        %v2651 = vadd.f32 %v2649, %v2650
        %v2652 = vsel %vm358, %v2595, 0.0
        %v2653 = vadd.f32 %v2651, %v2652
        %v2654 = vsel %vm358, %v2596, 0.0
        %v2655 = vadd.f32 %v2653, %v2654
        %v2656 = vsel %vm358, %v2597, 0.0
        %v2657 = vadd.f32 %v2655, %v2656
        %v2658 = vsel %vm358, %v2598, 0.0
        %v2659 = vadd.f32 %v2657, %v2658
        %v2660 = vsel %vm358, %v2599, 0.0
        %v2661 = vadd.f32 %v2659, %v2660
        %v2662 = vsel %vm358, %v2600, 0.0
        %v2663 = vadd.f32 %v2661, %v2662
        %v2664 = vrot.slane %v2663, 4
        %v2665 = vadd.f32 %v2663, %v2664
        %v2666 = vrot.slane %v2665, 2
        %v2667 = vadd.f32 %v2665, %v2666
        %v2668 = vrot.slane %v2667, 1
        %v2669 = vadd.f32 %v2667, %v2668
        %vm2670 = vcmask 1040384
        %v2671 = vsel %vm2670, %v2568, %v2669
        %v2672 = vld [vmem:[%s9] sm:$0xff]
        %v2673 = vld [vmem:[%s9 + $0x8] sm:$0xff]
        %v2674 = vld [vmem:[%s9 + $0x10] sm:$0xff]
        %v2675 = vld [vmem:[%s9 + $0x18] sm:$0xff]
        %v2677 = vsel %vm358, %v2671, 0
        %2679 = vmatprep.subr.mxu0 0.0
        %2680 = vmatpush1.msra.mxu0 %v2672
        %2681 = vmatprep.subr.mxu0 0.0
        %2682 = vmatpush1.msra.mxu0 %v2673
        %2683 = vmatprep.subr.mxu0 0.0
        %2684 = vmatpush1.msra.mxu0 %v2674
        %2685 = vmatprep.subr.mxu0 0.0
        %2686 = vmatpush1.msra.mxu0 %v2675
        %2687 = vmatprep.subr.mxu0 0.0
        %2688 = vmatpush1.msra.mxu0 0.0
        %2689 = vmatprep.subr.mxu0 0.0
        %2690 = vmatpush1.msra.mxu0 0.0
        %2691 = vmatprep.subr.mxu0 0.0
        %2692 = vmatpush1.msra.mxu0 0.0
        %2693 = vmatprep.subr.mxu0 0.0
        %2694 = vmatpush1.msra.mxu0 0.0
        %2695 = vmatprep.subr.mxu0 0.0
        %2696 = vmatpush1.msra.mxu0 0.0
        %2697 = vmatprep.subr.mxu0 0.0
        %2698 = vmatpush1.msra.mxu0 0.0
        %2699 = vmatprep.subr.mxu0 0.0
        %2700 = vmatpush1.msra.mxu0 0.0
        %2701 = vmatprep.subr.mxu0 0.0
        %2702 = vmatpush1.msra.mxu0 0.0
        %2703 = vmatprep.subr.mxu0 0.0
        %2704 = vmatpush1.msra.mxu0 0.0
        %2705 = vmatprep.subr.mxu0 0.0
        %2706 = vmatpush1.msra.mxu0 0.0
        %2707 = vmatprep.subr.mxu0 0.0
        %2708 = vmatpush1.msra.mxu0 0.0
        %2709 = vmatprep.subr.mxu0 0.0
        %2710 = vmatpush1.msra.mxu0 0.0
        %2711 = vmatprep.subr.mxu0 0.0
        %2712 = vmatpush1.msra.mxu0 0.0
        %2713 = vmatprep.subr.mxu0 0.0
        %2714 = vmatpush1.msra.mxu0 0.0
        %2715 = vmatprep.subr.mxu0 0.0
        %2716 = vmatpush1.msra.mxu0 0.0
        %2717 = vmatprep.subr.mxu0 0.0
        %2718 = vmatpush1.msra.mxu0 0.0
        %2719 = vmatprep.subr.mxu0 0.0
        %2720 = vmatpush1.msra.mxu0 0.0
        %2721 = vmatprep.subr.mxu0 0.0
        %2722 = vmatpush1.msra.mxu0 0.0
        %2723 = vmatprep.subr.mxu0 0.0
        %2724 = vmatpush1.msra.mxu0 0.0
        %2725 = vmatprep.subr.mxu0 0.0
        %2726 = vmatpush1.msra.mxu0 0.0
        %2727 = vmatprep.subr.mxu0 0.0
        %2728 = vmatpush1.msra.mxu0 0.0
        %2729 = vmatprep.subr.mxu0 0.0
        %2730 = vmatpush1.msra.mxu0 0.0
        %2731 = vmatprep.subr.mxu0 0.0
        %2732 = vmatpush1.msra.mxu0 0.0
        %2733 = vmatprep.subr.mxu0 0.0
        %2734 = vmatpush1.msra.mxu0 0.0
        %2735 = vmatprep.subr.mxu0 0.0
        %2736 = vmatpush1.msra.mxu0 0.0
        %2737 = vmatprep.subr.mxu0 0.0
        %2738 = vmatpush1.msra.mxu0 0.0
        %2739 = vmatprep.subr.mxu0 0.0
        %2740 = vmatpush1.msra.mxu0 0.0
        %2741 = vmatprep.subr.mxu0 0.0
        %2742 = vmatpush1.msra.mxu0 0.0
        %2743 = vmatprep.mubr.f32.mxu0 0.0
        %2744 = vmatmul.mubr.f32.gmra.mrb[0].mxu0 %v2677
        %v2745 = vpop.f32.mrb[0].mxu0
        %v2746 = vadd.f32 0.0, %v2745
        %v2747 = vpop.f32.mrb[0].mxu0
        %2748 = vdwg.mxu0
        %v2749 = vmul.f32 %v2746, %v2746
        %v2751 = vrot.slane %v2749, 7
        %v2753 = vsub.f32 %v2746, %v2751
        %v2754 = vmax.f32 %v2753, 0.0
        %v2755 = vadd.f32 %v2754, 1e-05
        %v2756 = vrsqrt.pop %v2755
        %v2757 = vlaneseq
        %v2758 = vshrl.u32 %v2757, 7
        %v2759 = vsub.s32 0, %v2758
        %v2760 = vrot.slane %v2746, %v2759
        %v2761 = vsub.f32 %v2340, %v2760
        %v2762 = vsub.f32 %v2345, %v2760
        %v2763 = vsub.f32 %v2350, %v2760
        %v2764 = vsub.f32 %v2355, %v2760
        %v2765 = vsub.f32 %v2360, %v2760
        %v2766 = vsub.f32 %v2365, %v2760
        %v2767 = vsub.f32 %v2370, %v2760
        %v2768 = vsub.f32 %v2375, %v2760
        %v2769 = vsub.f32 %v2380, %v2760
        %v2770 = vsub.f32 %v2385, %v2760
        %v2771 = vsub.f32 %v2390, %v2760
        %v2772 = vsub.f32 %v2395, %v2760
        %v2773 = vsub.f32 %v2400, %v2760
        %v2774 = vsub.f32 %v2405, %v2760
        %v2775 = vsub.f32 %v2410, %v2760
        %v2776 = vsub.f32 %v2415, %v2760
        %v2777 = vsub.f32 %v2420, %v2760
        %v2778 = vsub.f32 %v2425, %v2760
        %v2779 = vsub.f32 %v2430, %v2760
        %v2780 = vsub.f32 %v2435, %v2760
        %v2781 = vsub.f32 %v2440, %v2760
        %v2782 = vsub.f32 %v2445, %v2760
        %v2783 = vsub.f32 %v2450, %v2760
        %v2784 = vsub.f32 %v2455, %v2760
        %v2785 = vsub.f32 %v2460, %v2760
        %v2786 = vsub.f32 %v2465, %v2760
        %v2787 = vsub.f32 %v2470, %v2760
        %v2788 = vsub.f32 %v2475, %v2760
        %v2789 = vsub.f32 %v2480, %v2760
        %v2790 = vsub.f32 %v2485, %v2760
        %v2791 = vsub.f32 %v2490, %v2760
        %v2792 = vsub.f32 %v2495, %v2760
        %v2793 = vlaneseq
        %v2794 = vshrl.u32 %v2793, 7
        %v2795 = vsub.s32 1, %v2794
        %v2796 = vrot.slane %v2756, %v2795
        %v2797 = vmul.f32 %v2761, %v2796
        %v2798 = vmul.f32 %v2762, %v2796
        %v2799 = vmul.f32 %v2763, %v2796
        %v2800 = vmul.f32 %v2764, %v2796
        %v2801 = vmul.f32 %v2765, %v2796
        %v2802 = vmul.f32 %v2766, %v2796
        %v2803 = vmul.f32 %v2767, %v2796
        %v2804 = vmul.f32 %v2768, %v2796
        %v2805 = vmul.f32 %v2769, %v2796
        %v2806 = vmul.f32 %v2770, %v2796
        %v2807 = vmul.f32 %v2771, %v2796
        %v2808 = vmul.f32 %v2772, %v2796
        %v2809 = vmul.f32 %v2773, %v2796
        %v2810 = vmul.f32 %v2774, %v2796
        %v2811 = vmul.f32 %v2775, %v2796
        %v2812 = vmul.f32 %v2776, %v2796
        %v2813 = vmul.f32 %v2777, %v2796
        %v2814 = vmul.f32 %v2778, %v2796
        %v2815 = vmul.f32 %v2779, %v2796
        %v2816 = vmul.f32 %v2780, %v2796
        %v2817 = vmul.f32 %v2781, %v2796
        %v2818 = vmul.f32 %v2782, %v2796
        %v2819 = vmul.f32 %v2783, %v2796
        %v2820 = vmul.f32 %v2784, %v2796
        %v2821 = vmul.f32 %v2785, %v2796
        %v2822 = vmul.f32 %v2786, %v2796
        %v2823 = vmul.f32 %v2787, %v2796
        %v2824 = vmul.f32 %v2788, %v2796
        %v2825 = vmul.f32 %v2789, %v2796
        %v2826 = vmul.f32 %v2790, %v2796
        %v2827 = vmul.f32 %v2791, %v2796
        %v2828 = vmul.f32 %v2792, %v2796
        %v2830 = vlaneseq
        %v2831 = vshrl.u32 %v2830, 7
        %v2832 = vsub.s32 0, %v2831
        %v2833 = vrot.slane %v2498, %v2832
        %v2835 = vmul.f32 %v2797, %v2833
        %v2836 = vmul.f32 %v2798, %v2833
        %v2837 = vmul.f32 %v2799, %v2833
        %v2838 = vmul.f32 %v2800, %v2833
        %v2839 = vmul.f32 %v2801, %v2833
        %v2840 = vmul.f32 %v2802, %v2833
        %v2841 = vmul.f32 %v2803, %v2833
        %v2842 = vmul.f32 %v2804, %v2833
        %v2843 = vmul.f32 %v2805, %v2833
        %v2844 = vmul.f32 %v2806, %v2833
        %v2845 = vmul.f32 %v2807, %v2833
        %v2846 = vmul.f32 %v2808, %v2833
        %v2847 = vmul.f32 %v2809, %v2833
        %v2848 = vmul.f32 %v2810, %v2833
        %v2849 = vmul.f32 %v2811, %v2833
        %v2850 = vmul.f32 %v2812, %v2833
        %v2851 = vmul.f32 %v2813, %v2833
        %v2852 = vmul.f32 %v2814, %v2833
        %v2853 = vmul.f32 %v2815, %v2833
        %v2854 = vmul.f32 %v2816, %v2833
        %v2855 = vmul.f32 %v2817, %v2833
        %v2856 = vmul.f32 %v2818, %v2833
        %v2857 = vmul.f32 %v2819, %v2833
        %v2858 = vmul.f32 %v2820, %v2833
        %v2859 = vmul.f32 %v2821, %v2833
        %v2860 = vmul.f32 %v2822, %v2833
        %v2861 = vmul.f32 %v2823, %v2833
        %v2862 = vmul.f32 %v2824, %v2833
        %v2863 = vmul.f32 %v2825, %v2833
        %v2864 = vmul.f32 %v2826, %v2833
        %v2865 = vmul.f32 %v2827, %v2833
        %v2866 = vmul.f32 %v2828, %v2833
        %v2868 = vlaneseq
        %v2869 = vshrl.u32 %v2868, 7
        %v2870 = vsub.s32 0, %v2869
        %v2871 = vrot.slane %v2499, %v2870
        %v2873 = vadd.f32 %v2835, %v2871
        %v2874 = vadd.f32 %v2836, %v2871
        %v2875 = vadd.f32 %v2837, %v2871
        %v2876 = vadd.f32 %v2838, %v2871
        %v2877 = vadd.f32 %v2839, %v2871
        %v2878 = vadd.f32 %v2840, %v2871
        %v2879 = vadd.f32 %v2841, %v2871
        %v2880 = vadd.f32 %v2842, %v2871
        %v2881 = vadd.f32 %v2843, %v2871
        %v2882 = vadd.f32 %v2844, %v2871
        %v2883 = vadd.f32 %v2845, %v2871
        %v2884 = vadd.f32 %v2846, %v2871
        %v2885 = vadd.f32 %v2847, %v2871
        %v2886 = vadd.f32 %v2848, %v2871
        %v2887 = vadd.f32 %v2849, %v2871
        %v2888 = vadd.f32 %v2850, %v2871
        %v2889 = vadd.f32 %v2851, %v2871
        %v2890 = vadd.f32 %v2852, %v2871
        %v2891 = vadd.f32 %v2853, %v2871
        %v2892 = vadd.f32 %v2854, %v2871
        %v2893 = vadd.f32 %v2855, %v2871
        %v2894 = vadd.f32 %v2856, %v2871
        %v2895 = vadd.f32 %v2857, %v2871
        %v2896 = vadd.f32 %v2858, %v2871
        %v2897 = vadd.f32 %v2859, %v2871
        %v2898 = vadd.f32 %v2860, %v2871
        %v2899 = vadd.f32 %v2861, %v2871
        %v2900 = vadd.f32 %v2862, %v2871
        %v2901 = vadd.f32 %v2863, %v2871
        %v2902 = vadd.f32 %v2864, %v2871
        %v2903 = vadd.f32 %v2865, %v2871
        %v2904 = vadd.f32 %v2866, %v2871
        %v2905 = vxor.u32 %v2873, 2147483648
        %v2906 = vxor.u32 %v2874, 2147483648
        %v2907 = vxor.u32 %v2875, 2147483648
        %v2908 = vxor.u32 %v2876, 2147483648
        %v2909 = vxor.u32 %v2877, 2147483648
        %v2910 = vxor.u32 %v2878, 2147483648
        %v2911 = vxor.u32 %v2879, 2147483648
        %v2912 = vxor.u32 %v2880, 2147483648
        %v2913 = vxor.u32 %v2881, 2147483648
        %v2914 = vxor.u32 %v2882, 2147483648
        %v2915 = vxor.u32 %v2883, 2147483648
        %v2916 = vxor.u32 %v2884, 2147483648
        %v2917 = vxor.u32 %v2885, 2147483648
        %v2918 = vxor.u32 %v2886, 2147483648
        %v2919 = vxor.u32 %v2887, 2147483648
        %v2920 = vxor.u32 %v2888, 2147483648
        %v2921 = vxor.u32 %v2889, 2147483648
        %v2922 = vxor.u32 %v2890, 2147483648
        %v2923 = vxor.u32 %v2891, 2147483648
        %v2924 = vxor.u32 %v2892, 2147483648
        %v2925 = vxor.u32 %v2893, 2147483648
        %v2926 = vxor.u32 %v2894, 2147483648
        %v2927 = vxor.u32 %v2895, 2147483648
        %v2928 = vxor.u32 %v2896, 2147483648
        %v2929 = vxor.u32 %v2897, 2147483648
        %v2930 = vxor.u32 %v2898, 2147483648
        %v2931 = vxor.u32 %v2899, 2147483648
        %v2932 = vxor.u32 %v2900, 2147483648
        %v2933 = vxor.u32 %v2901, 2147483648
        %v2934 = vxor.u32 %v2902, 2147483648
        %v2935 = vxor.u32 %v2903, 2147483648
        %v2936 = vxor.u32 %v2904, 2147483648
        %v2937 = vmul.f32 %v2905, 1.442695
        %v2938 = vpow.pop %v2937
        %v2939 = vmul.f32 %v2906, 1.442695
        %v2940 = vpow.pop %v2939
        %v2941 = vmul.f32 %v2907, 1.442695
        %v2942 = vpow.pop %v2941
        %v2943 = vmul.f32 %v2908, 1.442695
        %v2944 = vpow.pop %v2943
        %v2945 = vmul.f32 %v2909, 1.442695
        %v2946 = vpow.pop %v2945
        %v2947 = vmul.f32 %v2910, 1.442695
        %v2948 = vpow.pop %v2947
        %v2949 = vmul.f32 %v2911, 1.442695
        %v2950 = vpow.pop %v2949
        %v2951 = vmul.f32 %v2912, 1.442695
        %v2952 = vpow.pop %v2951
        %v2953 = vmul.f32 %v2913, 1.442695
        %v2954 = vpow.pop %v2953
        %v2955 = vmul.f32 %v2914, 1.442695
        %v2956 = vpow.pop %v2955
        %v2957 = vmul.f32 %v2915, 1.442695
        %v2958 = vpow.pop %v2957
        %v2959 = vmul.f32 %v2916, 1.442695
        %v2960 = vpow.pop %v2959
        %v2961 = vmul.f32 %v2917, 1.442695
        %v2962 = vpow.pop %v2961
        %v2963 = vmul.f32 %v2918, 1.442695
        %v2964 = vpow.pop %v2963
        %v2965 = vmul.f32 %v2919, 1.442695
        %v2966 = vpow.pop %v2965
        %v2967 = vmul.f32 %v2920, 1.442695
        %v2968 = vpow.pop %v2967
        %v2969 = vmul.f32 %v2921, 1.442695
        %v2970 = vpow.pop %v2969
        %v2971 = vmul.f32 %v2922, 1.442695
        %v2972 = vpow.pop %v2971
        %v2973 = vmul.f32 %v2923, 1.442695
        %v2974 = vpow.pop %v2973
        %v2975 = vmul.f32 %v2924, 1.442695
        %v2976 = vpow.pop %v2975
        %v2977 = vmul.f32 %v2925, 1.442695
        %v2978 = vpow.pop %v2977
        %v2979 = vmul.f32 %v2926, 1.442695
        %v2980 = vpow.pop %v2979
        %v2981 = vmul.f32 %v2927, 1.442695
        %v2982 = vpow.pop %v2981
        %v2983 = vmul.f32 %v2928, 1.442695
        %v2984 = vpow.pop %v2983
        %v2985 = vmul.f32 %v2929, 1.442695
        %v2986 = vpow.pop %v2985
        %v2987 = vmul.f32 %v2930, 1.442695
        %v2988 = vpow.pop %v2987
        %v2989 = vmul.f32 %v2931, 1.442695
        %v2990 = vpow.pop %v2989
        %v2991 = vmul.f32 %v2932, 1.442695
        %v2992 = vpow.pop %v2991
        %v2993 = vmul.f32 %v2933, 1.442695
        %v2994 = vpow.pop %v2993
        %v2995 = vmul.f32 %v2934, 1.442695
        %v2996 = vpow.pop %v2995
        %v2997 = vmul.f32 %v2935, 1.442695
        %v2998 = vpow.pop %v2997
        %v2999 = vmul.f32 %v2936, 1.442695
        %v3000 = vpow.pop %v2999
        %v3001 = vadd.f32 %v2938, 1.0
        %v3002 = vadd.f32 %v2940, 1.0
        %v3003 = vadd.f32 %v2942, 1.0
        %v3004 = vadd.f32 %v2944, 1.0
        %v3005 = vadd.f32 %v2946, 1.0
        %v3006 = vadd.f32 %v2948, 1.0
        %v3007 = vadd.f32 %v2950, 1.0
        %v3008 = vadd.f32 %v2952, 1.0
        %v3009 = vadd.f32 %v2954, 1.0
        %v3010 = vadd.f32 %v2956, 1.0
        %v3011 = vadd.f32 %v2958, 1.0
        %v3012 = vadd.f32 %v2960, 1.0
        %v3013 = vadd.f32 %v2962, 1.0
        %v3014 = vadd.f32 %v2964, 1.0
        %v3015 = vadd.f32 %v2966, 1.0
        %v3016 = vadd.f32 %v2968, 1.0
        %v3017 = vadd.f32 %v2970, 1.0
        %v3018 = vadd.f32 %v2972, 1.0
        %v3019 = vadd.f32 %v2974, 1.0
        %v3020 = vadd.f32 %v2976, 1.0
        %v3021 = vadd.f32 %v2978, 1.0
        %v3022 = vadd.f32 %v2980, 1.0
        %v3023 = vadd.f32 %v2982, 1.0
        %v3024 = vadd.f32 %v2984, 1.0
        %v3025 = vadd.f32 %v2986, 1.0
        %v3026 = vadd.f32 %v2988, 1.0
        %v3027 = vadd.f32 %v2990, 1.0
        %v3028 = vadd.f32 %v2992, 1.0
        %v3029 = vadd.f32 %v2994, 1.0
        %v3030 = vadd.f32 %v2996, 1.0
        %v3031 = vadd.f32 %v2998, 1.0
        %v3032 = vadd.f32 %v3000, 1.0
        %v3033 = vrcp.pop %v3001
        %v3034 = vmul.f32 1.0, %v3033
        %v3035 = vrcp.pop %v3002
        %v3036 = vmul.f32 1.0, %v3035
        %v3037 = vrcp.pop %v3003
        %v3038 = vmul.f32 1.0, %v3037
        %v3039 = vrcp.pop %v3004
        %v3040 = vmul.f32 1.0, %v3039
        %v3041 = vrcp.pop %v3005
        %v3042 = vmul.f32 1.0, %v3041
        %v3043 = vrcp.pop %v3006
        %v3044 = vmul.f32 1.0, %v3043
        %v3045 = vrcp.pop %v3007
        %v3046 = vmul.f32 1.0, %v3045
        %v3047 = vrcp.pop %v3008
        %v3048 = vmul.f32 1.0, %v3047
        %v3049 = vrcp.pop %v3009
        %v3050 = vmul.f32 1.0, %v3049
        %v3051 = vrcp.pop %v3010
        %v3052 = vmul.f32 1.0, %v3051
        %v3053 = vrcp.pop %v3011
        %v3054 = vmul.f32 1.0, %v3053
        %v3055 = vrcp.pop %v3012
        %v3056 = vmul.f32 1.0, %v3055
        %v3057 = vrcp.pop %v3013
        %v3058 = vmul.f32 1.0, %v3057
        %v3059 = vrcp.pop %v3014
        %v3060 = vmul.f32 1.0, %v3059
        %v3061 = vrcp.pop %v3015
        %v3062 = vmul.f32 1.0, %v3061
        %v3063 = vrcp.pop %v3016
        %v3064 = vmul.f32 1.0, %v3063
        %v3065 = vrcp.pop %v3017
        %v3066 = vmul.f32 1.0, %v3065
        %v3067 = vrcp.pop %v3018
        %v3068 = vmul.f32 1.0, %v3067
        %v3069 = vrcp.pop %v3019
        %v3070 = vmul.f32 1.0, %v3069
        %v3071 = vrcp.pop %v3020
        %v3072 = vmul.f32 1.0, %v3071
        %v3073 = vrcp.pop %v3021
        %v3074 = vmul.f32 1.0, %v3073
        %v3075 = vrcp.pop %v3022
        %v3076 = vmul.f32 1.0, %v3075
        %v3077 = vrcp.pop %v3023
        %v3078 = vmul.f32 1.0, %v3077
        %v3079 = vrcp.pop %v3024
        %v3080 = vmul.f32 1.0, %v3079
        %v3081 = vrcp.pop %v3025
        %v3082 = vmul.f32 1.0, %v3081
        %v3083 = vrcp.pop %v3026
        %v3084 = vmul.f32 1.0, %v3083
        %v3085 = vrcp.pop %v3027
        %v3086 = vmul.f32 1.0, %v3085
        %v3087 = vrcp.pop %v3028
        %v3088 = vmul.f32 1.0, %v3087
        %v3089 = vrcp.pop %v3029
        %v3090 = vmul.f32 1.0, %v3089
        %v3091 = vrcp.pop %v3030
        %v3092 = vmul.f32 1.0, %v3091
        %v3093 = vrcp.pop %v3031
        %v3094 = vmul.f32 1.0, %v3093
        %v3095 = vrcp.pop %v3032
        %v3096 = vmul.f32 1.0, %v3095
        %v3097 = vmul.f32 %v2873, %v3034
        %v3098 = vmul.f32 %v2874, %v3036
        %v3099 = vmul.f32 %v2875, %v3038
        %v3100 = vmul.f32 %v2876, %v3040
        %v3101 = vmul.f32 %v2877, %v3042
        %v3102 = vmul.f32 %v2878, %v3044
        %v3103 = vmul.f32 %v2879, %v3046
        %v3104 = vmul.f32 %v2880, %v3048
        %v3105 = vmul.f32 %v2881, %v3050
        %v3106 = vmul.f32 %v2882, %v3052
        %v3107 = vmul.f32 %v2883, %v3054
        %v3108 = vmul.f32 %v2884, %v3056
        %v3109 = vmul.f32 %v2885, %v3058
        %v3110 = vmul.f32 %v2886, %v3060
        %v3111 = vmul.f32 %v2887, %v3062
        %v3112 = vmul.f32 %v2888, %v3064
        %v3113 = vmul.f32 %v2889, %v3066
        %v3114 = vmul.f32 %v2890, %v3068
        %v3115 = vmul.f32 %v2891, %v3070
        %v3116 = vmul.f32 %v2892, %v3072
        %v3117 = vmul.f32 %v2893, %v3074
        %v3118 = vmul.f32 %v2894, %v3076
        %v3119 = vmul.f32 %v2895, %v3078
        %v3120 = vmul.f32 %v2896, %v3080
        %v3121 = vmul.f32 %v2897, %v3082
        %v3122 = vmul.f32 %v2898, %v3084
        %v3123 = vmul.f32 %v2899, %v3086
        %v3124 = vmul.f32 %v2900, %v3088
        %v3125 = vmul.f32 %v2901, %v3090
        %v3126 = vmul.f32 %v2902, %v3092
        %v3127 = vmul.f32 %v2903, %v3094
        %v3128 = vmul.f32 %v2904, %v3096
        %3129 = vst.msk [vmem:[%s367 + $0x1] sm:$0xff] %vm358, %v3097
        %3130 = vst.msk [vmem:[%s367 + $0x9] sm:$0xff] %vm358, %v3098
        %3131 = vst.msk [vmem:[%s367 + $0x19] sm:$0xff] %vm358, %v3099
        %3132 = vst.msk [vmem:[%s367 + $0x21] sm:$0xff] %vm358, %v3100
        %3133 = vst.msk [vmem:[%s367 + $0x31] sm:$0xff] %vm358, %v3101
        %3134 = vst.msk [vmem:[%s367 + $0x39] sm:$0xff] %vm358, %v3102
        %3135 = vst.msk [vmem:[%s367 + $0x49] sm:$0xff] %vm358, %v3103
        %3136 = vst.msk [vmem:[%s367 + $0x51] sm:$0xff] %vm358, %v3104
        %3137 = vst.msk [vmem:[%s367 + $0x61] sm:$0xff] %vm358, %v3105
        %3138 = vst.msk [vmem:[%s367 + $0x69] sm:$0xff] %vm358, %v3106
        %3139 = vst.msk [vmem:[%s367 + $0x79] sm:$0xff] %vm358, %v3107
        %3140 = vst.msk [vmem:[%s367 + $0x81] sm:$0xff] %vm358, %v3108
        %3141 = vst.msk [vmem:[%s367 + $0x91] sm:$0xff] %vm358, %v3109
        %3142 = vst.msk [vmem:[%s367 + $0x99] sm:$0xff] %vm358, %v3110
        %3143 = vst.msk [vmem:[%s367 + $0xa9] sm:$0xff] %vm358, %v3111
        %3144 = vst.msk [vmem:[%s367 + $0xb1] sm:$0xff] %vm358, %v3112
        %3145 = vst.msk [vmem:[%s367 + $0xc1] sm:$0xff] %vm358, %v3113
        %3146 = vst.msk [vmem:[%s367 + $0xc9] sm:$0xff] %vm358, %v3114
        %3147 = vst.msk [vmem:[%s367 + $0xd9] sm:$0xff] %vm358, %v3115
        %3148 = vst.msk [vmem:[%s367 + $0xe1] sm:$0xff] %vm358, %v3116
        %3149 = vst.msk [vmem:[%s367 + $0xf1] sm:$0xff] %vm358, %v3117
        %3150 = vst.msk [vmem:[%s367 + $0xf9] sm:$0xff] %vm358, %v3118
        %3151 = vst.msk [vmem:[%s367 + $0x109] sm:$0xff] %vm358, %v3119
        %3152 = vst.msk [vmem:[%s367 + $0x111] sm:$0xff] %vm358, %v3120
        %3153 = vst.msk [vmem:[%s367 + $0x121] sm:$0xff] %vm358, %v3121
        %3154 = vst.msk [vmem:[%s367 + $0x129] sm:$0xff] %vm358, %v3122
        %3155 = vst.msk [vmem:[%s367 + $0x139] sm:$0xff] %vm358, %v3123
        %3156 = vst.msk [vmem:[%s367 + $0x141] sm:$0xff] %vm358, %v3124
        %3157 = vst.msk [vmem:[%s367 + $0x151] sm:$0xff] %vm358, %v3125
        %3158 = vst.msk [vmem:[%s367 + $0x159] sm:$0xff] %vm358, %v3126
        %3159 = vst.msk [vmem:[%s367 + $0x169] sm:$0xff] %vm358, %v3127
        %3160 = vst.msk [vmem:[%s367 + $0x171] sm:$0xff] %vm358, %v3128
        %v3161 = vld [vmem:[#allocation2] sm:$0xff]
        %v3162 = vld [vmem:[#allocation2 + $0x8] sm:$0xff]
        %v3163 = vld [vmem:[#allocation2 + $0x18] sm:$0xff]
        %v3164 = vld [vmem:[#allocation2 + $0x20] sm:$0xff]
        %v3165 = vld [vmem:[#allocation2 + $0x30] sm:$0xff]
        %v3166 = vld [vmem:[#allocation2 + $0x38] sm:$0xff]
        %v3167 = vld [vmem:[#allocation2 + $0x48] sm:$0xff]
        %v3168 = vld [vmem:[#allocation2 + $0x50] sm:$0xff]
        %v3169 = vld [vmem:[#allocation2 + $0x60] sm:$0xff]
        %v3170 = vld [vmem:[#allocation2 + $0x68] sm:$0xff]
        %v3171 = vld [vmem:[#allocation2 + $0x78] sm:$0xff]
        %v3172 = vld [vmem:[#allocation2 + $0x80] sm:$0xff]
        %v3173 = vld [vmem:[#allocation2 + $0x90] sm:$0xff]
        %v3174 = vld [vmem:[#allocation2 + $0x98] sm:$0xff]
        %v3175 = vld [vmem:[#allocation2 + $0xa8] sm:$0xff]
        %v3176 = vld [vmem:[#allocation2 + $0xb0] sm:$0xff]
        %v3177 = vld [vmem:[#allocation2 + $0xc0] sm:$0xff]
        %v3178 = vld [vmem:[#allocation2 + $0xc8] sm:$0xff]
        %v3179 = vld [vmem:[#allocation2 + $0xd8] sm:$0xff]
        %v3180 = vld [vmem:[#allocation2 + $0xe0] sm:$0xff]
        %v3181 = vld [vmem:[#allocation2 + $0xf0] sm:$0xff]
        %v3182 = vld [vmem:[#allocation2 + $0xf8] sm:$0xff]
        %v3183 = vld [vmem:[#allocation2 + $0x108] sm:$0xff]
        %v3184 = vld [vmem:[#allocation2 + $0x110] sm:$0xff]
        %v3185 = vld [vmem:[#allocation2 + $0x120] sm:$0xff]
        %v3186 = vld [vmem:[#allocation2 + $0x128] sm:$0xff]
        %v3187 = vld [vmem:[#allocation2 + $0x138] sm:$0xff]
        %v3188 = vld [vmem:[#allocation2 + $0x140] sm:$0xff]
        %v3189 = vld [vmem:[#allocation2 + $0x150] sm:$0xff]
        %v3190 = vld [vmem:[#allocation2 + $0x158] sm:$0xff]
        %v3191 = vld [vmem:[#allocation2 + $0x168] sm:$0xff]
        %v3192 = vld [vmem:[#allocation2 + $0x170] sm:$0xff]
        %3193 = vst.msk [vmem:[#allocation3] sm:$0xff] %vm358, %v3161
        %3194 = vst.msk [vmem:[#allocation3 + $0x18] sm:$0xff] %vm358, %v3162
        %3195 = vst.msk [vmem:[#allocation3 + $0x30] sm:$0xff] %vm358, %v3163
        %3196 = vst.msk [vmem:[#allocation3 + $0x48] sm:$0xff] %vm358, %v3164
        %3197 = vst.msk [vmem:[#allocation3 + $0x60] sm:$0xff] %vm358, %v3165
        %3198 = vst.msk [vmem:[#allocation3 + $0x78] sm:$0xff] %vm358, %v3166
        %3199 = vst.msk [vmem:[#allocation3 + $0x90] sm:$0xff] %vm358, %v3167
        %3200 = vst.msk [vmem:[#allocation3 + $0xa8] sm:$0xff] %vm358, %v3168
        %3201 = vst.msk [vmem:[#allocation3 + $0xc0] sm:$0xff] %vm358, %v3169
        %3202 = vst.msk [vmem:[#allocation3 + $0xd8] sm:$0xff] %vm358, %v3170
        %3203 = vst.msk [vmem:[#allocation3 + $0xf0] sm:$0xff] %vm358, %v3171
        %3204 = vst.msk [vmem:[#allocation3 + $0x108] sm:$0xff] %vm358, %v3172
        %3205 = vst.msk [vmem:[#allocation3 + $0x120] sm:$0xff] %vm358, %v3173
        %3206 = vst.msk [vmem:[#allocation3 + $0x138] sm:$0xff] %vm358, %v3174
        %3207 = vst.msk [vmem:[#allocation3 + $0x150] sm:$0xff] %vm358, %v3175
        %3208 = vst.msk [vmem:[#allocation3 + $0x168] sm:$0xff] %vm358, %v3176
        %3209 = vst.msk [vmem:[#allocation3 + $0x180] sm:$0xff] %vm358, %v3177
        %3210 = vst.msk [vmem:[#allocation3 + $0x198] sm:$0xff] %vm358, %v3178
        %3211 = vst.msk [vmem:[#allocation3 + $0x1b0] sm:$0xff] %vm358, %v3179
        %3212 = vst.msk [vmem:[#allocation3 + $0x1c8] sm:$0xff] %vm358, %v3180
        %3213 = vst.msk [vmem:[#allocation3 + $0x1e0] sm:$0xff] %vm358, %v3181
        %3214 = vst.msk [vmem:[#allocation3 + $0x1f8] sm:$0xff] %vm358, %v3182
        %3215 = vst.msk [vmem:[#allocation3 + $0x210] sm:$0xff] %vm358, %v3183
        %3216 = vst.msk [vmem:[#allocation3 + $0x228] sm:$0xff] %vm358, %v3184
        %3217 = vst.msk [vmem:[#allocation3 + $0x240] sm:$0xff] %vm358, %v3185
        %3218 = vst.msk [vmem:[#allocation3 + $0x258] sm:$0xff] %vm358, %v3186
        %3219 = vst.msk [vmem:[#allocation3 + $0x270] sm:$0xff] %vm358, %v3187
        %3220 = vst.msk [vmem:[#allocation3 + $0x288] sm:$0xff] %vm358, %v3188
        %3221 = vst.msk [vmem:[#allocation3 + $0x2a0] sm:$0xff] %vm358, %v3189
        %3222 = vst.msk [vmem:[#allocation3 + $0x2b8] sm:$0xff] %vm358, %v3190
        %3223 = vst.msk [vmem:[#allocation3 + $0x2d0] sm:$0xff] %vm358, %v3191
        %3224 = vst.msk [vmem:[#allocation3 + $0x2e8] sm:$0xff] %vm358, %v3192
        %v3225 = vld [vmem:[#allocation2 + $0x1] sm:$0xff]
        %v3226 = vld [vmem:[#allocation2 + $0x9] sm:$0xff]
        %v3227 = vld [vmem:[#allocation2 + $0x19] sm:$0xff]
        %v3228 = vld [vmem:[#allocation2 + $0x21] sm:$0xff]
        %v3229 = vld [vmem:[#allocation2 + $0x31] sm:$0xff]
        %v3230 = vld [vmem:[#allocation2 + $0x39] sm:$0xff]
        %v3231 = vld [vmem:[#allocation2 + $0x49] sm:$0xff]
        %v3232 = vld [vmem:[#allocation2 + $0x51] sm:$0xff]
        %v3233 = vld [vmem:[#allocation2 + $0x61] sm:$0xff]
        %v3234 = vld [vmem:[#allocation2 + $0x69] sm:$0xff]
        %v3235 = vld [vmem:[#allocation2 + $0x79] sm:$0xff]
        %v3236 = vld [vmem:[#allocation2 + $0x81] sm:$0xff]
        %v3237 = vld [vmem:[#allocation2 + $0x91] sm:$0xff]
        %v3238 = vld [vmem:[#allocation2 + $0x99] sm:$0xff]
        %v3239 = vld [vmem:[#allocation2 + $0xa9] sm:$0xff]
        %v3240 = vld [vmem:[#allocation2 + $0xb1] sm:$0xff]
        %v3241 = vld [vmem:[#allocation2 + $0xc1] sm:$0xff]
        %v3242 = vld [vmem:[#allocation2 + $0xc9] sm:$0xff]
        %v3243 = vld [vmem:[#allocation2 + $0xd9] sm:$0xff]
        %v3244 = vld [vmem:[#allocation2 + $0xe1] sm:$0xff]
        %v3245 = vld [vmem:[#allocation2 + $0xf1] sm:$0xff]
        %v3246 = vld [vmem:[#allocation2 + $0xf9] sm:$0xff]
        %v3247 = vld [vmem:[#allocation2 + $0x109] sm:$0xff]
        %v3248 = vld [vmem:[#allocation2 + $0x111] sm:$0xff]
        %v3249 = vld [vmem:[#allocation2 + $0x121] sm:$0xff]
        %v3250 = vld [vmem:[#allocation2 + $0x129] sm:$0xff]
        %v3251 = vld [vmem:[#allocation2 + $0x139] sm:$0xff]
        %v3252 = vld [vmem:[#allocation2 + $0x141] sm:$0xff]
        %v3253 = vld [vmem:[#allocation2 + $0x151] sm:$0xff]
        %v3254 = vld [vmem:[#allocation2 + $0x159] sm:$0xff]
        %v3255 = vld [vmem:[#allocation2 + $0x169] sm:$0xff]
        %v3256 = vld [vmem:[#allocation2 + $0x171] sm:$0xff]
        %3289 = vrot.lane.b32.xlu0 %v3225, 32
        %v3290 = vpop.permute.xlu0 %3289
        %3291 = vrot.lane.b32.xlu0 %v3226, 32
        %v3292 = vpop.permute.xlu0 %3291
        %3293 = vrot.lane.b32.xlu0 %v3227, 32
        %v3294 = vpop.permute.xlu0 %3293
        %3295 = vrot.lane.b32.xlu0 %v3228, 32
        %v3296 = vpop.permute.xlu0 %3295
        %3297 = vrot.lane.b32.xlu0 %v3229, 32
        %v3298 = vpop.permute.xlu0 %3297
        %3299 = vrot.lane.b32.xlu0 %v3230, 32
        %v3300 = vpop.permute.xlu0 %3299
        %3301 = vrot.lane.b32.xlu0 %v3231, 32
        %v3302 = vpop.permute.xlu0 %3301
        %3303 = vrot.lane.b32.xlu0 %v3232, 32
        %v3304 = vpop.permute.xlu0 %3303
        %3305 = vrot.lane.b32.xlu0 %v3233, 32
        %v3306 = vpop.permute.xlu0 %3305
        %3307 = vrot.lane.b32.xlu0 %v3234, 32
        %v3308 = vpop.permute.xlu0 %3307
        %3309 = vrot.lane.b32.xlu0 %v3235, 32
        %v3310 = vpop.permute.xlu0 %3309
        %3311 = vrot.lane.b32.xlu0 %v3236, 32
        %v3312 = vpop.permute.xlu0 %3311
        %3313 = vrot.lane.b32.xlu0 %v3237, 32
        %v3314 = vpop.permute.xlu0 %3313
        %3315 = vrot.lane.b32.xlu0 %v3238, 32
        %v3316 = vpop.permute.xlu0 %3315
        %3317 = vrot.lane.b32.xlu0 %v3239, 32
        %v3318 = vpop.permute.xlu0 %3317
        %3319 = vrot.lane.b32.xlu0 %v3240, 32
        %v3320 = vpop.permute.xlu0 %3319
        %3321 = vrot.lane.b32.xlu0 %v3241, 32
        %v3322 = vpop.permute.xlu0 %3321
        %3323 = vrot.lane.b32.xlu0 %v3242, 32
        %v3324 = vpop.permute.xlu0 %3323
        %3325 = vrot.lane.b32.xlu0 %v3243, 32
        %v3326 = vpop.permute.xlu0 %3325
        %3327 = vrot.lane.b32.xlu0 %v3244, 32
        %v3328 = vpop.permute.xlu0 %3327
        %3329 = vrot.lane.b32.xlu0 %v3245, 32
        %v3330 = vpop.permute.xlu0 %3329
        %3331 = vrot.lane.b32.xlu0 %v3246, 32
        %v3332 = vpop.permute.xlu0 %3331
        %3333 = vrot.lane.b32.xlu0 %v3247, 32
        %v3334 = vpop.permute.xlu0 %3333
        %3335 = vrot.lane.b32.xlu0 %v3248, 32
        %v3336 = vpop.permute.xlu0 %3335
        %3337 = vrot.lane.b32.xlu0 %v3249, 32
        %v3338 = vpop.permute.xlu0 %3337
        %3339 = vrot.lane.b32.xlu0 %v3250, 32
        %v3340 = vpop.permute.xlu0 %3339
        %3341 = vrot.lane.b32.xlu0 %v3251, 32
        %v3342 = vpop.permute.xlu0 %3341
        %3343 = vrot.lane.b32.xlu0 %v3252, 32
        %v3344 = vpop.permute.xlu0 %3343
        %3345 = vrot.lane.b32.xlu0 %v3253, 32
        %v3346 = vpop.permute.xlu0 %3345
        %3347 = vrot.lane.b32.xlu0 %v3254, 32
        %v3348 = vpop.permute.xlu0 %3347
        %3349 = vrot.lane.b32.xlu0 %v3255, 32
        %v3350 = vpop.permute.xlu0 %3349
        %3351 = vrot.lane.b32.xlu0 %v3256, 32
        %v3352 = vpop.permute.xlu0 %3351
        %3385 = vst.msk [vmem:[#allocation3] sm:$0xff] %vm689, %v3290
        %3386 = vst.msk [vmem:[#allocation3 + $0x18] sm:$0xff] %vm689, %v3292
        %3387 = vst.msk [vmem:[#allocation3 + $0x30] sm:$0xff] %vm689, %v3294
        %3388 = vst.msk [vmem:[#allocation3 + $0x48] sm:$0xff] %vm689, %v3296
        %3389 = vst.msk [vmem:[#allocation3 + $0x60] sm:$0xff] %vm689, %v3298
        %3390 = vst.msk [vmem:[#allocation3 + $0x78] sm:$0xff] %vm689, %v3300
        %3391 = vst.msk [vmem:[#allocation3 + $0x90] sm:$0xff] %vm689, %v3302
        %3392 = vst.msk [vmem:[#allocation3 + $0xa8] sm:$0xff] %vm689, %v3304
        %3393 = vst.msk [vmem:[#allocation3 + $0xc0] sm:$0xff] %vm689, %v3306
        %3394 = vst.msk [vmem:[#allocation3 + $0xd8] sm:$0xff] %vm689, %v3308
        %3395 = vst.msk [vmem:[#allocation3 + $0xf0] sm:$0xff] %vm689, %v3310
        %3396 = vst.msk [vmem:[#allocation3 + $0x108] sm:$0xff] %vm689, %v3312
        %3397 = vst.msk [vmem:[#allocation3 + $0x120] sm:$0xff] %vm689, %v3314
        %3398 = vst.msk [vmem:[#allocation3 + $0x138] sm:$0xff] %vm689, %v3316
        %3399 = vst.msk [vmem:[#allocation3 + $0x150] sm:$0xff] %vm689, %v3318
        %3400 = vst.msk [vmem:[#allocation3 + $0x168] sm:$0xff] %vm689, %v3320
        %3401 = vst.msk [vmem:[#allocation3 + $0x180] sm:$0xff] %vm689, %v3322
        %3402 = vst.msk [vmem:[#allocation3 + $0x198] sm:$0xff] %vm689, %v3324
        %3403 = vst.msk [vmem:[#allocation3 + $0x1b0] sm:$0xff] %vm689, %v3326
        %3404 = vst.msk [vmem:[#allocation3 + $0x1c8] sm:$0xff] %vm689, %v3328
        %3405 = vst.msk [vmem:[#allocation3 + $0x1e0] sm:$0xff] %vm689, %v3330
        %3406 = vst.msk [vmem:[#allocation3 + $0x1f8] sm:$0xff] %vm689, %v3332
        %3407 = vst.msk [vmem:[#allocation3 + $0x210] sm:$0xff] %vm689, %v3334
        %3408 = vst.msk [vmem:[#allocation3 + $0x228] sm:$0xff] %vm689, %v3336
        %3409 = vst.msk [vmem:[#allocation3 + $0x240] sm:$0xff] %vm689, %v3338
        %3410 = vst.msk [vmem:[#allocation3 + $0x258] sm:$0xff] %vm689, %v3340
        %3411 = vst.msk [vmem:[#allocation3 + $0x270] sm:$0xff] %vm689, %v3342
        %3412 = vst.msk [vmem:[#allocation3 + $0x288] sm:$0xff] %vm689, %v3344
        %3413 = vst.msk [vmem:[#allocation3 + $0x2a0] sm:$0xff] %vm689, %v3346
        %3414 = vst.msk [vmem:[#allocation3 + $0x2b8] sm:$0xff] %vm689, %v3348
        %3415 = vst.msk [vmem:[#allocation3 + $0x2d0] sm:$0xff] %vm689, %v3350
        %3416 = vst.msk [vmem:[#allocation3 + $0x2e8] sm:$0xff] %vm689, %v3352
        %v3417 = vld [vmem:[#allocation2 + $0x2] sm:$0xff]
        %v3418 = vld [vmem:[#allocation2 + $0xa] sm:$0xff]
        %v3419 = vld [vmem:[#allocation2 + $0x1a] sm:$0xff]
        %v3420 = vld [vmem:[#allocation2 + $0x22] sm:$0xff]
        %v3421 = vld [vmem:[#allocation2 + $0x32] sm:$0xff]
        %v3422 = vld [vmem:[#allocation2 + $0x3a] sm:$0xff]
        %v3423 = vld [vmem:[#allocation2 + $0x4a] sm:$0xff]
        %v3424 = vld [vmem:[#allocation2 + $0x52] sm:$0xff]
        %v3425 = vld [vmem:[#allocation2 + $0x62] sm:$0xff]
        %v3426 = vld [vmem:[#allocation2 + $0x6a] sm:$0xff]
        %v3427 = vld [vmem:[#allocation2 + $0x7a] sm:$0xff]
        %v3428 = vld [vmem:[#allocation2 + $0x82] sm:$0xff]
        %v3429 = vld [vmem:[#allocation2 + $0x92] sm:$0xff]
        %v3430 = vld [vmem:[#allocation2 + $0x9a] sm:$0xff]
        %v3431 = vld [vmem:[#allocation2 + $0xaa] sm:$0xff]
        %v3432 = vld [vmem:[#allocation2 + $0xb2] sm:$0xff]
        %v3433 = vld [vmem:[#allocation2 + $0xc2] sm:$0xff]
        %v3434 = vld [vmem:[#allocation2 + $0xca] sm:$0xff]
        %v3435 = vld [vmem:[#allocation2 + $0xda] sm:$0xff]
        %v3436 = vld [vmem:[#allocation2 + $0xe2] sm:$0xff]
        %v3437 = vld [vmem:[#allocation2 + $0xf2] sm:$0xff]
        %v3438 = vld [vmem:[#allocation2 + $0xfa] sm:$0xff]
        %v3439 = vld [vmem:[#allocation2 + $0x10a] sm:$0xff]
        %v3440 = vld [vmem:[#allocation2 + $0x112] sm:$0xff]
        %v3441 = vld [vmem:[#allocation2 + $0x122] sm:$0xff]
        %v3442 = vld [vmem:[#allocation2 + $0x12a] sm:$0xff]
        %v3443 = vld [vmem:[#allocation2 + $0x13a] sm:$0xff]
        %v3444 = vld [vmem:[#allocation2 + $0x142] sm:$0xff]
        %v3445 = vld [vmem:[#allocation2 + $0x152] sm:$0xff]
        %v3446 = vld [vmem:[#allocation2 + $0x15a] sm:$0xff]
        %v3447 = vld [vmem:[#allocation2 + $0x16a] sm:$0xff]
        %v3448 = vld [vmem:[#allocation2 + $0x172] sm:$0xff]
        %3481 = vrot.lane.b32.xlu0 %v3417, 64
        %v3482 = vpop.permute.xlu0 %3481
        %3483 = vrot.lane.b32.xlu0 %v3418, 64
        %v3484 = vpop.permute.xlu0 %3483
        %3485 = vrot.lane.b32.xlu0 %v3419, 64
        %v3486 = vpop.permute.xlu0 %3485
        %3487 = vrot.lane.b32.xlu0 %v3420, 64
        %v3488 = vpop.permute.xlu0 %3487
        %3489 = vrot.lane.b32.xlu0 %v3421, 64
        %v3490 = vpop.permute.xlu0 %3489
        %3491 = vrot.lane.b32.xlu0 %v3422, 64
        %v3492 = vpop.permute.xlu0 %3491
        %3493 = vrot.lane.b32.xlu0 %v3423, 64
        %v3494 = vpop.permute.xlu0 %3493
        %3495 = vrot.lane.b32.xlu0 %v3424, 64
        %v3496 = vpop.permute.xlu0 %3495
        %3497 = vrot.lane.b32.xlu0 %v3425, 64
        %v3498 = vpop.permute.xlu0 %3497
        %3499 = vrot.lane.b32.xlu0 %v3426, 64
        %v3500 = vpop.permute.xlu0 %3499
        %3501 = vrot.lane.b32.xlu0 %v3427, 64
        %v3502 = vpop.permute.xlu0 %3501
        %3503 = vrot.lane.b32.xlu0 %v3428, 64
        %v3504 = vpop.permute.xlu0 %3503
        %3505 = vrot.lane.b32.xlu0 %v3429, 64
        %v3506 = vpop.permute.xlu0 %3505
        %3507 = vrot.lane.b32.xlu0 %v3430, 64
        %v3508 = vpop.permute.xlu0 %3507
        %3509 = vrot.lane.b32.xlu0 %v3431, 64
        %v3510 = vpop.permute.xlu0 %3509
        %3511 = vrot.lane.b32.xlu0 %v3432, 64
        %v3512 = vpop.permute.xlu0 %3511
        %3513 = vrot.lane.b32.xlu0 %v3433, 64
        %v3514 = vpop.permute.xlu0 %3513
        %3515 = vrot.lane.b32.xlu0 %v3434, 64
        %v3516 = vpop.permute.xlu0 %3515
        %3517 = vrot.lane.b32.xlu0 %v3435, 64
        %v3518 = vpop.permute.xlu0 %3517
        %3519 = vrot.lane.b32.xlu0 %v3436, 64
        %v3520 = vpop.permute.xlu0 %3519
        %3521 = vrot.lane.b32.xlu0 %v3437, 64
        %v3522 = vpop.permute.xlu0 %3521
        %3523 = vrot.lane.b32.xlu0 %v3438, 64
        %v3524 = vpop.permute.xlu0 %3523
        %3525 = vrot.lane.b32.xlu0 %v3439, 64
        %v3526 = vpop.permute.xlu0 %3525
        %3527 = vrot.lane.b32.xlu0 %v3440, 64
        %v3528 = vpop.permute.xlu0 %3527
        %3529 = vrot.lane.b32.xlu0 %v3441, 64
        %v3530 = vpop.permute.xlu0 %3529
        %3531 = vrot.lane.b32.xlu0 %v3442, 64
        %v3532 = vpop.permute.xlu0 %3531
        %3533 = vrot.lane.b32.xlu0 %v3443, 64
        %v3534 = vpop.permute.xlu0 %3533
        %3535 = vrot.lane.b32.xlu0 %v3444, 64
        %v3536 = vpop.permute.xlu0 %3535
        %3537 = vrot.lane.b32.xlu0 %v3445, 64
        %v3538 = vpop.permute.xlu0 %3537
        %3539 = vrot.lane.b32.xlu0 %v3446, 64
        %v3540 = vpop.permute.xlu0 %3539
        %3541 = vrot.lane.b32.xlu0 %v3447, 64
        %v3542 = vpop.permute.xlu0 %3541
        %3543 = vrot.lane.b32.xlu0 %v3448, 64
        %v3544 = vpop.permute.xlu0 %3543
        %3577 = vst.msk [vmem:[#allocation3] sm:$0xff] %vm882, %v3482
        %3578 = vst.msk [vmem:[#allocation3 + $0x18] sm:$0xff] %vm882, %v3484
        %3579 = vst.msk [vmem:[#allocation3 + $0x30] sm:$0xff] %vm882, %v3486
        %3580 = vst.msk [vmem:[#allocation3 + $0x48] sm:$0xff] %vm882, %v3488
        %3581 = vst.msk [vmem:[#allocation3 + $0x60] sm:$0xff] %vm882, %v3490
        %3582 = vst.msk [vmem:[#allocation3 + $0x78] sm:$0xff] %vm882, %v3492
        %3583 = vst.msk [vmem:[#allocation3 + $0x90] sm:$0xff] %vm882, %v3494
        %3584 = vst.msk [vmem:[#allocation3 + $0xa8] sm:$0xff] %vm882, %v3496
        %3585 = vst.msk [vmem:[#allocation3 + $0xc0] sm:$0xff] %vm882, %v3498
        %3586 = vst.msk [vmem:[#allocation3 + $0xd8] sm:$0xff] %vm882, %v3500
        %3587 = vst.msk [vmem:[#allocation3 + $0xf0] sm:$0xff] %vm882, %v3502
        %3588 = vst.msk [vmem:[#allocation3 + $0x108] sm:$0xff] %vm882, %v3504
        %3589 = vst.msk [vmem:[#allocation3 + $0x120] sm:$0xff] %vm882, %v3506
        %3590 = vst.msk [vmem:[#allocation3 + $0x138] sm:$0xff] %vm882, %v3508
        %3591 = vst.msk [vmem:[#allocation3 + $0x150] sm:$0xff] %vm882, %v3510
        %3592 = vst.msk [vmem:[#allocation3 + $0x168] sm:$0xff] %vm882, %v3512
        %3593 = vst.msk [vmem:[#allocation3 + $0x180] sm:$0xff] %vm882, %v3514
        %3594 = vst.msk [vmem:[#allocation3 + $0x198] sm:$0xff] %vm882, %v3516
        %3595 = vst.msk [vmem:[#allocation3 + $0x1b0] sm:$0xff] %vm882, %v3518
        %3596 = vst.msk [vmem:[#allocation3 + $0x1c8] sm:$0xff] %vm882, %v3520
        %3597 = vst.msk [vmem:[#allocation3 + $0x1e0] sm:$0xff] %vm882, %v3522
        %3598 = vst.msk [vmem:[#allocation3 + $0x1f8] sm:$0xff] %vm882, %v3524
        %3599 = vst.msk [vmem:[#allocation3 + $0x210] sm:$0xff] %vm882, %v3526
        %3600 = vst.msk [vmem:[#allocation3 + $0x228] sm:$0xff] %vm882, %v3528
        %3601 = vst.msk [vmem:[#allocation3 + $0x240] sm:$0xff] %vm882, %v3530
        %3602 = vst.msk [vmem:[#allocation3 + $0x258] sm:$0xff] %vm882, %v3532
        %3603 = vst.msk [vmem:[#allocation3 + $0x270] sm:$0xff] %vm882, %v3534
        %3604 = vst.msk [vmem:[#allocation3 + $0x288] sm:$0xff] %vm882, %v3536
        %3605 = vst.msk [vmem:[#allocation3 + $0x2a0] sm:$0xff] %vm882, %v3538
        %3606 = vst.msk [vmem:[#allocation3 + $0x2b8] sm:$0xff] %vm882, %v3540
        %3607 = vst.msk [vmem:[#allocation3 + $0x2d0] sm:$0xff] %vm882, %v3542
        %3608 = vst.msk [vmem:[#allocation3 + $0x2e8] sm:$0xff] %vm882, %v3544
        %v3609 = vld [vmem:[%s367] sm:$0xff]
        %v3610 = vld [vmem:[%s367 + $0x8] sm:$0xff]
        %v3611 = vld [vmem:[%s367 + $0x18] sm:$0xff]
        %v3612 = vld [vmem:[%s367 + $0x20] sm:$0xff]
        %v3613 = vld [vmem:[%s367 + $0x30] sm:$0xff]
        %v3614 = vld [vmem:[%s367 + $0x38] sm:$0xff]
        %v3615 = vld [vmem:[%s367 + $0x48] sm:$0xff]
        %v3616 = vld [vmem:[%s367 + $0x50] sm:$0xff]
        %v3617 = vld [vmem:[%s367 + $0x60] sm:$0xff]
        %v3618 = vld [vmem:[%s367 + $0x68] sm:$0xff]
        %v3619 = vld [vmem:[%s367 + $0x78] sm:$0xff]
        %v3620 = vld [vmem:[%s367 + $0x80] sm:$0xff]
        %v3621 = vld [vmem:[%s367 + $0x90] sm:$0xff]
        %v3622 = vld [vmem:[%s367 + $0x98] sm:$0xff]
        %v3623 = vld [vmem:[%s367 + $0xa8] sm:$0xff]
        %v3624 = vld [vmem:[%s367 + $0xb0] sm:$0xff]
        %v3625 = vld [vmem:[%s367 + $0xc0] sm:$0xff]
        %v3626 = vld [vmem:[%s367 + $0xc8] sm:$0xff]
        %v3627 = vld [vmem:[%s367 + $0xd8] sm:$0xff]
        %v3628 = vld [vmem:[%s367 + $0xe0] sm:$0xff]
        %v3629 = vld [vmem:[%s367 + $0xf0] sm:$0xff]
        %v3630 = vld [vmem:[%s367 + $0xf8] sm:$0xff]
        %v3631 = vld [vmem:[%s367 + $0x108] sm:$0xff]
        %v3632 = vld [vmem:[%s367 + $0x110] sm:$0xff]
        %v3633 = vld [vmem:[%s367 + $0x120] sm:$0xff]
        %v3634 = vld [vmem:[%s367 + $0x128] sm:$0xff]
        %v3635 = vld [vmem:[%s367 + $0x138] sm:$0xff]
        %v3636 = vld [vmem:[%s367 + $0x140] sm:$0xff]
        %v3637 = vld [vmem:[%s367 + $0x150] sm:$0xff]
        %v3638 = vld [vmem:[%s367 + $0x158] sm:$0xff]
        %v3639 = vld [vmem:[%s367 + $0x168] sm:$0xff]
        %v3640 = vld [vmem:[%s367 + $0x170] sm:$0xff]
        %3673 = vrot.lane.b32.xlu0 %v3609, 96
        %v3674 = vpop.permute.xlu0 %3673
        %3675 = vrot.lane.b32.xlu0 %v3610, 96
        %v3676 = vpop.permute.xlu0 %3675
        %3677 = vrot.lane.b32.xlu0 %v3611, 96
        %v3678 = vpop.permute.xlu0 %3677
        %3679 = vrot.lane.b32.xlu0 %v3612, 96
        %v3680 = vpop.permute.xlu0 %3679
        %3681 = vrot.lane.b32.xlu0 %v3613, 96
        %v3682 = vpop.permute.xlu0 %3681
        %3683 = vrot.lane.b32.xlu0 %v3614, 96
        %v3684 = vpop.permute.xlu0 %3683
        %3685 = vrot.lane.b32.xlu0 %v3615, 96
        %v3686 = vpop.permute.xlu0 %3685
        %3687 = vrot.lane.b32.xlu0 %v3616, 96
        %v3688 = vpop.permute.xlu0 %3687
        %3689 = vrot.lane.b32.xlu0 %v3617, 96
        %v3690 = vpop.permute.xlu0 %3689
        %3691 = vrot.lane.b32.xlu0 %v3618, 96
        %v3692 = vpop.permute.xlu0 %3691
        %3693 = vrot.lane.b32.xlu0 %v3619, 96
        %v3694 = vpop.permute.xlu0 %3693
        %3695 = vrot.lane.b32.xlu0 %v3620, 96
        %v3696 = vpop.permute.xlu0 %3695
        %3697 = vrot.lane.b32.xlu0 %v3621, 96
        %v3698 = vpop.permute.xlu0 %3697
        %3699 = vrot.lane.b32.xlu0 %v3622, 96
        %v3700 = vpop.permute.xlu0 %3699
        %3701 = vrot.lane.b32.xlu0 %v3623, 96
        %v3702 = vpop.permute.xlu0 %3701
        %3703 = vrot.lane.b32.xlu0 %v3624, 96
        %v3704 = vpop.permute.xlu0 %3703
        %3705 = vrot.lane.b32.xlu0 %v3625, 96
        %v3706 = vpop.permute.xlu0 %3705
        %3707 = vrot.lane.b32.xlu0 %v3626, 96
        %v3708 = vpop.permute.xlu0 %3707
        %3709 = vrot.lane.b32.xlu0 %v3627, 96
        %v3710 = vpop.permute.xlu0 %3709
        %3711 = vrot.lane.b32.xlu0 %v3628, 96
        %v3712 = vpop.permute.xlu0 %3711
        %3713 = vrot.lane.b32.xlu0 %v3629, 96
        %v3714 = vpop.permute.xlu0 %3713
        %3715 = vrot.lane.b32.xlu0 %v3630, 96
        %v3716 = vpop.permute.xlu0 %3715
        %3717 = vrot.lane.b32.xlu0 %v3631, 96
        %v3718 = vpop.permute.xlu0 %3717
        %3719 = vrot.lane.b32.xlu0 %v3632, 96
        %v3720 = vpop.permute.xlu0 %3719
        %3721 = vrot.lane.b32.xlu0 %v3633, 96
        %v3722 = vpop.permute.xlu0 %3721
        %3723 = vrot.lane.b32.xlu0 %v3634, 96
        %v3724 = vpop.permute.xlu0 %3723
        %3725 = vrot.lane.b32.xlu0 %v3635, 96
        %v3726 = vpop.permute.xlu0 %3725
        %3727 = vrot.lane.b32.xlu0 %v3636, 96
        %v3728 = vpop.permute.xlu0 %3727
        %3729 = vrot.lane.b32.xlu0 %v3637, 96
        %v3730 = vpop.permute.xlu0 %3729
        %3731 = vrot.lane.b32.xlu0 %v3638, 96
        %v3732 = vpop.permute.xlu0 %3731
        %3733 = vrot.lane.b32.xlu0 %v3639, 96
        %v3734 = vpop.permute.xlu0 %3733
        %3735 = vrot.lane.b32.xlu0 %v3640, 96
        %v3736 = vpop.permute.xlu0 %3735
        %3769 = vst.msk [vmem:[#allocation3] sm:$0xff] %vm1075, %v3674
        %3770 = vst.msk [vmem:[#allocation3 + $0x18] sm:$0xff] %vm1075, %v3676
        %3771 = vst.msk [vmem:[#allocation3 + $0x30] sm:$0xff] %vm1075, %v3678
        %3772 = vst.msk [vmem:[#allocation3 + $0x48] sm:$0xff] %vm1075, %v3680
        %3773 = vst.msk [vmem:[#allocation3 + $0x60] sm:$0xff] %vm1075, %v3682
        %3774 = vst.msk [vmem:[#allocation3 + $0x78] sm:$0xff] %vm1075, %v3684
        %3775 = vst.msk [vmem:[#allocation3 + $0x90] sm:$0xff] %vm1075, %v3686
        %3776 = vst.msk [vmem:[#allocation3 + $0xa8] sm:$0xff] %vm1075, %v3688
        %3777 = vst.msk [vmem:[#allocation3 + $0xc0] sm:$0xff] %vm1075, %v3690
        %3778 = vst.msk [vmem:[#allocation3 + $0xd8] sm:$0xff] %vm1075, %v3692
        %3779 = vst.msk [vmem:[#allocation3 + $0xf0] sm:$0xff] %vm1075, %v3694
        %3780 = vst.msk [vmem:[#allocation3 + $0x108] sm:$0xff] %vm1075, %v3696
        %3781 = vst.msk [vmem:[#allocation3 + $0x120] sm:$0xff] %vm1075, %v3698
        %3782 = vst.msk [vmem:[#allocation3 + $0x138] sm:$0xff] %vm1075, %v3700
        %3783 = vst.msk [vmem:[#allocation3 + $0x150] sm:$0xff] %vm1075, %v3702
        %3784 = vst.msk [vmem:[#allocation3 + $0x168] sm:$0xff] %vm1075, %v3704
        %3785 = vst.msk [vmem:[#allocation3 + $0x180] sm:$0xff] %vm1075, %v3706
        %3786 = vst.msk [vmem:[#allocation3 + $0x198] sm:$0xff] %vm1075, %v3708
        %3787 = vst.msk [vmem:[#allocation3 + $0x1b0] sm:$0xff] %vm1075, %v3710
        %3788 = vst.msk [vmem:[#allocation3 + $0x1c8] sm:$0xff] %vm1075, %v3712
        %3789 = vst.msk [vmem:[#allocation3 + $0x1e0] sm:$0xff] %vm1075, %v3714
        %3790 = vst.msk [vmem:[#allocation3 + $0x1f8] sm:$0xff] %vm1075, %v3716
        %3791 = vst.msk [vmem:[#allocation3 + $0x210] sm:$0xff] %vm1075, %v3718
        %3792 = vst.msk [vmem:[#allocation3 + $0x228] sm:$0xff] %vm1075, %v3720
        %3793 = vst.msk [vmem:[#allocation3 + $0x240] sm:$0xff] %vm1075, %v3722
        %3794 = vst.msk [vmem:[#allocation3 + $0x258] sm:$0xff] %vm1075, %v3724
        %3795 = vst.msk [vmem:[#allocation3 + $0x270] sm:$0xff] %vm1075, %v3726
        %3796 = vst.msk [vmem:[#allocation3 + $0x288] sm:$0xff] %vm1075, %v3728
        %3797 = vst.msk [vmem:[#allocation3 + $0x2a0] sm:$0xff] %vm1075, %v3730
        %3798 = vst.msk [vmem:[#allocation3 + $0x2b8] sm:$0xff] %vm1075, %v3732
        %3799 = vst.msk [vmem:[#allocation3 + $0x2d0] sm:$0xff] %vm1075, %v3734
        %3800 = vst.msk [vmem:[#allocation3 + $0x2e8] sm:$0xff] %vm1075, %v3736
        %v3801 = vld [vmem:[%s367 + $0x1] sm:$0xff]
        %v3802 = vld [vmem:[%s367 + $0x9] sm:$0xff]
        %v3803 = vld [vmem:[%s367 + $0x19] sm:$0xff]
        %v3804 = vld [vmem:[%s367 + $0x21] sm:$0xff]
        %v3805 = vld [vmem:[%s367 + $0x31] sm:$0xff]
        %v3806 = vld [vmem:[%s367 + $0x39] sm:$0xff]
        %v3807 = vld [vmem:[%s367 + $0x49] sm:$0xff]
        %v3808 = vld [vmem:[%s367 + $0x51] sm:$0xff]
        %v3809 = vld [vmem:[%s367 + $0x61] sm:$0xff]
        %v3810 = vld [vmem:[%s367 + $0x69] sm:$0xff]
        %v3811 = vld [vmem:[%s367 + $0x79] sm:$0xff]
        %v3812 = vld [vmem:[%s367 + $0x81] sm:$0xff]
        %v3813 = vld [vmem:[%s367 + $0x91] sm:$0xff]
        %v3814 = vld [vmem:[%s367 + $0x99] sm:$0xff]
        %v3815 = vld [vmem:[%s367 + $0xa9] sm:$0xff]
        %v3816 = vld [vmem:[%s367 + $0xb1] sm:$0xff]
        %v3817 = vld [vmem:[%s367 + $0xc1] sm:$0xff]
        %v3818 = vld [vmem:[%s367 + $0xc9] sm:$0xff]
        %v3819 = vld [vmem:[%s367 + $0xd9] sm:$0xff]
        %v3820 = vld [vmem:[%s367 + $0xe1] sm:$0xff]
        %v3821 = vld [vmem:[%s367 + $0xf1] sm:$0xff]
        %v3822 = vld [vmem:[%s367 + $0xf9] sm:$0xff]
        %v3823 = vld [vmem:[%s367 + $0x109] sm:$0xff]
        %v3824 = vld [vmem:[%s367 + $0x111] sm:$0xff]
        %v3825 = vld [vmem:[%s367 + $0x121] sm:$0xff]
        %v3826 = vld [vmem:[%s367 + $0x129] sm:$0xff]
        %v3827 = vld [vmem:[%s367 + $0x139] sm:$0xff]
        %v3828 = vld [vmem:[%s367 + $0x141] sm:$0xff]
        %v3829 = vld [vmem:[%s367 + $0x151] sm:$0xff]
        %v3830 = vld [vmem:[%s367 + $0x159] sm:$0xff]
        %v3831 = vld [vmem:[%s367 + $0x169] sm:$0xff]
        %v3832 = vld [vmem:[%s367 + $0x171] sm:$0xff]
        %3833 = vst.msk [vmem:[#allocation3 + $0x8] sm:$0xff] %vm358, %v3801
        %3834 = vst.msk [vmem:[#allocation3 + $0x20] sm:$0xff] %vm358, %v3802
        %3835 = vst.msk [vmem:[#allocation3 + $0x38] sm:$0xff] %vm358, %v3803
        %3836 = vst.msk [vmem:[#allocation3 + $0x50] sm:$0xff] %vm358, %v3804
        %3837 = vst.msk [vmem:[#allocation3 + $0x68] sm:$0xff] %vm358, %v3805
        %3838 = vst.msk [vmem:[#allocation3 + $0x80] sm:$0xff] %vm358, %v3806
        %3839 = vst.msk [vmem:[#allocation3 + $0x98] sm:$0xff] %vm358, %v3807
        %3840 = vst.msk [vmem:[#allocation3 + $0xb0] sm:$0xff] %vm358, %v3808
        %3841 = vst.msk [vmem:[#allocation3 + $0xc8] sm:$0xff] %vm358, %v3809
        %3842 = vst.msk [vmem:[#allocation3 + $0xe0] sm:$0xff] %vm358, %v3810
        %3843 = vst.msk [vmem:[#allocation3 + $0xf8] sm:$0xff] %vm358, %v3811
        %3844 = vst.msk [vmem:[#allocation3 + $0x110] sm:$0xff] %vm358, %v3812
        %3845 = vst.msk [vmem:[#allocation3 + $0x128] sm:$0xff] %vm358, %v3813
        %3846 = vst.msk [vmem:[#allocation3 + $0x140] sm:$0xff] %vm358, %v3814
        %3847 = vst.msk [vmem:[#allocation3 + $0x158] sm:$0xff] %vm358, %v3815
        %3848 = vst.msk [vmem:[#allocation3 + $0x170] sm:$0xff] %vm358, %v3816
        %3849 = vst.msk [vmem:[#allocation3 + $0x188] sm:$0xff] %vm358, %v3817
        %3850 = vst.msk [vmem:[#allocation3 + $0x1a0] sm:$0xff] %vm358, %v3818
        %3851 = vst.msk [vmem:[#allocation3 + $0x1b8] sm:$0xff] %vm358, %v3819
        %3852 = vst.msk [vmem:[#allocation3 + $0x1d0] sm:$0xff] %vm358, %v3820
        %3853 = vst.msk [vmem:[#allocation3 + $0x1e8] sm:$0xff] %vm358, %v3821
        %3854 = vst.msk [vmem:[#allocation3 + $0x200] sm:$0xff] %vm358, %v3822
        %3855 = vst.msk [vmem:[#allocation3 + $0x218] sm:$0xff] %vm358, %v3823
        %3856 = vst.msk [vmem:[#allocation3 + $0x230] sm:$0xff] %vm358, %v3824
        %3857 = vst.msk [vmem:[#allocation3 + $0x248] sm:$0xff] %vm358, %v3825
        %3858 = vst.msk [vmem:[#allocation3 + $0x260] sm:$0xff] %vm358, %v3826
        %3859 = vst.msk [vmem:[#allocation3 + $0x278] sm:$0xff] %vm358, %v3827
        %3860 = vst.msk [vmem:[#allocation3 + $0x290] sm:$0xff] %vm358, %v3828
        %3861 = vst.msk [vmem:[#allocation3 + $0x2a8] sm:$0xff] %vm358, %v3829
        %3862 = vst.msk [vmem:[#allocation3 + $0x2c0] sm:$0xff] %vm358, %v3830
        %3863 = vst.msk [vmem:[#allocation3 + $0x2d8] sm:$0xff] %vm358, %v3831
        %3864 = vst.msk [vmem:[#allocation3 + $0x2f0] sm:$0xff] %vm358, %v3832
        %v3865 = vld [vmem:[%s367 + $0x2] sm:$0xff]
        %v3866 = vld [vmem:[%s367 + $0xa] sm:$0xff]
        %v3867 = vld [vmem:[%s367 + $0x1a] sm:$0xff]
        %v3868 = vld [vmem:[%s367 + $0x22] sm:$0xff]
        %v3869 = vld [vmem:[%s367 + $0x32] sm:$0xff]
        %v3870 = vld [vmem:[%s367 + $0x3a] sm:$0xff]
        %v3871 = vld [vmem:[%s367 + $0x4a] sm:$0xff]
        %v3872 = vld [vmem:[%s367 + $0x52] sm:$0xff]
        %v3873 = vld [vmem:[%s367 + $0x62] sm:$0xff]
        %v3874 = vld [vmem:[%s367 + $0x6a] sm:$0xff]
        %v3875 = vld [vmem:[%s367 + $0x7a] sm:$0xff]
        %v3876 = vld [vmem:[%s367 + $0x82] sm:$0xff]
        %v3877 = vld [vmem:[%s367 + $0x92] sm:$0xff]
        %v3878 = vld [vmem:[%s367 + $0x9a] sm:$0xff]
        %v3879 = vld [vmem:[%s367 + $0xaa] sm:$0xff]
        %v3880 = vld [vmem:[%s367 + $0xb2] sm:$0xff]
        %v3881 = vld [vmem:[%s367 + $0xc2] sm:$0xff]
        %v3882 = vld [vmem:[%s367 + $0xca] sm:$0xff]
        %v3883 = vld [vmem:[%s367 + $0xda] sm:$0xff]
        %v3884 = vld [vmem:[%s367 + $0xe2] sm:$0xff]
        %v3885 = vld [vmem:[%s367 + $0xf2] sm:$0xff]
        %v3886 = vld [vmem:[%s367 + $0xfa] sm:$0xff]
        %v3887 = vld [vmem:[%s367 + $0x10a] sm:$0xff]
        %v3888 = vld [vmem:[%s367 + $0x112] sm:$0xff]
        %v3889 = vld [vmem:[%s367 + $0x122] sm:$0xff]
        %v3890 = vld [vmem:[%s367 + $0x12a] sm:$0xff]
        %v3891 = vld [vmem:[%s367 + $0x13a] sm:$0xff]
        %v3892 = vld [vmem:[%s367 + $0x142] sm:$0xff]
        %v3893 = vld [vmem:[%s367 + $0x152] sm:$0xff]
        %v3894 = vld [vmem:[%s367 + $0x15a] sm:$0xff]
        %v3895 = vld [vmem:[%s367 + $0x16a] sm:$0xff]
        %v3896 = vld [vmem:[%s367 + $0x172] sm:$0xff]
        %3929 = vrot.lane.b32.xlu0 %v3865, 32
        %v3930 = vpop.permute.xlu0 %3929
        %3931 = vrot.lane.b32.xlu0 %v3866, 32
        %v3932 = vpop.permute.xlu0 %3931
        %3933 = vrot.lane.b32.xlu0 %v3867, 32
        %v3934 = vpop.permute.xlu0 %3933
        %3935 = vrot.lane.b32.xlu0 %v3868, 32
        %v3936 = vpop.permute.xlu0 %3935
        %3937 = vrot.lane.b32.xlu0 %v3869, 32
        %v3938 = vpop.permute.xlu0 %3937
        %3939 = vrot.lane.b32.xlu0 %v3870, 32
        %v3940 = vpop.permute.xlu0 %3939
        %3941 = vrot.lane.b32.xlu0 %v3871, 32
        %v3942 = vpop.permute.xlu0 %3941
        %3943 = vrot.lane.b32.xlu0 %v3872, 32
        %v3944 = vpop.permute.xlu0 %3943
        %3945 = vrot.lane.b32.xlu0 %v3873, 32
        %v3946 = vpop.permute.xlu0 %3945
        %3947 = vrot.lane.b32.xlu0 %v3874, 32
        %v3948 = vpop.permute.xlu0 %3947
        %3949 = vrot.lane.b32.xlu0 %v3875, 32
        %v3950 = vpop.permute.xlu0 %3949
        %3951 = vrot.lane.b32.xlu0 %v3876, 32
        %v3952 = vpop.permute.xlu0 %3951
        %3953 = vrot.lane.b32.xlu0 %v3877, 32
        %v3954 = vpop.permute.xlu0 %3953
        %3955 = vrot.lane.b32.xlu0 %v3878, 32
        %v3956 = vpop.permute.xlu0 %3955
        %3957 = vrot.lane.b32.xlu0 %v3879, 32
        %v3958 = vpop.permute.xlu0 %3957
        %3959 = vrot.lane.b32.xlu0 %v3880, 32
        %v3960 = vpop.permute.xlu0 %3959
        %3961 = vrot.lane.b32.xlu0 %v3881, 32
        %v3962 = vpop.permute.xlu0 %3961
        %3963 = vrot.lane.b32.xlu0 %v3882, 32
        %v3964 = vpop.permute.xlu0 %3963
        %3965 = vrot.lane.b32.xlu0 %v3883, 32
        %v3966 = vpop.permute.xlu0 %3965
        %3967 = vrot.lane.b32.xlu0 %v3884, 32
        %v3968 = vpop.permute.xlu0 %3967
        %3969 = vrot.lane.b32.xlu0 %v3885, 32
        %v3970 = vpop.permute.xlu0 %3969
        %3971 = vrot.lane.b32.xlu0 %v3886, 32
        %v3972 = vpop.permute.xlu0 %3971
        %3973 = vrot.lane.b32.xlu0 %v3887, 32
        %v3974 = vpop.permute.xlu0 %3973
        %3975 = vrot.lane.b32.xlu0 %v3888, 32
        %v3976 = vpop.permute.xlu0 %3975
        %3977 = vrot.lane.b32.xlu0 %v3889, 32
        %v3978 = vpop.permute.xlu0 %3977
        %3979 = vrot.lane.b32.xlu0 %v3890, 32
        %v3980 = vpop.permute.xlu0 %3979
        %3981 = vrot.lane.b32.xlu0 %v3891, 32
        %v3982 = vpop.permute.xlu0 %3981
        %3983 = vrot.lane.b32.xlu0 %v3892, 32
        %v3984 = vpop.permute.xlu0 %3983
        %3985 = vrot.lane.b32.xlu0 %v3893, 32
        %v3986 = vpop.permute.xlu0 %3985
        %3987 = vrot.lane.b32.xlu0 %v3894, 32
        %v3988 = vpop.permute.xlu0 %3987
        %3989 = vrot.lane.b32.xlu0 %v3895, 32
        %v3990 = vpop.permute.xlu0 %3989
        %3991 = vrot.lane.b32.xlu0 %v3896, 32
        %v3992 = vpop.permute.xlu0 %3991
        %4025 = vst.msk [vmem:[#allocation3 + $0x8] sm:$0xff] %vm689, %v3930
        %4026 = vst.msk [vmem:[#allocation3 + $0x20] sm:$0xff] %vm689, %v3932
        %4027 = vst.msk [vmem:[#allocation3 + $0x38] sm:$0xff] %vm689, %v3934
        %4028 = vst.msk [vmem:[#allocation3 + $0x50] sm:$0xff] %vm689, %v3936
        %4029 = vst.msk [vmem:[#allocation3 + $0x68] sm:$0xff] %vm689, %v3938
        %4030 = vst.msk [vmem:[#allocation3 + $0x80] sm:$0xff] %vm689, %v3940
        %4031 = vst.msk [vmem:[#allocation3 + $0x98] sm:$0xff] %vm689, %v3942
        %4032 = vst.msk [vmem:[#allocation3 + $0xb0] sm:$0xff] %vm689, %v3944
        %4033 = vst.msk [vmem:[#allocation3 + $0xc8] sm:$0xff] %vm689, %v3946
        %4034 = vst.msk [vmem:[#allocation3 + $0xe0] sm:$0xff] %vm689, %v3948
        %4035 = vst.msk [vmem:[#allocation3 + $0xf8] sm:$0xff] %vm689, %v3950
        %4036 = vst.msk [vmem:[#allocation3 + $0x110] sm:$0xff] %vm689, %v3952
        %4037 = vst.msk [vmem:[#allocation3 + $0x128] sm:$0xff] %vm689, %v3954
        %4038 = vst.msk [vmem:[#allocation3 + $0x140] sm:$0xff] %vm689, %v3956
        %4039 = vst.msk [vmem:[#allocation3 + $0x158] sm:$0xff] %vm689, %v3958
        %4040 = vst.msk [vmem:[#allocation3 + $0x170] sm:$0xff] %vm689, %v3960
        %4041 = vst.msk [vmem:[#allocation3 + $0x188] sm:$0xff] %vm689, %v3962
        %4042 = vst.msk [vmem:[#allocation3 + $0x1a0] sm:$0xff] %vm689, %v3964
        %4043 = vst.msk [vmem:[#allocation3 + $0x1b8] sm:$0xff] %vm689, %v3966
        %4044 = vst.msk [vmem:[#allocation3 + $0x1d0] sm:$0xff] %vm689, %v3968
        %4045 = vst.msk [vmem:[#allocation3 + $0x1e8] sm:$0xff] %vm689, %v3970
        %4046 = vst.msk [vmem:[#allocation3 + $0x200] sm:$0xff] %vm689, %v3972
        %4047 = vst.msk [vmem:[#allocation3 + $0x218] sm:$0xff] %vm689, %v3974
        %4048 = vst.msk [vmem:[#allocation3 + $0x230] sm:$0xff] %vm689, %v3976
        %4049 = vst.msk [vmem:[#allocation3 + $0x248] sm:$0xff] %vm689, %v3978
        %4050 = vst.msk [vmem:[#allocation3 + $0x260] sm:$0xff] %vm689, %v3980
        %4051 = vst.msk [vmem:[#allocation3 + $0x278] sm:$0xff] %vm689, %v3982
        %4052 = vst.msk [vmem:[#allocation3 + $0x290] sm:$0xff] %vm689, %v3984
        %4053 = vst.msk [vmem:[#allocation3 + $0x2a8] sm:$0xff] %vm689, %v3986
        %4054 = vst.msk [vmem:[#allocation3 + $0x2c0] sm:$0xff] %vm689, %v3988
        %4055 = vst.msk [vmem:[#allocation3 + $0x2d8] sm:$0xff] %vm689, %v3990
        %4056 = vst.msk [vmem:[#allocation3 + $0x2f0] sm:$0xff] %vm689, %v3992
        %v4057 = vld [vmem:[%s1364] sm:$0xff]
        %v4058 = vld [vmem:[%s1364 + $0x8] sm:$0xff]
        %v4059 = vld [vmem:[%s1364 + $0x18] sm:$0xff]
        %v4060 = vld [vmem:[%s1364 + $0x20] sm:$0xff]
        %v4061 = vld [vmem:[%s1364 + $0x30] sm:$0xff]
        %v4062 = vld [vmem:[%s1364 + $0x38] sm:$0xff]
        %v4063 = vld [vmem:[%s1364 + $0x48] sm:$0xff]
        %v4064 = vld [vmem:[%s1364 + $0x50] sm:$0xff]
        %v4065 = vld [vmem:[%s1364 + $0x60] sm:$0xff]
        %v4066 = vld [vmem:[%s1364 + $0x68] sm:$0xff]
        %v4067 = vld [vmem:[%s1364 + $0x78] sm:$0xff]
        %v4068 = vld [vmem:[%s1364 + $0x80] sm:$0xff]
        %v4069 = vld [vmem:[%s1364 + $0x90] sm:$0xff]
        %v4070 = vld [vmem:[%s1364 + $0x98] sm:$0xff]
        %v4071 = vld [vmem:[%s1364 + $0xa8] sm:$0xff]
        %v4072 = vld [vmem:[%s1364 + $0xb0] sm:$0xff]
        %v4073 = vld [vmem:[%s1364 + $0xc0] sm:$0xff]
        %v4074 = vld [vmem:[%s1364 + $0xc8] sm:$0xff]
        %v4075 = vld [vmem:[%s1364 + $0xd8] sm:$0xff]
        %v4076 = vld [vmem:[%s1364 + $0xe0] sm:$0xff]
        %v4077 = vld [vmem:[%s1364 + $0xf0] sm:$0xff]
        %v4078 = vld [vmem:[%s1364 + $0xf8] sm:$0xff]
        %v4079 = vld [vmem:[%s1364 + $0x108] sm:$0xff]
        %v4080 = vld [vmem:[%s1364 + $0x110] sm:$0xff]
        %v4081 = vld [vmem:[%s1364 + $0x120] sm:$0xff]
        %v4082 = vld [vmem:[%s1364 + $0x128] sm:$0xff]
        %v4083 = vld [vmem:[%s1364 + $0x138] sm:$0xff]
        %v4084 = vld [vmem:[%s1364 + $0x140] sm:$0xff]
        %v4085 = vld [vmem:[%s1364 + $0x150] sm:$0xff]
        %v4086 = vld [vmem:[%s1364 + $0x158] sm:$0xff]
        %v4087 = vld [vmem:[%s1364 + $0x168] sm:$0xff]
        %v4088 = vld [vmem:[%s1364 + $0x170] sm:$0xff]
        %4121 = vrot.lane.b32.xlu0 %v4057, 64
        %v4122 = vpop.permute.xlu0 %4121
        %4123 = vrot.lane.b32.xlu0 %v4058, 64
        %v4124 = vpop.permute.xlu0 %4123
        %4125 = vrot.lane.b32.xlu0 %v4059, 64
        %v4126 = vpop.permute.xlu0 %4125
        %4127 = vrot.lane.b32.xlu0 %v4060, 64
        %v4128 = vpop.permute.xlu0 %4127
        %4129 = vrot.lane.b32.xlu0 %v4061, 64
        %v4130 = vpop.permute.xlu0 %4129
        %4131 = vrot.lane.b32.xlu0 %v4062, 64
        %v4132 = vpop.permute.xlu0 %4131
        %4133 = vrot.lane.b32.xlu0 %v4063, 64
        %v4134 = vpop.permute.xlu0 %4133
        %4135 = vrot.lane.b32.xlu0 %v4064, 64
        %v4136 = vpop.permute.xlu0 %4135
        %4137 = vrot.lane.b32.xlu0 %v4065, 64
        %v4138 = vpop.permute.xlu0 %4137
        %4139 = vrot.lane.b32.xlu0 %v4066, 64
        %v4140 = vpop.permute.xlu0 %4139
        %4141 = vrot.lane.b32.xlu0 %v4067, 64
        %v4142 = vpop.permute.xlu0 %4141
        %4143 = vrot.lane.b32.xlu0 %v4068, 64
        %v4144 = vpop.permute.xlu0 %4143
        %4145 = vrot.lane.b32.xlu0 %v4069, 64
        %v4146 = vpop.permute.xlu0 %4145
        %4147 = vrot.lane.b32.xlu0 %v4070, 64
        %v4148 = vpop.permute.xlu0 %4147
        %4149 = vrot.lane.b32.xlu0 %v4071, 64
        %v4150 = vpop.permute.xlu0 %4149
        %4151 = vrot.lane.b32.xlu0 %v4072, 64
        %v4152 = vpop.permute.xlu0 %4151
        %4153 = vrot.lane.b32.xlu0 %v4073, 64
        %v4154 = vpop.permute.xlu0 %4153
        %4155 = vrot.lane.b32.xlu0 %v4074, 64
        %v4156 = vpop.permute.xlu0 %4155
        %4157 = vrot.lane.b32.xlu0 %v4075, 64
        %v4158 = vpop.permute.xlu0 %4157
        %4159 = vrot.lane.b32.xlu0 %v4076, 64
        %v4160 = vpop.permute.xlu0 %4159
        %4161 = vrot.lane.b32.xlu0 %v4077, 64
        %v4162 = vpop.permute.xlu0 %4161
        %4163 = vrot.lane.b32.xlu0 %v4078, 64
        %v4164 = vpop.permute.xlu0 %4163
        %4165 = vrot.lane.b32.xlu0 %v4079, 64
        %v4166 = vpop.permute.xlu0 %4165
        %4167 = vrot.lane.b32.xlu0 %v4080, 64
        %v4168 = vpop.permute.xlu0 %4167
        %4169 = vrot.lane.b32.xlu0 %v4081, 64
        %v4170 = vpop.permute.xlu0 %4169
        %4171 = vrot.lane.b32.xlu0 %v4082, 64
        %v4172 = vpop.permute.xlu0 %4171
        %4173 = vrot.lane.b32.xlu0 %v4083, 64
        %v4174 = vpop.permute.xlu0 %4173
        %4175 = vrot.lane.b32.xlu0 %v4084, 64
        %v4176 = vpop.permute.xlu0 %4175
        %4177 = vrot.lane.b32.xlu0 %v4085, 64
        %v4178 = vpop.permute.xlu0 %4177
        %4179 = vrot.lane.b32.xlu0 %v4086, 64
        %v4180 = vpop.permute.xlu0 %4179
        %4181 = vrot.lane.b32.xlu0 %v4087, 64
        %v4182 = vpop.permute.xlu0 %4181
        %4183 = vrot.lane.b32.xlu0 %v4088, 64
        %v4184 = vpop.permute.xlu0 %4183
        %4217 = vst.msk [vmem:[#allocation3 + $0x8] sm:$0xff] %vm882, %v4122
        %4218 = vst.msk [vmem:[#allocation3 + $0x20] sm:$0xff] %vm882, %v4124
        %4219 = vst.msk [vmem:[#allocation3 + $0x38] sm:$0xff] %vm882, %v4126
        %4220 = vst.msk [vmem:[#allocation3 + $0x50] sm:$0xff] %vm882, %v4128
        %4221 = vst.msk [vmem:[#allocation3 + $0x68] sm:$0xff] %vm882, %v4130
        %4222 = vst.msk [vmem:[#allocation3 + $0x80] sm:$0xff] %vm882, %v4132
        %4223 = vst.msk [vmem:[#allocation3 + $0x98] sm:$0xff] %vm882, %v4134
        %4224 = vst.msk [vmem:[#allocation3 + $0xb0] sm:$0xff] %vm882, %v4136
        %4225 = vst.msk [vmem:[#allocation3 + $0xc8] sm:$0xff] %vm882, %v4138
        %4226 = vst.msk [vmem:[#allocation3 + $0xe0] sm:$0xff] %vm882, %v4140
        %4227 = vst.msk [vmem:[#allocation3 + $0xf8] sm:$0xff] %vm882, %v4142
        %4228 = vst.msk [vmem:[#allocation3 + $0x110] sm:$0xff] %vm882, %v4144
        %4229 = vst.msk [vmem:[#allocation3 + $0x128] sm:$0xff] %vm882, %v4146
        %4230 = vst.msk [vmem:[#allocation3 + $0x140] sm:$0xff] %vm882, %v4148
        %4231 = vst.msk [vmem:[#allocation3 + $0x158] sm:$0xff] %vm882, %v4150
        %4232 = vst.msk [vmem:[#allocation3 + $0x170] sm:$0xff] %vm882, %v4152
        %4233 = vst.msk [vmem:[#allocation3 + $0x188] sm:$0xff] %vm882, %v4154
        %4234 = vst.msk [vmem:[#allocation3 + $0x1a0] sm:$0xff] %vm882, %v4156
        %4235 = vst.msk [vmem:[#allocation3 + $0x1b8] sm:$0xff] %vm882, %v4158
        %4236 = vst.msk [vmem:[#allocation3 + $0x1d0] sm:$0xff] %vm882, %v4160
        %4237 = vst.msk [vmem:[#allocation3 + $0x1e8] sm:$0xff] %vm882, %v4162
        %4238 = vst.msk [vmem:[#allocation3 + $0x200] sm:$0xff] %vm882, %v4164
        %4239 = vst.msk [vmem:[#allocation3 + $0x218] sm:$0xff] %vm882, %v4166
        %4240 = vst.msk [vmem:[#allocation3 + $0x230] sm:$0xff] %vm882, %v4168
        %4241 = vst.msk [vmem:[#allocation3 + $0x248] sm:$0xff] %vm882, %v4170
        %4242 = vst.msk [vmem:[#allocation3 + $0x260] sm:$0xff] %vm882, %v4172
        %4243 = vst.msk [vmem:[#allocation3 + $0x278] sm:$0xff] %vm882, %v4174
        %4244 = vst.msk [vmem:[#allocation3 + $0x290] sm:$0xff] %vm882, %v4176
        %4245 = vst.msk [vmem:[#allocation3 + $0x2a8] sm:$0xff] %vm882, %v4178
        %4246 = vst.msk [vmem:[#allocation3 + $0x2c0] sm:$0xff] %vm882, %v4180
        %4247 = vst.msk [vmem:[#allocation3 + $0x2d8] sm:$0xff] %vm882, %v4182
        %4248 = vst.msk [vmem:[#allocation3 + $0x2f0] sm:$0xff] %vm882, %v4184
        %v4249 = vld [vmem:[%s1364 + $0x1] sm:$0xff]
        %v4250 = vld [vmem:[%s1364 + $0x9] sm:$0xff]
        %v4251 = vld [vmem:[%s1364 + $0x19] sm:$0xff]
        %v4252 = vld [vmem:[%s1364 + $0x21] sm:$0xff]
        %v4253 = vld [vmem:[%s1364 + $0x31] sm:$0xff]
        %v4254 = vld [vmem:[%s1364 + $0x39] sm:$0xff]
        %v4255 = vld [vmem:[%s1364 + $0x49] sm:$0xff]
        %v4256 = vld [vmem:[%s1364 + $0x51] sm:$0xff]
        %v4257 = vld [vmem:[%s1364 + $0x61] sm:$0xff]
        %v4258 = vld [vmem:[%s1364 + $0x69] sm:$0xff]
        %v4259 = vld [vmem:[%s1364 + $0x79] sm:$0xff]
        %v4260 = vld [vmem:[%s1364 + $0x81] sm:$0xff]
        %v4261 = vld [vmem:[%s1364 + $0x91] sm:$0xff]
        %v4262 = vld [vmem:[%s1364 + $0x99] sm:$0xff]
        %v4263 = vld [vmem:[%s1364 + $0xa9] sm:$0xff]
        %v4264 = vld [vmem:[%s1364 + $0xb1] sm:$0xff]
        %v4265 = vld [vmem:[%s1364 + $0xc1] sm:$0xff]
        %v4266 = vld [vmem:[%s1364 + $0xc9] sm:$0xff]
        %v4267 = vld [vmem:[%s1364 + $0xd9] sm:$0xff]
        %v4268 = vld [vmem:[%s1364 + $0xe1] sm:$0xff]
        %v4269 = vld [vmem:[%s1364 + $0xf1] sm:$0xff]
        %v4270 = vld [vmem:[%s1364 + $0xf9] sm:$0xff]
        %v4271 = vld [vmem:[%s1364 + $0x109] sm:$0xff]
        %v4272 = vld [vmem:[%s1364 + $0x111] sm:$0xff]
        %v4273 = vld [vmem:[%s1364 + $0x121] sm:$0xff]
        %v4274 = vld [vmem:[%s1364 + $0x129] sm:$0xff]
        %v4275 = vld [vmem:[%s1364 + $0x139] sm:$0xff]
        %v4276 = vld [vmem:[%s1364 + $0x141] sm:$0xff]
        %v4277 = vld [vmem:[%s1364 + $0x151] sm:$0xff]
        %v4278 = vld [vmem:[%s1364 + $0x159] sm:$0xff]
        %v4279 = vld [vmem:[%s1364 + $0x169] sm:$0xff]
        %v4280 = vld [vmem:[%s1364 + $0x171] sm:$0xff]
        %4313 = vrot.lane.b32.xlu0 %v4249, 96
        %v4314 = vpop.permute.xlu0 %4313
        %4315 = vrot.lane.b32.xlu0 %v4250, 96
        %v4316 = vpop.permute.xlu0 %4315
        %4317 = vrot.lane.b32.xlu0 %v4251, 96
        %v4318 = vpop.permute.xlu0 %4317
        %4319 = vrot.lane.b32.xlu0 %v4252, 96
        %v4320 = vpop.permute.xlu0 %4319
        %4321 = vrot.lane.b32.xlu0 %v4253, 96
        %v4322 = vpop.permute.xlu0 %4321
        %4323 = vrot.lane.b32.xlu0 %v4254, 96
        %v4324 = vpop.permute.xlu0 %4323
        %4325 = vrot.lane.b32.xlu0 %v4255, 96
        %v4326 = vpop.permute.xlu0 %4325
        %4327 = vrot.lane.b32.xlu0 %v4256, 96
        %v4328 = vpop.permute.xlu0 %4327
        %4329 = vrot.lane.b32.xlu0 %v4257, 96
        %v4330 = vpop.permute.xlu0 %4329
        %4331 = vrot.lane.b32.xlu0 %v4258, 96
        %v4332 = vpop.permute.xlu0 %4331
        %4333 = vrot.lane.b32.xlu0 %v4259, 96
        %v4334 = vpop.permute.xlu0 %4333
        %4335 = vrot.lane.b32.xlu0 %v4260, 96
        %v4336 = vpop.permute.xlu0 %4335
        %4337 = vrot.lane.b32.xlu0 %v4261, 96
        %v4338 = vpop.permute.xlu0 %4337
        %4339 = vrot.lane.b32.xlu0 %v4262, 96
        %v4340 = vpop.permute.xlu0 %4339
        %4341 = vrot.lane.b32.xlu0 %v4263, 96
        %v4342 = vpop.permute.xlu0 %4341
        %4343 = vrot.lane.b32.xlu0 %v4264, 96
        %v4344 = vpop.permute.xlu0 %4343
        %4345 = vrot.lane.b32.xlu0 %v4265, 96
        %v4346 = vpop.permute.xlu0 %4345
        %4347 = vrot.lane.b32.xlu0 %v4266, 96
        %v4348 = vpop.permute.xlu0 %4347
        %4349 = vrot.lane.b32.xlu0 %v4267, 96
        %v4350 = vpop.permute.xlu0 %4349
        %4351 = vrot.lane.b32.xlu0 %v4268, 96
        %v4352 = vpop.permute.xlu0 %4351
        %4353 = vrot.lane.b32.xlu0 %v4269, 96
        %v4354 = vpop.permute.xlu0 %4353
        %4355 = vrot.lane.b32.xlu0 %v4270, 96
        %v4356 = vpop.permute.xlu0 %4355
        %4357 = vrot.lane.b32.xlu0 %v4271, 96
        %v4358 = vpop.permute.xlu0 %4357
        %4359 = vrot.lane.b32.xlu0 %v4272, 96
        %v4360 = vpop.permute.xlu0 %4359
        %4361 = vrot.lane.b32.xlu0 %v4273, 96
        %v4362 = vpop.permute.xlu0 %4361
        %4363 = vrot.lane.b32.xlu0 %v4274, 96
        %v4364 = vpop.permute.xlu0 %4363
        %4365 = vrot.lane.b32.xlu0 %v4275, 96
        %v4366 = vpop.permute.xlu0 %4365
        %4367 = vrot.lane.b32.xlu0 %v4276, 96
        %v4368 = vpop.permute.xlu0 %4367
        %4369 = vrot.lane.b32.xlu0 %v4277, 96
        %v4370 = vpop.permute.xlu0 %4369
        %4371 = vrot.lane.b32.xlu0 %v4278, 96
        %v4372 = vpop.permute.xlu0 %4371
        %4373 = vrot.lane.b32.xlu0 %v4279, 96
        %v4374 = vpop.permute.xlu0 %4373
        %4375 = vrot.lane.b32.xlu0 %v4280, 96
        %v4376 = vpop.permute.xlu0 %4375
        %4409 = vst.msk [vmem:[#allocation3 + $0x8] sm:$0xff] %vm1075, %v4314
        %4410 = vst.msk [vmem:[#allocation3 + $0x20] sm:$0xff] %vm1075, %v4316
        %4411 = vst.msk [vmem:[#allocation3 + $0x38] sm:$0xff] %vm1075, %v4318
        %4412 = vst.msk [vmem:[#allocation3 + $0x50] sm:$0xff] %vm1075, %v4320
        %4413 = vst.msk [vmem:[#allocation3 + $0x68] sm:$0xff] %vm1075, %v4322
        %4414 = vst.msk [vmem:[#allocation3 + $0x80] sm:$0xff] %vm1075, %v4324
        %4415 = vst.msk [vmem:[#allocation3 + $0x98] sm:$0xff] %vm1075, %v4326
        %4416 = vst.msk [vmem:[#allocation3 + $0xb0] sm:$0xff] %vm1075, %v4328
        %4417 = vst.msk [vmem:[#allocation3 + $0xc8] sm:$0xff] %vm1075, %v4330
        %4418 = vst.msk [vmem:[#allocation3 + $0xe0] sm:$0xff] %vm1075, %v4332
        %4419 = vst.msk [vmem:[#allocation3 + $0xf8] sm:$0xff] %vm1075, %v4334
        %4420 = vst.msk [vmem:[#allocation3 + $0x110] sm:$0xff] %vm1075, %v4336
        %4421 = vst.msk [vmem:[#allocation3 + $0x128] sm:$0xff] %vm1075, %v4338
        %4422 = vst.msk [vmem:[#allocation3 + $0x140] sm:$0xff] %vm1075, %v4340
        %4423 = vst.msk [vmem:[#allocation3 + $0x158] sm:$0xff] %vm1075, %v4342
        %4424 = vst.msk [vmem:[#allocation3 + $0x170] sm:$0xff] %vm1075, %v4344
        %4425 = vst.msk [vmem:[#allocation3 + $0x188] sm:$0xff] %vm1075, %v4346
        %4426 = vst.msk [vmem:[#allocation3 + $0x1a0] sm:$0xff] %vm1075, %v4348
        %4427 = vst.msk [vmem:[#allocation3 + $0x1b8] sm:$0xff] %vm1075, %v4350
        %4428 = vst.msk [vmem:[#allocation3 + $0x1d0] sm:$0xff] %vm1075, %v4352
        %4429 = vst.msk [vmem:[#allocation3 + $0x1e8] sm:$0xff] %vm1075, %v4354
        %4430 = vst.msk [vmem:[#allocation3 + $0x200] sm:$0xff] %vm1075, %v4356
        %4431 = vst.msk [vmem:[#allocation3 + $0x218] sm:$0xff] %vm1075, %v4358
        %4432 = vst.msk [vmem:[#allocation3 + $0x230] sm:$0xff] %vm1075, %v4360
        %4433 = vst.msk [vmem:[#allocation3 + $0x248] sm:$0xff] %vm1075, %v4362
        %4434 = vst.msk [vmem:[#allocation3 + $0x260] sm:$0xff] %vm1075, %v4364
        %4435 = vst.msk [vmem:[#allocation3 + $0x278] sm:$0xff] %vm1075, %v4366
        %4436 = vst.msk [vmem:[#allocation3 + $0x290] sm:$0xff] %vm1075, %v4368
        %4437 = vst.msk [vmem:[#allocation3 + $0x2a8] sm:$0xff] %vm1075, %v4370
        %4438 = vst.msk [vmem:[#allocation3 + $0x2c0] sm:$0xff] %vm1075, %v4372
        %4439 = vst.msk [vmem:[#allocation3 + $0x2d8] sm:$0xff] %vm1075, %v4374
        %4440 = vst.msk [vmem:[#allocation3 + $0x2f0] sm:$0xff] %vm1075, %v4376
        %v4441 = vld [vmem:[%s1364 + $0x2] sm:$0xff]
        %v4442 = vld [vmem:[%s1364 + $0xa] sm:$0xff]
        %v4443 = vld [vmem:[%s1364 + $0x1a] sm:$0xff]
        %v4444 = vld [vmem:[%s1364 + $0x22] sm:$0xff]
        %v4445 = vld [vmem:[%s1364 + $0x32] sm:$0xff]
        %v4446 = vld [vmem:[%s1364 + $0x3a] sm:$0xff]
        %v4447 = vld [vmem:[%s1364 + $0x4a] sm:$0xff]
        %v4448 = vld [vmem:[%s1364 + $0x52] sm:$0xff]
        %v4449 = vld [vmem:[%s1364 + $0x62] sm:$0xff]
        %v4450 = vld [vmem:[%s1364 + $0x6a] sm:$0xff]
        %v4451 = vld [vmem:[%s1364 + $0x7a] sm:$0xff]
        %v4452 = vld [vmem:[%s1364 + $0x82] sm:$0xff]
        %v4453 = vld [vmem:[%s1364 + $0x92] sm:$0xff]
        %v4454 = vld [vmem:[%s1364 + $0x9a] sm:$0xff]
        %v4455 = vld [vmem:[%s1364 + $0xaa] sm:$0xff]
        %v4456 = vld [vmem:[%s1364 + $0xb2] sm:$0xff]
        %v4457 = vld [vmem:[%s1364 + $0xc2] sm:$0xff]
        %v4458 = vld [vmem:[%s1364 + $0xca] sm:$0xff]
        %v4459 = vld [vmem:[%s1364 + $0xda] sm:$0xff]
        %v4460 = vld [vmem:[%s1364 + $0xe2] sm:$0xff]
        %v4461 = vld [vmem:[%s1364 + $0xf2] sm:$0xff]
        %v4462 = vld [vmem:[%s1364 + $0xfa] sm:$0xff]
        %v4463 = vld [vmem:[%s1364 + $0x10a] sm:$0xff]
        %v4464 = vld [vmem:[%s1364 + $0x112] sm:$0xff]
        %v4465 = vld [vmem:[%s1364 + $0x122] sm:$0xff]
        %v4466 = vld [vmem:[%s1364 + $0x12a] sm:$0xff]
        %v4467 = vld [vmem:[%s1364 + $0x13a] sm:$0xff]
        %v4468 = vld [vmem:[%s1364 + $0x142] sm:$0xff]
        %v4469 = vld [vmem:[%s1364 + $0x152] sm:$0xff]
        %v4470 = vld [vmem:[%s1364 + $0x15a] sm:$0xff]
        %v4471 = vld [vmem:[%s1364 + $0x16a] sm:$0xff]
        %v4472 = vld [vmem:[%s1364 + $0x172] sm:$0xff]
        %4473 = vst.msk [vmem:[#allocation3 + $0x10] sm:$0xff] %vm358, %v4441
        %4474 = vst.msk [vmem:[#allocation3 + $0x28] sm:$0xff] %vm358, %v4442
        %4475 = vst.msk [vmem:[#allocation3 + $0x40] sm:$0xff] %vm358, %v4443
        %4476 = vst.msk [vmem:[#allocation3 + $0x58] sm:$0xff] %vm358, %v4444
        %4477 = vst.msk [vmem:[#allocation3 + $0x70] sm:$0xff] %vm358, %v4445
        %4478 = vst.msk [vmem:[#allocation3 + $0x88] sm:$0xff] %vm358, %v4446
        %4479 = vst.msk [vmem:[#allocation3 + $0xa0] sm:$0xff] %vm358, %v4447
        %4480 = vst.msk [vmem:[#allocation3 + $0xb8] sm:$0xff] %vm358, %v4448
        %4481 = vst.msk [vmem:[#allocation3 + $0xd0] sm:$0xff] %vm358, %v4449
        %4482 = vst.msk [vmem:[#allocation3 + $0xe8] sm:$0xff] %vm358, %v4450
        %4483 = vst.msk [vmem:[#allocation3 + $0x100] sm:$0xff] %vm358, %v4451
        %4484 = vst.msk [vmem:[#allocation3 + $0x118] sm:$0xff] %vm358, %v4452
        %4485 = vst.msk [vmem:[#allocation3 + $0x130] sm:$0xff] %vm358, %v4453
        %4486 = vst.msk [vmem:[#allocation3 + $0x148] sm:$0xff] %vm358, %v4454
        %4487 = vst.msk [vmem:[#allocation3 + $0x160] sm:$0xff] %vm358, %v4455
        %4488 = vst.msk [vmem:[#allocation3 + $0x178] sm:$0xff] %vm358, %v4456
        %4489 = vst.msk [vmem:[#allocation3 + $0x190] sm:$0xff] %vm358, %v4457
        %4490 = vst.msk [vmem:[#allocation3 + $0x1a8] sm:$0xff] %vm358, %v4458
        %4491 = vst.msk [vmem:[#allocation3 + $0x1c0] sm:$0xff] %vm358, %v4459
        %4492 = vst.msk [vmem:[#allocation3 + $0x1d8] sm:$0xff] %vm358, %v4460
        %4493 = vst.msk [vmem:[#allocation3 + $0x1f0] sm:$0xff] %vm358, %v4461
        %4494 = vst.msk [vmem:[#allocation3 + $0x208] sm:$0xff] %vm358, %v4462
        %4495 = vst.msk [vmem:[#allocation3 + $0x220] sm:$0xff] %vm358, %v4463
        %4496 = vst.msk [vmem:[#allocation3 + $0x238] sm:$0xff] %vm358, %v4464
        %4497 = vst.msk [vmem:[#allocation3 + $0x250] sm:$0xff] %vm358, %v4465
        %4498 = vst.msk [vmem:[#allocation3 + $0x268] sm:$0xff] %vm358, %v4466
        %4499 = vst.msk [vmem:[#allocation3 + $0x280] sm:$0xff] %vm358, %v4467
        %4500 = vst.msk [vmem:[#allocation3 + $0x298] sm:$0xff] %vm358, %v4468
        %4501 = vst.msk [vmem:[#allocation3 + $0x2b0] sm:$0xff] %vm358, %v4469
        %4502 = vst.msk [vmem:[#allocation3 + $0x2c8] sm:$0xff] %vm358, %v4470
        %4503 = vst.msk [vmem:[#allocation3 + $0x2e0] sm:$0xff] %vm358, %v4471
        %4504 = vst.msk [vmem:[#allocation3 + $0x2f8] sm:$0xff] %vm358, %v4472
        %v4505 = vld [vmem:[%s6] sm:$0x1]
        %v4506 = vld [vmem:[#allocation3] sm:$0xff]
        %v4507 = vld [vmem:[#allocation3 + $0x8] sm:$0xff]
        %v4508 = vld [vmem:[#allocation3 + $0x10] sm:$0xff]
        %v4509 = vld [vmem:[#allocation3 + $0x18] sm:$0xff]
        %v4510 = vld [vmem:[#allocation3 + $0x20] sm:$0xff]
        %v4511 = vld [vmem:[#allocation3 + $0x28] sm:$0xff]
        %v4512 = vld [vmem:[#allocation3 + $0x30] sm:$0xff]
        %v4513 = vld [vmem:[#allocation3 + $0x38] sm:$0xff]
        %v4514 = vld [vmem:[#allocation3 + $0x40] sm:$0xff]
        %v4515 = vld [vmem:[#allocation3 + $0x48] sm:$0xff]
        %v4516 = vld [vmem:[#allocation3 + $0x50] sm:$0xff]
        %v4517 = vld [vmem:[#allocation3 + $0x58] sm:$0xff]
        %v4518 = vld [vmem:[#allocation3 + $0x60] sm:$0xff]
        %v4519 = vld [vmem:[#allocation3 + $0x68] sm:$0xff]
        %v4520 = vld [vmem:[#allocation3 + $0x70] sm:$0xff]
        %v4521 = vld [vmem:[#allocation3 + $0x78] sm:$0xff]
        %v4522 = vld [vmem:[#allocation3 + $0x80] sm:$0xff]
        %v4523 = vld [vmem:[#allocation3 + $0x88] sm:$0xff]
        %v4524 = vld [vmem:[#allocation3 + $0x90] sm:$0xff]
        %v4525 = vld [vmem:[#allocation3 + $0x98] sm:$0xff]
        %v4526 = vld [vmem:[#allocation3 + $0xa0] sm:$0xff]
        %v4527 = vld [vmem:[#allocation3 + $0xa8] sm:$0xff]
        %v4528 = vld [vmem:[#allocation3 + $0xb0] sm:$0xff]
        %v4529 = vld [vmem:[#allocation3 + $0xb8] sm:$0xff]
        %v4530 = vld [vmem:[#allocation3 + $0xc0] sm:$0xff]
        %v4531 = vld [vmem:[#allocation3 + $0xc8] sm:$0xff]
        %v4532 = vld [vmem:[#allocation3 + $0xd0] sm:$0xff]
        %v4533 = vld [vmem:[#allocation3 + $0xd8] sm:$0xff]
        %v4534 = vld [vmem:[#allocation3 + $0xe0] sm:$0xff]
        %v4535 = vld [vmem:[#allocation3 + $0xe8] sm:$0xff]
        %v4536 = vld [vmem:[#allocation3 + $0xf0] sm:$0xff]
        %v4537 = vld [vmem:[#allocation3 + $0xf8] sm:$0xff]
        %v4538 = vld [vmem:[#allocation3 + $0x100] sm:$0xff]
        %v4539 = vld [vmem:[#allocation3 + $0x108] sm:$0xff]
        %v4540 = vld [vmem:[#allocation3 + $0x110] sm:$0xff]
        %v4541 = vld [vmem:[#allocation3 + $0x118] sm:$0xff]
        %v4542 = vld [vmem:[#allocation3 + $0x120] sm:$0xff]
        %v4543 = vld [vmem:[#allocation3 + $0x128] sm:$0xff]
        %v4544 = vld [vmem:[#allocation3 + $0x130] sm:$0xff]
        %v4545 = vld [vmem:[#allocation3 + $0x138] sm:$0xff]
        %v4546 = vld [vmem:[#allocation3 + $0x140] sm:$0xff]
        %v4547 = vld [vmem:[#allocation3 + $0x148] sm:$0xff]
        %v4548 = vld [vmem:[#allocation3 + $0x150] sm:$0xff]
        %v4549 = vld [vmem:[#allocation3 + $0x158] sm:$0xff]
        %v4550 = vld [vmem:[#allocation3 + $0x160] sm:$0xff]
        %v4551 = vld [vmem:[#allocation3 + $0x168] sm:$0xff]
        %v4552 = vld [vmem:[#allocation3 + $0x170] sm:$0xff]
        %v4553 = vld [vmem:[#allocation3 + $0x178] sm:$0xff]
        %v4554 = vld [vmem:[#allocation3 + $0x180] sm:$0xff]
        %v4555 = vld [vmem:[#allocation3 + $0x188] sm:$0xff]
        %v4556 = vld [vmem:[#allocation3 + $0x190] sm:$0xff]
        %v4557 = vld [vmem:[#allocation3 + $0x198] sm:$0xff]
        %v4558 = vld [vmem:[#allocation3 + $0x1a0] sm:$0xff]
        %v4559 = vld [vmem:[#allocation3 + $0x1a8] sm:$0xff]
        %v4560 = vld [vmem:[#allocation3 + $0x1b0] sm:$0xff]
        %v4561 = vld [vmem:[#allocation3 + $0x1b8] sm:$0xff]
        %v4562 = vld [vmem:[#allocation3 + $0x1c0] sm:$0xff]
        %v4563 = vld [vmem:[#allocation3 + $0x1c8] sm:$0xff]
        %v4564 = vld [vmem:[#allocation3 + $0x1d0] sm:$0xff]
        %v4565 = vld [vmem:[#allocation3 + $0x1d8] sm:$0xff]
        %v4566 = vld [vmem:[#allocation3 + $0x1e0] sm:$0xff]
        %v4567 = vld [vmem:[#allocation3 + $0x1e8] sm:$0xff]
        %v4568 = vld [vmem:[#allocation3 + $0x1f0] sm:$0xff]
        %v4569 = vld [vmem:[#allocation3 + $0x1f8] sm:$0xff]
        %v4570 = vld [vmem:[#allocation3 + $0x200] sm:$0xff]
        %v4571 = vld [vmem:[#allocation3 + $0x208] sm:$0xff]
        %v4572 = vld [vmem:[#allocation3 + $0x210] sm:$0xff]
        %v4573 = vld [vmem:[#allocation3 + $0x218] sm:$0xff]
        %v4574 = vld [vmem:[#allocation3 + $0x220] sm:$0xff]
        %v4575 = vld [vmem:[#allocation3 + $0x228] sm:$0xff]
        %v4576 = vld [vmem:[#allocation3 + $0x230] sm:$0xff]
        %v4577 = vld [vmem:[#allocation3 + $0x238] sm:$0xff]
        %v4578 = vld [vmem:[#allocation3 + $0x240] sm:$0xff]
        %v4579 = vld [vmem:[#allocation3 + $0x248] sm:$0xff]
        %v4580 = vld [vmem:[#allocation3 + $0x250] sm:$0xff]
        %v4581 = vld [vmem:[#allocation3 + $0x258] sm:$0xff]
        %v4582 = vld [vmem:[#allocation3 + $0x260] sm:$0xff]
        %v4583 = vld [vmem:[#allocation3 + $0x268] sm:$0xff]
        %v4584 = vld [vmem:[#allocation3 + $0x270] sm:$0xff]
        %v4585 = vld [vmem:[#allocation3 + $0x278] sm:$0xff]
        %v4586 = vld [vmem:[#allocation3 + $0x280] sm:$0xff]
        %v4587 = vld [vmem:[#allocation3 + $0x288] sm:$0xff]
        %v4588 = vld [vmem:[#allocation3 + $0x290] sm:$0xff]
        %v4589 = vld [vmem:[#allocation3 + $0x298] sm:$0xff]
        %v4590 = vld [vmem:[#allocation3 + $0x2a0] sm:$0xff]
        %v4591 = vld [vmem:[#allocation3 + $0x2a8] sm:$0xff]
        %v4592 = vld [vmem:[#allocation3 + $0x2b0] sm:$0xff]
        %v4593 = vld [vmem:[#allocation3 + $0x2b8] sm:$0xff]
        %v4594 = vld [vmem:[#allocation3 + $0x2c0] sm:$0xff]
        %v4595 = vld [vmem:[#allocation3 + $0x2c8] sm:$0xff]
        %v4596 = vld [vmem:[#allocation3 + $0x2d0] sm:$0xff]
        %v4597 = vld [vmem:[#allocation3 + $0x2d8] sm:$0xff]
        %v4598 = vld [vmem:[#allocation3 + $0x2e0] sm:$0xff]
        %v4599 = vld [vmem:[#allocation3 + $0x2e8] sm:$0xff]
        %v4600 = vld [vmem:[#allocation3 + $0x2f0] sm:$0xff]
        %v4601 = vld [vmem:[#allocation3 + $0x2f8] sm:$0xff]
        %v4602 = vld [vmem:[%s5] sm:$0xff]
        %v4603 = vld [vmem:[%s5 + $0x8] sm:$0xff]
        %v4604 = vld [vmem:[%s5 + $0x10] sm:$0xff]
        %v4605 = vld [vmem:[%s5 + $0x18] sm:$0xff]
        %v4606 = vld [vmem:[%s5 + $0x20] sm:$0xff]
        %v4607 = vld [vmem:[%s5 + $0x28] sm:$0xff]
        %v4608 = vld [vmem:[%s5 + $0x30] sm:$0xff]
        %v4609 = vld [vmem:[%s5 + $0x38] sm:$0xff]
        %v4610 = vld [vmem:[%s5 + $0x40] sm:$0xff]
        %v4611 = vld [vmem:[%s5 + $0x48] sm:$0xff]
        %v4612 = vld [vmem:[%s5 + $0x50] sm:$0xff]
        %v4613 = vld [vmem:[%s5 + $0x58] sm:$0xff]
        %v4614 = vld [vmem:[%s5 + $0x60] sm:$0xff]
        %v4615 = vld [vmem:[%s5 + $0x68] sm:$0xff]
        %v4616 = vld [vmem:[%s5 + $0x70] sm:$0xff]
        %v4617 = vld [vmem:[%s5 + $0x78] sm:$0xff]
        %v4618 = vld [vmem:[%s5 + $0x80] sm:$0xff]
        %v4619 = vld [vmem:[%s5 + $0x88] sm:$0xff]
        %v4620 = vld [vmem:[%s5 + $0x90] sm:$0xff]
        %v4621 = vld [vmem:[%s5 + $0x98] sm:$0xff]
        %v4622 = vld [vmem:[%s5 + $0xa0] sm:$0xff]
        %v4623 = vld [vmem:[%s5 + $0xa8] sm:$0xff]
        %v4624 = vld [vmem:[%s5 + $0xb0] sm:$0xff]
        %v4625 = vld [vmem:[%s5 + $0xb8] sm:$0xff]
        %v4626 = vld [vmem:[%s5 + $0xc0] sm:$0xff]
        %v4627 = vld [vmem:[%s5 + $0xc8] sm:$0xff]
        %v4628 = vld [vmem:[%s5 + $0xd0] sm:$0xff]
        %v4629 = vld [vmem:[%s5 + $0xd8] sm:$0xff]
        %v4630 = vld [vmem:[%s5 + $0xe0] sm:$0xff]
        %v4631 = vld [vmem:[%s5 + $0xe8] sm:$0xff]
        %v4632 = vld [vmem:[%s5 + $0xf0] sm:$0xff]
        %v4633 = vld [vmem:[%s5 + $0xf8] sm:$0xff]
        %v4634 = vld [vmem:[%s5 + $0x100] sm:$0xff]
        %v4635 = vld [vmem:[%s5 + $0x108] sm:$0xff]
        %v4636 = vld [vmem:[%s5 + $0x110] sm:$0xff]
        %v4637 = vld [vmem:[%s5 + $0x118] sm:$0xff]
        %v4639 = vlaneseq
        %v4640 = vshrl.u32 %v4639, 7
        %v4641 = vsub.s32 0, %v4640
        %v4642 = vrot.slane %v4505, %v4641
        %v4645 = vsel %vm358, %v4508, 0
        %v4648 = vsel %vm358, %v4511, 0
        %v4651 = vsel %vm358, %v4514, 0
        %v4654 = vsel %vm358, %v4517, 0
        %v4657 = vsel %vm358, %v4520, 0
        %v4660 = vsel %vm358, %v4523, 0
        %v4663 = vsel %vm358, %v4526, 0
        %v4666 = vsel %vm358, %v4529, 0
        %v4669 = vsel %vm358, %v4532, 0
        %v4672 = vsel %vm358, %v4535, 0
        %v4675 = vsel %vm358, %v4538, 0
        %v4678 = vsel %vm358, %v4541, 0
        %v4681 = vsel %vm358, %v4544, 0
        %v4684 = vsel %vm358, %v4547, 0
        %v4687 = vsel %vm358, %v4550, 0
        %v4690 = vsel %vm358, %v4553, 0
        %v4693 = vsel %vm358, %v4556, 0
        %v4696 = vsel %vm358, %v4559, 0
        %v4699 = vsel %vm358, %v4562, 0
        %v4702 = vsel %vm358, %v4565, 0
        %v4705 = vsel %vm358, %v4568, 0
        %v4708 = vsel %vm358, %v4571, 0
        %v4711 = vsel %vm358, %v4574, 0
        %v4714 = vsel %vm358, %v4577, 0
        %v4717 = vsel %vm358, %v4580, 0
        %v4720 = vsel %vm358, %v4583, 0
        %v4723 = vsel %vm358, %v4586, 0
        %v4726 = vsel %vm358, %v4589, 0
        %v4729 = vsel %vm358, %v4592, 0
        %v4732 = vsel %vm358, %v4595, 0
        %v4735 = vsel %vm358, %v4598, 0
        %v4738 = vsel %vm358, %v4601, 0
        %4740 = vmatprep.subr.mxu0 0.0
        %4741 = vmatpush1.msra.mxu0 %v4602
        %4742 = vmatprep.subr.mxu0 0.0
        %4743 = vmatpush1.msra.mxu0 %v4603
        %4744 = vmatprep.subr.mxu0 0.0
        %4745 = vmatpush1.msra.mxu0 %v4604
        %4746 = vmatprep.subr.mxu0 0.0
        %4747 = vmatpush1.msra.mxu0 %v4605
        %4748 = vmatprep.subr.mxu0 0.0
        %4749 = vmatpush1.msra.mxu0 %v4606
        %4750 = vmatprep.subr.mxu0 0.0
        %4751 = vmatpush1.msra.mxu0 %v4607
        %4752 = vmatprep.subr.mxu0 0.0
        %4753 = vmatpush1.msra.mxu0 %v4608
        %4754 = vmatprep.subr.mxu0 0.0
        %4755 = vmatpush1.msra.mxu0 %v4609
        %4756 = vmatprep.subr.mxu0 0.0
        %4757 = vmatpush1.msra.mxu0 %v4610
        %4758 = vmatprep.subr.mxu0 0.0
        %4759 = vmatpush1.msra.mxu0 %v4611
        %4760 = vmatprep.subr.mxu0 0.0
        %4761 = vmatpush1.msra.mxu0 %v4612
        %4762 = vmatprep.subr.mxu0 0.0
        %4763 = vmatpush1.msra.mxu0 %v4613
        %4764 = vmatprep.subr.mxu0 0.0
        %4765 = vmatpush1.msra.mxu0 %v4614
        %4766 = vmatprep.subr.mxu0 0.0
        %4767 = vmatpush1.msra.mxu0 %v4615
        %4768 = vmatprep.subr.mxu0 0.0
        %4769 = vmatpush1.msra.mxu0 %v4616
        %4770 = vmatprep.subr.mxu0 0.0
        %4771 = vmatpush1.msra.mxu0 %v4617
        %4772 = vmatprep.subr.mxu0 0.0
        %4773 = vmatpush1.msra.mxu0 %v4618
        %4774 = vmatprep.subr.mxu0 0.0
        %4775 = vmatpush1.msra.mxu0 %v4619
        %4776 = vmatprep.subr.mxu0 0.0
        %4777 = vmatpush1.msra.mxu0 %v4620
        %4778 = vmatprep.subr.mxu0 0.0
        %4779 = vmatpush1.msra.mxu0 %v4621
        %4780 = vmatprep.subr.mxu0 0.0
        %4781 = vmatpush1.msra.mxu0 %v4622
        %4782 = vmatprep.subr.mxu0 0.0
        %4783 = vmatpush1.msra.mxu0 %v4623
        %4784 = vmatprep.subr.mxu0 0.0
        %4785 = vmatpush1.msra.mxu0 %v4624
        %4786 = vmatprep.subr.mxu0 0.0
        %4787 = vmatpush1.msra.mxu0 %v4625
        %4788 = vmatprep.subr.mxu0 0.0
        %4789 = vmatpush1.msra.mxu0 %v4626
        %4790 = vmatprep.subr.mxu0 0.0
        %4791 = vmatpush1.msra.mxu0 %v4627
        %4792 = vmatprep.subr.mxu0 0.0
        %4793 = vmatpush1.msra.mxu0 %v4628
        %4794 = vmatprep.subr.mxu0 0.0
        %4795 = vmatpush1.msra.mxu0 %v4629
        %4796 = vmatprep.subr.mxu0 0.0
        %4797 = vmatpush1.msra.mxu0 %v4630
        %4798 = vmatprep.subr.mxu0 0.0
        %4799 = vmatpush1.msra.mxu0 %v4631
        %4800 = vmatprep.subr.mxu0 0.0
        %4801 = vmatpush1.msra.mxu0 %v4632
        %4802 = vmatprep.subr.mxu0 0.0
        %4803 = vmatpush1.msra.mxu0 %v4633
        %4804 = vmatprep.mubr.f32.mxu0 %v4507
        %4805 = vmatmul.mubr.f32.gmra.mrb[0].mxu0 %v4506
        %v4806 = vpop.f32.mrb[0].mxu0
        %v4807 = vadd.f32 %v4642, %v4806
        %v4808 = vpop.f32.mrb[0].mxu0
        %4809 = vmatprep.mubr.f32.mxu0 %v4510
        %4810 = vmatmul.mubr.f32.gmra.mrb[0].mxu0 %v4509
        %v4811 = vpop.f32.mrb[0].mxu0
        %v4812 = vadd.f32 %v4642, %v4811
        %v4813 = vpop.f32.mrb[0].mxu0
        %4814 = vmatprep.mubr.f32.mxu0 %v4513
        %4815 = vmatmul.mubr.f32.gmra.mrb[0].mxu0 %v4512
        %v4816 = vpop.f32.mrb[0].mxu0
        %v4817 = vadd.f32 %v4642, %v4816
        %v4818 = vpop.f32.mrb[0].mxu0
        %4819 = vmatprep.mubr.f32.mxu0 %v4516
        %4820 = vmatmul.mubr.f32.gmra.mrb[0].mxu0 %v4515
        %v4821 = vpop.f32.mrb[0].mxu0
        %v4822 = vadd.f32 %v4642, %v4821
        %v4823 = vpop.f32.mrb[0].mxu0
        %4824 = vmatprep.mubr.f32.mxu0 %v4519
        %4825 = vmatmul.mubr.f32.gmra.mrb[0].mxu0 %v4518
        %v4826 = vpop.f32.mrb[0].mxu0
        %v4827 = vadd.f32 %v4642, %v4826
        %v4828 = vpop.f32.mrb[0].mxu0
        %4829 = vmatprep.mubr.f32.mxu0 %v4522
        %4830 = vmatmul.mubr.f32.gmra.mrb[0].mxu0 %v4521
        %v4831 = vpop.f32.mrb[0].mxu0
        %v4832 = vadd.f32 %v4642, %v4831
        %v4833 = vpop.f32.mrb[0].mxu0
        %4834 = vmatprep.mubr.f32.mxu0 %v4525
        %4835 = vmatmul.mubr.f32.gmra.mrb[0].mxu0 %v4524
        %v4836 = vpop.f32.mrb[0].mxu0
        %v4837 = vadd.f32 %v4642, %v4836
        %v4838 = vpop.f32.mrb[0].mxu0
        %4839 = vmatprep.mubr.f32.mxu0 %v4528
        %4840 = vmatmul.mubr.f32.gmra.mrb[0].mxu0 %v4527
        %v4841 = vpop.f32.mrb[0].mxu0
        %v4842 = vadd.f32 %v4642, %v4841
        %v4843 = vpop.f32.mrb[0].mxu0
        %4844 = vmatprep.mubr.f32.mxu0 %v4531
        %4845 = vmatmul.mubr.f32.gmra.mrb[0].mxu0 %v4530
        %v4846 = vpop.f32.mrb[0].mxu0
        %v4847 = vadd.f32 %v4642, %v4846
        %v4848 = vpop.f32.mrb[0].mxu0
        %4849 = vmatprep.mubr.f32.mxu0 %v4534
        %4850 = vmatmul.mubr.f32.gmra.mrb[0].mxu0 %v4533
        %v4851 = vpop.f32.mrb[0].mxu0
        %v4852 = vadd.f32 %v4642, %v4851
        %v4853 = vpop.f32.mrb[0].mxu0
        %4854 = vmatprep.mubr.f32.mxu0 %v4537
        %4855 = vmatmul.mubr.f32.gmra.mrb[0].mxu0 %v4536
        %v4856 = vpop.f32.mrb[0].mxu0
        %v4857 = vadd.f32 %v4642, %v4856
        %v4858 = vpop.f32.mrb[0].mxu0
        %4859 = vmatprep.mubr.f32.mxu0 %v4540
        %4860 = vmatmul.mubr.f32.gmra.mrb[0].mxu0 %v4539
        %v4861 = vpop.f32.mrb[0].mxu0
        %v4862 = vadd.f32 %v4642, %v4861
        %v4863 = vpop.f32.mrb[0].mxu0
        %4864 = vmatprep.mubr.f32.mxu0 %v4543
        %4865 = vmatmul.mubr.f32.gmra.mrb[0].mxu0 %v4542
        %v4866 = vpop.f32.mrb[0].mxu0
        %v4867 = vadd.f32 %v4642, %v4866
        %v4868 = vpop.f32.mrb[0].mxu0
        %4869 = vmatprep.mubr.f32.mxu0 %v4546
        %4870 = vmatmul.mubr.f32.gmra.mrb[0].mxu0 %v4545
        %v4871 = vpop.f32.mrb[0].mxu0
        %v4872 = vadd.f32 %v4642, %v4871
        %v4873 = vpop.f32.mrb[0].mxu0
        %4874 = vmatprep.mubr.f32.mxu0 %v4549
        %4875 = vmatmul.mubr.f32.gmra.mrb[0].mxu0 %v4548
        %v4876 = vpop.f32.mrb[0].mxu0
        %v4877 = vadd.f32 %v4642, %v4876
        %v4878 = vpop.f32.mrb[0].mxu0
        %4879 = vmatprep.mubr.f32.mxu0 %v4552
        %4880 = vmatmul.mubr.f32.gmra.mrb[0].mxu0 %v4551
        %v4881 = vpop.f32.mrb[0].mxu0
        %v4882 = vadd.f32 %v4642, %v4881
        %v4883 = vpop.f32.mrb[0].mxu0
        %4884 = vmatprep.mubr.f32.mxu0 %v4555
        %4885 = vmatmul.mubr.f32.gmra.mrb[0].mxu0 %v4554
        %v4886 = vpop.f32.mrb[0].mxu0
        %v4887 = vadd.f32 %v4642, %v4886
        %v4888 = vpop.f32.mrb[0].mxu0
        %4889 = vmatprep.mubr.f32.mxu0 %v4558
        %4890 = vmatmul.mubr.f32.gmra.mrb[0].mxu0 %v4557
        %v4891 = vpop.f32.mrb[0].mxu0
        %v4892 = vadd.f32 %v4642, %v4891
        %v4893 = vpop.f32.mrb[0].mxu0
        %4894 = vmatprep.mubr.f32.mxu0 %v4561
        %4895 = vmatmul.mubr.f32.gmra.mrb[0].mxu0 %v4560
        %v4896 = vpop.f32.mrb[0].mxu0
        %v4897 = vadd.f32 %v4642, %v4896
        %v4898 = vpop.f32.mrb[0].mxu0
        %4899 = vmatprep.mubr.f32.mxu0 %v4564
        %4900 = vmatmul.mubr.f32.gmra.mrb[0].mxu0 %v4563
        %v4901 = vpop.f32.mrb[0].mxu0
        %v4902 = vadd.f32 %v4642, %v4901
        %v4903 = vpop.f32.mrb[0].mxu0
        %4904 = vmatprep.mubr.f32.mxu0 %v4567
        %4905 = vmatmul.mubr.f32.gmra.mrb[0].mxu0 %v4566
        %v4906 = vpop.f32.mrb[0].mxu0
        %v4907 = vadd.f32 %v4642, %v4906
        %v4908 = vpop.f32.mrb[0].mxu0
        %4909 = vmatprep.mubr.f32.mxu0 %v4570
        %4910 = vmatmul.mubr.f32.gmra.mrb[0].mxu0 %v4569
        %v4911 = vpop.f32.mrb[0].mxu0
        %v4912 = vadd.f32 %v4642, %v4911
        %v4913 = vpop.f32.mrb[0].mxu0
        %4914 = vmatprep.mubr.f32.mxu0 %v4573
        %4915 = vmatmul.mubr.f32.gmra.mrb[0].mxu0 %v4572
        %v4916 = vpop.f32.mrb[0].mxu0
        %v4917 = vadd.f32 %v4642, %v4916
        %v4918 = vpop.f32.mrb[0].mxu0
        %4919 = vmatprep.mubr.f32.mxu0 %v4576
        %4920 = vmatmul.mubr.f32.gmra.mrb[0].mxu0 %v4575
        %v4921 = vpop.f32.mrb[0].mxu0
        %v4922 = vadd.f32 %v4642, %v4921
        %v4923 = vpop.f32.mrb[0].mxu0
        %4924 = vmatprep.mubr.f32.mxu0 %v4579
        %4925 = vmatmul.mubr.f32.gmra.mrb[0].mxu0 %v4578
        %v4926 = vpop.f32.mrb[0].mxu0
        %v4927 = vadd.f32 %v4642, %v4926
        %v4928 = vpop.f32.mrb[0].mxu0
        %4929 = vmatprep.mubr.f32.mxu0 %v4582
        %4930 = vmatmul.mubr.f32.gmra.mrb[0].mxu0 %v4581
        %v4931 = vpop.f32.mrb[0].mxu0
        %v4932 = vadd.f32 %v4642, %v4931
        %v4933 = vpop.f32.mrb[0].mxu0
        %4934 = vmatprep.mubr.f32.mxu0 %v4585
        %4935 = vmatmul.mubr.f32.gmra.mrb[0].mxu0 %v4584
        %v4936 = vpop.f32.mrb[0].mxu0
        %v4937 = vadd.f32 %v4642, %v4936
        %v4938 = vpop.f32.mrb[0].mxu0
        %4939 = vmatprep.mubr.f32.mxu0 %v4588
        %4940 = vmatmul.mubr.f32.gmra.mrb[0].mxu0 %v4587
        %v4941 = vpop.f32.mrb[0].mxu0
        %v4942 = vadd.f32 %v4642, %v4941
        %v4943 = vpop.f32.mrb[0].mxu0
        %4944 = vmatprep.mubr.f32.mxu0 %v4591
        %4945 = vmatmul.mubr.f32.gmra.mrb[0].mxu0 %v4590
        %v4946 = vpop.f32.mrb[0].mxu0
        %v4947 = vadd.f32 %v4642, %v4946
        %v4948 = vpop.f32.mrb[0].mxu0
        %4949 = vmatprep.mubr.f32.mxu0 %v4594
        %4950 = vmatmul.mubr.f32.gmra.mrb[0].mxu0 %v4593
        %v4951 = vpop.f32.mrb[0].mxu0
        %v4952 = vadd.f32 %v4642, %v4951
        %v4953 = vpop.f32.mrb[0].mxu0
        %4954 = vmatprep.mubr.f32.mxu0 %v4597
        %4955 = vmatmul.mubr.f32.gmra.mrb[0].mxu0 %v4596
        %v4956 = vpop.f32.mrb[0].mxu0
        %v4957 = vadd.f32 %v4642, %v4956
        %v4958 = vpop.f32.mrb[0].mxu0
        %4959 = vmatprep.mubr.f32.mxu0 %v4600
        %4960 = vmatmul.mubr.f32.gmra.mrb[0].mxu0 %v4599
        %v4961 = vpop.f32.mrb[0].mxu0
        %v4962 = vadd.f32 %v4642, %v4961
        %v4963 = vpop.f32.mrb[0].mxu0
        %4964 = vdwg.mxu0
        %4965 = vmatprep.subr.mxu0 0.0
        %4966 = vmatpush1.msra.mxu0 %v4634
        %4967 = vmatprep.subr.mxu0 0.0
        %4968 = vmatpush1.msra.mxu0 %v4635
        %4969 = vmatprep.subr.mxu0 0.0
        %4970 = vmatpush1.msra.mxu0 %v4636
        %4971 = vmatprep.subr.mxu0 0.0
        %4972 = vmatpush1.msra.mxu0 %v4637
        %4973 = vmatprep.subr.mxu0 0.0
        %4974 = vmatpush1.msra.mxu0 0.0
        %4975 = vmatprep.subr.mxu0 0.0
        %4976 = vmatpush1.msra.mxu0 0.0
        %4977 = vmatprep.subr.mxu0 0.0
        %4978 = vmatpush1.msra.mxu0 0.0
        %4979 = vmatprep.subr.mxu0 0.0
        %4980 = vmatpush1.msra.mxu0 0.0
        %4981 = vmatprep.subr.mxu0 0.0
        %4982 = vmatpush1.msra.mxu0 0.0
        %4983 = vmatprep.subr.mxu0 0.0
        %4984 = vmatpush1.msra.mxu0 0.0
        %4985 = vmatprep.subr.mxu0 0.0
        %4986 = vmatpush1.msra.mxu0 0.0
        %4987 = vmatprep.subr.mxu0 0.0
        %4988 = vmatpush1.msra.mxu0 0.0
        %4989 = vmatprep.subr.mxu0 0.0
        %4990 = vmatpush1.msra.mxu0 0.0
        %4991 = vmatprep.subr.mxu0 0.0
        %4992 = vmatpush1.msra.mxu0 0.0
        %4993 = vmatprep.subr.mxu0 0.0
        %4994 = vmatpush1.msra.mxu0 0.0
        %4995 = vmatprep.subr.mxu0 0.0
        %4996 = vmatpush1.msra.mxu0 0.0
        %4997 = vmatprep.subr.mxu0 0.0
        %4998 = vmatpush1.msra.mxu0 0.0
        %4999 = vmatprep.subr.mxu0 0.0
        %5000 = vmatpush1.msra.mxu0 0.0
        %5001 = vmatprep.subr.mxu0 0.0
        %5002 = vmatpush1.msra.mxu0 0.0
        %5003 = vmatprep.subr.mxu0 0.0
        %5004 = vmatpush1.msra.mxu0 0.0
        %5005 = vmatprep.subr.mxu0 0.0
        %5006 = vmatpush1.msra.mxu0 0.0
        %5007 = vmatprep.subr.mxu0 0.0
        %5008 = vmatpush1.msra.mxu0 0.0
        %5009 = vmatprep.subr.mxu0 0.0
        %5010 = vmatpush1.msra.mxu0 0.0
        %5011 = vmatprep.subr.mxu0 0.0
        %5012 = vmatpush1.msra.mxu0 0.0
        %5013 = vmatprep.subr.mxu0 0.0
        %5014 = vmatpush1.msra.mxu0 0.0
        %5015 = vmatprep.subr.mxu0 0.0
        %5016 = vmatpush1.msra.mxu0 0.0
        %5017 = vmatprep.subr.mxu0 0.0
        %5018 = vmatpush1.msra.mxu0 0.0
        %5019 = vmatprep.subr.mxu0 0.0
        %5020 = vmatpush1.msra.mxu0 0.0
        %5021 = vmatprep.subr.mxu0 0.0
        %5022 = vmatpush1.msra.mxu0 0.0
        %5023 = vmatprep.subr.mxu0 0.0
        %5024 = vmatpush1.msra.mxu0 0.0
        %5025 = vmatprep.subr.mxu0 0.0
        %5026 = vmatpush1.msra.mxu0 0.0
        %5027 = vmatprep.subr.mxu0 0.0
        %5028 = vmatpush1.msra.mxu0 0.0
        %5029 = vmatprep.mubr.f32.mxu0 0.0
        %5030 = vmatmul.mubr.f32.gmra.mrb[0].mxu0 %v4645
        %v5031 = vpop.f32.mrb[0].mxu0
        %v5032 = vadd.f32 %v4807, %v5031
        %v5033 = vpop.f32.mrb[0].mxu0
        %5034 = vmatprep.mubr.f32.mxu0 0.0
        %5035 = vmatmul.mubr.f32.gmra.mrb[0].mxu0 %v4648
        %v5036 = vpop.f32.mrb[0].mxu0
        %v5037 = vadd.f32 %v4812, %v5036
        %v5038 = vpop.f32.mrb[0].mxu0
        %5039 = vmatprep.mubr.f32.mxu0 0.0
        %5040 = vmatmul.mubr.f32.gmra.mrb[0].mxu0 %v4651
        %v5041 = vpop.f32.mrb[0].mxu0
        %v5042 = vadd.f32 %v4817, %v5041
        %v5043 = vpop.f32.mrb[0].mxu0
        %5044 = vmatprep.mubr.f32.mxu0 0.0
        %5045 = vmatmul.mubr.f32.gmra.mrb[0].mxu0 %v4654
        %v5046 = vpop.f32.mrb[0].mxu0
        %v5047 = vadd.f32 %v4822, %v5046
        %v5048 = vpop.f32.mrb[0].mxu0
        %5049 = vmatprep.mubr.f32.mxu0 0.0
        %5050 = vmatmul.mubr.f32.gmra.mrb[0].mxu0 %v4657
        %v5051 = vpop.f32.mrb[0].mxu0
        %v5052 = vadd.f32 %v4827, %v5051
        %v5053 = vpop.f32.mrb[0].mxu0
        %5054 = vmatprep.mubr.f32.mxu0 0.0
        %5055 = vmatmul.mubr.f32.gmra.mrb[0].mxu0 %v4660
        %v5056 = vpop.f32.mrb[0].mxu0
        %v5057 = vadd.f32 %v4832, %v5056
        %v5058 = vpop.f32.mrb[0].mxu0
        %5059 = vmatprep.mubr.f32.mxu0 0.0
        %5060 = vmatmul.mubr.f32.gmra.mrb[0].mxu0 %v4663
        %v5061 = vpop.f32.mrb[0].mxu0
        %v5062 = vadd.f32 %v4837, %v5061
        %v5063 = vpop.f32.mrb[0].mxu0
        %5064 = vmatprep.mubr.f32.mxu0 0.0
        %5065 = vmatmul.mubr.f32.gmra.mrb[0].mxu0 %v4666
        %v5066 = vpop.f32.mrb[0].mxu0
        %v5067 = vadd.f32 %v4842, %v5066
        %v5068 = vpop.f32.mrb[0].mxu0
        %5069 = vmatprep.mubr.f32.mxu0 0.0
        %5070 = vmatmul.mubr.f32.gmra.mrb[0].mxu0 %v4669
        %v5071 = vpop.f32.mrb[0].mxu0
        %v5072 = vadd.f32 %v4847, %v5071
        %v5073 = vpop.f32.mrb[0].mxu0
        %5074 = vmatprep.mubr.f32.mxu0 0.0
        %5075 = vmatmul.mubr.f32.gmra.mrb[0].mxu0 %v4672
        %v5076 = vpop.f32.mrb[0].mxu0
        %v5077 = vadd.f32 %v4852, %v5076
        %v5078 = vpop.f32.mrb[0].mxu0
        %5079 = vmatprep.mubr.f32.mxu0 0.0
        %5080 = vmatmul.mubr.f32.gmra.mrb[0].mxu0 %v4675
        %v5081 = vpop.f32.mrb[0].mxu0
        %v5082 = vadd.f32 %v4857, %v5081
        %v5083 = vpop.f32.mrb[0].mxu0
        %5084 = vmatprep.mubr.f32.mxu0 0.0
        %5085 = vmatmul.mubr.f32.gmra.mrb[0].mxu0 %v4678
        %v5086 = vpop.f32.mrb[0].mxu0
        %v5087 = vadd.f32 %v4862, %v5086
        %v5088 = vpop.f32.mrb[0].mxu0
        %5089 = vmatprep.mubr.f32.mxu0 0.0
        %5090 = vmatmul.mubr.f32.gmra.mrb[0].mxu0 %v4681
        %v5091 = vpop.f32.mrb[0].mxu0
        %v5092 = vadd.f32 %v4867, %v5091
        %v5093 = vpop.f32.mrb[0].mxu0
        %5094 = vmatprep.mubr.f32.mxu0 0.0
        %5095 = vmatmul.mubr.f32.gmra.mrb[0].mxu0 %v4684
        %v5096 = vpop.f32.mrb[0].mxu0
        %v5097 = vadd.f32 %v4872, %v5096
        %v5098 = vpop.f32.mrb[0].mxu0
        %5099 = vmatprep.mubr.f32.mxu0 0.0
        %5100 = vmatmul.mubr.f32.gmra.mrb[0].mxu0 %v4687
        %v5101 = vpop.f32.mrb[0].mxu0
        %v5102 = vadd.f32 %v4877, %v5101
        %v5103 = vpop.f32.mrb[0].mxu0
        %5104 = vmatprep.mubr.f32.mxu0 0.0
        %5105 = vmatmul.mubr.f32.gmra.mrb[0].mxu0 %v4690
        %v5106 = vpop.f32.mrb[0].mxu0
        %v5107 = vadd.f32 %v4882, %v5106
        %v5108 = vpop.f32.mrb[0].mxu0
        %5109 = vmatprep.mubr.f32.mxu0 0.0
        %5110 = vmatmul.mubr.f32.gmra.mrb[0].mxu0 %v4693
        %v5111 = vpop.f32.mrb[0].mxu0
        %v5112 = vadd.f32 %v4887, %v5111
        %v5113 = vpop.f32.mrb[0].mxu0
        %5114 = vmatprep.mubr.f32.mxu0 0.0
        %5115 = vmatmul.mubr.f32.gmra.mrb[0].mxu0 %v4696
        %v5116 = vpop.f32.mrb[0].mxu0
        %v5117 = vadd.f32 %v4892, %v5116
        %v5118 = vpop.f32.mrb[0].mxu0
        %5119 = vmatprep.mubr.f32.mxu0 0.0
        %5120 = vmatmul.mubr.f32.gmra.mrb[0].mxu0 %v4699
        %v5121 = vpop.f32.mrb[0].mxu0
        %v5122 = vadd.f32 %v4897, %v5121
        %v5123 = vpop.f32.mrb[0].mxu0
        %5124 = vmatprep.mubr.f32.mxu0 0.0
        %5125 = vmatmul.mubr.f32.gmra.mrb[0].mxu0 %v4702
        %v5126 = vpop.f32.mrb[0].mxu0
        %v5127 = vadd.f32 %v4902, %v5126
        %v5128 = vpop.f32.mrb[0].mxu0
        %5129 = vmatprep.mubr.f32.mxu0 0.0
        %5130 = vmatmul.mubr.f32.gmra.mrb[0].mxu0 %v4705
        %v5131 = vpop.f32.mrb[0].mxu0
        %v5132 = vadd.f32 %v4907, %v5131
        %v5133 = vpop.f32.mrb[0].mxu0
        %5134 = vmatprep.mubr.f32.mxu0 0.0
        %5135 = vmatmul.mubr.f32.gmra.mrb[0].mxu0 %v4708
        %v5136 = vpop.f32.mrb[0].mxu0
        %v5137 = vadd.f32 %v4912, %v5136
        %v5138 = vpop.f32.mrb[0].mxu0
        %5139 = vmatprep.mubr.f32.mxu0 0.0
        %5140 = vmatmul.mubr.f32.gmra.mrb[0].mxu0 %v4711
        %v5141 = vpop.f32.mrb[0].mxu0
        %v5142 = vadd.f32 %v4917, %v5141
        %v5143 = vpop.f32.mrb[0].mxu0
        %5144 = vmatprep.mubr.f32.mxu0 0.0
        %5145 = vmatmul.mubr.f32.gmra.mrb[0].mxu0 %v4714
        %v5146 = vpop.f32.mrb[0].mxu0
        %v5147 = vadd.f32 %v4922, %v5146
        %v5148 = vpop.f32.mrb[0].mxu0
        %5149 = vmatprep.mubr.f32.mxu0 0.0
        %5150 = vmatmul.mubr.f32.gmra.mrb[0].mxu0 %v4717
        %v5151 = vpop.f32.mrb[0].mxu0
        %v5152 = vadd.f32 %v4927, %v5151
        %v5153 = vpop.f32.mrb[0].mxu0
        %5154 = vmatprep.mubr.f32.mxu0 0.0
        %5155 = vmatmul.mubr.f32.gmra.mrb[0].mxu0 %v4720
        %v5156 = vpop.f32.mrb[0].mxu0
        %v5157 = vadd.f32 %v4932, %v5156
        %v5158 = vpop.f32.mrb[0].mxu0
        %5159 = vmatprep.mubr.f32.mxu0 0.0
        %5160 = vmatmul.mubr.f32.gmra.mrb[0].mxu0 %v4723
        %v5161 = vpop.f32.mrb[0].mxu0
        %v5162 = vadd.f32 %v4937, %v5161
        %v5163 = vpop.f32.mrb[0].mxu0
        %5164 = vmatprep.mubr.f32.mxu0 0.0
        %5165 = vmatmul.mubr.f32.gmra.mrb[0].mxu0 %v4726
        %v5166 = vpop.f32.mrb[0].mxu0
        %v5167 = vadd.f32 %v4942, %v5166
        %v5168 = vpop.f32.mrb[0].mxu0
        %5169 = vmatprep.mubr.f32.mxu0 0.0
        %5170 = vmatmul.mubr.f32.gmra.mrb[0].mxu0 %v4729
        %v5171 = vpop.f32.mrb[0].mxu0
        %v5172 = vadd.f32 %v4947, %v5171
        %v5173 = vpop.f32.mrb[0].mxu0
        %5174 = vmatprep.mubr.f32.mxu0 0.0
        %5175 = vmatmul.mubr.f32.gmra.mrb[0].mxu0 %v4732
        %v5176 = vpop.f32.mrb[0].mxu0
        %v5177 = vadd.f32 %v4952, %v5176
        %v5178 = vpop.f32.mrb[0].mxu0
        %5179 = vmatprep.mubr.f32.mxu0 0.0
        %5180 = vmatmul.mubr.f32.gmra.mrb[0].mxu0 %v4735
        %v5181 = vpop.f32.mrb[0].mxu0
        %v5182 = vadd.f32 %v4957, %v5181
        %v5183 = vpop.f32.mrb[0].mxu0
        %5184 = vmatprep.mubr.f32.mxu0 0.0
        %5185 = vmatmul.mubr.f32.gmra.mrb[0].mxu0 %v4738
        %v5186 = vpop.f32.mrb[0].mxu0
        %v5187 = vadd.f32 %v4962, %v5186
        %v5188 = vpop.f32.mrb[0].mxu0
        %5189 = vdwg.mxu0
        %v5190 = vld [vmem:[%s7] sm:$0x1]
        %v5191 = vld [vmem:[%s8] sm:$0x1]
        %v5192 = vsel %vm358, %v5032, 0.0
        %v5193 = vsel %vm358, %v5037, 0.0
        %v5194 = vadd.f32 %v5192, %v5193
        %v5195 = vsel %vm358, %v5042, 0.0
        %v5196 = vadd.f32 %v5194, %v5195
        %v5197 = vsel %vm358, %v5047, 0.0
        %v5198 = vadd.f32 %v5196, %v5197
        %v5199 = vsel %vm358, %v5052, 0.0
        %v5200 = vadd.f32 %v5198, %v5199
        %v5201 = vsel %vm358, %v5057, 0.0
        %v5202 = vadd.f32 %v5200, %v5201
        %v5203 = vsel %vm358, %v5062, 0.0
        %v5204 = vadd.f32 %v5202, %v5203
        %v5205 = vsel %vm358, %v5067, 0.0
        %v5206 = vadd.f32 %v5204, %v5205
        %v5207 = vsel %vm358, %v5072, 0.0
        %v5208 = vadd.f32 %v5206, %v5207
        %v5209 = vsel %vm358, %v5077, 0.0
        %v5210 = vadd.f32 %v5208, %v5209
        %v5211 = vsel %vm358, %v5082, 0.0
        %v5212 = vadd.f32 %v5210, %v5211
        %v5213 = vsel %vm358, %v5087, 0.0
        %v5214 = vadd.f32 %v5212, %v5213
        %v5215 = vsel %vm358, %v5092, 0.0
        %v5216 = vadd.f32 %v5214, %v5215
        %v5217 = vsel %vm358, %v5097, 0.0
        %v5218 = vadd.f32 %v5216, %v5217
        %v5219 = vsel %vm358, %v5102, 0.0
        %v5220 = vadd.f32 %v5218, %v5219
        %v5221 = vsel %vm358, %v5107, 0.0
        %v5222 = vadd.f32 %v5220, %v5221
        %v5223 = vsel %vm358, %v5112, 0.0
        %v5224 = vadd.f32 %v5222, %v5223
        %v5225 = vsel %vm358, %v5117, 0.0
        %v5226 = vadd.f32 %v5224, %v5225
        %v5227 = vsel %vm358, %v5122, 0.0
        %v5228 = vadd.f32 %v5226, %v5227
        %v5229 = vsel %vm358, %v5127, 0.0
        %v5230 = vadd.f32 %v5228, %v5229
        %v5231 = vsel %vm358, %v5132, 0.0
        %v5232 = vadd.f32 %v5230, %v5231
        %v5233 = vsel %vm358, %v5137, 0.0
        %v5234 = vadd.f32 %v5232, %v5233
        %v5235 = vsel %vm358, %v5142, 0.0
        %v5236 = vadd.f32 %v5234, %v5235
        %v5237 = vsel %vm358, %v5147, 0.0
        %v5238 = vadd.f32 %v5236, %v5237
        %v5239 = vsel %vm358, %v5152, 0.0
        %v5240 = vadd.f32 %v5238, %v5239
        %v5241 = vsel %vm358, %v5157, 0.0
        %v5242 = vadd.f32 %v5240, %v5241
        %v5243 = vsel %vm358, %v5162, 0.0
        %v5244 = vadd.f32 %v5242, %v5243
        %v5245 = vsel %vm358, %v5167, 0.0
        %v5246 = vadd.f32 %v5244, %v5245
        %v5247 = vsel %vm358, %v5172, 0.0
        %v5248 = vadd.f32 %v5246, %v5247
        %v5249 = vsel %vm358, %v5177, 0.0
        %v5250 = vadd.f32 %v5248, %v5249
        %v5251 = vsel %vm358, %v5182, 0.0
        %v5252 = vadd.f32 %v5250, %v5251
        %v5253 = vsel %vm358, %v5187, 0.0
        %v5254 = vadd.f32 %v5252, %v5253
        %v5255 = vrot.slane %v5254, 4
        %v5256 = vadd.f32 %v5254, %v5255
        %v5257 = vrot.slane %v5256, 2
        %v5258 = vadd.f32 %v5256, %v5257
        %v5259 = vrot.slane %v5258, 1
        %v5260 = vadd.f32 %v5258, %v5259
        %v5261 = vmul.f32 %v5032, %v5032
        %v5262 = vmul.f32 %v5037, %v5037
        %v5263 = vmul.f32 %v5042, %v5042
        %v5264 = vmul.f32 %v5047, %v5047
        %v5265 = vmul.f32 %v5052, %v5052
        %v5266 = vmul.f32 %v5057, %v5057
        %v5267 = vmul.f32 %v5062, %v5062
        %v5268 = vmul.f32 %v5067, %v5067
        %v5269 = vmul.f32 %v5072, %v5072
        %v5270 = vmul.f32 %v5077, %v5077
        %v5271 = vmul.f32 %v5082, %v5082
        %v5272 = vmul.f32 %v5087, %v5087
        %v5273 = vmul.f32 %v5092, %v5092
        %v5274 = vmul.f32 %v5097, %v5097
        %v5275 = vmul.f32 %v5102, %v5102
        %v5276 = vmul.f32 %v5107, %v5107
        %v5277 = vmul.f32 %v5112, %v5112
        %v5278 = vmul.f32 %v5117, %v5117
        %v5279 = vmul.f32 %v5122, %v5122
        %v5280 = vmul.f32 %v5127, %v5127
        %v5281 = vmul.f32 %v5132, %v5132
        %v5282 = vmul.f32 %v5137, %v5137
        %v5283 = vmul.f32 %v5142, %v5142
        %v5284 = vmul.f32 %v5147, %v5147
        %v5285 = vmul.f32 %v5152, %v5152
        %v5286 = vmul.f32 %v5157, %v5157
        %v5287 = vmul.f32 %v5162, %v5162
        %v5288 = vmul.f32 %v5167, %v5167
        %v5289 = vmul.f32 %v5172, %v5172
        %v5290 = vmul.f32 %v5177, %v5177
        %v5291 = vmul.f32 %v5182, %v5182
        %v5292 = vmul.f32 %v5187, %v5187
        %v5293 = vsel %vm358, %v5261, 0.0
        %v5294 = vsel %vm358, %v5262, 0.0
        %v5295 = vadd.f32 %v5293, %v5294
        %v5296 = vsel %vm358, %v5263, 0.0
        %v5297 = vadd.f32 %v5295, %v5296
        %v5298 = vsel %vm358, %v5264, 0.0
        %v5299 = vadd.f32 %v5297, %v5298
        %v5300 = vsel %vm358, %v5265, 0.0
        %v5301 = vadd.f32 %v5299, %v5300
        %v5302 = vsel %vm358, %v5266, 0.0
        %v5303 = vadd.f32 %v5301, %v5302
        %v5304 = vsel %vm358, %v5267, 0.0
        %v5305 = vadd.f32 %v5303, %v5304
        %v5306 = vsel %vm358, %v5268, 0.0
        %v5307 = vadd.f32 %v5305, %v5306
        %v5308 = vsel %vm358, %v5269, 0.0
        %v5309 = vadd.f32 %v5307, %v5308
        %v5310 = vsel %vm358, %v5270, 0.0
        %v5311 = vadd.f32 %v5309, %v5310
        %v5312 = vsel %vm358, %v5271, 0.0
        %v5313 = vadd.f32 %v5311, %v5312
        %v5314 = vsel %vm358, %v5272, 0.0
        %v5315 = vadd.f32 %v5313, %v5314
        %v5316 = vsel %vm358, %v5273, 0.0
        %v5317 = vadd.f32 %v5315, %v5316
        %v5318 = vsel %vm358, %v5274, 0.0
        %v5319 = vadd.f32 %v5317, %v5318
        %v5320 = vsel %vm358, %v5275, 0.0
        %v5321 = vadd.f32 %v5319, %v5320
        %v5322 = vsel %vm358, %v5276, 0.0
        %v5323 = vadd.f32 %v5321, %v5322
        %v5324 = vsel %vm358, %v5277, 0.0
        %v5325 = vadd.f32 %v5323, %v5324
        %v5326 = vsel %vm358, %v5278, 0.0
        %v5327 = vadd.f32 %v5325, %v5326
        %v5328 = vsel %vm358, %v5279, 0.0
        %v5329 = vadd.f32 %v5327, %v5328
        %v5330 = vsel %vm358, %v5280, 0.0
        %v5331 = vadd.f32 %v5329, %v5330
        %v5332 = vsel %vm358, %v5281, 0.0
        %v5333 = vadd.f32 %v5331, %v5332
        %v5334 = vsel %vm358, %v5282, 0.0
        %v5335 = vadd.f32 %v5333, %v5334
        %v5336 = vsel %vm358, %v5283, 0.0
        %v5337 = vadd.f32 %v5335, %v5336
        %v5338 = vsel %vm358, %v5284, 0.0
        %v5339 = vadd.f32 %v5337, %v5338
        %v5340 = vsel %vm358, %v5285, 0.0
        %v5341 = vadd.f32 %v5339, %v5340
        %v5342 = vsel %vm358, %v5286, 0.0
        %v5343 = vadd.f32 %v5341, %v5342
        %v5344 = vsel %vm358, %v5287, 0.0
        %v5345 = vadd.f32 %v5343, %v5344
        %v5346 = vsel %vm358, %v5288, 0.0
        %v5347 = vadd.f32 %v5345, %v5346
        %v5348 = vsel %vm358, %v5289, 0.0
        %v5349 = vadd.f32 %v5347, %v5348
        %v5350 = vsel %vm358, %v5290, 0.0
        %v5351 = vadd.f32 %v5349, %v5350
        %v5352 = vsel %vm358, %v5291, 0.0
        %v5353 = vadd.f32 %v5351, %v5352
        %v5354 = vsel %vm358, %v5292, 0.0
        %v5355 = vadd.f32 %v5353, %v5354
        %v5356 = vrot.slane %v5355, 4
        %v5357 = vadd.f32 %v5355, %v5356
        %v5358 = vrot.slane %v5357, 2
        %v5359 = vadd.f32 %v5357, %v5358
        %v5360 = vrot.slane %v5359, 1
        %v5361 = vadd.f32 %v5359, %v5360
        %v5362 = vsel %vm2670, %v5260, %v5361
        %v5363 = vld [vmem:[%s9] sm:$0xff]
        %v5364 = vld [vmem:[%s9 + $0x8] sm:$0xff]
        %v5365 = vld [vmem:[%s9 + $0x10] sm:$0xff]
        %v5366 = vld [vmem:[%s9 + $0x18] sm:$0xff]
        %v5368 = vsel %vm358, %v5362, 0
        %5370 = vmatprep.subr.mxu0 0.0
        %5371 = vmatpush1.msra.mxu0 %v5363
        %5372 = vmatprep.subr.mxu0 0.0
        %5373 = vmatpush1.msra.mxu0 %v5364
        %5374 = vmatprep.subr.mxu0 0.0
        %5375 = vmatpush1.msra.mxu0 %v5365
        %5376 = vmatprep.subr.mxu0 0.0
        %5377 = vmatpush1.msra.mxu0 %v5366
        %5378 = vmatprep.subr.mxu0 0.0
        %5379 = vmatpush1.msra.mxu0 0.0
        %5380 = vmatprep.subr.mxu0 0.0
        %5381 = vmatpush1.msra.mxu0 0.0
        %5382 = vmatprep.subr.mxu0 0.0
        %5383 = vmatpush1.msra.mxu0 0.0
        %5384 = vmatprep.subr.mxu0 0.0
        %5385 = vmatpush1.msra.mxu0 0.0
        %5386 = vmatprep.subr.mxu0 0.0
        %5387 = vmatpush1.msra.mxu0 0.0
        %5388 = vmatprep.subr.mxu0 0.0
        %5389 = vmatpush1.msra.mxu0 0.0
        %5390 = vmatprep.subr.mxu0 0.0
        %5391 = vmatpush1.msra.mxu0 0.0
        %5392 = vmatprep.subr.mxu0 0.0
        %5393 = vmatpush1.msra.mxu0 0.0
        %5394 = vmatprep.subr.mxu0 0.0
        %5395 = vmatpush1.msra.mxu0 0.0
        %5396 = vmatprep.subr.mxu0 0.0
        %5397 = vmatpush1.msra.mxu0 0.0
        %5398 = vmatprep.subr.mxu0 0.0
        %5399 = vmatpush1.msra.mxu0 0.0
        %5400 = vmatprep.subr.mxu0 0.0
        %5401 = vmatpush1.msra.mxu0 0.0
        %5402 = vmatprep.subr.mxu0 0.0
        %5403 = vmatpush1.msra.mxu0 0.0
        %5404 = vmatprep.subr.mxu0 0.0
        %5405 = vmatpush1.msra.mxu0 0.0
        %5406 = vmatprep.subr.mxu0 0.0
        %5407 = vmatpush1.msra.mxu0 0.0
        %5408 = vmatprep.subr.mxu0 0.0
        %5409 = vmatpush1.msra.mxu0 0.0
        %5410 = vmatprep.subr.mxu0 0.0
        %5411 = vmatpush1.msra.mxu0 0.0
        %5412 = vmatprep.subr.mxu0 0.0
        %5413 = vmatpush1.msra.mxu0 0.0
        %5414 = vmatprep.subr.mxu0 0.0
        %5415 = vmatpush1.msra.mxu0 0.0
        %5416 = vmatprep.subr.mxu0 0.0
        %5417 = vmatpush1.msra.mxu0 0.0
        %5418 = vmatprep.subr.mxu0 0.0
        %5419 = vmatpush1.msra.mxu0 0.0
        %5420 = vmatprep.subr.mxu0 0.0
        %5421 = vmatpush1.msra.mxu0 0.0
        %5422 = vmatprep.subr.mxu0 0.0
        %5423 = vmatpush1.msra.mxu0 0.0
        %5424 = vmatprep.subr.mxu0 0.0
        %5425 = vmatpush1.msra.mxu0 0.0
        %5426 = vmatprep.subr.mxu0 0.0
        %5427 = vmatpush1.msra.mxu0 0.0
        %5428 = vmatprep.subr.mxu0 0.0
        %5429 = vmatpush1.msra.mxu0 0.0
        %5430 = vmatprep.subr.mxu0 0.0
        %5431 = vmatpush1.msra.mxu0 0.0
        %5432 = vmatprep.subr.mxu0 0.0
        %5433 = vmatpush1.msra.mxu0 0.0
        %5434 = vmatprep.mubr.f32.mxu0 0.0
        %5435 = vmatmul.mubr.f32.gmra.mrb[0].mxu0 %v5368
        %v5436 = vpop.f32.mrb[0].mxu0
        %v5437 = vadd.f32 0.0, %v5436
        %v5438 = vpop.f32.mrb[0].mxu0
        %5439 = vdwg.mxu0
        %v5440 = vmul.f32 %v5437, %v5437
        %v5442 = vrot.slane %v5440, 7
        %v5444 = vsub.f32 %v5437, %v5442
        %v5445 = vmax.f32 %v5444, 0.0
        %v5446 = vadd.f32 %v5445, 1e-05
        %v5447 = vrsqrt.pop %v5446
        %v5448 = vlaneseq
        %v5449 = vshrl.u32 %v5448, 7
        %v5450 = vsub.s32 0, %v5449
        %v5451 = vrot.slane %v5437, %v5450
        %v5452 = vsub.f32 %v5032, %v5451
        %v5453 = vsub.f32 %v5037, %v5451
        %v5454 = vsub.f32 %v5042, %v5451
        %v5455 = vsub.f32 %v5047, %v5451
        %v5456 = vsub.f32 %v5052, %v5451
        %v5457 = vsub.f32 %v5057, %v5451
        %v5458 = vsub.f32 %v5062, %v5451
        %v5459 = vsub.f32 %v5067, %v5451
        %v5460 = vsub.f32 %v5072, %v5451
        %v5461 = vsub.f32 %v5077, %v5451
        %v5462 = vsub.f32 %v5082, %v5451
        %v5463 = vsub.f32 %v5087, %v5451
        %v5464 = vsub.f32 %v5092, %v5451
        %v5465 = vsub.f32 %v5097, %v5451
        %v5466 = vsub.f32 %v5102, %v5451
        %v5467 = vsub.f32 %v5107, %v5451
        %v5468 = vsub.f32 %v5112, %v5451
        %v5469 = vsub.f32 %v5117, %v5451
        %v5470 = vsub.f32 %v5122, %v5451
        %v5471 = vsub.f32 %v5127, %v5451
        %v5472 = vsub.f32 %v5132, %v5451
        %v5473 = vsub.f32 %v5137, %v5451
        %v5474 = vsub.f32 %v5142, %v5451
        %v5475 = vsub.f32 %v5147, %v5451
        %v5476 = vsub.f32 %v5152, %v5451
        %v5477 = vsub.f32 %v5157, %v5451
        %v5478 = vsub.f32 %v5162, %v5451
        %v5479 = vsub.f32 %v5167, %v5451
        %v5480 = vsub.f32 %v5172, %v5451
        %v5481 = vsub.f32 %v5177, %v5451
        %v5482 = vsub.f32 %v5182, %v5451
        %v5483 = vsub.f32 %v5187, %v5451
        %v5484 = vlaneseq
        %v5485 = vshrl.u32 %v5484, 7
        %v5486 = vsub.s32 1, %v5485
        %v5487 = vrot.slane %v5447, %v5486
        %v5488 = vmul.f32 %v5452, %v5487
        %v5489 = vmul.f32 %v5453, %v5487
        %v5490 = vmul.f32 %v5454, %v5487
        %v5491 = vmul.f32 %v5455, %v5487
        %v5492 = vmul.f32 %v5456, %v5487
        %v5493 = vmul.f32 %v5457, %v5487
        %v5494 = vmul.f32 %v5458, %v5487
        %v5495 = vmul.f32 %v5459, %v5487
        %v5496 = vmul.f32 %v5460, %v5487
        %v5497 = vmul.f32 %v5461, %v5487
        %v5498 = vmul.f32 %v5462, %v5487
        %v5499 = vmul.f32 %v5463, %v5487
        %v5500 = vmul.f32 %v5464, %v5487
        %v5501 = vmul.f32 %v5465, %v5487
        %v5502 = vmul.f32 %v5466, %v5487
        %v5503 = vmul.f32 %v5467, %v5487
        %v5504 = vmul.f32 %v5468, %v5487
        %v5505 = vmul.f32 %v5469, %v5487
        %v5506 = vmul.f32 %v5470, %v5487
        %v5507 = vmul.f32 %v5471, %v5487
        %v5508 = vmul.f32 %v5472, %v5487
        %v5509 = vmul.f32 %v5473, %v5487
        %v5510 = vmul.f32 %v5474, %v5487
        %v5511 = vmul.f32 %v5475, %v5487
        %v5512 = vmul.f32 %v5476, %v5487
        %v5513 = vmul.f32 %v5477, %v5487
        %v5514 = vmul.f32 %v5478, %v5487
        %v5515 = vmul.f32 %v5479, %v5487
        %v5516 = vmul.f32 %v5480, %v5487
        %v5517 = vmul.f32 %v5481, %v5487
        %v5518 = vmul.f32 %v5482, %v5487
        %v5519 = vmul.f32 %v5483, %v5487
        %v5521 = vlaneseq
        %v5522 = vshrl.u32 %v5521, 7
        %v5523 = vsub.s32 0, %v5522
        %v5524 = vrot.slane %v5190, %v5523
        %v5526 = vmul.f32 %v5488, %v5524
        %v5527 = vmul.f32 %v5489, %v5524
        %v5528 = vmul.f32 %v5490, %v5524
        %v5529 = vmul.f32 %v5491, %v5524
        %v5530 = vmul.f32 %v5492, %v5524
        %v5531 = vmul.f32 %v5493, %v5524
        %v5532 = vmul.f32 %v5494, %v5524
        %v5533 = vmul.f32 %v5495, %v5524
        %v5534 = vmul.f32 %v5496, %v5524
        %v5535 = vmul.f32 %v5497, %v5524
        %v5536 = vmul.f32 %v5498, %v5524
        %v5537 = vmul.f32 %v5499, %v5524
        %v5538 = vmul.f32 %v5500, %v5524
        %v5539 = vmul.f32 %v5501, %v5524
        %v5540 = vmul.f32 %v5502, %v5524
        %v5541 = vmul.f32 %v5503, %v5524
        %v5542 = vmul.f32 %v5504, %v5524
        %v5543 = vmul.f32 %v5505, %v5524
        %v5544 = vmul.f32 %v5506, %v5524
        %v5545 = vmul.f32 %v5507, %v5524
        %v5546 = vmul.f32 %v5508, %v5524
        %v5547 = vmul.f32 %v5509, %v5524
        %v5548 = vmul.f32 %v5510, %v5524
        %v5549 = vmul.f32 %v5511, %v5524
        %v5550 = vmul.f32 %v5512, %v5524
        %v5551 = vmul.f32 %v5513, %v5524
        %v5552 = vmul.f32 %v5514, %v5524
        %v5553 = vmul.f32 %v5515, %v5524
        %v5554 = vmul.f32 %v5516, %v5524
        %v5555 = vmul.f32 %v5517, %v5524
        %v5556 = vmul.f32 %v5518, %v5524
        %v5557 = vmul.f32 %v5519, %v5524
        %v5559 = vlaneseq
        %v5560 = vshrl.u32 %v5559, 7
        %v5561 = vsub.s32 0, %v5560
        %v5562 = vrot.slane %v5191, %v5561
        %v5564 = vadd.f32 %v5526, %v5562
        %v5565 = vadd.f32 %v5527, %v5562
        %v5566 = vadd.f32 %v5528, %v5562
        %v5567 = vadd.f32 %v5529, %v5562
        %v5568 = vadd.f32 %v5530, %v5562
        %v5569 = vadd.f32 %v5531, %v5562
        %v5570 = vadd.f32 %v5532, %v5562
        %v5571 = vadd.f32 %v5533, %v5562
        %v5572 = vadd.f32 %v5534, %v5562
        %v5573 = vadd.f32 %v5535, %v5562
        %v5574 = vadd.f32 %v5536, %v5562
        %v5575 = vadd.f32 %v5537, %v5562
        %v5576 = vadd.f32 %v5538, %v5562
        %v5577 = vadd.f32 %v5539, %v5562
        %v5578 = vadd.f32 %v5540, %v5562
        %v5579 = vadd.f32 %v5541, %v5562
        %v5580 = vadd.f32 %v5542, %v5562
        %v5581 = vadd.f32 %v5543, %v5562
        %v5582 = vadd.f32 %v5544, %v5562
        %v5583 = vadd.f32 %v5545, %v5562
        %v5584 = vadd.f32 %v5546, %v5562
        %v5585 = vadd.f32 %v5547, %v5562
        %v5586 = vadd.f32 %v5548, %v5562
        %v5587 = vadd.f32 %v5549, %v5562
        %v5588 = vadd.f32 %v5550, %v5562
        %v5589 = vadd.f32 %v5551, %v5562
        %v5590 = vadd.f32 %v5552, %v5562
        %v5591 = vadd.f32 %v5553, %v5562
        %v5592 = vadd.f32 %v5554, %v5562
        %v5593 = vadd.f32 %v5555, %v5562
        %v5594 = vadd.f32 %v5556, %v5562
        %v5595 = vadd.f32 %v5557, %v5562
        %v5596 = vadd.f32 %v401, %v5564
        %v5597 = vadd.f32 %v402, %v5565
        %v5598 = vadd.f32 %v403, %v5566
        %v5599 = vadd.f32 %v404, %v5567
        %v5600 = vadd.f32 %v405, %v5568
        %v5601 = vadd.f32 %v406, %v5569
        %v5602 = vadd.f32 %v407, %v5570
        %v5603 = vadd.f32 %v408, %v5571
        %v5604 = vadd.f32 %v409, %v5572
        %v5605 = vadd.f32 %v410, %v5573
        %v5606 = vadd.f32 %v411, %v5574
        %v5607 = vadd.f32 %v412, %v5575
        %v5608 = vadd.f32 %v413, %v5576
        %v5609 = vadd.f32 %v414, %v5577
        %v5610 = vadd.f32 %v415, %v5578
        %v5611 = vadd.f32 %v416, %v5579
        %v5612 = vadd.f32 %v417, %v5580
        %v5613 = vadd.f32 %v418, %v5581
        %v5614 = vadd.f32 %v419, %v5582
        %v5615 = vadd.f32 %v420, %v5583
        %v5616 = vadd.f32 %v421, %v5584
        %v5617 = vadd.f32 %v422, %v5585
        %v5618 = vadd.f32 %v423, %v5586
        %v5619 = vadd.f32 %v424, %v5587
        %v5620 = vadd.f32 %v425, %v5588
        %v5621 = vadd.f32 %v426, %v5589
        %v5622 = vadd.f32 %v427, %v5590
        %v5623 = vadd.f32 %v428, %v5591
        %v5624 = vadd.f32 %v429, %v5592
        %v5625 = vadd.f32 %v430, %v5593
        %v5626 = vadd.f32 %v431, %v5594
        %v5627 = vadd.f32 %v432, %v5595
        %v5628 = vxor.u32 %v5596, 2147483648
        %v5629 = vxor.u32 %v5597, 2147483648
        %v5630 = vxor.u32 %v5598, 2147483648
        %v5631 = vxor.u32 %v5599, 2147483648
        %v5632 = vxor.u32 %v5600, 2147483648
        %v5633 = vxor.u32 %v5601, 2147483648
        %v5634 = vxor.u32 %v5602, 2147483648
        %v5635 = vxor.u32 %v5603, 2147483648
        %v5636 = vxor.u32 %v5604, 2147483648
        %v5637 = vxor.u32 %v5605, 2147483648
        %v5638 = vxor.u32 %v5606, 2147483648
        %v5639 = vxor.u32 %v5607, 2147483648
        %v5640 = vxor.u32 %v5608, 2147483648
        %v5641 = vxor.u32 %v5609, 2147483648
        %v5642 = vxor.u32 %v5610, 2147483648
        %v5643 = vxor.u32 %v5611, 2147483648
        %v5644 = vxor.u32 %v5612, 2147483648
        %v5645 = vxor.u32 %v5613, 2147483648
        %v5646 = vxor.u32 %v5614, 2147483648
        %v5647 = vxor.u32 %v5615, 2147483648
        %v5648 = vxor.u32 %v5616, 2147483648
        %v5649 = vxor.u32 %v5617, 2147483648
        %v5650 = vxor.u32 %v5618, 2147483648
        %v5651 = vxor.u32 %v5619, 2147483648
        %v5652 = vxor.u32 %v5620, 2147483648
        %v5653 = vxor.u32 %v5621, 2147483648
        %v5654 = vxor.u32 %v5622, 2147483648
        %v5655 = vxor.u32 %v5623, 2147483648
        %v5656 = vxor.u32 %v5624, 2147483648
        %v5657 = vxor.u32 %v5625, 2147483648
        %v5658 = vxor.u32 %v5626, 2147483648
        %v5659 = vxor.u32 %v5627, 2147483648
        %v5660 = vmul.f32 %v5628, 1.442695
        %v5661 = vpow.pop %v5660
        %v5662 = vmul.f32 %v5629, 1.442695
        %v5663 = vpow.pop %v5662
        %v5664 = vmul.f32 %v5630, 1.442695
        %v5665 = vpow.pop %v5664
        %v5666 = vmul.f32 %v5631, 1.442695
        %v5667 = vpow.pop %v5666
        %v5668 = vmul.f32 %v5632, 1.442695
        %v5669 = vpow.pop %v5668
        %v5670 = vmul.f32 %v5633, 1.442695
        %v5671 = vpow.pop %v5670
        %v5672 = vmul.f32 %v5634, 1.442695
        %v5673 = vpow.pop %v5672
        %v5674 = vmul.f32 %v5635, 1.442695
        %v5675 = vpow.pop %v5674
        %v5676 = vmul.f32 %v5636, 1.442695
        %v5677 = vpow.pop %v5676
        %v5678 = vmul.f32 %v5637, 1.442695
        %v5679 = vpow.pop %v5678
        %v5680 = vmul.f32 %v5638, 1.442695
        %v5681 = vpow.pop %v5680
        %v5682 = vmul.f32 %v5639, 1.442695
        %v5683 = vpow.pop %v5682
        %v5684 = vmul.f32 %v5640, 1.442695
        %v5685 = vpow.pop %v5684
        %v5686 = vmul.f32 %v5641, 1.442695
        %v5687 = vpow.pop %v5686
        %v5688 = vmul.f32 %v5642, 1.442695
        %v5689 = vpow.pop %v5688
        %v5690 = vmul.f32 %v5643, 1.442695
        %v5691 = vpow.pop %v5690
        %v5692 = vmul.f32 %v5644, 1.442695
        %v5693 = vpow.pop %v5692
        %v5694 = vmul.f32 %v5645, 1.442695
        %v5695 = vpow.pop %v5694
        %v5696 = vmul.f32 %v5646, 1.442695
        %v5697 = vpow.pop %v5696
        %v5698 = vmul.f32 %v5647, 1.442695
        %v5699 = vpow.pop %v5698
        %v5700 = vmul.f32 %v5648, 1.442695
        %v5701 = vpow.pop %v5700
        %v5702 = vmul.f32 %v5649, 1.442695
        %v5703 = vpow.pop %v5702
        %v5704 = vmul.f32 %v5650, 1.442695
        %v5705 = vpow.pop %v5704
        %v5706 = vmul.f32 %v5651, 1.442695
        %v5707 = vpow.pop %v5706
        %v5708 = vmul.f32 %v5652, 1.442695
        %v5709 = vpow.pop %v5708
        %v5710 = vmul.f32 %v5653, 1.442695
        %v5711 = vpow.pop %v5710
        %v5712 = vmul.f32 %v5654, 1.442695
        %v5713 = vpow.pop %v5712
        %v5714 = vmul.f32 %v5655, 1.442695
        %v5715 = vpow.pop %v5714
        %v5716 = vmul.f32 %v5656, 1.442695
        %v5717 = vpow.pop %v5716
        %v5718 = vmul.f32 %v5657, 1.442695
        %v5719 = vpow.pop %v5718
        %v5720 = vmul.f32 %v5658, 1.442695
        %v5721 = vpow.pop %v5720
        %v5722 = vmul.f32 %v5659, 1.442695
        %v5723 = vpow.pop %v5722
        %v5724 = vadd.f32 %v5661, 1.0
        %v5725 = vadd.f32 %v5663, 1.0
        %v5726 = vadd.f32 %v5665, 1.0
        %v5727 = vadd.f32 %v5667, 1.0
        %v5728 = vadd.f32 %v5669, 1.0
        %v5729 = vadd.f32 %v5671, 1.0
        %v5730 = vadd.f32 %v5673, 1.0
        %v5731 = vadd.f32 %v5675, 1.0
        %v5732 = vadd.f32 %v5677, 1.0
        %v5733 = vadd.f32 %v5679, 1.0
        %v5734 = vadd.f32 %v5681, 1.0
        %v5735 = vadd.f32 %v5683, 1.0
        %v5736 = vadd.f32 %v5685, 1.0
        %v5737 = vadd.f32 %v5687, 1.0
        %v5738 = vadd.f32 %v5689, 1.0
        %v5739 = vadd.f32 %v5691, 1.0
        %v5740 = vadd.f32 %v5693, 1.0
        %v5741 = vadd.f32 %v5695, 1.0
        %v5742 = vadd.f32 %v5697, 1.0
        %v5743 = vadd.f32 %v5699, 1.0
        %v5744 = vadd.f32 %v5701, 1.0
        %v5745 = vadd.f32 %v5703, 1.0
        %v5746 = vadd.f32 %v5705, 1.0
        %v5747 = vadd.f32 %v5707, 1.0
        %v5748 = vadd.f32 %v5709, 1.0
        %v5749 = vadd.f32 %v5711, 1.0
        %v5750 = vadd.f32 %v5713, 1.0
        %v5751 = vadd.f32 %v5715, 1.0
        %v5752 = vadd.f32 %v5717, 1.0
        %v5753 = vadd.f32 %v5719, 1.0
        %v5754 = vadd.f32 %v5721, 1.0
        %v5755 = vadd.f32 %v5723, 1.0
        %v5756 = vrcp.pop %v5724
        %v5757 = vmul.f32 1.0, %v5756
        %v5758 = vrcp.pop %v5725
        %v5759 = vmul.f32 1.0, %v5758
        %v5760 = vrcp.pop %v5726
        %v5761 = vmul.f32 1.0, %v5760
        %v5762 = vrcp.pop %v5727
        %v5763 = vmul.f32 1.0, %v5762
        %v5764 = vrcp.pop %v5728
        %v5765 = vmul.f32 1.0, %v5764
        %v5766 = vrcp.pop %v5729
        %v5767 = vmul.f32 1.0, %v5766
        %v5768 = vrcp.pop %v5730
        %v5769 = vmul.f32 1.0, %v5768
        %v5770 = vrcp.pop %v5731
        %v5771 = vmul.f32 1.0, %v5770
        %v5772 = vrcp.pop %v5732
        %v5773 = vmul.f32 1.0, %v5772
        %v5774 = vrcp.pop %v5733
        %v5775 = vmul.f32 1.0, %v5774
        %v5776 = vrcp.pop %v5734
        %v5777 = vmul.f32 1.0, %v5776
        %v5778 = vrcp.pop %v5735
        %v5779 = vmul.f32 1.0, %v5778
        %v5780 = vrcp.pop %v5736
        %v5781 = vmul.f32 1.0, %v5780
        %v5782 = vrcp.pop %v5737
        %v5783 = vmul.f32 1.0, %v5782
        %v5784 = vrcp.pop %v5738
        %v5785 = vmul.f32 1.0, %v5784
        %v5786 = vrcp.pop %v5739
        %v5787 = vmul.f32 1.0, %v5786
        %v5788 = vrcp.pop %v5740
        %v5789 = vmul.f32 1.0, %v5788
        %v5790 = vrcp.pop %v5741
        %v5791 = vmul.f32 1.0, %v5790
        %v5792 = vrcp.pop %v5742
        %v5793 = vmul.f32 1.0, %v5792
        %v5794 = vrcp.pop %v5743
        %v5795 = vmul.f32 1.0, %v5794
        %v5796 = vrcp.pop %v5744
        %v5797 = vmul.f32 1.0, %v5796
        %v5798 = vrcp.pop %v5745
        %v5799 = vmul.f32 1.0, %v5798
        %v5800 = vrcp.pop %v5746
        %v5801 = vmul.f32 1.0, %v5800
        %v5802 = vrcp.pop %v5747
        %v5803 = vmul.f32 1.0, %v5802
        %v5804 = vrcp.pop %v5748
        %v5805 = vmul.f32 1.0, %v5804
        %v5806 = vrcp.pop %v5749
        %v5807 = vmul.f32 1.0, %v5806
        %v5808 = vrcp.pop %v5750
        %v5809 = vmul.f32 1.0, %v5808
        %v5810 = vrcp.pop %v5751
        %v5811 = vmul.f32 1.0, %v5810
        %v5812 = vrcp.pop %v5752
        %v5813 = vmul.f32 1.0, %v5812
        %v5814 = vrcp.pop %v5753
        %v5815 = vmul.f32 1.0, %v5814
        %v5816 = vrcp.pop %v5754
        %v5817 = vmul.f32 1.0, %v5816
        %v5818 = vrcp.pop %v5755
        %v5819 = vmul.f32 1.0, %v5818
        %v5820 = vmul.f32 %v5596, %v5757
        %v5821 = vmul.f32 %v5597, %v5759
        %v5822 = vmul.f32 %v5598, %v5761
        %v5823 = vmul.f32 %v5599, %v5763
        %v5824 = vmul.f32 %v5600, %v5765
        %v5825 = vmul.f32 %v5601, %v5767
        %v5826 = vmul.f32 %v5602, %v5769
        %v5827 = vmul.f32 %v5603, %v5771
        %v5828 = vmul.f32 %v5604, %v5773
        %v5829 = vmul.f32 %v5605, %v5775
        %v5830 = vmul.f32 %v5606, %v5777
        %v5831 = vmul.f32 %v5607, %v5779
        %v5832 = vmul.f32 %v5608, %v5781
        %v5833 = vmul.f32 %v5609, %v5783
        %v5834 = vmul.f32 %v5610, %v5785
        %v5835 = vmul.f32 %v5611, %v5787
        %v5836 = vmul.f32 %v5612, %v5789
        %v5837 = vmul.f32 %v5613, %v5791
        %v5838 = vmul.f32 %v5614, %v5793
        %v5839 = vmul.f32 %v5615, %v5795
        %v5840 = vmul.f32 %v5616, %v5797
        %v5841 = vmul.f32 %v5617, %v5799
        %v5842 = vmul.f32 %v5618, %v5801
        %v5843 = vmul.f32 %v5619, %v5803
        %v5844 = vmul.f32 %v5620, %v5805
        %v5845 = vmul.f32 %v5621, %v5807
        %v5846 = vmul.f32 %v5622, %v5809
        %v5847 = vmul.f32 %v5623, %v5811
        %v5848 = vmul.f32 %v5624, %v5813
        %v5849 = vmul.f32 %v5625, %v5815
        %v5850 = vmul.f32 %v5626, %v5817
        %v5851 = vmul.f32 %v5627, %v5819
        %5852 = vst.msk [vmem:[%s352] sm:$0xff] %vm358, %v5820
        %5853 = vst.msk [vmem:[%s352 + $0x8] sm:$0xff] %vm358, %v5821
        %5854 = vst.msk [vmem:[%s352 + $0x10] sm:$0xff] %vm358, %v5822
        %5855 = vst.msk [vmem:[%s352 + $0x18] sm:$0xff] %vm358, %v5823
        %5856 = vst.msk [vmem:[%s352 + $0x20] sm:$0xff] %vm358, %v5824
        %5857 = vst.msk [vmem:[%s352 + $0x28] sm:$0xff] %vm358, %v5825
        %5858 = vst.msk [vmem:[%s352 + $0x30] sm:$0xff] %vm358, %v5826
        %5859 = vst.msk [vmem:[%s352 + $0x38] sm:$0xff] %vm358, %v5827
        %5860 = vst.msk [vmem:[%s352 + $0x40] sm:$0xff] %vm358, %v5828
        %5861 = vst.msk [vmem:[%s352 + $0x48] sm:$0xff] %vm358, %v5829
        %5862 = vst.msk [vmem:[%s352 + $0x50] sm:$0xff] %vm358, %v5830
        %5863 = vst.msk [vmem:[%s352 + $0x58] sm:$0xff] %vm358, %v5831
        %5864 = vst.msk [vmem:[%s352 + $0x60] sm:$0xff] %vm358, %v5832
        %5865 = vst.msk [vmem:[%s352 + $0x68] sm:$0xff] %vm358, %v5833
        %5866 = vst.msk [vmem:[%s352 + $0x70] sm:$0xff] %vm358, %v5834
        %5867 = vst.msk [vmem:[%s352 + $0x78] sm:$0xff] %vm358, %v5835
        %5868 = vst.msk [vmem:[%s352 + $0x80] sm:$0xff] %vm358, %v5836
        %5869 = vst.msk [vmem:[%s352 + $0x88] sm:$0xff] %vm358, %v5837
        %5870 = vst.msk [vmem:[%s352 + $0x90] sm:$0xff] %vm358, %v5838
        %5871 = vst.msk [vmem:[%s352 + $0x98] sm:$0xff] %vm358, %v5839
        %5872 = vst.msk [vmem:[%s352 + $0xa0] sm:$0xff] %vm358, %v5840
        %5873 = vst.msk [vmem:[%s352 + $0xa8] sm:$0xff] %vm358, %v5841
        %5874 = vst.msk [vmem:[%s352 + $0xb0] sm:$0xff] %vm358, %v5842
        %5875 = vst.msk [vmem:[%s352 + $0xb8] sm:$0xff] %vm358, %v5843
        %5876 = vst.msk [vmem:[%s352 + $0xc0] sm:$0xff] %vm358, %v5844
        %5877 = vst.msk [vmem:[%s352 + $0xc8] sm:$0xff] %vm358, %v5845
        %5878 = vst.msk [vmem:[%s352 + $0xd0] sm:$0xff] %vm358, %v5846
        %5879 = vst.msk [vmem:[%s352 + $0xd8] sm:$0xff] %vm358, %v5847
        %5880 = vst.msk [vmem:[%s352 + $0xe0] sm:$0xff] %vm358, %v5848
        %5881 = vst.msk [vmem:[%s352 + $0xe8] sm:$0xff] %vm358, %v5849
        %5882 = vst.msk [vmem:[%s352 + $0xf0] sm:$0xff] %vm358, %v5850
        %5883 = vst.msk [vmem:[%s352 + $0xf8] sm:$0xff] %vm358, %v5851
        %s5884 = sand.u32 %s247, 1
        %s5885 = scalar_lea.sflag [#allocation5], %s5884
        %s5886 = sand.u32 %s247, 1
        %s5887 = smul.addr %s5886, 256
        %s5888 = scalar_lea.vmem [#allocation4], %s5887
        // Predicated region
        $region61: #{residual_block.1} parent=59 // pred_check
          %p5889 = pneg %p257
        $region62: #{residual_block.1} parent=59 // pred_check_branch
          %5891 = sbr.rel (%p5889) target = $region64
        $region63: #{residual_block.1} parent=59 // pred_region
          %s5893 = ssub.s32 4096, 4096
          %5894 = vsyncadd %s5885, %s5893
          %s5895 = smul.addr %s24, 32
          %s5896 = smul.addr %s5895, 128
          %s5897 = scalar_lea.hbm %s10, %s5896
          %s5898 = sshll.u32 %s5888, 4
          %s5899 = int_to_ptr.vmem [resolvable:$true] %s5898
          %5904 = dma.vmem_to_hbm [thread:$0]  %s5899, 4096, %s5897, %s5885, 128, 128, 8
        $region64: #{residual_block.1} parent=59 // pred_fallthru
          _
      $region60: #{residual_block.1} parent=5 // pred_fallthru
        _
      %p5905 = scmp.le.s32.totalorder 2, %s19
      // Predicated region
      $region65: #{residual_block.1} parent=5 // pred_check
        %p5906 = pneg %p5905
      $region66: #{residual_block.1} parent=5 // pred_check_branch
        %5908 = sbr.rel (%p5906) target = $region68
      $region67: #{residual_block.1} parent=5 // pred_region
        %s5909 = ssub.s32 %s19, 2
        // Predicated region
        $region69: #{residual_block.1} parent=67 // pred_check
          %p5910 = pneg %p263
        $region70: #{residual_block.1} parent=67 // pred_check_branch
          %5912 = sbr.rel (%p5910) target = $region72
        $region71: #{residual_block.1} parent=67 // pred_region
          %s5913 = sand.u32 %s248, 1
          %s5914 = scalar_lea.sflag [#allocation5], %s5913
          %s5915 = sand.u32 %s248, 1
          %s5916 = smul.addr %s5915, 256
          %s5917 = scalar_lea.vmem [#allocation4], %s5916
          %5918 = dma.done %s5914, 4096
        $region72: #{residual_block.1} parent=67 // pred_fallthru
          _
      $region68: #{residual_block.1} parent=5 // pred_fallthru
        _
    $region6: #{residual_block.1} parent=1 // loop_footer
      %s23 = sadd.s32 1, %s19
    $region7: #{residual_block.1} parent=1 // loop_footer_branch
      %18 = sbr.rel target = $region3
    $region8: #{residual_block.1} parent=1 // loop_exit
      _
    %5919 = vsyncpa [#allocation5], 1
    %s5920 = scalar_lea.sflag [#allocation5], 1
    %5921 = vsyncpa %s5920, 1

</llo_original>
